<compile_context>
chip_gen: v7x
topology: tpu7x:2x2x1
jax: 0.10.0
libtpu: 0.0.40
codegen_flags: <defaults>
</compile_context>

<pallas_src>
import functools

import jax
import jax.numpy as jnp
from jax.experimental import pallas as pl
from jax.experimental.pallas import tpu as pltpu

LANES = 128


def _round_up(x, m):
    return ((x + m - 1) // m) * m


def _leaky_relu(x, slope=0.2):
    return jnp.where(x > 0, x, slope * x)


@functools.lru_cache(maxsize=1)
def _hw_config():
    """(vmem_limit_bytes, target_matmul_rows), generation-aware, safe fallbacks."""
    kind = ""
    try:
        kind = jax.devices()[0].device_kind.lower()
    except Exception:
        pass
    cap = None
    try:
        cap = int(getattr(pltpu.get_tpu_info(), "vmem_capacity_bytes", 0)) or None
    except Exception:
        cap = None
    if cap is None:
        cap = 128 * 1024 * 1024 if ("v5" in kind or "v6" in kind) else 64 * 1024 * 1024
    vmem_limit = min(int(cap * 3 // 4), 100 * 1024 * 1024)   # ~96 MiB v5e/v6e, 48 MiB v7x
    target_rows = 128 if "v5" in kind else 256               # v5e MXU is 128-deep
    return vmem_limit, target_rows


def _pick_cout_tile(cin_k, cp, vmem_limit):
    """Largest multiple-of-128 divisor of cp whose double-buffered weight slab fits."""
    budget = max(vmem_limit // 6, 4 * 1024 * 1024)
    m = cp // LANES
    for d in range(m, 0, -1):
        if m % d:
            continue
        tc = d * LANES
        if 2 * (16 * cin_k) * tc * 2 <= budget or tc == LANES:
            return tc
    return LANES


def _pick_batch_block(n, ho, wo, cin_k, tc, vmem_limit, target_rows):
    """Samples per conv grid step: fill the MXU M dim within a real VMEM budget."""
    p = ho * wo
    in_blk = (ho + 1) * (wo + 1) * 4 * cin_k * 2       # bf16 input block, per sample
    out_blk = p * tc * 2                               # bf16 output block, per sample
    tap_tmp = p * 4 * cin_k * 2                        # bf16 tap temp, per sample
    f32_tmp = 2 * p * tc * 4                           # f32 acc + IN temps, per sample
    per_sample = 2 * in_blk + 2 * out_blk + tap_tmp + f32_tmp
    fixed = 2 * (16 * cin_k) * tc * 2                  # double-buffered weight slab
    budget = int(vmem_limit * 0.6)
    b_cap = max(1, n // 2) if n >= 2 else 1            # keep >=2 parallel steps (megacore)
    best = 1
    for b in range(1, b_cap + 1):
        if n % b:
            continue
        if b > 1 and fixed + b * per_sample > budget:
            break
        best = b
        if b * p >= target_rows:
            break
    return best


# ---------------------------------------------------------------------------
# Conv2dBlock kernel:
#   4 tap-accumulated bf16 MXU matmuls -> f32 InstanceNorm2d -> LeakyReLU(0.2)
# ---------------------------------------------------------------------------
def conv_in_lrelu_kernel(xq_ref, w_ref, o_ref):
    # xq_ref: [B, Ho+1, Wo+1, 4*Cin_k]  parity-packed, reflection-padded input (bf16)
    # w_ref : [4, 4*Cin_k, tc]          per-tap weight slabs, rows ordered (p, q, ci)
    # o_ref : [B, P, tc]                P = Ho*Wo, tc = out-channel tile (128-multiple)
    B, Hq, Wq, C4 = xq_ref.shape
    Ho, Wo = Hq - 1, Wq - 1
    P = Ho * Wo
    tc = o_ref.shape[-1]

    # Four tap-accumulated matmuls instead of one 16x im2col concat: each 2x2
    # spatial tap (a, b) already carries its 4 stride-2 parity phases on the
    # channel axis, so K = 4*Cin per matmul and no large concat buffer exists.
    y = None
    for t, (a, b) in enumerate(((0, 0), (0, 1), (1, 0), (1, 1))):
        tap = xq_ref[:, a:a + Ho, b:b + Wo, :].reshape(B * P, C4)
        part = jnp.dot(tap, w_ref[t], preferred_element_type=jnp.float32)
        y = part if y is None else y + part
    y = y.reshape(B, P, tc)

    # One-pass InstanceNorm2d (affine=False, eps=1e-5, biased variance), f32 epilogue.
    inv_p = jnp.float32(1.0 / P)
    mean = jnp.sum(y, axis=1, keepdims=True) * inv_p
    var = jnp.maximum(jnp.sum(y * y, axis=1, keepdims=True) * inv_p - mean * mean, 0.0)
    yn = (y - mean) * jax.lax.rsqrt(var + 1e-5)
    o_ref[...] = _leaky_relu(yn).astype(o_ref.dtype)


def conv2d_block(x_nhwc, w_packed):
    """ReflectionPad2d(1) -> Conv2d(4, stride 2, no bias) -> InstanceNorm2d -> LeakyReLU(0.2).

    x_nhwc   : [N, H, W, C]       channels-last activation (C <= Cin_k)
    w_packed : [4, 4*Cin_k, Cp]   prepacked per-tap conv weight (bf16)
    returns  : [N, H/2, W/2, Cp] bf16, Cp = round_up(Cout, 128); extra channels are 0.
    """
    N, H, W, C = x_nhwc.shape
    Cin_k = w_packed.shape[1] // 4
    Cp = w_packed.shape[2]
    assert H % 2 == 0 and W % 2 == 0 and H >= 4 and W >= 4 and C <= Cin_k
    Ho, Wo = H // 2, W // 2
    P = Ho * Wo

    x = x_nhwc.astype(jnp.bfloat16)
    if C != Cin_k:
        x = jnp.pad(x, ((0, 0), (0, 0), (0, 0), (0, Cin_k - C)))

    # TODO(synk): fuse the reflect-pad + parity-pack into the kernel (strided
    # pl.ds reads of the raw NHWC block) to drop this extra XLA activation pass.
    xp = jnp.pad(x, ((0, 0), (1, 1), (1, 1), (0, 0)), mode="reflect")
    xq = jnp.concatenate(
        [xp[:, p::2, q::2, :] for p in (0, 1) for q in (0, 1)],
        axis=-1)                                                # [N, Ho+1, Wo+1, 4*Cin_k]

    vmem_limit, target_rows = _hw_config()
    tc = _pick_cout_tile(Cin_k, Cp, vmem_limit)
    B = _pick_batch_block(N, Ho, Wo, Cin_k, tc, vmem_limit, target_rows)
    n_ctiles = Cp // tc

    cost = pl.CostEstimate(
        flops=2 * N * P * (16 * Cin_k) * Cp,
        transcendentals=N * Cp,
        bytes_accessed=int(xq.size * 2 * n_ctiles
                           + (16 * Cin_k) * Cp * 2 * (N // B)
                           + N * P * Cp * 2))

    out = pl.pallas_call(
        conv_in_lrelu_kernel,
        out_shape=jax.ShapeDtypeStruct((N, P, Cp), jnp.bfloat16),
        grid_spec=pltpu.PrefetchScalarGridSpec(
            num_scalar_prefetch=0,
            grid=(N // B, n_ctiles),
            in_specs=[
                pl.BlockSpec((B, Ho + 1, Wo + 1, 4 * Cin_k),
                             lambda n, c: (n, 0, 0, 0)),
                pl.BlockSpec((4, 4 * Cin_k, tc), lambda n, c: (0, 0, c)),
            ],
            out_specs=pl.BlockSpec((B, P, tc), lambda n, c: (n, 0, c)),
        ),
        compiler_params=pltpu.CompilerParams(
            dimension_semantics=("parallel", "parallel"),
            vmem_limit_bytes=vmem_limit,
        ),
        cost_estimate=cost,
    )(xq, w_packed)
    return out.reshape(N, Ho, Wo, Cp)


# ---------------------------------------------------------------------------
# Fused FC heads: grid = (head, F-tile); head 0 = att (sigmoid), head 1 = adv.
#   h = LeakyReLU(feat @ W1_head)   (F tiled with an f32 accumulator)
#   z = h @ W2_head                 (output padded to 128 lanes)
# ---------------------------------------------------------------------------
def fc_heads_kernel(x_ref, w1_ref, w2_ref, o_ref, acc_ref):
    h_idx = pl.program_id(0)
    k = pl.program_id(1)

    @pl.when(k == 0)
    def _init():
        acc_ref[...] = jnp.zeros_like(acc_ref)

    acc_ref[...] += jnp.dot(x_ref[...], w1_ref[0],
                            preferred_element_type=jnp.float32)

    @pl.when(k == pl.num_programs(1) - 1)
    def _finalize():
        h = _leaky_relu(acc_ref[...]).astype(jnp.bfloat16)
        z = jnp.dot(h, w2_ref[0], preferred_element_type=jnp.float32)
        z = jnp.where(h_idx == 0, jax.nn.sigmoid(z), z)
        o_ref[...] = z.reshape(o_ref.shape)


def _pick_f_tile(fp, h1, vmem_limit):
    budget = max(vmem_limit // 3, 16 * 1024 * 1024)
    if fp * h1 * 2 * 2 <= budget:              # double-buffered per-head FC1 tile
        return fp
    for tf in (4096, 2048, 1024, 512, 256, 128):
        if fp % tf == 0 and tf * h1 * 2 * 2 <= budget:
            return tf
    return fp


def fc_heads(feat, w1_packed, w2_packed, num_att):
    """feat: [N, Fp]; w1_packed: [2, Fp, H1]; w2_packed: [2, H1, OUTP] (bf16)."""
    N, Fp = feat.shape
    H1 = w1_packed.shape[-1]
    OUTP = w2_packed.shape[-1]
    vmem_limit, _ = _hw_config()
    tf = _pick_f_tile(Fp, H1, vmem_limit)

    cost = pl.CostEstimate(
        flops=2 * N * Fp * H1 * 2 + 2 * N * H1 * OUTP * 2,
        transcendentals=N * OUTP,
        bytes_accessed=int(feat.size * 2 * 2 + w1_packed.size * 2
                           + w2_packed.size * 2 + 2 * N * OUTP * 4))

    out = pl.pallas_call(
        fc_heads_kernel,
        out_shape=jax.ShapeDtypeStruct((2, N, OUTP), jnp.float32),
        grid_spec=pltpu.PrefetchScalarGridSpec(
            num_scalar_prefetch=0,
            grid=(2, Fp // tf),
            in_specs=[
                pl.BlockSpec((N, tf), lambda h, k: (0, k)),
                pl.BlockSpec((1, tf, H1), lambda h, k: (h, k, 0)),
                pl.BlockSpec((1, H1, OUTP), lambda h, k: (h, 0, 0)),
            ],
            out_specs=pl.BlockSpec((1, N, OUTP), lambda h, k: (h, 0, 0)),
            scratch_shapes=[pltpu.VMEM((N, H1), jnp.float32)],
        ),
        compiler_params=pltpu.CompilerParams(
            dimension_semantics=("parallel", "arbitrary"),
            vmem_limit_bytes=vmem_limit,
        ),
        cost_estimate=cost,
    )(feat.astype(jnp.bfloat16), w1_packed, w2_packed)
    return out[0, :, :num_att], out[1, :, :1]


# ---------------------------------------------------------------------------
# One-time weight preparation (hoisted out of the per-call path)
# ---------------------------------------------------------------------------
def prepare_params(params, image_hw):
    H, W = image_hw
    prepared = {"conv": []}
    cin_real, cin_pad = 3, 3
    h_cur, w_cur = H, W
    for w_oihw in params["conv"]:
        cout, cin_w = int(w_oihw.shape[0]), int(w_oihw.shape[1])
        assert cin_w == cin_real
        # First layer: pad 3 -> 8 channels only (packed lane dim 32); later
        # layers arrive already 128-padded from the previous conv output.
        cin_k = _round_up(cin_pad, 8)
        cp = _round_up(cout, LANES)
        wf = jnp.pad(w_oihw.astype(jnp.float32),
                     ((0, cp - cout), (0, cin_k - cin_w), (0, 0), (0, 0)))
        w_t = jnp.transpose(wf, (2, 3, 1, 0))                     # [kh, kw, cin_k, cp]
        taps = []
        for a in (0, 1):
            for b in (0, 1):
                rows = [w_t[2 * a + p, 2 * b + q] for p in (0, 1) for q in (0, 1)]
                taps.append(jnp.concatenate(rows, axis=0))        # [4*cin_k, cp]
        prepared["conv"].append(jnp.stack(taps, axis=0).astype(jnp.bfloat16))
        cin_real, cin_pad = cout, cp
        h_cur //= 2
        w_cur //= 2

    ho, wo, c_real, c_pad = h_cur, w_cur, cin_real, cin_pad
    h1 = int(params["att_w1"].shape[0])
    num_att = int(params["att_w2"].shape[0])
    assert params["att_w1"].shape[1] == c_real * ho * wo == params["adv_w1"].shape[1]
    outp = _round_up(max(num_att, 1), LANES)

    def to_nhwc_rows(w1):
        # torch FC1 weight [H1, c*h*w] (NCHW flatten) -> rows in the NHWC order of
        # the lane-padded conv features, so feat @ rows == x.view(N,-1) @ w1.T.
        r = w1.T.reshape(c_real, ho, wo, h1)
        r = jnp.transpose(r, (1, 2, 0, 3))
        r = jnp.pad(r, ((0, 0), (0, 0), (0, c_pad - c_real), (0, 0)))
        return r.reshape(ho * wo * c_pad, h1)

    prepared["fc_w1"] = jnp.stack(
        [to_nhwc_rows(params["att_w1"]), to_nhwc_rows(params["adv_w1"])],
        axis=0).astype(jnp.bfloat16)                              # [2, Fp, H1]
    w2_att = jnp.zeros((h1, outp), jnp.float32).at[:, :num_att].set(params["att_w2"].T)
    w2_adv = jnp.zeros((h1, outp), jnp.float32).at[:, :1].set(params["adv_w2"].T)
    prepared["fc_w2"] = jnp.stack([w2_att, w2_adv], axis=0).astype(jnp.bfloat16)
    return prepared


# ---------------------------------------------------------------------------
# Parameter init (shapes follow Discriminator.__init__; weights in torch layout)
# ---------------------------------------------------------------------------
def init_discriminator_params(key, conv_num_block, dim, num_att):
    params = {"conv": []}
    d = dim
    in_c = 3
    for _ in range(conv_num_block):
        key, sub = jax.random.split(key)
        fan_in = in_c * 4 * 4
        std = (2.0 / fan_in) ** 0.5                    # kaiming_normal_ (fan_in, relu gain)
        params["conv"].append(
            jax.random.normal(sub, (d, in_c, 4, 4), jnp.float32) * std)
        in_c = d
        d *= 2
    d //= 2
    num_features = d * 4 * 4
    gain = 2 ** 0.5

    def fc_w(k, out_c, in_c_):
        # NOTE: reproduces the reference FC init verbatim:
        # `self.he_std = in_channels * -0.5 * gain` (a multiply, not in**-0.5).
        he_std = in_c_ * -0.5 * gain
        return jax.random.normal(k, (out_c, in_c_), jnp.float32) * he_std

    k1, k2, k3, k4 = jax.random.split(key, 4)
    params["att_w1"] = fc_w(k1, 1024, num_features)
    params["att_w2"] = fc_w(k2, num_att, 1024)
    params["adv_w1"] = fc_w(k3, 1024, num_features)
    params["adv_w2"] = fc_w(k4, 1, 1024)
    return params


@functools.partial(jax.jit, static_argnums=2)
def discriminator_forward(prepared, x_nchw, num_att):
    # Single layout fix-up: torch NCHW -> channels-last NHWC (bf16 MXU operands).
    h = jnp.transpose(x_nchw, (0, 2, 3, 1)).astype(jnp.bfloat16)
    for w_packed in prepared["conv"]:
        h = conv2d_block(h, w_packed)
    n, ho, wo, c_pad = h.shape
    # torch's .view(N, -1) (NCHW order) is absorbed into the prepacked FC1 row
    # permutation, so the features are flattened as-is (NHWC).
    feat = h.reshape(n, ho * wo * c_pad)
    return fc_heads(feat, prepared["fc_w1"], prepared["fc_w2"], num_att)


if __name__ == "__main__":
    # Discriminator(conv_num_block=2, dim=8, num_att=5); input 16x16 so that two
    # stride-2 blocks give the 4x4 spatial size assumed by num_features.
    conv_num_block, dim, num_att = 2, 8, 5
    key = jax.random.PRNGKey(0)
    pkey, xkey = jax.random.split(key)
    params = init_discriminator_params(pkey, conv_num_block, dim, num_att)
    prepared = prepare_params(params, image_hw=(16, 16))   # hoisted weight repacking
    x = jax.random.normal(xkey, (2, 3, 16, 16), jnp.float32)

    att, adv = discriminator_forward(prepared, x, num_att)
    jax.block_until_ready((att, adv))
    assert att.shape == (2, num_att) and adv.shape == (2, 1)
    assert bool(jnp.all(jnp.isfinite(att))) and bool(jnp.all(jnp.isfinite(adv)))
    assert bool(jnp.all((att >= 0) & (att <= 1)))
    print("KERNEL_OK")
</pallas_src>

<mosaic_0001>
module attributes {stable_mosaic.version = 11 : i64} {
  func.func @conv_in_lrelu_kernel(%arg0: i32, %arg1: i32, %arg2: memref<1x9x9x32xbf16, #tpu.memory_space<vmem>>, %arg3: memref<4x32x128xbf16, #tpu.memory_space<vmem>>, %arg4: memref<1x64x128xbf16, #tpu.memory_space<vmem>>) attributes {dimension_semantics = [#tpu.dimension_semantics<parallel>, #tpu.dimension_semantics<parallel>], iteration_bounds = array<i64: 2, 1>, scalar_prefetch = 0 : i64, scratch_operands = 0 : i64, tpu.core_type = #tpu.core_type<tc>, window_params = [{transform_indices = @transform_0, window_bounds = array<i64: 1, 9, 9, 32>}, {transform_indices = @transform_1, window_bounds = array<i64: 4, 32, 128>}, {transform_indices = @transform_2, window_bounds = array<i64: 1, 64, 128>}]} {
    %c0 = arith.constant 0 : index
    %c0_0 = arith.constant 0 : index
    %c0_1 = arith.constant 0 : index
    %c0_2 = arith.constant 0 : index
    %0 = vector.load %arg2[%c0, %c0_0, %c0_1, %c0_2] : memref<1x9x9x32xbf16, #tpu.memory_space<vmem>>, vector<1x8x8x32xbf16>
    %1 = vector.shape_cast %0 : vector<1x8x8x32xbf16> to vector<64x32xbf16>
    %c0_3 = arith.constant 0 : index
    %c0_4 = arith.constant 0 : index
    %c0_5 = arith.constant 0 : index
    %2 = vector.load %arg3[%c0_3, %c0_4, %c0_5] : memref<4x32x128xbf16, #tpu.memory_space<vmem>>, vector<1x32x128xbf16>
    %3 = vector.shape_cast %2 : vector<1x32x128xbf16> to vector<32x128xbf16>
    %cst = arith.constant dense<0.000000e+00> : vector<64x128xf32>
    %4 = tpu.matmul %1, %3, %cst {dimension_numbers = #tpu.dot_dimension_numbers<[1], [0], [0], [1], [0, 0, 1, 1], [], []>} : vector<64x32xbf16>, vector<32x128xbf16>, vector<64x128xf32> -> vector<64x128xf32>
    %c0_6 = arith.constant 0 : index
    %c0_7 = arith.constant 0 : index
    %c1 = arith.constant 1 : index
    %c0_8 = arith.constant 0 : index
    %5 = vector.load %arg2[%c0_6, %c0_7, %c1, %c0_8] : memref<1x9x9x32xbf16, #tpu.memory_space<vmem>>, vector<1x8x8x32xbf16>
    %6 = vector.shape_cast %5 : vector<1x8x8x32xbf16> to vector<64x32xbf16>
    %c1_9 = arith.constant 1 : index
    %c0_10 = arith.constant 0 : index
    %c0_11 = arith.constant 0 : index
    %7 = vector.load %arg3[%c1_9, %c0_10, %c0_11] : memref<4x32x128xbf16, #tpu.memory_space<vmem>>, vector<1x32x128xbf16>
    %8 = vector.shape_cast %7 : vector<1x32x128xbf16> to vector<32x128xbf16>
    %cst_12 = arith.constant dense<0.000000e+00> : vector<64x128xf32>
    %9 = tpu.matmul %6, %8, %cst_12 {dimension_numbers = #tpu.dot_dimension_numbers<[1], [0], [0], [1], [0, 0, 1, 1], [], []>} : vector<64x32xbf16>, vector<32x128xbf16>, vector<64x128xf32> -> vector<64x128xf32>
    %10 = arith.addf %4, %9 : vector<64x128xf32>
    %c0_13 = arith.constant 0 : index
    %c1_14 = arith.constant 1 : index
    %c0_15 = arith.constant 0 : index
    %c0_16 = arith.constant 0 : index
    %11 = vector.load %arg2[%c0_13, %c1_14, %c0_15, %c0_16] : memref<1x9x9x32xbf16, #tpu.memory_space<vmem>>, vector<1x8x8x32xbf16>
    %12 = vector.shape_cast %11 : vector<1x8x8x32xbf16> to vector<64x32xbf16>
    %c2 = arith.constant 2 : index
    %c0_17 = arith.constant 0 : index
    %c0_18 = arith.constant 0 : index
    %13 = vector.load %arg3[%c2, %c0_17, %c0_18] : memref<4x32x128xbf16, #tpu.memory_space<vmem>>, vector<1x32x128xbf16>
    %14 = vector.shape_cast %13 : vector<1x32x128xbf16> to vector<32x128xbf16>
    %cst_19 = arith.constant dense<0.000000e+00> : vector<64x128xf32>
    %15 = tpu.matmul %12, %14, %cst_19 {dimension_numbers = #tpu.dot_dimension_numbers<[1], [0], [0], [1], [0, 0, 1, 1], [], []>} : vector<64x32xbf16>, vector<32x128xbf16>, vector<64x128xf32> -> vector<64x128xf32>
    %16 = arith.addf %10, %15 : vector<64x128xf32>
    %c0_20 = arith.constant 0 : index
    %c1_21 = arith.constant 1 : index
    %c1_22 = arith.constant 1 : index
    %c0_23 = arith.constant 0 : index
    %17 = vector.load %arg2[%c0_20, %c1_21, %c1_22, %c0_23] : memref<1x9x9x32xbf16, #tpu.memory_space<vmem>>, vector<1x8x8x32xbf16>
    %18 = vector.shape_cast %17 : vector<1x8x8x32xbf16> to vector<64x32xbf16>
    %c3 = arith.constant 3 : index
    %c0_24 = arith.constant 0 : index
    %c0_25 = arith.constant 0 : index
    %19 = vector.load %arg3[%c3, %c0_24, %c0_25] : memref<4x32x128xbf16, #tpu.memory_space<vmem>>, vector<1x32x128xbf16>
    %20 = vector.shape_cast %19 : vector<1x32x128xbf16> to vector<32x128xbf16>
    %cst_26 = arith.constant dense<0.000000e+00> : vector<64x128xf32>
    %21 = tpu.matmul %18, %20, %cst_26 {dimension_numbers = #tpu.dot_dimension_numbers<[1], [0], [0], [1], [0, 0, 1, 1], [], []>} : vector<64x32xbf16>, vector<32x128xbf16>, vector<64x128xf32> -> vector<64x128xf32>
    %22 = arith.addf %16, %21 : vector<64x128xf32>
    %23 = vector.shape_cast %22 : vector<64x128xf32> to vector<1x64x128xf32>
    %cst_27 = arith.constant dense<0.000000e+00> : vector<1x128xf32>
    %24 = vector.multi_reduction <add>, %23, %cst_27 [1] : vector<1x64x128xf32> to vector<1x128xf32>
    %25 = vector.shape_cast %24 : vector<1x128xf32> to vector<1x1x128xf32>
    %cst_28 = arith.constant 1.562500e-02 : f32
    %26 = vector.broadcast %cst_28 : f32 to vector<1x1x128xf32>
    %27 = arith.mulf %25, %26 : vector<1x1x128xf32>
    %28 = arith.mulf %23, %23 : vector<1x64x128xf32>
    %cst_29 = arith.constant dense<0.000000e+00> : vector<1x128xf32>
    %29 = vector.multi_reduction <add>, %28, %cst_29 [1] : vector<1x64x128xf32> to vector<1x128xf32>
    %30 = vector.shape_cast %29 : vector<1x128xf32> to vector<1x1x128xf32>
    %cst_30 = arith.constant 1.562500e-02 : f32
    %31 = vector.broadcast %cst_30 : f32 to vector<1x1x128xf32>
    %32 = arith.mulf %30, %31 : vector<1x1x128xf32>
    %33 = arith.mulf %27, %27 : vector<1x1x128xf32>
    %34 = arith.subf %32, %33 : vector<1x1x128xf32>
    %cst_31 = arith.constant 0.000000e+00 : f32
    %35 = vector.broadcast %cst_31 : f32 to vector<1x1x128xf32>
    %36 = arith.maximumf %34, %35 : vector<1x1x128xf32>
    %37 = vector.broadcast %27 : vector<1x1x128xf32> to vector<1x64x128xf32>
    %38 = arith.subf %23, %37 : vector<1x64x128xf32>
    %cst_32 = arith.constant 9.99999974E-6 : f32
    %39 = vector.broadcast %cst_32 : f32 to vector<1x1x128xf32>
    %40 = arith.addf %36, %39 : vector<1x1x128xf32>
    %41 = math.rsqrt %40 : vector<1x1x128xf32>
    %42 = vector.broadcast %41 : vector<1x1x128xf32> to vector<1x64x128xf32>
    %43 = arith.mulf %38, %42 : vector<1x64x128xf32>
    %cst_33 = arith.constant 0.000000e+00 : f32
    %44 = vector.broadcast %cst_33 : f32 to vector<1x64x128xf32>
    %45 = arith.cmpf ogt, %43, %44 : vector<1x64x128xf32>
    %cst_34 = arith.constant 2.000000e-01 : f32
    %46 = vector.broadcast %cst_34 : f32 to vector<1x64x128xf32>
    %47 = arith.mulf %46, %43 : vector<1x64x128xf32>
    %48 = arith.select %45, %43, %47 : vector<1x64x128xi1>, vector<1x64x128xf32>
    %49 = arith.truncf %48 : vector<1x64x128xf32> to vector<1x64x128xbf16>
    %c0_35 = arith.constant 0 : index
    %c0_36 = arith.constant 0 : index
    %c0_37 = arith.constant 0 : index
    %50 = vector.load %arg4[%c0_35, %c0_36, %c0_37] : memref<1x64x128xbf16, #tpu.memory_space<vmem>>, vector<1x64x128xbf16>
    tpu.vector_store %arg4[%c0_35, %c0_36, %c0_37], %49 {strides = array<i32>} : memref<1x64x128xbf16, #tpu.memory_space<vmem>>, vector<1x64x128xbf16>,
    return
  }
  func.func @transform_0(%arg0: i32, %arg1: i32) -> (i32, i32, i32, i32) {
    %c0_i32 = arith.constant 0 : i32
    %c0_i32_0 = arith.constant 0 : i32
    %c0_i32_1 = arith.constant 0 : i32
    %c0_i32_2 = arith.constant 0 : i32
    return %arg0, %c0_i32, %c0_i32_0, %c0_i32_1 : i32, i32, i32, i32
  }
  func.func @transform_1(%arg0: i32, %arg1: i32) -> (i32, i32, i32) {
    %c0_i32 = arith.constant 0 : i32
    %c0_i32_0 = arith.constant 0 : i32
    %c0_i32_1 = arith.constant 0 : i32
    return %c0_i32, %c0_i32_0, %arg1 : i32, i32, i32
  }
  func.func @transform_2(%arg0: i32, %arg1: i32) -> (i32, i32, i32) {
    %c0_i32 = arith.constant 0 : i32
    %c0_i32_0 = arith.constant 0 : i32
    return %arg0, %c0_i32, %arg1 : i32, i32, i32
  }
}

module attributes {stable_mosaic.version = 11 : i64} {
  func.func @fc_heads_kernel(%arg0: i32, %arg1: i32, %arg2: memref<2x2048xbf16, #tpu.memory_space<vmem>>, %arg3: memref<1x2048x1024xbf16, #tpu.memory_space<vmem>>, %arg4: memref<1x1024x128xbf16, #tpu.memory_space<vmem>>, %arg5: memref<1x2x128xf32, #tpu.memory_space<vmem>>, %arg6: memref<2x1024xf32, #tpu.memory_space<vmem>>) attributes {dimension_semantics = [#tpu.dimension_semantics<parallel>, #tpu.dimension_semantics<arbitrary>], iteration_bounds = array<i64: 2, 1>, scalar_prefetch = 0 : i64, scratch_operands = 1 : i64, tpu.core_type = #tpu.core_type<tc>, window_params = [{transform_indices = @transform_0, window_bounds = array<i64: 2, 2048>}, {transform_indices = @transform_1, window_bounds = array<i64: 1, 2048, 1024>}, {transform_indices = @transform_2, window_bounds = array<i64: 1, 1024, 128>}, {transform_indices = @transform_3, window_bounds = array<i64: 1, 2, 128>}]} {
    %c0_i32 = arith.constant 0 : i32
    %0 = arith.cmpi eq, %arg1, %c0_i32 : i32
    %1 = arith.extui %0 : i1 to i32
    %c0_i32_0 = arith.constant 0 : i32
    %2 = arith.cmpi ne, %1, %c0_i32_0 : i32
    scf.if %2 {
      %cst_11 = arith.constant 0.000000e+00 : f32
      %13 = vector.broadcast %cst_11 : f32 to vector<2x1024xf32>
      %c0_12 = arith.constant 0 : index
      %c0_13 = arith.constant 0 : index
      %14 = vector.load %arg6[%c0_12, %c0_13] : memref<2x1024xf32, #tpu.memory_space<vmem>>, vector<2x1024xf32>
      tpu.vector_store %arg6[%c0_12, %c0_13], %13 {strides = array<i32>} : memref<2x1024xf32, #tpu.memory_space<vmem>>, vector<2x1024xf32>,
    } else {
    }
    %c0 = arith.constant 0 : index
    %c0_1 = arith.constant 0 : index
    %3 = vector.load %arg6[%c0, %c0_1] : memref<2x1024xf32, #tpu.memory_space<vmem>>, vector<2x1024xf32>
    %c0_2 = arith.constant 0 : index
    %c0_3 = arith.constant 0 : index
    %4 = vector.load %arg2[%c0_2, %c0_3] : memref<2x2048xbf16, #tpu.memory_space<vmem>>, vector<2x2048xbf16>
    %c0_4 = arith.constant 0 : index
    %c0_5 = arith.constant 0 : index
    %c0_6 = arith.constant 0 : index
    %5 = vector.load %arg3[%c0_4, %c0_5, %c0_6] : memref<1x2048x1024xbf16, #tpu.memory_space<vmem>>, vector<1x2048x1024xbf16>
    %6 = vector.shape_cast %5 : vector<1x2048x1024xbf16> to vector<2048x1024xbf16>
    %cst = arith.constant dense<0.000000e+00> : vector<2x1024xf32>
    %7 = tpu.matmul %4, %6, %cst {dimension_numbers = #tpu.dot_dimension_numbers<[1], [0], [0], [1], [0, 0, 1, 1], [], []>} : vector<2x2048xbf16>, vector<2048x1024xbf16>, vector<2x1024xf32> -> vector<2x1024xf32>
    %8 = arith.addf %3, %7 : vector<2x1024xf32>
    %c0_7 = arith.constant 0 : index
    %c0_8 = arith.constant 0 : index
    %9 = vector.load %arg6[%c0_7, %c0_8] : memref<2x1024xf32, #tpu.memory_space<vmem>>, vector<2x1024xf32>
    tpu.vector_store %arg6[%c0_7, %c0_8], %8 {strides = array<i32>} : memref<2x1024xf32, #tpu.memory_space<vmem>>, vector<2x1024xf32>,
    %c0_i32_9 = arith.constant 0 : i32
    %10 = arith.cmpi eq, %arg1, %c0_i32_9 : i32
    %11 = arith.extui %10 : i1 to i32
    %c0_i32_10 = arith.constant 0 : i32
    %12 = arith.cmpi ne, %11, %c0_i32_10 : i32
    scf.if %12 {
      %c0_11 = arith.constant 0 : index
      %c0_12 = arith.constant 0 : index
      %13 = vector.load %arg6[%c0_11, %c0_12] : memref<2x1024xf32, #tpu.memory_space<vmem>>, vector<2x1024xf32>
      %cst_13 = arith.constant 0.000000e+00 : f32
      %14 = vector.broadcast %cst_13 : f32 to vector<2x1024xf32>
      %15 = arith.cmpf ogt, %13, %14 : vector<2x1024xf32>
      %cst_14 = arith.constant 2.000000e-01 : f32
      %16 = vector.broadcast %cst_14 : f32 to vector<2x1024xf32>
      %17 = arith.mulf %16, %13 : vector<2x1024xf32>
      %18 = arith.select %15, %13, %17 : vector<2x1024xi1>, vector<2x1024xf32>
      %19 = arith.truncf %18 : vector<2x1024xf32> to vector<2x1024xbf16>
      %c0_15 = arith.constant 0 : index
      %c0_16 = arith.constant 0 : index
      %c0_17 = arith.constant 0 : index
      %20 = vector.load %arg4[%c0_15, %c0_16, %c0_17] : memref<1x1024x128xbf16, #tpu.memory_space<vmem>>, vector<1x1024x128xbf16>
      %21 = vector.shape_cast %20 : vector<1x1024x128xbf16> to vector<1024x128xbf16>
      %cst_18 = arith.constant dense<0.000000e+00> : vector<2x128xf32>
      %22 = tpu.matmul %19, %21, %cst_18 {dimension_numbers = #tpu.dot_dimension_numbers<[1], [0], [0], [1], [0, 0, 1, 1], [], []>} : vector<2x1024xbf16>, vector<1024x128xbf16>, vector<2x128xf32> -> vector<2x128xf32>
      %c0_i32_19 = arith.constant 0 : i32
      %23 = arith.cmpi eq, %arg0, %c0_i32_19 : i32
      %24 = arith.negf %22 : vector<2x128xf32>
      %25 = math.exp %24 : vector<2x128xf32>
      %cst_20 = arith.constant 1.000000e+00 : f32
      %26 = vector.broadcast %cst_20 : f32 to vector<2x128xf32>
      %27 = arith.addf %26, %25 : vector<2x128xf32>
      %28 = arith.divf %26, %27 : vector<2x128xf32>
      %29 = arith.select %23, %28, %22 : vector<2x128xf32>
      %30 = vector.shape_cast %29 : vector<2x128xf32> to vector<1x2x128xf32>
      %c0_21 = arith.constant 0 : index
      %c0_22 = arith.constant 0 : index
      %c0_23 = arith.constant 0 : index
      %31 = vector.load %arg5[%c0_21, %c0_22, %c0_23] : memref<1x2x128xf32, #tpu.memory_space<vmem>>, vector<1x2x128xf32>
      tpu.vector_store %arg5[%c0_21, %c0_22, %c0_23], %30 {strides = array<i32>} : memref<1x2x128xf32, #tpu.memory_space<vmem>>, vector<1x2x128xf32>,
    } else {
    }
    return
  }
  func.func @transform_0(%arg0: i32, %arg1: i32) -> (i32, i32) {
    %c0_i32 = arith.constant 0 : i32
    %c0_i32_0 = arith.constant 0 : i32
    return %c0_i32, %arg1 : i32, i32
  }
  func.func @transform_1(%arg0: i32, %arg1: i32) -> (i32, i32, i32) {
    %c0_i32 = arith.constant 0 : i32
    %c0_i32_0 = arith.constant 0 : i32
    return %arg0, %arg1, %c0_i32 : i32, i32, i32
  }
  func.func @transform_2(%arg0: i32, %arg1: i32) -> (i32, i32, i32) {
    %c0_i32 = arith.constant 0 : i32
    %c0_i32_0 = arith.constant 0 : i32
    %c0_i32_1 = arith.constant 0 : i32
    return %arg0, %c0_i32, %c0_i32_0 : i32, i32, i32
  }
  func.func @transform_3(%arg0: i32, %arg1: i32) -> (i32, i32, i32) {
    %c0_i32 = arith.constant 0 : i32
    %c0_i32_0 = arith.constant 0 : i32
    %c0_i32_1 = arith.constant 0 : i32
    return %arg0, %c0_i32, %c0_i32_0 : i32, i32, i32
  }
}

module attributes {stable_mosaic.version = 11 : i64} {
  func.func @conv_in_lrelu_kernel(%arg0: i32, %arg1: i32, %arg2: memref<1x5x5x512xbf16, #tpu.memory_space<vmem>>, %arg3: memref<4x512x128xbf16, #tpu.memory_space<vmem>>, %arg4: memref<1x16x128xbf16, #tpu.memory_space<vmem>>) attributes {dimension_semantics = [#tpu.dimension_semantics<parallel>, #tpu.dimension_semantics<parallel>], iteration_bounds = array<i64: 2, 1>, scalar_prefetch = 0 : i64, scratch_operands = 0 : i64, tpu.core_type = #tpu.core_type<tc>, window_params = [{transform_indices = @transform_0, window_bounds = array<i64: 1, 5, 5, 512>}, {transform_indices = @transform_1, window_bounds = array<i64: 4, 512, 128>}, {transform_indices = @transform_2, window_bounds = array<i64: 1, 16, 128>}]} {
    %c0 = arith.constant 0 : index
    %c0_0 = arith.constant 0 : index
    %c0_1 = arith.constant 0 : index
    %c0_2 = arith.constant 0 : index
    %0 = vector.load %arg2[%c0, %c0_0, %c0_1, %c0_2] : memref<1x5x5x512xbf16, #tpu.memory_space<vmem>>, vector<1x4x4x512xbf16>
    %1 = vector.shape_cast %0 : vector<1x4x4x512xbf16> to vector<16x512xbf16>
    %c0_3 = arith.constant 0 : index
    %c0_4 = arith.constant 0 : index
    %c0_5 = arith.constant 0 : index
    %2 = vector.load %arg3[%c0_3, %c0_4, %c0_5] : memref<4x512x128xbf16, #tpu.memory_space<vmem>>, vector<1x512x128xbf16>
    %3 = vector.shape_cast %2 : vector<1x512x128xbf16> to vector<512x128xbf16>
    %cst = arith.constant dense<0.000000e+00> : vector<16x128xf32>
    %4 = tpu.matmul %1, %3, %cst {dimension_numbers = #tpu.dot_dimension_numbers<[1], [0], [0], [1], [0, 0, 1, 1], [], []>} : vector<16x512xbf16>, vector<512x128xbf16>, vector<16x128xf32> -> vector<16x128xf32>
    %c0_6 = arith.constant 0 : index
    %c0_7 = arith.constant 0 : index
    %c1 = arith.constant 1 : index
    %c0_8 = arith.constant 0 : index
    %5 = vector.load %arg2[%c0_6, %c0_7, %c1, %c0_8] : memref<1x5x5x512xbf16, #tpu.memory_space<vmem>>, vector<1x4x4x512xbf16>
    %6 = vector.shape_cast %5 : vector<1x4x4x512xbf16> to vector<16x512xbf16>
    %c1_9 = arith.constant 1 : index
    %c0_10 = arith.constant 0 : index
    %c0_11 = arith.constant 0 : index
    %7 = vector.load %arg3[%c1_9, %c0_10, %c0_11] : memref<4x512x128xbf16, #tpu.memory_space<vmem>>, vector<1x512x128xbf16>
    %8 = vector.shape_cast %7 : vector<1x512x128xbf16> to vector<512x128xbf16>
    %cst_12 = arith.constant dense<0.000000e+00> : vector<16x128xf32>
    %9 = tpu.matmul %6, %8, %cst_12 {dimension_numbers = #tpu.dot_dimension_numbers<[1], [0], [0], [1], [0, 0, 1, 1], [], []>} : vector<16x512xbf16>, vector<512x128xbf16>, vector<16x128xf32> -> vector<16x128xf32>
    %10 = arith.addf %4, %9 : vector<16x128xf32>
    %c0_13 = arith.constant 0 : index
    %c1_14 = arith.constant 1 : index
    %c0_15 = arith.constant 0 : index
    %c0_16 = arith.constant 0 : index
    %11 = vector.load %arg2[%c0_13, %c1_14, %c0_15, %c0_16] : memref<1x5x5x512xbf16, #tpu.memory_space<vmem>>, vector<1x4x4x512xbf16>
    %12 = vector.shape_cast %11 : vector<1x4x4x512xbf16> to vector<16x512xbf16>
    %c2 = arith.constant 2 : index
    %c0_17 = arith.constant 0 : index
    %c0_18 = arith.constant 0 : index
    %13 = vector.load %arg3[%c2, %c0_17, %c0_18] : memref<4x512x128xbf16, #tpu.memory_space<vmem>>, vector<1x512x128xbf16>
    %14 = vector.shape_cast %13 : vector<1x512x128xbf16> to vector<512x128xbf16>
    %cst_19 = arith.constant dense<0.000000e+00> : vector<16x128xf32>
    %15 = tpu.matmul %12, %14, %cst_19 {dimension_numbers = #tpu.dot_dimension_numbers<[1], [0], [0], [1], [0, 0, 1, 1], [], []>} : vector<16x512xbf16>, vector<512x128xbf16>, vector<16x128xf32> -> vector<16x128xf32>
    %16 = arith.addf %10, %15 : vector<16x128xf32>
    %c0_20 = arith.constant 0 : index
    %c1_21 = arith.constant 1 : index
    %c1_22 = arith.constant 1 : index
    %c0_23 = arith.constant 0 : index
    %17 = vector.load %arg2[%c0_20, %c1_21, %c1_22, %c0_23] : memref<1x5x5x512xbf16, #tpu.memory_space<vmem>>, vector<1x4x4x512xbf16>
    %18 = vector.shape_cast %17 : vector<1x4x4x512xbf16> to vector<16x512xbf16>
    %c3 = arith.constant 3 : index
    %c0_24 = arith.constant 0 : index
    %c0_25 = arith.constant 0 : index
    %19 = vector.load %arg3[%c3, %c0_24, %c0_25] : memref<4x512x128xbf16, #tpu.memory_space<vmem>>, vector<1x512x128xbf16>
    %20 = vector.shape_cast %19 : vector<1x512x128xbf16> to vector<512x128xbf16>
    %cst_26 = arith.constant dense<0.000000e+00> : vector<16x128xf32>
    %21 = tpu.matmul %18, %20, %cst_26 {dimension_numbers = #tpu.dot_dimension_numbers<[1], [0], [0], [1], [0, 0, 1, 1], [], []>} : vector<16x512xbf16>, vector<512x128xbf16>, vector<16x128xf32> -> vector<16x128xf32>
    %22 = arith.addf %16, %21 : vector<16x128xf32>
    %23 = vector.shape_cast %22 : vector<16x128xf32> to vector<1x16x128xf32>
    %cst_27 = arith.constant dense<0.000000e+00> : vector<1x128xf32>
    %24 = vector.multi_reduction <add>, %23, %cst_27 [1] : vector<1x16x128xf32> to vector<1x128xf32>
    %25 = vector.shape_cast %24 : vector<1x128xf32> to vector<1x1x128xf32>
    %cst_28 = arith.constant 6.250000e-02 : f32
    %26 = vector.broadcast %cst_28 : f32 to vector<1x1x128xf32>
    %27 = arith.mulf %25, %26 : vector<1x1x128xf32>
    %28 = arith.mulf %23, %23 : vector<1x16x128xf32>
    %cst_29 = arith.constant dense<0.000000e+00> : vector<1x128xf32>
    %29 = vector.multi_reduction <add>, %28, %cst_29 [1] : vector<1x16x128xf32> to vector<1x128xf32>
    %30 = vector.shape_cast %29 : vector<1x128xf32> to vector<1x1x128xf32>
    %cst_30 = arith.constant 6.250000e-02 : f32
    %31 = vector.broadcast %cst_30 : f32 to vector<1x1x128xf32>
    %32 = arith.mulf %30, %31 : vector<1x1x128xf32>
    %33 = arith.mulf %27, %27 : vector<1x1x128xf32>
    %34 = arith.subf %32, %33 : vector<1x1x128xf32>
    %cst_31 = arith.constant 0.000000e+00 : f32
    %35 = vector.broadcast %cst_31 : f32 to vector<1x1x128xf32>
    %36 = arith.maximumf %34, %35 : vector<1x1x128xf32>
    %37 = vector.broadcast %27 : vector<1x1x128xf32> to vector<1x16x128xf32>
    %38 = arith.subf %23, %37 : vector<1x16x128xf32>
    %cst_32 = arith.constant 9.99999974E-6 : f32
    %39 = vector.broadcast %cst_32 : f32 to vector<1x1x128xf32>
    %40 = arith.addf %36, %39 : vector<1x1x128xf32>
    %41 = math.rsqrt %40 : vector<1x1x128xf32>
    %42 = vector.broadcast %41 : vector<1x1x128xf32> to vector<1x16x128xf32>
    %43 = arith.mulf %38, %42 : vector<1x16x128xf32>
    %cst_33 = arith.constant 0.000000e+00 : f32
    %44 = vector.broadcast %cst_33 : f32 to vector<1x16x128xf32>
    %45 = arith.cmpf ogt, %43, %44 : vector<1x16x128xf32>
    %cst_34 = arith.constant 2.000000e-01 : f32
    %46 = vector.broadcast %cst_34 : f32 to vector<1x16x128xf32>
    %47 = arith.mulf %46, %43 : vector<1x16x128xf32>
    %48 = arith.select %45, %43, %47 : vector<1x16x128xi1>, vector<1x16x128xf32>
    %49 = arith.truncf %48 : vector<1x16x128xf32> to vector<1x16x128xbf16>
    %c0_35 = arith.constant 0 : index
    %c0_36 = arith.constant 0 : index
    %c0_37 = arith.constant 0 : index
    %50 = vector.load %arg4[%c0_35, %c0_36, %c0_37] : memref<1x16x128xbf16, #tpu.memory_space<vmem>>, vector<1x16x128xbf16>
    tpu.vector_store %arg4[%c0_35, %c0_36, %c0_37], %49 {strides = array<i32>} : memref<1x16x128xbf16, #tpu.memory_space<vmem>>, vector<1x16x128xbf16>,
    return
  }
  func.func @transform_0(%arg0: i32, %arg1: i32) -> (i32, i32, i32, i32) {
    %c0_i32 = arith.constant 0 : i32
    %c0_i32_0 = arith.constant 0 : i32
    %c0_i32_1 = arith.constant 0 : i32
    %c0_i32_2 = arith.constant 0 : i32
    return %arg0, %c0_i32, %c0_i32_0, %c0_i32_1 : i32, i32, i32, i32
  }
  func.func @transform_1(%arg0: i32, %arg1: i32) -> (i32, i32, i32) {
    %c0_i32 = arith.constant 0 : i32
    %c0_i32_0 = arith.constant 0 : i32
    %c0_i32_1 = arith.constant 0 : i32
    return %c0_i32, %c0_i32_0, %arg1 : i32, i32, i32
  }
  func.func @transform_2(%arg0: i32, %arg1: i32) -> (i32, i32, i32) {
    %c0_i32 = arith.constant 0 : i32
    %c0_i32_0 = arith.constant 0 : i32
    return %arg0, %c0_i32, %arg1 : i32, i32, i32
  }
}

</mosaic_0001>

<llo_original>
// kernel: discriminator_forward.3
$region0: #{discriminator_forward.3}
  #allocation0 [shape = 'u32[]', space=smem, size = 0x4, offset = 0x4, fixed_abs, tag = 'smem constant byte address 0x4 - core index']
  #allocation1 [shape = 'u32[144,128]{1,0:T(1,128)}', space=vmem, size = 0x12000, scoped, tag = 'internal scratch']
  %s0 = inlined_call_operand.vmem [shape: bf16[2,9,9,32], index: 0, kind: input, shape index: {}]
  %s1 = inlined_call_operand.hbm [shape: bf16[4,32,128], index: 1, kind: input, shape index: {}]
  %s2 = inlined_call_operand.vmem [shape: bf16[2,64,128], index: 2, kind: output, shape index: {}]
  %s3 = sld [smem:[#allocation0]]
  $region45: #{discriminator_forward.3} parent=0
    _
  %s5 = ssub.s32 1, %s3
  %s6 = scalar_select 0, %s5, %s3
  $region1: #{discriminator_forward.3} parent=0
    #allocation2 [shape = 'u8[32768]{0}', space=vmem, size = 0x8000, scoped, tag = 'input window, operand 1, single buffered']
    #allocation3 [shape = 's32[2]{0}', space=sflag, size = 0x8, scoped, tag = 'scoped memory for discriminator_forward.3']
    %7 = vsyncpa [#allocation3], 0
    loop: start=0, step=1, limit=4
    $region2: #{discriminator_forward.3} parent=1 // loop_pre_header
      _
    $region3: #{discriminator_forward.3} parent=1 // loop_header
      %s9 = sphi 0, %s13
      %p10 = scmp.ge.s32.totalorder %s9, 4
      %s16 = sphi 0, %s28
      %s17 = sphi 0, %s24
      %s18 = sphi 0, %s16
      %s19 = sphi 0, %s17
      %s20 = sphi 0, %s18
      %s21 = sphi 0, %s19
      %s31 = sphi 0, %s33
      %s34 = sphi 0, %s31
      %s35 = sphi 0, %s34
      %s51 = sphi 0, %s35
      %s57 = sphi 0, %s59
      %s60 = sphi 0, %s57
      %s61 = sphi 0, %s60
      %s77 = sphi 0, %s61
      %s85 = sphi 0, %s87
      %s88 = sphi 0, %s85
      %s89 = sphi 0, %s88
      %s105 = sphi 0, %s89
    $region4: #{discriminator_forward.3} parent=1 // loop_header_branch
      %12 = sbr.rel (%p10) target = $region8
    $region5: #{discriminator_forward.3} parent=1 // loop_body
      %s14 = ssub.s32 %s9, 1
      %s15 = ssub.s32 %s9, 2
      %s22 = sadd.s32 1, %s17
      %p23 = scmp.ge.s32.totalorder %s22, 1
      %s24 = scalar_select %p23, 0, %s22
      %s25 = sadd.s32 1, %s16
      %s26 = scalar_select %p23, %s25, %s16
      %p27 = scmp.ge.s32.totalorder %s26, 2
      %s28 = scalar_select %p27, 0, %s26
      %s29 = ssub.s32 %s16, %s28
      %p30 = scmp.eq.s32.totalorder %s29, 0
      %s32 = sadd.s32 %s31, 1
      %s33 = scalar_select %p30, %s31, %s32
      %p36 = pneg %p30
      %p37 = scmp.eq.s32.totalorder %s9, 1
      %p38 = por %p36, %p37
      %p39 = scmp.ne.s32.totalorder %s31, %s34
      %p40 = scmp.eq.s32.totalorder %s9, 0
      %p41 = por %p39, %p40
      %p42 = scmp.ne.s32.totalorder %s31, %s34
      %p43 = scmp.eq.s32.totalorder %s14, 1
      %p44 = por %p42, %p43
      %p45 = scmp.ne.s32.totalorder %s34, %s35
      %p46 = scmp.eq.s32.totalorder %s14, 0
      %p47 = por %p45, %p46
      %p48 = scmp.ne.s32.totalorder %s34, %s35
      %p49 = scmp.eq.s32.totalorder %s15, 1
      %p50 = por %p48, %p49
      %p52 = scmp.ne.s32.totalorder %s35, %s51
      %p53 = scmp.eq.s32.totalorder %s15, 0
      %p54 = por %p52, %p53
      %s55 = ssub.s32 %s17, %s24
      %p56 = scmp.eq.s32.totalorder %s55, 0
      %s58 = sadd.s32 %s57, 1
      %s59 = scalar_select %p56, %s57, %s58
      %p62 = pneg %p56
      %p63 = scmp.eq.s32.totalorder %s9, 1
      %p64 = por %p62, %p63
      %p65 = scmp.ne.s32.totalorder %s57, %s60
      %p66 = scmp.eq.s32.totalorder %s9, 0
      %p67 = por %p65, %p66
      %p68 = scmp.ne.s32.totalorder %s57, %s60
      %p69 = scmp.eq.s32.totalorder %s14, 1
      %p70 = por %p68, %p69
      %p71 = scmp.ne.s32.totalorder %s60, %s61
      %p72 = scmp.eq.s32.totalorder %s14, 0
      %p73 = por %p71, %p72
      %p74 = scmp.ne.s32.totalorder %s60, %s61
      %p75 = scmp.eq.s32.totalorder %s15, 1
      %p76 = por %p74, %p75
      %p78 = scmp.ne.s32.totalorder %s61, %s77
      %p79 = scmp.eq.s32.totalorder %s15, 0
      %p80 = por %p78, %p79
      %s81 = ssub.s32 %s16, %s28
      %s82 = ssub.s32 %s17, %s24
      %s83 = sor.u32 %s81, %s82
      %p84 = scmp.eq.s32.totalorder %s83, 0
      %s86 = sadd.s32 %s85, 1
      %s87 = scalar_select %p84, %s85, %s86
      %p90 = pneg %p84
      %p91 = scmp.eq.s32.totalorder %s9, 1
      %p92 = por %p90, %p91
      %p93 = scmp.ne.s32.totalorder %s85, %s88
      %p94 = scmp.eq.s32.totalorder %s9, 0
      %p95 = por %p93, %p94
      %p96 = scmp.ne.s32.totalorder %s85, %s88
      %p97 = scmp.eq.s32.totalorder %s14, 1
      %p98 = por %p96, %p97
      %p99 = scmp.ne.s32.totalorder %s88, %s89
      %p100 = scmp.eq.s32.totalorder %s14, 0
      %p101 = por %p99, %p100
      %p102 = scmp.ne.s32.totalorder %s88, %s89
      %p103 = scmp.eq.s32.totalorder %s15, 1
      %p104 = por %p102, %p103
      %p106 = scmp.ne.s32.totalorder %s89, %s105
      %p107 = scmp.eq.s32.totalorder %s15, 0
      %p108 = por %p106, %p107
      %p109 = scmp.le.s32.totalorder 1, %s9
      %p110 = scmp.lt.s32.totalorder %s9, 3
      %p111 = pnand %p109, %p110
      %p112 = pneg %p111
      // Predicated region
      $region9: #{discriminator_forward.3} parent=5 // pred_check
        _
      $region10: #{discriminator_forward.3} parent=5 // pred_check_branch
        %114 = sbr.rel (%p111) target = $region12
      $region11: #{discriminator_forward.3} parent=5 // pred_region
        %s115 = ssub.s32 %s9, 1
        // Predicated region
        $region13: #{discriminator_forward.3} parent=11 // pred_check
          %p116 = pneg %p73
        $region14: #{discriminator_forward.3} parent=11 // pred_check_branch
          %118 = sbr.rel (%p116) target = $region16
        $region15: #{discriminator_forward.3} parent=11 // pred_region
          %s120 = ssub.s32 1024, 1024
          %121 = vsyncadd [#allocation3], %s120
          %s122 = smul.addr %s19, 64
          %s123 = scalar_lea.hbm %s1, %s122
          %s124 = sshll.u32 [#allocation2], 4
          %s125 = int_to_ptr.vmem [resolvable:$true] %s124
          %130 = dma.hbm_to_vmem [thread:$0]  %s123, 1024, %s125, [#allocation3], 64, 64, 4
        $region16: #{discriminator_forward.3} parent=11 // pred_fallthru
          _
      $region12: #{discriminator_forward.3} parent=5 // pred_fallthru
        _
      %p131 = scmp.lt.s32.totalorder %s9, 2
      // Predicated region
      $region17: #{discriminator_forward.3} parent=5 // pred_check
        %p132 = pneg %p131
      $region18: #{discriminator_forward.3} parent=5 // pred_check_branch
        %134 = sbr.rel (%p132) target = $region20
      $region19: #{discriminator_forward.3} parent=5 // pred_region
        // Predicated region
        $region21: #{discriminator_forward.3} parent=19 // pred_check
          %p135 = pneg %p41
        $region22: #{discriminator_forward.3} parent=19 // pred_check_branch
          %137 = sbr.rel (%p135) target = $region24
        $region23: #{discriminator_forward.3} parent=19 // pred_region
          %p138 = scmp.lt.s32.totalorder %s16, 1
          %s139 = scalar_select %p138, %s16, 1
          %s140 = smul.addr %s139, 18
          %s141 = smul.addr %s140, 4
          %s142 = scalar_lea.vmem %s0, %s141
        $region24: #{discriminator_forward.3} parent=19 // pred_fallthru
          _
      $region20: #{discriminator_forward.3} parent=5 // pred_fallthru
        _
      %p143 = scmp.le.s32.totalorder 1, %s9
      %p144 = scmp.lt.s32.totalorder %s9, 3
      %p145 = pnand %p143, %p144
      %p146 = pneg %p145
      // Predicated region
      $region25: #{discriminator_forward.3} parent=5 // pred_check
        _
      $region26: #{discriminator_forward.3} parent=5 // pred_check_branch
        %148 = sbr.rel (%p145) target = $region28
      $region27: #{discriminator_forward.3} parent=5 // pred_region
        %s149 = ssub.s32 %s9, 1
        // Predicated region
        $region29: #{discriminator_forward.3} parent=27 // pred_check
          %p150 = pneg %p73
        $region30: #{discriminator_forward.3} parent=27 // pred_check_branch
          %152 = sbr.rel (%p150) target = $region32
        $region31: #{discriminator_forward.3} parent=27 // pred_region
          %153 = dma.done [#allocation3], 1024
        $region32: #{discriminator_forward.3} parent=27 // pred_fallthru
          _
        %p154 = scmp.lt.s32.totalorder %s18, 1
        %s155 = scalar_select %p154, %s18, 1
        %s156 = smul.addr %s155, 18
        %s157 = smul.addr %s156, 4
        %s158 = scalar_lea.vmem %s0, %s157
        %p159 = pneg %p47
        %p160 = pneg %p44
        %p161 = pneg %p73
        %p162 = pneg %p70
        %p163 = pneg %p101
        %p164 = pneg %p98
        %p165 = scmp.lt.s32.totalorder %s18, 1
        %s166 = scalar_select %p165, %s18, 1
        %p167 = scmp.lt.s32.totalorder %s19, 0
        %s168 = scalar_select %p167, %s19, 0
        %s169 = smul.addr %s166, 8
        %s170 = sadd.s32 %s168, %s169
        %s171 = smul.addr %s170, 4
        %s172 = scalar_lea.vmem %s2, %s171
        %p173 = scmp.lt.s32.totalorder %s18, 1
        %s174 = scalar_select %p173, %s18, 1
        %s175 = smul.addr %s174, 18
        %s176 = smul.addr %s175, 4
        %s177 = scalar_lea.vmem %s0, %s176
        %p178 = scmp.lt.s32.totalorder %s18, 1
        %s179 = scalar_select %p178, %s18, 1
        %p180 = scmp.lt.s32.totalorder %s19, 0
        %s181 = scalar_select %p180, %s19, 0
        %s182 = smul.addr %s179, 8
        %s183 = sadd.s32 %s181, %s182
        %s184 = smul.addr %s183, 4
        %s185 = scalar_lea.vmem %s2, %s184
        %v187 = vld [vmem:[%s177] sm:$0xf]
        %v188 = vld [vmem:[%s177 + $0x8] sm:$0xf]
        %v189 = vld [vmem:[%s177 + $0x10] sm:$0xf]
        %v190 = vld [vmem:[%s177 + $0x18] sm:$0xf]
        %v191 = vld [vmem:[%s177 + $0x20] sm:$0xf]
        %v192 = vld [vmem:[%s177 + $0x28] sm:$0xf]
        %v193 = vld [vmem:[%s177 + $0x30] sm:$0xf]
        %v194 = vld [vmem:[%s177 + $0x38] sm:$0xf]
        %v195 = vld [vmem:[#allocation2] sm:$0xf]
        %v196 = vld [vmem:[#allocation2 + $0x4] sm:$0xf]
        %v197 = vld [vmem:[#allocation2 + $0x8] sm:$0xf]
        %v198 = vld [vmem:[#allocation2 + $0xc] sm:$0xf]
        %v199 = vld [vmem:[%s177 + $0x4] sm:$0x1]
        %v200 = vld [vmem:[%s177 + $0xc] sm:$0x1]
        %v201 = vld [vmem:[%s177 + $0x14] sm:$0x1]
        %v202 = vld [vmem:[%s177 + $0x1c] sm:$0x1]
        %v203 = vld [vmem:[%s177 + $0x24] sm:$0x1]
        %v204 = vld [vmem:[%s177 + $0x2c] sm:$0x1]
        %v205 = vld [vmem:[%s177 + $0x34] sm:$0x1]
        %v206 = vld [vmem:[%s177 + $0x3c] sm:$0x1]
        %vm207 = vsmask.f32 3328
        %vm208 = vsmask.f32 7440
        %vm209 = vmor %vm207, %vm208
        %v211 = vshrl.u32 %v187, 16
        %v213 = vrot.slane %v211, 4
        %v214 = vshll.u32 %v187, 16
        %v216 = vrot.slane %v214, 5
        %v217 = vor.u32 %v213, %v216
        %v218 = vrot.slane %v217, 4
        %v220 = vshll.u32 %v199, 16
        %v222 = vrot.slane %v220, 5
        %v223 = vsel %vm209, %v218, %v222
        %v225 = vshrl.u32 %v188, 16
        %v227 = vrot.slane %v225, 4
        %v228 = vshll.u32 %v188, 16
        %v230 = vrot.slane %v228, 5
        %v231 = vor.u32 %v227, %v230
        %v232 = vrot.slane %v231, 4
        %v234 = vshll.u32 %v200, 16
        %v236 = vrot.slane %v234, 5
        %v237 = vsel %vm209, %v232, %v236
        %v239 = vshrl.u32 %v189, 16
        %v241 = vrot.slane %v239, 4
        %v242 = vshll.u32 %v189, 16
        %v244 = vrot.slane %v242, 5
        %v245 = vor.u32 %v241, %v244
        %v246 = vrot.slane %v245, 4
        %v248 = vshll.u32 %v201, 16
        %v250 = vrot.slane %v248, 5
        %v251 = vsel %vm209, %v246, %v250
        %v253 = vshrl.u32 %v190, 16
        %v255 = vrot.slane %v253, 4
        %v256 = vshll.u32 %v190, 16
        %v258 = vrot.slane %v256, 5
        %v259 = vor.u32 %v255, %v258
        %v260 = vrot.slane %v259, 4
        %v262 = vshll.u32 %v202, 16
        %v264 = vrot.slane %v262, 5
        %v265 = vsel %vm209, %v260, %v264
        %v267 = vshrl.u32 %v191, 16
        %v269 = vrot.slane %v267, 4
        %v270 = vshll.u32 %v191, 16
        %v272 = vrot.slane %v270, 5
        %v273 = vor.u32 %v269, %v272
        %v274 = vrot.slane %v273, 4
        %v276 = vshll.u32 %v203, 16
        %v278 = vrot.slane %v276, 5
        %v279 = vsel %vm209, %v274, %v278
        %v281 = vshrl.u32 %v192, 16
        %v283 = vrot.slane %v281, 4
        %v284 = vshll.u32 %v192, 16
        %v286 = vrot.slane %v284, 5
        %v287 = vor.u32 %v283, %v286
        %v288 = vrot.slane %v287, 4
        %v290 = vshll.u32 %v204, 16
        %v292 = vrot.slane %v290, 5
        %v293 = vsel %vm209, %v288, %v292
        %v295 = vshrl.u32 %v193, 16
        %v297 = vrot.slane %v295, 4
        %v298 = vshll.u32 %v193, 16
        %v300 = vrot.slane %v298, 5
        %v301 = vor.u32 %v297, %v300
        %v302 = vrot.slane %v301, 4
        %v304 = vshll.u32 %v205, 16
        %v306 = vrot.slane %v304, 5
        %v307 = vsel %vm209, %v302, %v306
        %v309 = vshrl.u32 %v194, 16
        %v311 = vrot.slane %v309, 4
        %v312 = vshll.u32 %v194, 16
        %v314 = vrot.slane %v312, 5
        %v315 = vor.u32 %v311, %v314
        %v316 = vrot.slane %v315, 4
        %v318 = vshll.u32 %v206, 16
        %v320 = vrot.slane %v318, 5
        %v321 = vsel %vm209, %v316, %v320
        %s322 = scalar_lea.vmem [#allocation2], 16
        %v323 = vld [vmem:[%s322] sm:$0xf]
        %v324 = vld [vmem:[%s322 + $0x4] sm:$0xf]
        %v325 = vld [vmem:[%s322 + $0x8] sm:$0xf]
        %v326 = vld [vmem:[%s322 + $0xc] sm:$0xf]
        %v327 = vunpack.c.l.b16 %v223
        %v328 = vunpack.c.l.b16 %v237
        %v329 = vunpack.c.l.b16 %v251
        %v330 = vunpack.c.l.b16 %v265
        %v331 = vunpack.c.l.b16 %v279
        %v332 = vunpack.c.l.b16 %v293
        %v333 = vunpack.c.l.b16 %v307
        %v334 = vunpack.c.l.b16 %v321
        %v335 = vpack.c.b16 %v328, %v327
        %v336 = vpack.c.b16 %v330, %v329
        %v337 = vpack.c.b16 %v332, %v331
        %v338 = vpack.c.b16 %v334, %v333
        %v343 = vunpack.c.l.b16 %v323
        %v344 = vunpack.c.l.b16 %v324
        %v345 = vunpack.c.l.b16 %v325
        %v346 = vunpack.c.l.b16 %v326
        %v347 = vpack.c.b16 %v344, %v343
        %v348 = vpack.c.b16 %v346, %v345
        %vm351 = vcmask 261120
        %v353 = vsel %vm351, %v335, 0
        %v356 = vsel %vm351, %v336, 0
        %v359 = vsel %vm351, %v337, 0
        %v362 = vsel %vm351, %v338, 0
        %364 = vmatprep.subr.bf16.mxu0 0
        %365 = vmatpush1.bf16.msra.mxu0 %v347
        %366 = vmatprep.subr.bf16.mxu0 0
        %367 = vmatpush1.bf16.msra.mxu0 %v348
        %368 = vmatprep.subr.bf16.mxu0 0
        %369 = vmatpush1.bf16.msra.mxu0 0
        %370 = vmatprep.subr.bf16.mxu0 0
        %371 = vmatpush1.bf16.msra.mxu0 0
        %372 = vmatprep.subr.bf16.mxu0 0
        %373 = vmatpush1.bf16.msra.mxu0 0
        %374 = vmatprep.subr.bf16.mxu0 0
        %375 = vmatpush1.bf16.msra.mxu0 0
        %376 = vmatprep.subr.bf16.mxu0 0
        %377 = vmatpush1.bf16.msra.mxu0 0
        %378 = vmatprep.subr.bf16.mxu0 0
        %379 = vmatpush1.bf16.msra.mxu0 0
        %380 = vmatprep.subr.bf16.mxu0 0
        %381 = vmatpush1.bf16.msra.mxu0 0
        %382 = vmatprep.subr.bf16.mxu0 0
        %383 = vmatpush1.bf16.msra.mxu0 0
        %384 = vmatprep.subr.bf16.mxu0 0
        %385 = vmatpush1.bf16.msra.mxu0 0
        %386 = vmatprep.subr.bf16.mxu0 0
        %387 = vmatpush1.bf16.msra.mxu0 0
        %388 = vmatprep.subr.bf16.mxu0 0
        %389 = vmatpush1.bf16.msra.mxu0 0
        %390 = vmatprep.subr.bf16.mxu0 0
        %391 = vmatpush1.bf16.msra.mxu0 0
        %392 = vmatprep.subr.bf16.mxu0 0
        %393 = vmatpush1.bf16.msra.mxu0 0
        %394 = vmatprep.subr.bf16.mxu0 0
        %395 = vmatpush1.bf16.msra.mxu0 0
        %396 = vmatprep.mubr.bf16.mxu0 0
        %397 = vmatmul.mubr.bf16.gmra.mrb[0].mxu0 %v353
        %v398 = vpop.f32.mrb[0].mxu0
        %v399 = vadd.f32 0.0, %v398
        %v400 = vpop.f32.mrb[0].mxu0
        %v401 = vpop.f32.mrb[0].mxu0
        %v402 = vadd.f32 0.0, %v401
        %v403 = vpop.f32.mrb[0].mxu0
        %404 = vmatprep.mubr.bf16.mxu0 0
        %405 = vmatmul.mubr.bf16.gmra.mrb[0].mxu0 %v356
        %v406 = vpop.f32.mrb[0].mxu0
        %v407 = vadd.f32 0.0, %v406
        %v408 = vpop.f32.mrb[0].mxu0
        %v409 = vpop.f32.mrb[0].mxu0
        %v410 = vadd.f32 0.0, %v409
        %v411 = vpop.f32.mrb[0].mxu0
        %412 = vmatprep.mubr.bf16.mxu0 0
        %413 = vmatmul.mubr.bf16.gmra.mrb[0].mxu0 %v359
        %v414 = vpop.f32.mrb[0].mxu0
        %v415 = vadd.f32 0.0, %v414
        %v416 = vpop.f32.mrb[0].mxu0
        %v417 = vpop.f32.mrb[0].mxu0
        %v418 = vadd.f32 0.0, %v417
        %v419 = vpop.f32.mrb[0].mxu0
        %420 = vmatprep.mubr.bf16.mxu0 0
        %421 = vmatmul.mubr.bf16.gmra.mrb[0].mxu0 %v362
        %v422 = vpop.f32.mrb[0].mxu0
        %v423 = vadd.f32 0.0, %v422
        %v424 = vpop.f32.mrb[0].mxu0
        %v425 = vpop.f32.mrb[0].mxu0
        %v426 = vadd.f32 0.0, %v425
        %v427 = vpop.f32.mrb[0].mxu0
        %428 = vdwg.mxu0
        %v437 = vunpack.c.l.b16 %v187
        %v438 = vunpack.c.l.b16 %v188
        %v439 = vunpack.c.l.b16 %v189
        %v440 = vunpack.c.l.b16 %v190
        %v441 = vunpack.c.l.b16 %v191
        %v442 = vunpack.c.l.b16 %v192
        %v443 = vunpack.c.l.b16 %v193
        %v444 = vunpack.c.l.b16 %v194
        %v445 = vpack.c.b16 %v438, %v437
        %v446 = vpack.c.b16 %v440, %v439
        %v447 = vpack.c.b16 %v442, %v441
        %v448 = vpack.c.b16 %v444, %v443
        %v453 = vunpack.c.l.b16 %v195
        %v454 = vunpack.c.l.b16 %v196
        %v455 = vunpack.c.l.b16 %v197
        %v456 = vunpack.c.l.b16 %v198
        %v457 = vpack.c.b16 %v454, %v453
        %v458 = vpack.c.b16 %v456, %v455
        %v462 = vsel %vm351, %v445, 0
        %v465 = vsel %vm351, %v446, 0
        %v468 = vsel %vm351, %v447, 0
        %v471 = vsel %vm351, %v448, 0
        %473 = vmatprep.subr.bf16.mxu0 0
        %474 = vmatpush1.bf16.msra.mxu0 %v457
        %475 = vmatprep.subr.bf16.mxu0 0
        %476 = vmatpush1.bf16.msra.mxu0 %v458
        %477 = vmatprep.subr.bf16.mxu0 0
        %478 = vmatpush1.bf16.msra.mxu0 0
        %479 = vmatprep.subr.bf16.mxu0 0
        %480 = vmatpush1.bf16.msra.mxu0 0
        %481 = vmatprep.subr.bf16.mxu0 0
        %482 = vmatpush1.bf16.msra.mxu0 0
        %483 = vmatprep.subr.bf16.mxu0 0
        %484 = vmatpush1.bf16.msra.mxu0 0
        %485 = vmatprep.subr.bf16.mxu0 0
        %486 = vmatpush1.bf16.msra.mxu0 0
        %487 = vmatprep.subr.bf16.mxu0 0
        %488 = vmatpush1.bf16.msra.mxu0 0
        %489 = vmatprep.subr.bf16.mxu0 0
        %490 = vmatpush1.bf16.msra.mxu0 0
        %491 = vmatprep.subr.bf16.mxu0 0
        %492 = vmatpush1.bf16.msra.mxu0 0
        %493 = vmatprep.subr.bf16.mxu0 0
        %494 = vmatpush1.bf16.msra.mxu0 0
        %495 = vmatprep.subr.bf16.mxu0 0
        %496 = vmatpush1.bf16.msra.mxu0 0
        %497 = vmatprep.subr.bf16.mxu0 0
        %498 = vmatpush1.bf16.msra.mxu0 0
        %499 = vmatprep.subr.bf16.mxu0 0
        %500 = vmatpush1.bf16.msra.mxu0 0
        %501 = vmatprep.subr.bf16.mxu0 0
        %502 = vmatpush1.bf16.msra.mxu0 0
        %503 = vmatprep.subr.bf16.mxu0 0
        %504 = vmatpush1.bf16.msra.mxu0 0
        %505 = vmatprep.mubr.bf16.mxu0 0
        %506 = vmatmul.mubr.bf16.gmra.mrb[0].mxu0 %v462
        %v507 = vpop.f32.mrb[0].mxu0
        %v508 = vadd.f32 %v399, %v507
        %v509 = vpop.f32.mrb[0].mxu0
        %v510 = vpop.f32.mrb[0].mxu0
        %v511 = vadd.f32 %v402, %v510
        %v512 = vpop.f32.mrb[0].mxu0
        %513 = vmatprep.mubr.bf16.mxu0 0
        %514 = vmatmul.mubr.bf16.gmra.mrb[0].mxu0 %v465
        %v515 = vpop.f32.mrb[0].mxu0
        %v516 = vadd.f32 %v407, %v515
        %v517 = vpop.f32.mrb[0].mxu0
        %v518 = vpop.f32.mrb[0].mxu0
        %v519 = vadd.f32 %v410, %v518
        %v520 = vpop.f32.mrb[0].mxu0
        %521 = vmatprep.mubr.bf16.mxu0 0
        %522 = vmatmul.mubr.bf16.gmra.mrb[0].mxu0 %v468
        %v523 = vpop.f32.mrb[0].mxu0
        %v524 = vadd.f32 %v415, %v523
        %v525 = vpop.f32.mrb[0].mxu0
        %v526 = vpop.f32.mrb[0].mxu0
        %v527 = vadd.f32 %v418, %v526
        %v528 = vpop.f32.mrb[0].mxu0
        %529 = vmatprep.mubr.bf16.mxu0 0
        %530 = vmatmul.mubr.bf16.gmra.mrb[0].mxu0 %v471
        %v531 = vpop.f32.mrb[0].mxu0
        %v532 = vadd.f32 %v423, %v531
        %v533 = vpop.f32.mrb[0].mxu0
        %v534 = vpop.f32.mrb[0].mxu0
        %v535 = vadd.f32 %v426, %v534
        %v536 = vpop.f32.mrb[0].mxu0
        %537 = vdwg.mxu0
        %s538 = scalar_lea.vmem %s177, 8
        %v539 = vld [vmem:[%s538] sm:$0xf]
        %v540 = vld [vmem:[%s538 + $0x8] sm:$0xf]
        %v541 = vld [vmem:[%s538 + $0x10] sm:$0xf]
        %v542 = vld [vmem:[%s538 + $0x18] sm:$0xf]
        %v543 = vld [vmem:[%s538 + $0x20] sm:$0xf]
        %v544 = vld [vmem:[%s538 + $0x28] sm:$0xf]
        %v545 = vld [vmem:[%s538 + $0x30] sm:$0xf]
        %v546 = vld [vmem:[%s538 + $0x38] sm:$0xf]
        %s547 = scalar_lea.vmem [#allocation2], 32
        %v548 = vld [vmem:[%s547] sm:$0xf]
        %v549 = vld [vmem:[%s547 + $0x4] sm:$0xf]
        %v550 = vld [vmem:[%s547 + $0x8] sm:$0xf]
        %v551 = vld [vmem:[%s547 + $0xc] sm:$0xf]
        %v560 = vunpack.c.l.b16 %v539
        %v561 = vunpack.c.l.b16 %v540
        %v562 = vunpack.c.l.b16 %v541
        %v563 = vunpack.c.l.b16 %v542
        %v564 = vunpack.c.l.b16 %v543
        %v565 = vunpack.c.l.b16 %v544
        %v566 = vunpack.c.l.b16 %v545
        %v567 = vunpack.c.l.b16 %v546
        %v568 = vpack.c.b16 %v561, %v560
        %v569 = vpack.c.b16 %v563, %v562
        %v570 = vpack.c.b16 %v565, %v564
        %v571 = vpack.c.b16 %v567, %v566
        %v576 = vunpack.c.l.b16 %v548
        %v577 = vunpack.c.l.b16 %v549
        %v578 = vunpack.c.l.b16 %v550
        %v579 = vunpack.c.l.b16 %v551
        %v580 = vpack.c.b16 %v577, %v576
        %v581 = vpack.c.b16 %v579, %v578
        %v585 = vsel %vm351, %v568, 0
        %v588 = vsel %vm351, %v569, 0
        %v591 = vsel %vm351, %v570, 0
        %v594 = vsel %vm351, %v571, 0
        %596 = vmatprep.subr.bf16.mxu0 0
        %597 = vmatpush1.bf16.msra.mxu0 %v580
        %598 = vmatprep.subr.bf16.mxu0 0
        %599 = vmatpush1.bf16.msra.mxu0 %v581
        %600 = vmatprep.subr.bf16.mxu0 0
        %601 = vmatpush1.bf16.msra.mxu0 0
        %602 = vmatprep.subr.bf16.mxu0 0
        %603 = vmatpush1.bf16.msra.mxu0 0
        %604 = vmatprep.subr.bf16.mxu0 0
        %605 = vmatpush1.bf16.msra.mxu0 0
        %606 = vmatprep.subr.bf16.mxu0 0
        %607 = vmatpush1.bf16.msra.mxu0 0
        %608 = vmatprep.subr.bf16.mxu0 0
        %609 = vmatpush1.bf16.msra.mxu0 0
        %610 = vmatprep.subr.bf16.mxu0 0
        %611 = vmatpush1.bf16.msra.mxu0 0
        %612 = vmatprep.subr.bf16.mxu0 0
        %613 = vmatpush1.bf16.msra.mxu0 0
        %614 = vmatprep.subr.bf16.mxu0 0
        %615 = vmatpush1.bf16.msra.mxu0 0
        %616 = vmatprep.subr.bf16.mxu0 0
        %617 = vmatpush1.bf16.msra.mxu0 0
        %618 = vmatprep.subr.bf16.mxu0 0
        %619 = vmatpush1.bf16.msra.mxu0 0
        %620 = vmatprep.subr.bf16.mxu0 0
        %621 = vmatpush1.bf16.msra.mxu0 0
        %622 = vmatprep.subr.bf16.mxu0 0
        %623 = vmatpush1.bf16.msra.mxu0 0
        %624 = vmatprep.subr.bf16.mxu0 0
        %625 = vmatpush1.bf16.msra.mxu0 0
        %626 = vmatprep.subr.bf16.mxu0 0
        %627 = vmatpush1.bf16.msra.mxu0 0
        %628 = vmatprep.mubr.bf16.mxu0 0
        %629 = vmatmul.mubr.bf16.gmra.mrb[0].mxu0 %v585
        %v630 = vpop.f32.mrb[0].mxu0
        %v631 = vadd.f32 0.0, %v630
        %v632 = vpop.f32.mrb[0].mxu0
        %v633 = vpop.f32.mrb[0].mxu0
        %v634 = vadd.f32 0.0, %v633
        %v635 = vpop.f32.mrb[0].mxu0
        %636 = vmatprep.mubr.bf16.mxu0 0
        %637 = vmatmul.mubr.bf16.gmra.mrb[0].mxu0 %v588
        %v638 = vpop.f32.mrb[0].mxu0
        %v639 = vadd.f32 0.0, %v638
        %v640 = vpop.f32.mrb[0].mxu0
        %v641 = vpop.f32.mrb[0].mxu0
        %v642 = vadd.f32 0.0, %v641
        %v643 = vpop.f32.mrb[0].mxu0
        %644 = vmatprep.mubr.bf16.mxu0 0
        %645 = vmatmul.mubr.bf16.gmra.mrb[0].mxu0 %v591
        %v646 = vpop.f32.mrb[0].mxu0
        %v647 = vadd.f32 0.0, %v646
        %v648 = vpop.f32.mrb[0].mxu0
        %v649 = vpop.f32.mrb[0].mxu0
        %v650 = vadd.f32 0.0, %v649
        %v651 = vpop.f32.mrb[0].mxu0
        %652 = vmatprep.mubr.bf16.mxu0 0
        %653 = vmatmul.mubr.bf16.gmra.mrb[0].mxu0 %v594
        %v654 = vpop.f32.mrb[0].mxu0
        %v655 = vadd.f32 0.0, %v654
        %v656 = vpop.f32.mrb[0].mxu0
        %v657 = vpop.f32.mrb[0].mxu0
        %v658 = vadd.f32 0.0, %v657
        %v659 = vpop.f32.mrb[0].mxu0
        %660 = vdwg.mxu0
        %v661 = vadd.f32 %v508, %v631
        %v662 = vadd.f32 %v511, %v634
        %v663 = vadd.f32 %v516, %v639
        %v664 = vadd.f32 %v519, %v642
        %v665 = vadd.f32 %v524, %v647
        %v666 = vadd.f32 %v527, %v650
        %v667 = vadd.f32 %v532, %v655
        %v668 = vadd.f32 %v535, %v658
        %v669 = vld [vmem:[%s538] sm:$0xf]
        %v670 = vld [vmem:[%s538 + $0x4] sm:$0x1]
        %v671 = vld [vmem:[%s538 + $0x8] sm:$0xf]
        %v672 = vld [vmem:[%s538 + $0xc] sm:$0x1]
        %v673 = vld [vmem:[%s538 + $0x10] sm:$0xf]
        %v674 = vld [vmem:[%s538 + $0x14] sm:$0x1]
        %v675 = vld [vmem:[%s538 + $0x18] sm:$0xf]
        %v676 = vld [vmem:[%s538 + $0x1c] sm:$0x1]
        %v677 = vld [vmem:[%s538 + $0x20] sm:$0xf]
        %v678 = vld [vmem:[%s538 + $0x24] sm:$0x1]
        %v679 = vld [vmem:[%s538 + $0x28] sm:$0xf]
        %v680 = vld [vmem:[%s538 + $0x2c] sm:$0x1]
        %v681 = vld [vmem:[%s538 + $0x30] sm:$0xf]
        %v682 = vld [vmem:[%s538 + $0x34] sm:$0x1]
        %v683 = vld [vmem:[%s538 + $0x38] sm:$0xf]
        %v684 = vld [vmem:[%s538 + $0x3c] sm:$0x1]
        %v686 = vshrl.u32 %v669, 16
        %v688 = vrot.slane %v686, 4
        %v689 = vshll.u32 %v669, 16
        %v691 = vrot.slane %v689, 5
        %v692 = vor.u32 %v688, %v691
        %v693 = vrot.slane %v692, 4
        %v695 = vshll.u32 %v670, 16
        %v697 = vrot.slane %v695, 5
        %v698 = vsel %vm209, %v693, %v697
        %v700 = vshrl.u32 %v671, 16
        %v702 = vrot.slane %v700, 4
        %v703 = vshll.u32 %v671, 16
        %v705 = vrot.slane %v703, 5
        %v706 = vor.u32 %v702, %v705
        %v707 = vrot.slane %v706, 4
        %v709 = vshll.u32 %v672, 16
        %v711 = vrot.slane %v709, 5
        %v712 = vsel %vm209, %v707, %v711
        %v714 = vshrl.u32 %v673, 16
        %v716 = vrot.slane %v714, 4
        %v717 = vshll.u32 %v673, 16
        %v719 = vrot.slane %v717, 5
        %v720 = vor.u32 %v716, %v719
        %v721 = vrot.slane %v720, 4
        %v723 = vshll.u32 %v674, 16
        %v725 = vrot.slane %v723, 5
        %v726 = vsel %vm209, %v721, %v725
        %v728 = vshrl.u32 %v675, 16
        %v730 = vrot.slane %v728, 4
        %v731 = vshll.u32 %v675, 16
        %v733 = vrot.slane %v731, 5
        %v734 = vor.u32 %v730, %v733
        %v735 = vrot.slane %v734, 4
        %v737 = vshll.u32 %v676, 16
        %v739 = vrot.slane %v737, 5
        %v740 = vsel %vm209, %v735, %v739
        %v742 = vshrl.u32 %v677, 16
        %v744 = vrot.slane %v742, 4
        %v745 = vshll.u32 %v677, 16
        %v747 = vrot.slane %v745, 5
        %v748 = vor.u32 %v744, %v747
        %v749 = vrot.slane %v748, 4
        %v751 = vshll.u32 %v678, 16
        %v753 = vrot.slane %v751, 5
        %v754 = vsel %vm209, %v749, %v753
        %v756 = vshrl.u32 %v679, 16
        %v758 = vrot.slane %v756, 4
        %v759 = vshll.u32 %v679, 16
        %v761 = vrot.slane %v759, 5
        %v762 = vor.u32 %v758, %v761
        %v763 = vrot.slane %v762, 4
        %v765 = vshll.u32 %v680, 16
        %v767 = vrot.slane %v765, 5
        %v768 = vsel %vm209, %v763, %v767
        %v770 = vshrl.u32 %v681, 16
        %v772 = vrot.slane %v770, 4
        %v773 = vshll.u32 %v681, 16
        %v775 = vrot.slane %v773, 5
        %v776 = vor.u32 %v772, %v775
        %v777 = vrot.slane %v776, 4
        %v779 = vshll.u32 %v682, 16
        %v781 = vrot.slane %v779, 5
        %v782 = vsel %vm209, %v777, %v781
        %v784 = vshrl.u32 %v683, 16
        %v786 = vrot.slane %v784, 4
        %v787 = vshll.u32 %v683, 16
        %v789 = vrot.slane %v787, 5
        %v790 = vor.u32 %v786, %v789
        %v791 = vrot.slane %v790, 4
        %v793 = vshll.u32 %v684, 16
        %v795 = vrot.slane %v793, 5
        %v796 = vsel %vm209, %v791, %v795
        %s797 = scalar_lea.vmem [#allocation2], 48
        %v798 = vld [vmem:[%s797] sm:$0xf]
        %v799 = vld [vmem:[%s797 + $0x4] sm:$0xf]
        %v800 = vld [vmem:[%s797 + $0x8] sm:$0xf]
        %v801 = vld [vmem:[%s797 + $0xc] sm:$0xf]
        %v802 = vunpack.c.l.b16 %v698
        %v803 = vunpack.c.l.b16 %v712
        %v804 = vunpack.c.l.b16 %v726
        %v805 = vunpack.c.l.b16 %v740
        %v806 = vunpack.c.l.b16 %v754
        %v807 = vunpack.c.l.b16 %v768
        %v808 = vunpack.c.l.b16 %v782
        %v809 = vunpack.c.l.b16 %v796
        %v810 = vpack.c.b16 %v803, %v802
        %v811 = vpack.c.b16 %v805, %v804
        %v812 = vpack.c.b16 %v807, %v806
        %v813 = vpack.c.b16 %v809, %v808
        %v818 = vunpack.c.l.b16 %v798
        %v819 = vunpack.c.l.b16 %v799
        %v820 = vunpack.c.l.b16 %v800
        %v821 = vunpack.c.l.b16 %v801
        %v822 = vpack.c.b16 %v819, %v818
        %v823 = vpack.c.b16 %v821, %v820
        %v827 = vsel %vm351, %v810, 0
        %v830 = vsel %vm351, %v811, 0
        %v833 = vsel %vm351, %v812, 0
        %v836 = vsel %vm351, %v813, 0
        %838 = vmatprep.subr.bf16.mxu0 0
        %839 = vmatpush1.bf16.msra.mxu0 %v822
        %840 = vmatprep.subr.bf16.mxu0 0
        %841 = vmatpush1.bf16.msra.mxu0 %v823
        %842 = vmatprep.subr.bf16.mxu0 0
        %843 = vmatpush1.bf16.msra.mxu0 0
        %844 = vmatprep.subr.bf16.mxu0 0
        %845 = vmatpush1.bf16.msra.mxu0 0
        %846 = vmatprep.subr.bf16.mxu0 0
        %847 = vmatpush1.bf16.msra.mxu0 0
        %848 = vmatprep.subr.bf16.mxu0 0
        %849 = vmatpush1.bf16.msra.mxu0 0
        %850 = vmatprep.subr.bf16.mxu0 0
        %851 = vmatpush1.bf16.msra.mxu0 0
        %852 = vmatprep.subr.bf16.mxu0 0
        %853 = vmatpush1.bf16.msra.mxu0 0
        %854 = vmatprep.subr.bf16.mxu0 0
        %855 = vmatpush1.bf16.msra.mxu0 0
        %856 = vmatprep.subr.bf16.mxu0 0
        %857 = vmatpush1.bf16.msra.mxu0 0
        %858 = vmatprep.subr.bf16.mxu0 0
        %859 = vmatpush1.bf16.msra.mxu0 0
        %860 = vmatprep.subr.bf16.mxu0 0
        %861 = vmatpush1.bf16.msra.mxu0 0
        %862 = vmatprep.subr.bf16.mxu0 0
        %863 = vmatpush1.bf16.msra.mxu0 0
        %864 = vmatprep.subr.bf16.mxu0 0
        %865 = vmatpush1.bf16.msra.mxu0 0
        %866 = vmatprep.subr.bf16.mxu0 0
        %867 = vmatpush1.bf16.msra.mxu0 0
        %868 = vmatprep.subr.bf16.mxu0 0
        %869 = vmatpush1.bf16.msra.mxu0 0
        %870 = vmatprep.mubr.bf16.mxu0 0
        %871 = vmatmul.mubr.bf16.gmra.mrb[0].mxu0 %v827
        %v872 = vpop.f32.mrb[0].mxu0
        %v873 = vadd.f32 0.0, %v872
        %v874 = vpop.f32.mrb[0].mxu0
        %v875 = vpop.f32.mrb[0].mxu0
        %v876 = vadd.f32 0.0, %v875
        %v877 = vpop.f32.mrb[0].mxu0
        %878 = vmatprep.mubr.bf16.mxu0 0
        %879 = vmatmul.mubr.bf16.gmra.mrb[0].mxu0 %v830
        %v880 = vpop.f32.mrb[0].mxu0
        %v881 = vadd.f32 0.0, %v880
        %v882 = vpop.f32.mrb[0].mxu0
        %v883 = vpop.f32.mrb[0].mxu0
        %v884 = vadd.f32 0.0, %v883
        %v885 = vpop.f32.mrb[0].mxu0
        %886 = vmatprep.mubr.bf16.mxu0 0
        %887 = vmatmul.mubr.bf16.gmra.mrb[0].mxu0 %v833
        %v888 = vpop.f32.mrb[0].mxu0
        %v889 = vadd.f32 0.0, %v888
        %v890 = vpop.f32.mrb[0].mxu0
        %v891 = vpop.f32.mrb[0].mxu0
        %v892 = vadd.f32 0.0, %v891
        %v893 = vpop.f32.mrb[0].mxu0
        %894 = vmatprep.mubr.bf16.mxu0 0
        %895 = vmatmul.mubr.bf16.gmra.mrb[0].mxu0 %v836
        %v896 = vpop.f32.mrb[0].mxu0
        %v897 = vadd.f32 0.0, %v896
        %v898 = vpop.f32.mrb[0].mxu0
        %v899 = vpop.f32.mrb[0].mxu0
        %v900 = vadd.f32 0.0, %v899
        %v901 = vpop.f32.mrb[0].mxu0
        %902 = vdwg.mxu0
        %v903 = vadd.f32 %v661, %v873
        %v904 = vadd.f32 %v662, %v876
        %v905 = vadd.f32 %v663, %v881
        %v906 = vadd.f32 %v664, %v884
        %v907 = vadd.f32 %v665, %v889
        %v908 = vadd.f32 %v666, %v892
        %v909 = vadd.f32 %v667, %v897
        %v910 = vadd.f32 %v668, %v900
        %v911 = vadd.f32 %v903, %v904
        %v912 = vadd.f32 %v911, %v905
        %v913 = vadd.f32 %v912, %v906
        %v914 = vadd.f32 %v913, %v907
        %v915 = vadd.f32 %v914, %v908
        %v916 = vadd.f32 %v915, %v909
        %v917 = vadd.f32 %v916, %v910
        %v918 = vrot.slane %v917, 4
        %v919 = vadd.f32 %v917, %v918
        %v920 = vrot.slane %v919, 2
        %v921 = vadd.f32 %v919, %v920
        %v922 = vrot.slane %v921, 1
        %v923 = vadd.f32 %v921, %v922
        %v924 = vmul.f32 %v923, 0.015625
        %v925 = vmul.f32 %v903, %v903
        %v926 = vmul.f32 %v904, %v904
        %v927 = vmul.f32 %v905, %v905
        %v928 = vmul.f32 %v906, %v906
        %v929 = vmul.f32 %v907, %v907
        %v930 = vmul.f32 %v908, %v908
        %v931 = vmul.f32 %v909, %v909
        %v932 = vmul.f32 %v910, %v910
        %v933 = vadd.f32 %v925, %v926
        %v934 = vadd.f32 %v933, %v927
        %v935 = vadd.f32 %v934, %v928
        %v936 = vadd.f32 %v935, %v929
        %v937 = vadd.f32 %v936, %v930
        %v938 = vadd.f32 %v937, %v931
        %v939 = vadd.f32 %v938, %v932
        %v940 = vrot.slane %v939, 4
        %v941 = vadd.f32 %v939, %v940
        %v942 = vrot.slane %v941, 2
        %v943 = vadd.f32 %v941, %v942
        %v944 = vrot.slane %v943, 1
        %v945 = vadd.f32 %v943, %v944
        %v946 = vmul.f32 %v945, 0.015625
        %v947 = vmul.f32 %v924, %v924
        %v948 = vsub.f32 %v946, %v947
        %v949 = vmax.f32 %v948, 0.0
        %v950 = vsub.f32 %v903, %v924
        %v951 = vsub.f32 %v904, %v924
        %v952 = vsub.f32 %v905, %v924
        %v953 = vsub.f32 %v906, %v924
        %v954 = vsub.f32 %v907, %v924
        %v955 = vsub.f32 %v908, %v924
        %v956 = vsub.f32 %v909, %v924
        %v957 = vsub.f32 %v910, %v924
        %v958 = vadd.f32 %v949, 1e-05
        %v959 = vrsqrt.pop %v958
        %v960 = vmul.f32 %v950, %v959
        %v961 = vmul.f32 %v951, %v959
        %v962 = vmul.f32 %v952, %v959
        %v963 = vmul.f32 %v953, %v959
        %v964 = vmul.f32 %v954, %v959
        %v965 = vmul.f32 %v955, %v959
        %v966 = vmul.f32 %v956, %v959
        %v967 = vmul.f32 %v957, %v959
        %vm968 = vcmp.gt.f32.partialorder %v960, 0.0
        %vm969 = vcmp.gt.f32.partialorder %v961, 0.0
        %vm970 = vcmp.gt.f32.partialorder %v962, 0.0
        %vm971 = vcmp.gt.f32.partialorder %v963, 0.0
        %vm972 = vcmp.gt.f32.partialorder %v964, 0.0
        %vm973 = vcmp.gt.f32.partialorder %v965, 0.0
        %vm974 = vcmp.gt.f32.partialorder %v966, 0.0
        %vm975 = vcmp.gt.f32.partialorder %v967, 0.0
        %v976 = vmul.f32 %v960, 0.2
        %v977 = vmul.f32 %v961, 0.2
        %v978 = vmul.f32 %v962, 0.2
        %v979 = vmul.f32 %v963, 0.2
        %v980 = vmul.f32 %v964, 0.2
        %v981 = vmul.f32 %v965, 0.2
        %v982 = vmul.f32 %v966, 0.2
        %v983 = vmul.f32 %v967, 0.2
        %v984 = vsel %vm968, %v960, %v976
        %v985 = vsel %vm969, %v961, %v977
        %v986 = vsel %vm970, %v962, %v978
        %v987 = vsel %vm971, %v963, %v979
        %v988 = vsel %vm972, %v964, %v980
        %v989 = vsel %vm973, %v965, %v981
        %v990 = vsel %vm974, %v966, %v982
        %v991 = vsel %vm975, %v967, %v983
        %v992 = vpack.c.bf16 %v985, %v984
        %v993 = vpack.c.bf16 %v987, %v986
        %v994 = vpack.c.bf16 %v989, %v988
        %v995 = vpack.c.bf16 %v991, %v990
        %v1000 = vunpack.c.l.b16 %v992
        %v1001 = vunpack.c.h.b16 %v992
        %v1002 = vunpack.c.l.b16 %v993
        %v1003 = vunpack.c.h.b16 %v993
        %v1004 = vunpack.c.l.b16 %v994
        %v1005 = vunpack.c.h.b16 %v994
        %v1006 = vunpack.c.l.b16 %v995
        %v1007 = vunpack.c.h.b16 %v995
        %v1008 = vpack.c.b16 %v1000, %v1000
        %v1009 = vpack.c.b16 %v1001, %v1001
        %v1010 = vpack.c.b16 %v1002, %v1002
        %v1011 = vpack.c.b16 %v1003, %v1003
        %v1012 = vpack.c.b16 %v1004, %v1004
        %v1013 = vpack.c.b16 %v1005, %v1005
        %v1014 = vpack.c.b16 %v1006, %v1006
        %v1015 = vpack.c.b16 %v1007, %v1007
        %1024 = vst [vmem:[%s185] sm:$0xf] %v1008
        %1025 = vst [vmem:[%s185 + $0x4] sm:$0xf] %v1009
        %1026 = vst [vmem:[%s185 + $0x8] sm:$0xf] %v1010
        %1027 = vst [vmem:[%s185 + $0xc] sm:$0xf] %v1011
        %1028 = vst [vmem:[%s185 + $0x10] sm:$0xf] %v1012
        %1029 = vst [vmem:[%s185 + $0x14] sm:$0xf] %v1013
        %1030 = vst [vmem:[%s185 + $0x18] sm:$0xf] %v1014
        %1031 = vst [vmem:[%s185 + $0x1c] sm:$0xf] %v1015
        %p1032 = scmp.lt.s32.totalorder %s18, 1
        %s1033 = scalar_select %p1032, %s18, 1
        %p1034 = scmp.lt.s32.totalorder %s19, 0
        %s1035 = scalar_select %p1034, %s19, 0
        %s1036 = smul.addr %s1033, 8
        %s1037 = sadd.s32 %s1035, %s1036
        %s1038 = smul.addr %s1037, 4
        %s1039 = scalar_lea.vmem %s2, %s1038
        // Predicated region
        $region33: #{discriminator_forward.3} parent=27 // pred_check
          %p1040 = pneg %p98
        $region34: #{discriminator_forward.3} parent=27 // pred_check_branch
          %1042 = sbr.rel (%p1040) target = $region36
        $region35: #{discriminator_forward.3} parent=27 // pred_region
          _
        $region36: #{discriminator_forward.3} parent=27 // pred_fallthru
          _
      $region28: #{discriminator_forward.3} parent=5 // pred_fallthru
        _
      %p1043 = scmp.le.s32.totalorder 2, %s9
      // Predicated region
      $region37: #{discriminator_forward.3} parent=5 // pred_check
        %p1044 = pneg %p1043
      $region38: #{discriminator_forward.3} parent=5 // pred_check_branch
        %1046 = sbr.rel (%p1044) target = $region40
      $region39: #{discriminator_forward.3} parent=5 // pred_region
        %s1047 = ssub.s32 %s9, 2
        // Predicated region
        $region41: #{discriminator_forward.3} parent=39 // pred_check
          %p1048 = pneg %p104
        $region42: #{discriminator_forward.3} parent=39 // pred_check_branch
          %1050 = sbr.rel (%p1048) target = $region44
        $region43: #{discriminator_forward.3} parent=39 // pred_region
          %p1051 = scmp.lt.s32.totalorder %s20, 1
          %s1052 = scalar_select %p1051, %s20, 1
          %p1053 = scmp.lt.s32.totalorder %s21, 0
          %s1054 = scalar_select %p1053, %s21, 0
          %s1055 = smul.addr %s1052, 8
          %s1056 = sadd.s32 %s1054, %s1055
          %s1057 = smul.addr %s1056, 4
          %s1058 = scalar_lea.vmem %s2, %s1057
        $region44: #{discriminator_forward.3} parent=39 // pred_fallthru
          _
      $region40: #{discriminator_forward.3} parent=5 // pred_fallthru
        _
    $region6: #{discriminator_forward.3} parent=1 // loop_footer
      %s13 = sadd.s32 1, %s9
    $region7: #{discriminator_forward.3} parent=1 // loop_footer_branch
      %8 = sbr.rel target = $region3
    $region8: #{discriminator_forward.3} parent=1 // loop_exit
      _
    %1059 = vsyncpa [#allocation3], 1
    %s1060 = scalar_lea.sflag [#allocation3], 1
    %1061 = vsyncpa %s1060, 1

// kernel: discriminator_forward.4
$region0: #{discriminator_forward.4}
  #allocation0 [shape = 'u32[]', space=smem, size = 0x4, offset = 0x4, fixed_abs, tag = 'smem constant byte address 0x4 - core index']
  #allocation1 [shape = 'u32[144,128]{1,0:T(1,128)}', space=vmem, size = 0x12000, scoped, tag = 'internal scratch']
  %s0 = inlined_call_operand.vmem [shape: bf16[2,5,5,512], index: 0, kind: input, shape index: {}]
  %s1 = inlined_call_operand.hbm [shape: bf16[4,512,128], index: 1, kind: input, shape index: {}]
  %s2 = inlined_call_operand.vmem [shape: bf16[2,16,128], index: 2, kind: output, shape index: {}]
  %s3 = sld [smem:[#allocation0]]
  $region45: #{discriminator_forward.4} parent=0
    _
  %s5 = ssub.s32 1, %s3
  %s6 = scalar_select 0, %s5, %s3
  $region1: #{discriminator_forward.4} parent=0
    #allocation2 [shape = 'u8[524288]{0}', space=vmem, size = 0x80000, scoped, tag = 'input window, operand 1, single buffered']
    #allocation3 [shape = 's32[2]{0}', space=sflag, size = 0x8, scoped, tag = 'scoped memory for discriminator_forward.4']
    %7 = vsyncpa [#allocation3], 0
    loop: start=0, step=1, limit=4
    $region2: #{discriminator_forward.4} parent=1 // loop_pre_header
      _
    $region3: #{discriminator_forward.4} parent=1 // loop_header
      %s9 = sphi 0, %s13
      %p10 = scmp.ge.s32.totalorder %s9, 4
      %s16 = sphi 0, %s28
      %s17 = sphi 0, %s24
      %s18 = sphi 0, %s16
      %s19 = sphi 0, %s17
      %s20 = sphi 0, %s18
      %s21 = sphi 0, %s19
      %s31 = sphi 0, %s33
      %s34 = sphi 0, %s31
      %s35 = sphi 0, %s34
      %s51 = sphi 0, %s35
      %s57 = sphi 0, %s59
      %s60 = sphi 0, %s57
      %s61 = sphi 0, %s60
      %s77 = sphi 0, %s61
      %s85 = sphi 0, %s87
      %s88 = sphi 0, %s85
      %s89 = sphi 0, %s88
      %s105 = sphi 0, %s89
    $region4: #{discriminator_forward.4} parent=1 // loop_header_branch
      %12 = sbr.rel (%p10) target = $region8
    $region5: #{discriminator_forward.4} parent=1 // loop_body
      %s14 = ssub.s32 %s9, 1
      %s15 = ssub.s32 %s9, 2
      %s22 = sadd.s32 1, %s17
      %p23 = scmp.ge.s32.totalorder %s22, 1
      %s24 = scalar_select %p23, 0, %s22
      %s25 = sadd.s32 1, %s16
      %s26 = scalar_select %p23, %s25, %s16
      %p27 = scmp.ge.s32.totalorder %s26, 2
      %s28 = scalar_select %p27, 0, %s26
      %s29 = ssub.s32 %s16, %s28
      %p30 = scmp.eq.s32.totalorder %s29, 0
      %s32 = sadd.s32 %s31, 1
      %s33 = scalar_select %p30, %s31, %s32
      %p36 = pneg %p30
      %p37 = scmp.eq.s32.totalorder %s9, 1
      %p38 = por %p36, %p37
      %p39 = scmp.ne.s32.totalorder %s31, %s34
      %p40 = scmp.eq.s32.totalorder %s9, 0
      %p41 = por %p39, %p40
      %p42 = scmp.ne.s32.totalorder %s31, %s34
      %p43 = scmp.eq.s32.totalorder %s14, 1
      %p44 = por %p42, %p43
      %p45 = scmp.ne.s32.totalorder %s34, %s35
      %p46 = scmp.eq.s32.totalorder %s14, 0
      %p47 = por %p45, %p46
      %p48 = scmp.ne.s32.totalorder %s34, %s35
      %p49 = scmp.eq.s32.totalorder %s15, 1
      %p50 = por %p48, %p49
      %p52 = scmp.ne.s32.totalorder %s35, %s51
      %p53 = scmp.eq.s32.totalorder %s15, 0
      %p54 = por %p52, %p53
      %s55 = ssub.s32 %s17, %s24
      %p56 = scmp.eq.s32.totalorder %s55, 0
      %s58 = sadd.s32 %s57, 1
      %s59 = scalar_select %p56, %s57, %s58
      %p62 = pneg %p56
      %p63 = scmp.eq.s32.totalorder %s9, 1
      %p64 = por %p62, %p63
      %p65 = scmp.ne.s32.totalorder %s57, %s60
      %p66 = scmp.eq.s32.totalorder %s9, 0
      %p67 = por %p65, %p66
      %p68 = scmp.ne.s32.totalorder %s57, %s60
      %p69 = scmp.eq.s32.totalorder %s14, 1
      %p70 = por %p68, %p69
      %p71 = scmp.ne.s32.totalorder %s60, %s61
      %p72 = scmp.eq.s32.totalorder %s14, 0
      %p73 = por %p71, %p72
      %p74 = scmp.ne.s32.totalorder %s60, %s61
      %p75 = scmp.eq.s32.totalorder %s15, 1
      %p76 = por %p74, %p75
      %p78 = scmp.ne.s32.totalorder %s61, %s77
      %p79 = scmp.eq.s32.totalorder %s15, 0
      %p80 = por %p78, %p79
      %s81 = ssub.s32 %s16, %s28
      %s82 = ssub.s32 %s17, %s24
      %s83 = sor.u32 %s81, %s82
      %p84 = scmp.eq.s32.totalorder %s83, 0
      %s86 = sadd.s32 %s85, 1
      %s87 = scalar_select %p84, %s85, %s86
      %p90 = pneg %p84
      %p91 = scmp.eq.s32.totalorder %s9, 1
      %p92 = por %p90, %p91
      %p93 = scmp.ne.s32.totalorder %s85, %s88
      %p94 = scmp.eq.s32.totalorder %s9, 0
      %p95 = por %p93, %p94
      %p96 = scmp.ne.s32.totalorder %s85, %s88
      %p97 = scmp.eq.s32.totalorder %s14, 1
      %p98 = por %p96, %p97
      %p99 = scmp.ne.s32.totalorder %s88, %s89
      %p100 = scmp.eq.s32.totalorder %s14, 0
      %p101 = por %p99, %p100
      %p102 = scmp.ne.s32.totalorder %s88, %s89
      %p103 = scmp.eq.s32.totalorder %s15, 1
      %p104 = por %p102, %p103
      %p106 = scmp.ne.s32.totalorder %s89, %s105
      %p107 = scmp.eq.s32.totalorder %s15, 0
      %p108 = por %p106, %p107
      %p109 = scmp.le.s32.totalorder 1, %s9
      %p110 = scmp.lt.s32.totalorder %s9, 3
      %p111 = pnand %p109, %p110
      %p112 = pneg %p111
      // Predicated region
      $region9: #{discriminator_forward.4} parent=5 // pred_check
        _
      $region10: #{discriminator_forward.4} parent=5 // pred_check_branch
        %114 = sbr.rel (%p111) target = $region12
      $region11: #{discriminator_forward.4} parent=5 // pred_region
        %s115 = ssub.s32 %s9, 1
        // Predicated region
        $region13: #{discriminator_forward.4} parent=11 // pred_check
          %p116 = pneg %p73
        $region14: #{discriminator_forward.4} parent=11 // pred_check_branch
          %118 = sbr.rel (%p116) target = $region16
        $region15: #{discriminator_forward.4} parent=11 // pred_region
          %s120 = ssub.s32 16384, 16384
          %121 = vsyncadd [#allocation3], %s120
          %s122 = smul.addr %s19, 64
          %s123 = scalar_lea.hbm %s1, %s122
          %s124 = sshll.u32 [#allocation2], 4
          %s125 = int_to_ptr.vmem [resolvable:$true] %s124
          %130 = dma.hbm_to_vmem [thread:$0]  %s123, 16384, %s125, [#allocation3], 64, 64, 4
        $region16: #{discriminator_forward.4} parent=11 // pred_fallthru
          _
      $region12: #{discriminator_forward.4} parent=5 // pred_fallthru
        _
      %p131 = scmp.lt.s32.totalorder %s9, 2
      // Predicated region
      $region17: #{discriminator_forward.4} parent=5 // pred_check
        %p132 = pneg %p131
      $region18: #{discriminator_forward.4} parent=5 // pred_check_branch
        %134 = sbr.rel (%p132) target = $region20
      $region19: #{discriminator_forward.4} parent=5 // pred_region
        // Predicated region
        $region21: #{discriminator_forward.4} parent=19 // pred_check
          %p135 = pneg %p41
        $region22: #{discriminator_forward.4} parent=19 // pred_check_branch
          %137 = sbr.rel (%p135) target = $region24
        $region23: #{discriminator_forward.4} parent=19 // pred_region
          %p138 = scmp.lt.s32.totalorder %s16, 1
          %s139 = scalar_select %p138, %s16, 1
          %s140 = smul.addr %s139, 20
          %s141 = smul.addr %s140, 4
          %s142 = scalar_lea.vmem %s0, %s141
        $region24: #{discriminator_forward.4} parent=19 // pred_fallthru
          _
      $region20: #{discriminator_forward.4} parent=5 // pred_fallthru
        _
      %p143 = scmp.le.s32.totalorder 1, %s9
      %p144 = scmp.lt.s32.totalorder %s9, 3
      %p145 = pnand %p143, %p144
      %p146 = pneg %p145
      // Predicated region
      $region25: #{discriminator_forward.4} parent=5 // pred_check
        _
      $region26: #{discriminator_forward.4} parent=5 // pred_check_branch
        %148 = sbr.rel (%p145) target = $region28
      $region27: #{discriminator_forward.4} parent=5 // pred_region
        %s149 = ssub.s32 %s9, 1
        // Predicated region
        $region29: #{discriminator_forward.4} parent=27 // pred_check
          %p150 = pneg %p73
        $region30: #{discriminator_forward.4} parent=27 // pred_check_branch
          %152 = sbr.rel (%p150) target = $region32
        $region31: #{discriminator_forward.4} parent=27 // pred_region
          %153 = dma.done [#allocation3], 16384
        $region32: #{discriminator_forward.4} parent=27 // pred_fallthru
          _
        %p154 = scmp.lt.s32.totalorder %s18, 1
        %s155 = scalar_select %p154, %s18, 1
        %s156 = smul.addr %s155, 20
        %s157 = smul.addr %s156, 4
        %s158 = scalar_lea.vmem %s0, %s157
        %p159 = pneg %p47
        %p160 = pneg %p44
        %p161 = pneg %p73
        %p162 = pneg %p70
        %p163 = pneg %p101
        %p164 = pneg %p98
        %p165 = scmp.lt.s32.totalorder %s18, 1
        %s166 = scalar_select %p165, %s18, 1
        %p167 = scmp.lt.s32.totalorder %s19, 0
        %s168 = scalar_select %p167, %s19, 0
        %s169 = smul.addr %s166, 2
        %s170 = sadd.s32 %s168, %s169
        %s171 = smul.addr %s170, 4
        %s172 = scalar_lea.vmem %s2, %s171
        %p173 = scmp.lt.s32.totalorder %s18, 1
        %s174 = scalar_select %p173, %s18, 1
        %s175 = smul.addr %s174, 20
        %s176 = smul.addr %s175, 4
        %s177 = scalar_lea.vmem %s0, %s176
        %p178 = scmp.lt.s32.totalorder %s18, 1
        %s179 = scalar_select %p178, %s18, 1
        %p180 = scmp.lt.s32.totalorder %s19, 0
        %s181 = scalar_select %p180, %s19, 0
        %s182 = smul.addr %s179, 2
        %s183 = sadd.s32 %s181, %s182
        %s184 = smul.addr %s183, 4
        %s185 = scalar_lea.vmem %s2, %s184
        %v187 = vld [vmem:[%s177] sm:$0x33]
        %v188 = vld [vmem:[%s177 + $0x8] sm:$0x33]
        %v189 = vld [vmem:[%s177 + $0x10] sm:$0x33]
        %v190 = vld [vmem:[%s177 + $0x18] sm:$0x33]
        %v191 = vld [vmem:[%s177 + $0x20] sm:$0x33]
        %v192 = vld [vmem:[%s177 + $0x28] sm:$0x33]
        %v193 = vld [vmem:[%s177 + $0x30] sm:$0x33]
        %v194 = vld [vmem:[%s177 + $0x38] sm:$0x33]
        %v204 = vunpack.c.l.s4 1983009808
        %v205 = vunpack.c.0.s8 %v204
        %v206 = vlaneseq
        %v207 = vshrl.u32 %v206, 7
        %v208 = vsub.s32 %v205, %v207
        %v209 = vrot.slane %v187, %v208
        %v211 = vunpack.c.l.s4 1983009808
        %v212 = vunpack.c.0.s8 %v211
        %v213 = vlaneseq
        %v214 = vshrl.u32 %v213, 7
        %v215 = vsub.s32 %v212, %v214
        %v216 = vrot.slane %v188, %v215
        %v217 = vcombine.low %v209, %v216
        %v219 = vunpack.c.l.s4 1983009808
        %v220 = vunpack.c.0.s8 %v219
        %v221 = vlaneseq
        %v222 = vshrl.u32 %v221, 7
        %v223 = vsub.s32 %v220, %v222
        %v224 = vrot.slane %v189, %v223
        %v226 = vunpack.c.l.s4 1983009808
        %v227 = vunpack.c.0.s8 %v226
        %v228 = vlaneseq
        %v229 = vshrl.u32 %v228, 7
        %v230 = vsub.s32 %v227, %v229
        %v231 = vrot.slane %v190, %v230
        %v232 = vcombine.low %v224, %v231
        %v234 = vunpack.c.l.s4 1983009808
        %v235 = vunpack.c.0.s8 %v234
        %v236 = vlaneseq
        %v237 = vshrl.u32 %v236, 7
        %v238 = vsub.s32 %v235, %v237
        %v239 = vrot.slane %v191, %v238
        %v241 = vunpack.c.l.s4 1983009808
        %v242 = vunpack.c.0.s8 %v241
        %v243 = vlaneseq
        %v244 = vshrl.u32 %v243, 7
        %v245 = vsub.s32 %v242, %v244
        %v246 = vrot.slane %v192, %v245
        %v247 = vcombine.low %v239, %v246
        %v249 = vunpack.c.l.s4 1983009808
        %v250 = vunpack.c.0.s8 %v249
        %v251 = vlaneseq
        %v252 = vshrl.u32 %v251, 7
        %v253 = vsub.s32 %v250, %v252
        %v254 = vrot.slane %v193, %v253
        %v256 = vunpack.c.l.s4 1983009808
        %v257 = vunpack.c.0.s8 %v256
        %v258 = vlaneseq
        %v259 = vshrl.u32 %v258, 7
        %v260 = vsub.s32 %v257, %v259
        %v261 = vrot.slane %v194, %v260
        %v262 = vcombine.low %v254, %v261
        %v263 = vld [vmem:[#allocation2] sm:$0xf]
        %v264 = vld [vmem:[#allocation2 + $0x4] sm:$0xf]
        %v265 = vld [vmem:[#allocation2 + $0x8] sm:$0xf]
        %v266 = vld [vmem:[#allocation2 + $0xc] sm:$0xf]
        %v267 = vld [vmem:[#allocation2 + $0x10] sm:$0xf]
        %v268 = vld [vmem:[#allocation2 + $0x14] sm:$0xf]
        %v269 = vld [vmem:[#allocation2 + $0x18] sm:$0xf]
        %v270 = vld [vmem:[#allocation2 + $0x1c] sm:$0xf]
        %v271 = vld [vmem:[#allocation2 + $0x20] sm:$0xf]
        %v272 = vld [vmem:[#allocation2 + $0x24] sm:$0xf]
        %v273 = vld [vmem:[#allocation2 + $0x28] sm:$0xf]
        %v274 = vld [vmem:[#allocation2 + $0x2c] sm:$0xf]
        %v275 = vld [vmem:[#allocation2 + $0x30] sm:$0xf]
        %v276 = vld [vmem:[#allocation2 + $0x34] sm:$0xf]
        %v277 = vld [vmem:[#allocation2 + $0x38] sm:$0xf]
        %v278 = vld [vmem:[#allocation2 + $0x3c] sm:$0xf]
        %v279 = vld [vmem:[#allocation2 + $0x40] sm:$0xf]
        %v280 = vld [vmem:[#allocation2 + $0x44] sm:$0xf]
        %v281 = vld [vmem:[#allocation2 + $0x48] sm:$0xf]
        %v282 = vld [vmem:[#allocation2 + $0x4c] sm:$0xf]
        %v283 = vld [vmem:[#allocation2 + $0x50] sm:$0xf]
        %v284 = vld [vmem:[#allocation2 + $0x54] sm:$0xf]
        %v285 = vld [vmem:[#allocation2 + $0x58] sm:$0xf]
        %v286 = vld [vmem:[#allocation2 + $0x5c] sm:$0xf]
        %v287 = vld [vmem:[#allocation2 + $0x60] sm:$0xf]
        %v288 = vld [vmem:[#allocation2 + $0x64] sm:$0xf]
        %v289 = vld [vmem:[#allocation2 + $0x68] sm:$0xf]
        %v290 = vld [vmem:[#allocation2 + $0x6c] sm:$0xf]
        %v291 = vld [vmem:[#allocation2 + $0x70] sm:$0xf]
        %v292 = vld [vmem:[#allocation2 + $0x74] sm:$0xf]
        %v293 = vld [vmem:[#allocation2 + $0x78] sm:$0xf]
        %v294 = vld [vmem:[#allocation2 + $0x7c] sm:$0xf]
        %v295 = vld [vmem:[#allocation2 + $0x80] sm:$0xf]
        %v296 = vld [vmem:[#allocation2 + $0x84] sm:$0xf]
        %v297 = vld [vmem:[#allocation2 + $0x88] sm:$0xf]
        %v298 = vld [vmem:[#allocation2 + $0x8c] sm:$0xf]
        %v299 = vld [vmem:[#allocation2 + $0x90] sm:$0xf]
        %v300 = vld [vmem:[#allocation2 + $0x94] sm:$0xf]
        %v301 = vld [vmem:[#allocation2 + $0x98] sm:$0xf]
        %v302 = vld [vmem:[#allocation2 + $0x9c] sm:$0xf]
        %v303 = vld [vmem:[#allocation2 + $0xa0] sm:$0xf]
        %v304 = vld [vmem:[#allocation2 + $0xa4] sm:$0xf]
        %v305 = vld [vmem:[#allocation2 + $0xa8] sm:$0xf]
        %v306 = vld [vmem:[#allocation2 + $0xac] sm:$0xf]
        %v307 = vld [vmem:[#allocation2 + $0xb0] sm:$0xf]
        %v308 = vld [vmem:[#allocation2 + $0xb4] sm:$0xf]
        %v309 = vld [vmem:[#allocation2 + $0xb8] sm:$0xf]
        %v310 = vld [vmem:[#allocation2 + $0xbc] sm:$0xf]
        %v311 = vld [vmem:[#allocation2 + $0xc0] sm:$0xf]
        %v312 = vld [vmem:[#allocation2 + $0xc4] sm:$0xf]
        %v313 = vld [vmem:[#allocation2 + $0xc8] sm:$0xf]
        %v314 = vld [vmem:[#allocation2 + $0xcc] sm:$0xf]
        %v315 = vld [vmem:[#allocation2 + $0xd0] sm:$0xf]
        %v316 = vld [vmem:[#allocation2 + $0xd4] sm:$0xf]
        %v317 = vld [vmem:[#allocation2 + $0xd8] sm:$0xf]
        %v318 = vld [vmem:[#allocation2 + $0xdc] sm:$0xf]
        %v319 = vld [vmem:[#allocation2 + $0xe0] sm:$0xf]
        %v320 = vld [vmem:[#allocation2 + $0xe4] sm:$0xf]
        %v321 = vld [vmem:[#allocation2 + $0xe8] sm:$0xf]
        %v322 = vld [vmem:[#allocation2 + $0xec] sm:$0xf]
        %v323 = vld [vmem:[#allocation2 + $0xf0] sm:$0xf]
        %v324 = vld [vmem:[#allocation2 + $0xf4] sm:$0xf]
        %v325 = vld [vmem:[#allocation2 + $0xf8] sm:$0xf]
        %v326 = vld [vmem:[#allocation2 + $0xfc] sm:$0xf]
        %v327 = vld [vmem:[%s177] sm:$0x77]
        %v328 = vld [vmem:[%s177 + $0x8] sm:$0x77]
        %v329 = vld [vmem:[%s177 + $0x10] sm:$0x77]
        %v330 = vld [vmem:[%s177 + $0x18] sm:$0x77]
        %v331 = vld [vmem:[%s177 + $0x20] sm:$0x77]
        %v332 = vld [vmem:[%s177 + $0x28] sm:$0x77]
        %v333 = vld [vmem:[%s177 + $0x30] sm:$0x77]
        %v334 = vld [vmem:[%s177 + $0x38] sm:$0x77]
        %v344 = vunpack.c.l.s4 1983009808
        %v345 = vunpack.c.0.s8 %v344
        %v346 = vlaneseq
        %v347 = vshrl.u32 %v346, 7
        %v348 = vsub.s32 %v345, %v347
        %v349 = vrot.slane %v327, %v348
        %v351 = vunpack.c.l.s4 1983009808
        %v352 = vunpack.c.0.s8 %v351
        %v353 = vlaneseq
        %v354 = vshrl.u32 %v353, 7
        %v355 = vsub.s32 %v352, %v354
        %v356 = vrot.slane %v328, %v355
        %v357 = vcombine.low %v349, %v356
        %v358 = vcombine.high %v349, %v356
        %v360 = vunpack.c.l.s4 1983009808
        %v361 = vunpack.c.0.s8 %v360
        %v362 = vlaneseq
        %v363 = vshrl.u32 %v362, 7
        %v364 = vsub.s32 %v361, %v363
        %v365 = vrot.slane %v329, %v364
        %v367 = vunpack.c.l.s4 1983009808
        %v368 = vunpack.c.0.s8 %v367
        %v369 = vlaneseq
        %v370 = vshrl.u32 %v369, 7
        %v371 = vsub.s32 %v368, %v370
        %v372 = vrot.slane %v330, %v371
        %v373 = vcombine.low %v365, %v372
        %v374 = vcombine.high %v365, %v372
        %v376 = vunpack.c.l.s4 1983009808
        %v377 = vunpack.c.0.s8 %v376
        %v378 = vlaneseq
        %v379 = vshrl.u32 %v378, 7
        %v380 = vsub.s32 %v377, %v379
        %v381 = vrot.slane %v331, %v380
        %v383 = vunpack.c.l.s4 1983009808
        %v384 = vunpack.c.0.s8 %v383
        %v385 = vlaneseq
        %v386 = vshrl.u32 %v385, 7
        %v387 = vsub.s32 %v384, %v386
        %v388 = vrot.slane %v332, %v387
        %v389 = vcombine.low %v381, %v388
        %v390 = vcombine.high %v381, %v388
        %v392 = vunpack.c.l.s4 1983009808
        %v393 = vunpack.c.0.s8 %v392
        %v394 = vlaneseq
        %v395 = vshrl.u32 %v394, 7
        %v396 = vsub.s32 %v393, %v395
        %v397 = vrot.slane %v333, %v396
        %v399 = vunpack.c.l.s4 1983009808
        %v400 = vunpack.c.0.s8 %v399
        %v401 = vlaneseq
        %v402 = vshrl.u32 %v401, 7
        %v403 = vsub.s32 %v400, %v402
        %v404 = vrot.slane %v334, %v403
        %v405 = vcombine.low %v397, %v404
        %v406 = vcombine.high %v397, %v404
        %vm407 = vsmask.f32 1280
        %vm408 = vsmask.f32 3336
        %vm409 = vmor %vm407, %vm408
        %vm410 = vsmask.f32 5392
        %vm411 = vmor %vm409, %vm410
        %vm412 = vsmask.f32 7448
        %vm413 = vmor %vm411, %vm412
        %v415 = vshrl.u32 %v357, 16
        %v417 = vrot.slane %v415, 6
        %v418 = vshll.u32 %v357, 16
        %v420 = vrot.slane %v418, 7
        %v421 = vor.u32 %v417, %v420
        %v422 = vrot.slane %v421, 2
        %v424 = vshll.u32 %v358, 16
        %v426 = vrot.slane %v424, 7
        %v427 = vsel %vm413, %v422, %v426
        %v429 = vshrl.u32 %v373, 16
        %v431 = vrot.slane %v429, 6
        %v432 = vshll.u32 %v373, 16
        %v434 = vrot.slane %v432, 7
        %v435 = vor.u32 %v431, %v434
        %v436 = vrot.slane %v435, 2
        %v438 = vshll.u32 %v374, 16
        %v440 = vrot.slane %v438, 7
        %v441 = vsel %vm413, %v436, %v440
        %v443 = vshrl.u32 %v389, 16
        %v445 = vrot.slane %v443, 6
        %v446 = vshll.u32 %v389, 16
        %v448 = vrot.slane %v446, 7
        %v449 = vor.u32 %v445, %v448
        %v450 = vrot.slane %v449, 2
        %v452 = vshll.u32 %v390, 16
        %v454 = vrot.slane %v452, 7
        %v455 = vsel %vm413, %v450, %v454
        %v457 = vshrl.u32 %v405, 16
        %v459 = vrot.slane %v457, 6
        %v460 = vshll.u32 %v405, 16
        %v462 = vrot.slane %v460, 7
        %v463 = vor.u32 %v459, %v462
        %v464 = vrot.slane %v463, 2
        %v466 = vshll.u32 %v406, 16
        %v468 = vrot.slane %v466, 7
        %v469 = vsel %vm413, %v464, %v468
        %s470 = scalar_lea.vmem [#allocation2], 256
        %v471 = vld [vmem:[%s470] sm:$0xf]
        %v472 = vld [vmem:[%s470 + $0x4] sm:$0xf]
        %v473 = vld [vmem:[%s470 + $0x8] sm:$0xf]
        %v474 = vld [vmem:[%s470 + $0xc] sm:$0xf]
        %v475 = vld [vmem:[%s470 + $0x10] sm:$0xf]
        %v476 = vld [vmem:[%s470 + $0x14] sm:$0xf]
        %v477 = vld [vmem:[%s470 + $0x18] sm:$0xf]
        %v478 = vld [vmem:[%s470 + $0x1c] sm:$0xf]
        %v479 = vld [vmem:[%s470 + $0x20] sm:$0xf]
        %v480 = vld [vmem:[%s470 + $0x24] sm:$0xf]
        %v481 = vld [vmem:[%s470 + $0x28] sm:$0xf]
        %v482 = vld [vmem:[%s470 + $0x2c] sm:$0xf]
        %v483 = vld [vmem:[%s470 + $0x30] sm:$0xf]
        %v484 = vld [vmem:[%s470 + $0x34] sm:$0xf]
        %v485 = vld [vmem:[%s470 + $0x38] sm:$0xf]
        %v486 = vld [vmem:[%s470 + $0x3c] sm:$0xf]
        %v487 = vld [vmem:[%s470 + $0x40] sm:$0xf]
        %v488 = vld [vmem:[%s470 + $0x44] sm:$0xf]
        %v489 = vld [vmem:[%s470 + $0x48] sm:$0xf]
        %v490 = vld [vmem:[%s470 + $0x4c] sm:$0xf]
        %v491 = vld [vmem:[%s470 + $0x50] sm:$0xf]
        %v492 = vld [vmem:[%s470 + $0x54] sm:$0xf]
        %v493 = vld [vmem:[%s470 + $0x58] sm:$0xf]
        %v494 = vld [vmem:[%s470 + $0x5c] sm:$0xf]
        %v495 = vld [vmem:[%s470 + $0x60] sm:$0xf]
        %v496 = vld [vmem:[%s470 + $0x64] sm:$0xf]
        %v497 = vld [vmem:[%s470 + $0x68] sm:$0xf]
        %v498 = vld [vmem:[%s470 + $0x6c] sm:$0xf]
        %v499 = vld [vmem:[%s470 + $0x70] sm:$0xf]
        %v500 = vld [vmem:[%s470 + $0x74] sm:$0xf]
        %v501 = vld [vmem:[%s470 + $0x78] sm:$0xf]
        %v502 = vld [vmem:[%s470 + $0x7c] sm:$0xf]
        %v503 = vld [vmem:[%s470 + $0x80] sm:$0xf]
        %v504 = vld [vmem:[%s470 + $0x84] sm:$0xf]
        %v505 = vld [vmem:[%s470 + $0x88] sm:$0xf]
        %v506 = vld [vmem:[%s470 + $0x8c] sm:$0xf]
        %v507 = vld [vmem:[%s470 + $0x90] sm:$0xf]
        %v508 = vld [vmem:[%s470 + $0x94] sm:$0xf]
        %v509 = vld [vmem:[%s470 + $0x98] sm:$0xf]
        %v510 = vld [vmem:[%s470 + $0x9c] sm:$0xf]
        %v511 = vld [vmem:[%s470 + $0xa0] sm:$0xf]
        %v512 = vld [vmem:[%s470 + $0xa4] sm:$0xf]
        %v513 = vld [vmem:[%s470 + $0xa8] sm:$0xf]
        %v514 = vld [vmem:[%s470 + $0xac] sm:$0xf]
        %v515 = vld [vmem:[%s470 + $0xb0] sm:$0xf]
        %v516 = vld [vmem:[%s470 + $0xb4] sm:$0xf]
        %v517 = vld [vmem:[%s470 + $0xb8] sm:$0xf]
        %v518 = vld [vmem:[%s470 + $0xbc] sm:$0xf]
        %v519 = vld [vmem:[%s470 + $0xc0] sm:$0xf]
        %v520 = vld [vmem:[%s470 + $0xc4] sm:$0xf]
        %v521 = vld [vmem:[%s470 + $0xc8] sm:$0xf]
        %v522 = vld [vmem:[%s470 + $0xcc] sm:$0xf]
        %v523 = vld [vmem:[%s470 + $0xd0] sm:$0xf]
        %v524 = vld [vmem:[%s470 + $0xd4] sm:$0xf]
        %v525 = vld [vmem:[%s470 + $0xd8] sm:$0xf]
        %v526 = vld [vmem:[%s470 + $0xdc] sm:$0xf]
        %v527 = vld [vmem:[%s470 + $0xe0] sm:$0xf]
        %v528 = vld [vmem:[%s470 + $0xe4] sm:$0xf]
        %v529 = vld [vmem:[%s470 + $0xe8] sm:$0xf]
        %v530 = vld [vmem:[%s470 + $0xec] sm:$0xf]
        %v531 = vld [vmem:[%s470 + $0xf0] sm:$0xf]
        %v532 = vld [vmem:[%s470 + $0xf4] sm:$0xf]
        %v533 = vld [vmem:[%s470 + $0xf8] sm:$0xf]
        %v534 = vld [vmem:[%s470 + $0xfc] sm:$0xf]
        %v535 = vcombine.low %v427, %v441
        %v536 = vcombine.high %v427, %v441
        %v537 = vcombine.low %v455, %v469
        %v538 = vcombine.high %v455, %v469
        %v540 = vunpack.c.l.s4 1983009808
        %v541 = vunpack.c.0.s8 %v540
        %v542 = vlaneseq
        %v543 = vshrl.u32 %v542, 7
        %v544 = vsub.s32 %v541, %v543
        %v545 = vrot.slane %v535, %v544
        %v547 = vunpack.c.l.s4 1983009808
        %v548 = vunpack.c.0.s8 %v547
        %v549 = vlaneseq
        %v550 = vshrl.u32 %v549, 7
        %v551 = vsub.s32 %v548, %v550
        %v552 = vrot.slane %v536, %v551
        %v554 = vunpack.c.l.s4 1983009808
        %v555 = vunpack.c.0.s8 %v554
        %v556 = vlaneseq
        %v557 = vshrl.u32 %v556, 7
        %v558 = vsub.s32 %v555, %v557
        %v559 = vrot.slane %v537, %v558
        %v561 = vunpack.c.l.s4 1983009808
        %v562 = vunpack.c.0.s8 %v561
        %v563 = vlaneseq
        %v564 = vshrl.u32 %v563, 7
        %v565 = vsub.s32 %v562, %v564
        %v566 = vrot.slane %v538, %v565
        %v567 = vcombine.low %v545, %v559
        %v568 = vcombine.high %v545, %v559
        %v569 = vcombine.low %v552, %v566
        %v570 = vcombine.high %v552, %v566
        %v639 = vunpack.c.l.b16 %v471
        %v640 = vunpack.c.l.b16 %v472
        %v641 = vunpack.c.l.b16 %v473
        %v642 = vunpack.c.l.b16 %v474
        %v643 = vunpack.c.l.b16 %v475
        %v644 = vunpack.c.l.b16 %v476
        %v645 = vunpack.c.l.b16 %v477
        %v646 = vunpack.c.l.b16 %v478
        %v647 = vunpack.c.l.b16 %v479
        %v648 = vunpack.c.l.b16 %v480
        %v649 = vunpack.c.l.b16 %v481
        %v650 = vunpack.c.l.b16 %v482
        %v651 = vunpack.c.l.b16 %v483
        %v652 = vunpack.c.l.b16 %v484
        %v653 = vunpack.c.l.b16 %v485
        %v654 = vunpack.c.l.b16 %v486
        %v655 = vunpack.c.l.b16 %v487
        %v656 = vunpack.c.l.b16 %v488
        %v657 = vunpack.c.l.b16 %v489
        %v658 = vunpack.c.l.b16 %v490
        %v659 = vunpack.c.l.b16 %v491
        %v660 = vunpack.c.l.b16 %v492
        %v661 = vunpack.c.l.b16 %v493
        %v662 = vunpack.c.l.b16 %v494
        %v663 = vunpack.c.l.b16 %v495
        %v664 = vunpack.c.l.b16 %v496
        %v665 = vunpack.c.l.b16 %v497
        %v666 = vunpack.c.l.b16 %v498
        %v667 = vunpack.c.l.b16 %v499
        %v668 = vunpack.c.l.b16 %v500
        %v669 = vunpack.c.l.b16 %v501
        %v670 = vunpack.c.l.b16 %v502
        %v671 = vunpack.c.l.b16 %v503
        %v672 = vunpack.c.l.b16 %v504
        %v673 = vunpack.c.l.b16 %v505
        %v674 = vunpack.c.l.b16 %v506
        %v675 = vunpack.c.l.b16 %v507
        %v676 = vunpack.c.l.b16 %v508
        %v677 = vunpack.c.l.b16 %v509
        %v678 = vunpack.c.l.b16 %v510
        %v679 = vunpack.c.l.b16 %v511
        %v680 = vunpack.c.l.b16 %v512
        %v681 = vunpack.c.l.b16 %v513
        %v682 = vunpack.c.l.b16 %v514
        %v683 = vunpack.c.l.b16 %v515
        %v684 = vunpack.c.l.b16 %v516
        %v685 = vunpack.c.l.b16 %v517
        %v686 = vunpack.c.l.b16 %v518
        %v687 = vunpack.c.l.b16 %v519
        %v688 = vunpack.c.l.b16 %v520
        %v689 = vunpack.c.l.b16 %v521
        %v690 = vunpack.c.l.b16 %v522
        %v691 = vunpack.c.l.b16 %v523
        %v692 = vunpack.c.l.b16 %v524
        %v693 = vunpack.c.l.b16 %v525
        %v694 = vunpack.c.l.b16 %v526
        %v695 = vunpack.c.l.b16 %v527
        %v696 = vunpack.c.l.b16 %v528
        %v697 = vunpack.c.l.b16 %v529
        %v698 = vunpack.c.l.b16 %v530
        %v699 = vunpack.c.l.b16 %v531
        %v700 = vunpack.c.l.b16 %v532
        %v701 = vunpack.c.l.b16 %v533
        %v702 = vunpack.c.l.b16 %v534
        %v703 = vpack.c.b16 %v640, %v639
        %v704 = vpack.c.b16 %v642, %v641
        %v705 = vpack.c.b16 %v644, %v643
        %v706 = vpack.c.b16 %v646, %v645
        %v707 = vpack.c.b16 %v648, %v647
        %v708 = vpack.c.b16 %v650, %v649
        %v709 = vpack.c.b16 %v652, %v651
        %v710 = vpack.c.b16 %v654, %v653
        %v711 = vpack.c.b16 %v656, %v655
        %v712 = vpack.c.b16 %v658, %v657
        %v713 = vpack.c.b16 %v660, %v659
        %v714 = vpack.c.b16 %v662, %v661
        %v715 = vpack.c.b16 %v664, %v663
        %v716 = vpack.c.b16 %v666, %v665
        %v717 = vpack.c.b16 %v668, %v667
        %v718 = vpack.c.b16 %v670, %v669
        %v719 = vpack.c.b16 %v672, %v671
        %v720 = vpack.c.b16 %v674, %v673
        %v721 = vpack.c.b16 %v676, %v675
        %v722 = vpack.c.b16 %v678, %v677
        %v723 = vpack.c.b16 %v680, %v679
        %v724 = vpack.c.b16 %v682, %v681
        %v725 = vpack.c.b16 %v684, %v683
        %v726 = vpack.c.b16 %v686, %v685
        %v727 = vpack.c.b16 %v688, %v687
        %v728 = vpack.c.b16 %v690, %v689
        %v729 = vpack.c.b16 %v692, %v691
        %v730 = vpack.c.b16 %v694, %v693
        %v731 = vpack.c.b16 %v696, %v695
        %v732 = vpack.c.b16 %v698, %v697
        %v733 = vpack.c.b16 %v700, %v699
        %v734 = vpack.c.b16 %v702, %v701
        %767 = vmatprep.subr.bf16.mxu0 0
        %768 = vmatpush1.bf16.msra.mxu0 %v703
        %769 = vmatprep.subr.bf16.mxu0 0
        %770 = vmatpush1.bf16.msra.mxu0 %v704
        %771 = vmatprep.subr.bf16.mxu0 0
        %772 = vmatpush1.bf16.msra.mxu0 %v705
        %773 = vmatprep.subr.bf16.mxu0 0
        %774 = vmatpush1.bf16.msra.mxu0 %v706
        %775 = vmatprep.subr.bf16.mxu0 0
        %776 = vmatpush1.bf16.msra.mxu0 %v707
        %777 = vmatprep.subr.bf16.mxu0 0
        %778 = vmatpush1.bf16.msra.mxu0 %v708
        %779 = vmatprep.subr.bf16.mxu0 0
        %780 = vmatpush1.bf16.msra.mxu0 %v709
        %781 = vmatprep.subr.bf16.mxu0 0
        %782 = vmatpush1.bf16.msra.mxu0 %v710
        %783 = vmatprep.subr.bf16.mxu0 0
        %784 = vmatpush1.bf16.msra.mxu0 %v711
        %785 = vmatprep.subr.bf16.mxu0 0
        %786 = vmatpush1.bf16.msra.mxu0 %v712
        %787 = vmatprep.subr.bf16.mxu0 0
        %788 = vmatpush1.bf16.msra.mxu0 %v713
        %789 = vmatprep.subr.bf16.mxu0 0
        %790 = vmatpush1.bf16.msra.mxu0 %v714
        %791 = vmatprep.subr.bf16.mxu0 0
        %792 = vmatpush1.bf16.msra.mxu0 %v715
        %793 = vmatprep.subr.bf16.mxu0 0
        %794 = vmatpush1.bf16.msra.mxu0 %v716
        %795 = vmatprep.subr.bf16.mxu0 0
        %796 = vmatpush1.bf16.msra.mxu0 %v717
        %797 = vmatprep.subr.bf16.mxu0 0
        %798 = vmatpush1.bf16.msra.mxu0 %v718
        %799 = vmatprep.mubr.bf16.mxu0 %v568
        %800 = vmatmul.mubr.bf16.gmra.mrb[0].mxu0 %v567
        %v801 = vpop.f32.mrb[0].mxu0
        %v802 = vadd.f32 0.0, %v801
        %v803 = vpop.f32.mrb[0].mxu0
        %v804 = vpop.f32.mrb[0].mxu0
        %v805 = vadd.f32 0.0, %v804
        %v806 = vpop.f32.mrb[0].mxu0
        %807 = vdwg.mxu0
        %808 = vmatprep.subr.bf16.mxu0 0
        %809 = vmatpush1.bf16.msra.mxu0 %v719
        %810 = vmatprep.subr.bf16.mxu0 0
        %811 = vmatpush1.bf16.msra.mxu0 %v720
        %812 = vmatprep.subr.bf16.mxu0 0
        %813 = vmatpush1.bf16.msra.mxu0 %v721
        %814 = vmatprep.subr.bf16.mxu0 0
        %815 = vmatpush1.bf16.msra.mxu0 %v722
        %816 = vmatprep.subr.bf16.mxu0 0
        %817 = vmatpush1.bf16.msra.mxu0 %v723
        %818 = vmatprep.subr.bf16.mxu0 0
        %819 = vmatpush1.bf16.msra.mxu0 %v724
        %820 = vmatprep.subr.bf16.mxu0 0
        %821 = vmatpush1.bf16.msra.mxu0 %v725
        %822 = vmatprep.subr.bf16.mxu0 0
        %823 = vmatpush1.bf16.msra.mxu0 %v726
        %824 = vmatprep.subr.bf16.mxu0 0
        %825 = vmatpush1.bf16.msra.mxu0 %v727
        %826 = vmatprep.subr.bf16.mxu0 0
        %827 = vmatpush1.bf16.msra.mxu0 %v728
        %828 = vmatprep.subr.bf16.mxu0 0
        %829 = vmatpush1.bf16.msra.mxu0 %v729
        %830 = vmatprep.subr.bf16.mxu0 0
        %831 = vmatpush1.bf16.msra.mxu0 %v730
        %832 = vmatprep.subr.bf16.mxu0 0
        %833 = vmatpush1.bf16.msra.mxu0 %v731
        %834 = vmatprep.subr.bf16.mxu0 0
        %835 = vmatpush1.bf16.msra.mxu0 %v732
        %836 = vmatprep.subr.bf16.mxu0 0
        %837 = vmatpush1.bf16.msra.mxu0 %v733
        %838 = vmatprep.subr.bf16.mxu0 0
        %839 = vmatpush1.bf16.msra.mxu0 %v734
        %840 = vmatprep.mubr.bf16.mxu0 %v570
        %841 = vmatmul.mubr.bf16.gmra.mrb[0].mxu0 %v569
        %v842 = vpop.f32.mrb[0].mxu0
        %v843 = vadd.f32 %v802, %v842
        %v844 = vpop.f32.mrb[0].mxu0
        %v845 = vpop.f32.mrb[0].mxu0
        %v846 = vadd.f32 %v805, %v845
        %v847 = vpop.f32.mrb[0].mxu0
        %848 = vdwg.mxu0
        %v849 = vcombine.low %v217, %v232
        %v850 = vcombine.high %v217, %v232
        %v851 = vcombine.low %v247, %v262
        %v852 = vcombine.high %v247, %v262
        %v854 = vunpack.c.l.s4 1983009808
        %v855 = vunpack.c.0.s8 %v854
        %v856 = vlaneseq
        %v857 = vshrl.u32 %v856, 7
        %v858 = vsub.s32 %v855, %v857
        %v859 = vrot.slane %v849, %v858
        %v861 = vunpack.c.l.s4 1983009808
        %v862 = vunpack.c.0.s8 %v861
        %v863 = vlaneseq
        %v864 = vshrl.u32 %v863, 7
        %v865 = vsub.s32 %v862, %v864
        %v866 = vrot.slane %v850, %v865
        %v868 = vunpack.c.l.s4 1983009808
        %v869 = vunpack.c.0.s8 %v868
        %v870 = vlaneseq
        %v871 = vshrl.u32 %v870, 7
        %v872 = vsub.s32 %v869, %v871
        %v873 = vrot.slane %v851, %v872
        %v875 = vunpack.c.l.s4 1983009808
        %v876 = vunpack.c.0.s8 %v875
        %v877 = vlaneseq
        %v878 = vshrl.u32 %v877, 7
        %v879 = vsub.s32 %v876, %v878
        %v880 = vrot.slane %v852, %v879
        %v881 = vcombine.low %v859, %v873
        %v882 = vcombine.high %v859, %v873
        %v883 = vcombine.low %v866, %v880
        %v884 = vcombine.high %v866, %v880
        %v953 = vunpack.c.l.b16 %v263
        %v954 = vunpack.c.l.b16 %v264
        %v955 = vunpack.c.l.b16 %v265
        %v956 = vunpack.c.l.b16 %v266
        %v957 = vunpack.c.l.b16 %v267
        %v958 = vunpack.c.l.b16 %v268
        %v959 = vunpack.c.l.b16 %v269
        %v960 = vunpack.c.l.b16 %v270
        %v961 = vunpack.c.l.b16 %v271
        %v962 = vunpack.c.l.b16 %v272
        %v963 = vunpack.c.l.b16 %v273
        %v964 = vunpack.c.l.b16 %v274
        %v965 = vunpack.c.l.b16 %v275
        %v966 = vunpack.c.l.b16 %v276
        %v967 = vunpack.c.l.b16 %v277
        %v968 = vunpack.c.l.b16 %v278
        %v969 = vunpack.c.l.b16 %v279
        %v970 = vunpack.c.l.b16 %v280
        %v971 = vunpack.c.l.b16 %v281
        %v972 = vunpack.c.l.b16 %v282
        %v973 = vunpack.c.l.b16 %v283
        %v974 = vunpack.c.l.b16 %v284
        %v975 = vunpack.c.l.b16 %v285
        %v976 = vunpack.c.l.b16 %v286
        %v977 = vunpack.c.l.b16 %v287
        %v978 = vunpack.c.l.b16 %v288
        %v979 = vunpack.c.l.b16 %v289
        %v980 = vunpack.c.l.b16 %v290
        %v981 = vunpack.c.l.b16 %v291
        %v982 = vunpack.c.l.b16 %v292
        %v983 = vunpack.c.l.b16 %v293
        %v984 = vunpack.c.l.b16 %v294
        %v985 = vunpack.c.l.b16 %v295
        %v986 = vunpack.c.l.b16 %v296
        %v987 = vunpack.c.l.b16 %v297
        %v988 = vunpack.c.l.b16 %v298
        %v989 = vunpack.c.l.b16 %v299
        %v990 = vunpack.c.l.b16 %v300
        %v991 = vunpack.c.l.b16 %v301
        %v992 = vunpack.c.l.b16 %v302
        %v993 = vunpack.c.l.b16 %v303
        %v994 = vunpack.c.l.b16 %v304
        %v995 = vunpack.c.l.b16 %v305
        %v996 = vunpack.c.l.b16 %v306
        %v997 = vunpack.c.l.b16 %v307
        %v998 = vunpack.c.l.b16 %v308
        %v999 = vunpack.c.l.b16 %v309
        %v1000 = vunpack.c.l.b16 %v310
        %v1001 = vunpack.c.l.b16 %v311
        %v1002 = vunpack.c.l.b16 %v312
        %v1003 = vunpack.c.l.b16 %v313
        %v1004 = vunpack.c.l.b16 %v314
        %v1005 = vunpack.c.l.b16 %v315
        %v1006 = vunpack.c.l.b16 %v316
        %v1007 = vunpack.c.l.b16 %v317
        %v1008 = vunpack.c.l.b16 %v318
        %v1009 = vunpack.c.l.b16 %v319
        %v1010 = vunpack.c.l.b16 %v320
        %v1011 = vunpack.c.l.b16 %v321
        %v1012 = vunpack.c.l.b16 %v322
        %v1013 = vunpack.c.l.b16 %v323
        %v1014 = vunpack.c.l.b16 %v324
        %v1015 = vunpack.c.l.b16 %v325
        %v1016 = vunpack.c.l.b16 %v326
        %v1017 = vpack.c.b16 %v954, %v953
        %v1018 = vpack.c.b16 %v956, %v955
        %v1019 = vpack.c.b16 %v958, %v957
        %v1020 = vpack.c.b16 %v960, %v959
        %v1021 = vpack.c.b16 %v962, %v961
        %v1022 = vpack.c.b16 %v964, %v963
        %v1023 = vpack.c.b16 %v966, %v965
        %v1024 = vpack.c.b16 %v968, %v967
        %v1025 = vpack.c.b16 %v970, %v969
        %v1026 = vpack.c.b16 %v972, %v971
        %v1027 = vpack.c.b16 %v974, %v973
        %v1028 = vpack.c.b16 %v976, %v975
        %v1029 = vpack.c.b16 %v978, %v977
        %v1030 = vpack.c.b16 %v980, %v979
        %v1031 = vpack.c.b16 %v982, %v981
        %v1032 = vpack.c.b16 %v984, %v983
        %v1033 = vpack.c.b16 %v986, %v985
        %v1034 = vpack.c.b16 %v988, %v987
        %v1035 = vpack.c.b16 %v990, %v989
        %v1036 = vpack.c.b16 %v992, %v991
        %v1037 = vpack.c.b16 %v994, %v993
        %v1038 = vpack.c.b16 %v996, %v995
        %v1039 = vpack.c.b16 %v998, %v997
        %v1040 = vpack.c.b16 %v1000, %v999
        %v1041 = vpack.c.b16 %v1002, %v1001
        %v1042 = vpack.c.b16 %v1004, %v1003
        %v1043 = vpack.c.b16 %v1006, %v1005
        %v1044 = vpack.c.b16 %v1008, %v1007
        %v1045 = vpack.c.b16 %v1010, %v1009
        %v1046 = vpack.c.b16 %v1012, %v1011
        %v1047 = vpack.c.b16 %v1014, %v1013
        %v1048 = vpack.c.b16 %v1016, %v1015
        %1081 = vmatprep.subr.bf16.mxu0 0
        %1082 = vmatpush1.bf16.msra.mxu0 %v1017
        %1083 = vmatprep.subr.bf16.mxu0 0
        %1084 = vmatpush1.bf16.msra.mxu0 %v1018
        %1085 = vmatprep.subr.bf16.mxu0 0
        %1086 = vmatpush1.bf16.msra.mxu0 %v1019
        %1087 = vmatprep.subr.bf16.mxu0 0
        %1088 = vmatpush1.bf16.msra.mxu0 %v1020
        %1089 = vmatprep.subr.bf16.mxu0 0
        %1090 = vmatpush1.bf16.msra.mxu0 %v1021
        %1091 = vmatprep.subr.bf16.mxu0 0
        %1092 = vmatpush1.bf16.msra.mxu0 %v1022
        %1093 = vmatprep.subr.bf16.mxu0 0
        %1094 = vmatpush1.bf16.msra.mxu0 %v1023
        %1095 = vmatprep.subr.bf16.mxu0 0
        %1096 = vmatpush1.bf16.msra.mxu0 %v1024
        %1097 = vmatprep.subr.bf16.mxu0 0
        %1098 = vmatpush1.bf16.msra.mxu0 %v1025
        %1099 = vmatprep.subr.bf16.mxu0 0
        %1100 = vmatpush1.bf16.msra.mxu0 %v1026
        %1101 = vmatprep.subr.bf16.mxu0 0
        %1102 = vmatpush1.bf16.msra.mxu0 %v1027
        %1103 = vmatprep.subr.bf16.mxu0 0
        %1104 = vmatpush1.bf16.msra.mxu0 %v1028
        %1105 = vmatprep.subr.bf16.mxu0 0
        %1106 = vmatpush1.bf16.msra.mxu0 %v1029
        %1107 = vmatprep.subr.bf16.mxu0 0
        %1108 = vmatpush1.bf16.msra.mxu0 %v1030
        %1109 = vmatprep.subr.bf16.mxu0 0
        %1110 = vmatpush1.bf16.msra.mxu0 %v1031
        %1111 = vmatprep.subr.bf16.mxu0 0
        %1112 = vmatpush1.bf16.msra.mxu0 %v1032
        %1113 = vmatprep.mubr.bf16.mxu0 %v882
        %1114 = vmatmul.mubr.bf16.gmra.mrb[0].mxu0 %v881
        %v1115 = vpop.f32.mrb[0].mxu0
        %v1116 = vadd.f32 %v843, %v1115
        %v1117 = vpop.f32.mrb[0].mxu0
        %v1118 = vpop.f32.mrb[0].mxu0
        %v1119 = vadd.f32 %v846, %v1118
        %v1120 = vpop.f32.mrb[0].mxu0
        %1121 = vdwg.mxu0
        %1122 = vmatprep.subr.bf16.mxu0 0
        %1123 = vmatpush1.bf16.msra.mxu0 %v1033
        %1124 = vmatprep.subr.bf16.mxu0 0
        %1125 = vmatpush1.bf16.msra.mxu0 %v1034
        %1126 = vmatprep.subr.bf16.mxu0 0
        %1127 = vmatpush1.bf16.msra.mxu0 %v1035
        %1128 = vmatprep.subr.bf16.mxu0 0
        %1129 = vmatpush1.bf16.msra.mxu0 %v1036
        %1130 = vmatprep.subr.bf16.mxu0 0
        %1131 = vmatpush1.bf16.msra.mxu0 %v1037
        %1132 = vmatprep.subr.bf16.mxu0 0
        %1133 = vmatpush1.bf16.msra.mxu0 %v1038
        %1134 = vmatprep.subr.bf16.mxu0 0
        %1135 = vmatpush1.bf16.msra.mxu0 %v1039
        %1136 = vmatprep.subr.bf16.mxu0 0
        %1137 = vmatpush1.bf16.msra.mxu0 %v1040
        %1138 = vmatprep.subr.bf16.mxu0 0
        %1139 = vmatpush1.bf16.msra.mxu0 %v1041
        %1140 = vmatprep.subr.bf16.mxu0 0
        %1141 = vmatpush1.bf16.msra.mxu0 %v1042
        %1142 = vmatprep.subr.bf16.mxu0 0
        %1143 = vmatpush1.bf16.msra.mxu0 %v1043
        %1144 = vmatprep.subr.bf16.mxu0 0
        %1145 = vmatpush1.bf16.msra.mxu0 %v1044
        %1146 = vmatprep.subr.bf16.mxu0 0
        %1147 = vmatpush1.bf16.msra.mxu0 %v1045
        %1148 = vmatprep.subr.bf16.mxu0 0
        %1149 = vmatpush1.bf16.msra.mxu0 %v1046
        %1150 = vmatprep.subr.bf16.mxu0 0
        %1151 = vmatpush1.bf16.msra.mxu0 %v1047
        %1152 = vmatprep.subr.bf16.mxu0 0
        %1153 = vmatpush1.bf16.msra.mxu0 %v1048
        %1154 = vmatprep.mubr.bf16.mxu0 %v884
        %1155 = vmatmul.mubr.bf16.gmra.mrb[0].mxu0 %v883
        %v1156 = vpop.f32.mrb[0].mxu0
        %v1157 = vadd.f32 %v1116, %v1156
        %v1158 = vpop.f32.mrb[0].mxu0
        %v1159 = vpop.f32.mrb[0].mxu0
        %v1160 = vadd.f32 %v1119, %v1159
        %v1161 = vpop.f32.mrb[0].mxu0
        %1162 = vdwg.mxu0
        %s1163 = scalar_lea.vmem %s177, 16
        %v1164 = vld [vmem:[%s1163] sm:$0x33]
        %v1165 = vld [vmem:[%s1163 + $0x8] sm:$0x33]
        %v1166 = vld [vmem:[%s1163 + $0x10] sm:$0x33]
        %v1167 = vld [vmem:[%s1163 + $0x18] sm:$0x33]
        %v1168 = vld [vmem:[%s1163 + $0x20] sm:$0x33]
        %v1169 = vld [vmem:[%s1163 + $0x28] sm:$0x33]
        %v1170 = vld [vmem:[%s1163 + $0x30] sm:$0x33]
        %v1171 = vld [vmem:[%s1163 + $0x38] sm:$0x33]
        %v1181 = vunpack.c.l.s4 1983009808
        %v1182 = vunpack.c.0.s8 %v1181
        %v1183 = vlaneseq
        %v1184 = vshrl.u32 %v1183, 7
        %v1185 = vsub.s32 %v1182, %v1184
        %v1186 = vrot.slane %v1164, %v1185
        %v1188 = vunpack.c.l.s4 1983009808
        %v1189 = vunpack.c.0.s8 %v1188
        %v1190 = vlaneseq
        %v1191 = vshrl.u32 %v1190, 7
        %v1192 = vsub.s32 %v1189, %v1191
        %v1193 = vrot.slane %v1165, %v1192
        %v1194 = vcombine.low %v1186, %v1193
        %v1196 = vunpack.c.l.s4 1983009808
        %v1197 = vunpack.c.0.s8 %v1196
        %v1198 = vlaneseq
        %v1199 = vshrl.u32 %v1198, 7
        %v1200 = vsub.s32 %v1197, %v1199
        %v1201 = vrot.slane %v1166, %v1200
        %v1203 = vunpack.c.l.s4 1983009808
        %v1204 = vunpack.c.0.s8 %v1203
        %v1205 = vlaneseq
        %v1206 = vshrl.u32 %v1205, 7
        %v1207 = vsub.s32 %v1204, %v1206
        %v1208 = vrot.slane %v1167, %v1207
        %v1209 = vcombine.low %v1201, %v1208
        %v1211 = vunpack.c.l.s4 1983009808
        %v1212 = vunpack.c.0.s8 %v1211
        %v1213 = vlaneseq
        %v1214 = vshrl.u32 %v1213, 7
        %v1215 = vsub.s32 %v1212, %v1214
        %v1216 = vrot.slane %v1168, %v1215
        %v1218 = vunpack.c.l.s4 1983009808
        %v1219 = vunpack.c.0.s8 %v1218
        %v1220 = vlaneseq
        %v1221 = vshrl.u32 %v1220, 7
        %v1222 = vsub.s32 %v1219, %v1221
        %v1223 = vrot.slane %v1169, %v1222
        %v1224 = vcombine.low %v1216, %v1223
        %v1226 = vunpack.c.l.s4 1983009808
        %v1227 = vunpack.c.0.s8 %v1226
        %v1228 = vlaneseq
        %v1229 = vshrl.u32 %v1228, 7
        %v1230 = vsub.s32 %v1227, %v1229
        %v1231 = vrot.slane %v1170, %v1230
        %v1233 = vunpack.c.l.s4 1983009808
        %v1234 = vunpack.c.0.s8 %v1233
        %v1235 = vlaneseq
        %v1236 = vshrl.u32 %v1235, 7
        %v1237 = vsub.s32 %v1234, %v1236
        %v1238 = vrot.slane %v1171, %v1237
        %v1239 = vcombine.low %v1231, %v1238
        %s1240 = scalar_lea.vmem [#allocation2], 512
        %v1241 = vld [vmem:[%s1240] sm:$0xf]
        %v1242 = vld [vmem:[%s1240 + $0x4] sm:$0xf]
        %v1243 = vld [vmem:[%s1240 + $0x8] sm:$0xf]
        %v1244 = vld [vmem:[%s1240 + $0xc] sm:$0xf]
        %v1245 = vld [vmem:[%s1240 + $0x10] sm:$0xf]
        %v1246 = vld [vmem:[%s1240 + $0x14] sm:$0xf]
        %v1247 = vld [vmem:[%s1240 + $0x18] sm:$0xf]
        %v1248 = vld [vmem:[%s1240 + $0x1c] sm:$0xf]
        %v1249 = vld [vmem:[%s1240 + $0x20] sm:$0xf]
        %v1250 = vld [vmem:[%s1240 + $0x24] sm:$0xf]
        %v1251 = vld [vmem:[%s1240 + $0x28] sm:$0xf]
        %v1252 = vld [vmem:[%s1240 + $0x2c] sm:$0xf]
        %v1253 = vld [vmem:[%s1240 + $0x30] sm:$0xf]
        %v1254 = vld [vmem:[%s1240 + $0x34] sm:$0xf]
        %v1255 = vld [vmem:[%s1240 + $0x38] sm:$0xf]
        %v1256 = vld [vmem:[%s1240 + $0x3c] sm:$0xf]
        %v1257 = vld [vmem:[%s1240 + $0x40] sm:$0xf]
        %v1258 = vld [vmem:[%s1240 + $0x44] sm:$0xf]
        %v1259 = vld [vmem:[%s1240 + $0x48] sm:$0xf]
        %v1260 = vld [vmem:[%s1240 + $0x4c] sm:$0xf]
        %v1261 = vld [vmem:[%s1240 + $0x50] sm:$0xf]
        %v1262 = vld [vmem:[%s1240 + $0x54] sm:$0xf]
        %v1263 = vld [vmem:[%s1240 + $0x58] sm:$0xf]
        %v1264 = vld [vmem:[%s1240 + $0x5c] sm:$0xf]
        %v1265 = vld [vmem:[%s1240 + $0x60] sm:$0xf]
        %v1266 = vld [vmem:[%s1240 + $0x64] sm:$0xf]
        %v1267 = vld [vmem:[%s1240 + $0x68] sm:$0xf]
        %v1268 = vld [vmem:[%s1240 + $0x6c] sm:$0xf]
        %v1269 = vld [vmem:[%s1240 + $0x70] sm:$0xf]
        %v1270 = vld [vmem:[%s1240 + $0x74] sm:$0xf]
        %v1271 = vld [vmem:[%s1240 + $0x78] sm:$0xf]
        %v1272 = vld [vmem:[%s1240 + $0x7c] sm:$0xf]
        %v1273 = vld [vmem:[%s1240 + $0x80] sm:$0xf]
        %v1274 = vld [vmem:[%s1240 + $0x84] sm:$0xf]
        %v1275 = vld [vmem:[%s1240 + $0x88] sm:$0xf]
        %v1276 = vld [vmem:[%s1240 + $0x8c] sm:$0xf]
        %v1277 = vld [vmem:[%s1240 + $0x90] sm:$0xf]
        %v1278 = vld [vmem:[%s1240 + $0x94] sm:$0xf]
        %v1279 = vld [vmem:[%s1240 + $0x98] sm:$0xf]
        %v1280 = vld [vmem:[%s1240 + $0x9c] sm:$0xf]
        %v1281 = vld [vmem:[%s1240 + $0xa0] sm:$0xf]
        %v1282 = vld [vmem:[%s1240 + $0xa4] sm:$0xf]
        %v1283 = vld [vmem:[%s1240 + $0xa8] sm:$0xf]
        %v1284 = vld [vmem:[%s1240 + $0xac] sm:$0xf]
        %v1285 = vld [vmem:[%s1240 + $0xb0] sm:$0xf]
        %v1286 = vld [vmem:[%s1240 + $0xb4] sm:$0xf]
        %v1287 = vld [vmem:[%s1240 + $0xb8] sm:$0xf]
        %v1288 = vld [vmem:[%s1240 + $0xbc] sm:$0xf]
        %v1289 = vld [vmem:[%s1240 + $0xc0] sm:$0xf]
        %v1290 = vld [vmem:[%s1240 + $0xc4] sm:$0xf]
        %v1291 = vld [vmem:[%s1240 + $0xc8] sm:$0xf]
        %v1292 = vld [vmem:[%s1240 + $0xcc] sm:$0xf]
        %v1293 = vld [vmem:[%s1240 + $0xd0] sm:$0xf]
        %v1294 = vld [vmem:[%s1240 + $0xd4] sm:$0xf]
        %v1295 = vld [vmem:[%s1240 + $0xd8] sm:$0xf]
        %v1296 = vld [vmem:[%s1240 + $0xdc] sm:$0xf]
        %v1297 = vld [vmem:[%s1240 + $0xe0] sm:$0xf]
        %v1298 = vld [vmem:[%s1240 + $0xe4] sm:$0xf]
        %v1299 = vld [vmem:[%s1240 + $0xe8] sm:$0xf]
        %v1300 = vld [vmem:[%s1240 + $0xec] sm:$0xf]
        %v1301 = vld [vmem:[%s1240 + $0xf0] sm:$0xf]
        %v1302 = vld [vmem:[%s1240 + $0xf4] sm:$0xf]
        %v1303 = vld [vmem:[%s1240 + $0xf8] sm:$0xf]
        %v1304 = vld [vmem:[%s1240 + $0xfc] sm:$0xf]
        %v1305 = vcombine.low %v1194, %v1209
        %v1306 = vcombine.high %v1194, %v1209
        %v1307 = vcombine.low %v1224, %v1239
        %v1308 = vcombine.high %v1224, %v1239
        %v1310 = vunpack.c.l.s4 1983009808
        %v1311 = vunpack.c.0.s8 %v1310
        %v1312 = vlaneseq
        %v1313 = vshrl.u32 %v1312, 7
        %v1314 = vsub.s32 %v1311, %v1313
        %v1315 = vrot.slane %v1305, %v1314
        %v1317 = vunpack.c.l.s4 1983009808
        %v1318 = vunpack.c.0.s8 %v1317
        %v1319 = vlaneseq
        %v1320 = vshrl.u32 %v1319, 7
        %v1321 = vsub.s32 %v1318, %v1320
        %v1322 = vrot.slane %v1306, %v1321
        %v1324 = vunpack.c.l.s4 1983009808
        %v1325 = vunpack.c.0.s8 %v1324
        %v1326 = vlaneseq
        %v1327 = vshrl.u32 %v1326, 7
        %v1328 = vsub.s32 %v1325, %v1327
        %v1329 = vrot.slane %v1307, %v1328
        %v1331 = vunpack.c.l.s4 1983009808
        %v1332 = vunpack.c.0.s8 %v1331
        %v1333 = vlaneseq
        %v1334 = vshrl.u32 %v1333, 7
        %v1335 = vsub.s32 %v1332, %v1334
        %v1336 = vrot.slane %v1308, %v1335
        %v1337 = vcombine.low %v1315, %v1329
        %v1338 = vcombine.high %v1315, %v1329
        %v1339 = vcombine.low %v1322, %v1336
        %v1340 = vcombine.high %v1322, %v1336
        %v1409 = vunpack.c.l.b16 %v1241
        %v1410 = vunpack.c.l.b16 %v1242
        %v1411 = vunpack.c.l.b16 %v1243
        %v1412 = vunpack.c.l.b16 %v1244
        %v1413 = vunpack.c.l.b16 %v1245
        %v1414 = vunpack.c.l.b16 %v1246
        %v1415 = vunpack.c.l.b16 %v1247
        %v1416 = vunpack.c.l.b16 %v1248
        %v1417 = vunpack.c.l.b16 %v1249
        %v1418 = vunpack.c.l.b16 %v1250
        %v1419 = vunpack.c.l.b16 %v1251
        %v1420 = vunpack.c.l.b16 %v1252
        %v1421 = vunpack.c.l.b16 %v1253
        %v1422 = vunpack.c.l.b16 %v1254
        %v1423 = vunpack.c.l.b16 %v1255
        %v1424 = vunpack.c.l.b16 %v1256
        %v1425 = vunpack.c.l.b16 %v1257
        %v1426 = vunpack.c.l.b16 %v1258
        %v1427 = vunpack.c.l.b16 %v1259
        %v1428 = vunpack.c.l.b16 %v1260
        %v1429 = vunpack.c.l.b16 %v1261
        %v1430 = vunpack.c.l.b16 %v1262
        %v1431 = vunpack.c.l.b16 %v1263
        %v1432 = vunpack.c.l.b16 %v1264
        %v1433 = vunpack.c.l.b16 %v1265
        %v1434 = vunpack.c.l.b16 %v1266
        %v1435 = vunpack.c.l.b16 %v1267
        %v1436 = vunpack.c.l.b16 %v1268
        %v1437 = vunpack.c.l.b16 %v1269
        %v1438 = vunpack.c.l.b16 %v1270
        %v1439 = vunpack.c.l.b16 %v1271
        %v1440 = vunpack.c.l.b16 %v1272
        %v1441 = vunpack.c.l.b16 %v1273
        %v1442 = vunpack.c.l.b16 %v1274
        %v1443 = vunpack.c.l.b16 %v1275
        %v1444 = vunpack.c.l.b16 %v1276
        %v1445 = vunpack.c.l.b16 %v1277
        %v1446 = vunpack.c.l.b16 %v1278
        %v1447 = vunpack.c.l.b16 %v1279
        %v1448 = vunpack.c.l.b16 %v1280
        %v1449 = vunpack.c.l.b16 %v1281
        %v1450 = vunpack.c.l.b16 %v1282
        %v1451 = vunpack.c.l.b16 %v1283
        %v1452 = vunpack.c.l.b16 %v1284
        %v1453 = vunpack.c.l.b16 %v1285
        %v1454 = vunpack.c.l.b16 %v1286
        %v1455 = vunpack.c.l.b16 %v1287
        %v1456 = vunpack.c.l.b16 %v1288
        %v1457 = vunpack.c.l.b16 %v1289
        %v1458 = vunpack.c.l.b16 %v1290
        %v1459 = vunpack.c.l.b16 %v1291
        %v1460 = vunpack.c.l.b16 %v1292
        %v1461 = vunpack.c.l.b16 %v1293
        %v1462 = vunpack.c.l.b16 %v1294
        %v1463 = vunpack.c.l.b16 %v1295
        %v1464 = vunpack.c.l.b16 %v1296
        %v1465 = vunpack.c.l.b16 %v1297
        %v1466 = vunpack.c.l.b16 %v1298
        %v1467 = vunpack.c.l.b16 %v1299
        %v1468 = vunpack.c.l.b16 %v1300
        %v1469 = vunpack.c.l.b16 %v1301
        %v1470 = vunpack.c.l.b16 %v1302
        %v1471 = vunpack.c.l.b16 %v1303
        %v1472 = vunpack.c.l.b16 %v1304
        %v1473 = vpack.c.b16 %v1410, %v1409
        %v1474 = vpack.c.b16 %v1412, %v1411
        %v1475 = vpack.c.b16 %v1414, %v1413
        %v1476 = vpack.c.b16 %v1416, %v1415
        %v1477 = vpack.c.b16 %v1418, %v1417
        %v1478 = vpack.c.b16 %v1420, %v1419
        %v1479 = vpack.c.b16 %v1422, %v1421
        %v1480 = vpack.c.b16 %v1424, %v1423
        %v1481 = vpack.c.b16 %v1426, %v1425
        %v1482 = vpack.c.b16 %v1428, %v1427
        %v1483 = vpack.c.b16 %v1430, %v1429
        %v1484 = vpack.c.b16 %v1432, %v1431
        %v1485 = vpack.c.b16 %v1434, %v1433
        %v1486 = vpack.c.b16 %v1436, %v1435
        %v1487 = vpack.c.b16 %v1438, %v1437
        %v1488 = vpack.c.b16 %v1440, %v1439
        %v1489 = vpack.c.b16 %v1442, %v1441
        %v1490 = vpack.c.b16 %v1444, %v1443
        %v1491 = vpack.c.b16 %v1446, %v1445
        %v1492 = vpack.c.b16 %v1448, %v1447
        %v1493 = vpack.c.b16 %v1450, %v1449
        %v1494 = vpack.c.b16 %v1452, %v1451
        %v1495 = vpack.c.b16 %v1454, %v1453
        %v1496 = vpack.c.b16 %v1456, %v1455
        %v1497 = vpack.c.b16 %v1458, %v1457
        %v1498 = vpack.c.b16 %v1460, %v1459
        %v1499 = vpack.c.b16 %v1462, %v1461
        %v1500 = vpack.c.b16 %v1464, %v1463
        %v1501 = vpack.c.b16 %v1466, %v1465
        %v1502 = vpack.c.b16 %v1468, %v1467
        %v1503 = vpack.c.b16 %v1470, %v1469
        %v1504 = vpack.c.b16 %v1472, %v1471
        %1537 = vmatprep.subr.bf16.mxu0 0
        %1538 = vmatpush1.bf16.msra.mxu0 %v1473
        %1539 = vmatprep.subr.bf16.mxu0 0
        %1540 = vmatpush1.bf16.msra.mxu0 %v1474
        %1541 = vmatprep.subr.bf16.mxu0 0
        %1542 = vmatpush1.bf16.msra.mxu0 %v1475
        %1543 = vmatprep.subr.bf16.mxu0 0
        %1544 = vmatpush1.bf16.msra.mxu0 %v1476
        %1545 = vmatprep.subr.bf16.mxu0 0
        %1546 = vmatpush1.bf16.msra.mxu0 %v1477
        %1547 = vmatprep.subr.bf16.mxu0 0
        %1548 = vmatpush1.bf16.msra.mxu0 %v1478
        %1549 = vmatprep.subr.bf16.mxu0 0
        %1550 = vmatpush1.bf16.msra.mxu0 %v1479
        %1551 = vmatprep.subr.bf16.mxu0 0
        %1552 = vmatpush1.bf16.msra.mxu0 %v1480
        %1553 = vmatprep.subr.bf16.mxu0 0
        %1554 = vmatpush1.bf16.msra.mxu0 %v1481
        %1555 = vmatprep.subr.bf16.mxu0 0
        %1556 = vmatpush1.bf16.msra.mxu0 %v1482
        %1557 = vmatprep.subr.bf16.mxu0 0
        %1558 = vmatpush1.bf16.msra.mxu0 %v1483
        %1559 = vmatprep.subr.bf16.mxu0 0
        %1560 = vmatpush1.bf16.msra.mxu0 %v1484
        %1561 = vmatprep.subr.bf16.mxu0 0
        %1562 = vmatpush1.bf16.msra.mxu0 %v1485
        %1563 = vmatprep.subr.bf16.mxu0 0
        %1564 = vmatpush1.bf16.msra.mxu0 %v1486
        %1565 = vmatprep.subr.bf16.mxu0 0
        %1566 = vmatpush1.bf16.msra.mxu0 %v1487
        %1567 = vmatprep.subr.bf16.mxu0 0
        %1568 = vmatpush1.bf16.msra.mxu0 %v1488
        %1569 = vmatprep.mubr.bf16.mxu0 %v1338
        %1570 = vmatmul.mubr.bf16.gmra.mrb[0].mxu0 %v1337
        %v1571 = vpop.f32.mrb[0].mxu0
        %v1572 = vadd.f32 0.0, %v1571
        %v1573 = vpop.f32.mrb[0].mxu0
        %v1574 = vpop.f32.mrb[0].mxu0
        %v1575 = vadd.f32 0.0, %v1574
        %v1576 = vpop.f32.mrb[0].mxu0
        %1577 = vdwg.mxu0
        %1578 = vmatprep.subr.bf16.mxu0 0
        %1579 = vmatpush1.bf16.msra.mxu0 %v1489
        %1580 = vmatprep.subr.bf16.mxu0 0
        %1581 = vmatpush1.bf16.msra.mxu0 %v1490
        %1582 = vmatprep.subr.bf16.mxu0 0
        %1583 = vmatpush1.bf16.msra.mxu0 %v1491
        %1584 = vmatprep.subr.bf16.mxu0 0
        %1585 = vmatpush1.bf16.msra.mxu0 %v1492
        %1586 = vmatprep.subr.bf16.mxu0 0
        %1587 = vmatpush1.bf16.msra.mxu0 %v1493
        %1588 = vmatprep.subr.bf16.mxu0 0
        %1589 = vmatpush1.bf16.msra.mxu0 %v1494
        %1590 = vmatprep.subr.bf16.mxu0 0
        %1591 = vmatpush1.bf16.msra.mxu0 %v1495
        %1592 = vmatprep.subr.bf16.mxu0 0
        %1593 = vmatpush1.bf16.msra.mxu0 %v1496
        %1594 = vmatprep.subr.bf16.mxu0 0
        %1595 = vmatpush1.bf16.msra.mxu0 %v1497
        %1596 = vmatprep.subr.bf16.mxu0 0
        %1597 = vmatpush1.bf16.msra.mxu0 %v1498
        %1598 = vmatprep.subr.bf16.mxu0 0
        %1599 = vmatpush1.bf16.msra.mxu0 %v1499
        %1600 = vmatprep.subr.bf16.mxu0 0
        %1601 = vmatpush1.bf16.msra.mxu0 %v1500
        %1602 = vmatprep.subr.bf16.mxu0 0
        %1603 = vmatpush1.bf16.msra.mxu0 %v1501
        %1604 = vmatprep.subr.bf16.mxu0 0
        %1605 = vmatpush1.bf16.msra.mxu0 %v1502
        %1606 = vmatprep.subr.bf16.mxu0 0
        %1607 = vmatpush1.bf16.msra.mxu0 %v1503
        %1608 = vmatprep.subr.bf16.mxu0 0
        %1609 = vmatpush1.bf16.msra.mxu0 %v1504
        %1610 = vmatprep.mubr.bf16.mxu0 %v1340
        %1611 = vmatmul.mubr.bf16.gmra.mrb[0].mxu0 %v1339
        %v1612 = vpop.f32.mrb[0].mxu0
        %v1613 = vadd.f32 %v1572, %v1612
        %v1614 = vpop.f32.mrb[0].mxu0
        %v1615 = vpop.f32.mrb[0].mxu0
        %v1616 = vadd.f32 %v1575, %v1615
        %v1617 = vpop.f32.mrb[0].mxu0
        %1618 = vdwg.mxu0
        %v1619 = vadd.f32 %v1157, %v1613
        %v1620 = vadd.f32 %v1160, %v1616
        %v1621 = vld [vmem:[%s1163] sm:$0x77]
        %v1622 = vld [vmem:[%s1163 + $0x8] sm:$0x77]
        %v1623 = vld [vmem:[%s1163 + $0x10] sm:$0x77]
        %v1624 = vld [vmem:[%s1163 + $0x18] sm:$0x77]
        %v1625 = vld [vmem:[%s1163 + $0x20] sm:$0x77]
        %v1626 = vld [vmem:[%s1163 + $0x28] sm:$0x77]
        %v1627 = vld [vmem:[%s1163 + $0x30] sm:$0x77]
        %v1628 = vld [vmem:[%s1163 + $0x38] sm:$0x77]
        %v1638 = vunpack.c.l.s4 1983009808
        %v1639 = vunpack.c.0.s8 %v1638
        %v1640 = vlaneseq
        %v1641 = vshrl.u32 %v1640, 7
        %v1642 = vsub.s32 %v1639, %v1641
        %v1643 = vrot.slane %v1621, %v1642
        %v1645 = vunpack.c.l.s4 1983009808
        %v1646 = vunpack.c.0.s8 %v1645
        %v1647 = vlaneseq
        %v1648 = vshrl.u32 %v1647, 7
        %v1649 = vsub.s32 %v1646, %v1648
        %v1650 = vrot.slane %v1622, %v1649
        %v1651 = vcombine.low %v1643, %v1650
        %v1652 = vcombine.high %v1643, %v1650
        %v1654 = vunpack.c.l.s4 1983009808
        %v1655 = vunpack.c.0.s8 %v1654
        %v1656 = vlaneseq
        %v1657 = vshrl.u32 %v1656, 7
        %v1658 = vsub.s32 %v1655, %v1657
        %v1659 = vrot.slane %v1623, %v1658
        %v1661 = vunpack.c.l.s4 1983009808
        %v1662 = vunpack.c.0.s8 %v1661
        %v1663 = vlaneseq
        %v1664 = vshrl.u32 %v1663, 7
        %v1665 = vsub.s32 %v1662, %v1664
        %v1666 = vrot.slane %v1624, %v1665
        %v1667 = vcombine.low %v1659, %v1666
        %v1668 = vcombine.high %v1659, %v1666
        %v1670 = vunpack.c.l.s4 1983009808
        %v1671 = vunpack.c.0.s8 %v1670
        %v1672 = vlaneseq
        %v1673 = vshrl.u32 %v1672, 7
        %v1674 = vsub.s32 %v1671, %v1673
        %v1675 = vrot.slane %v1625, %v1674
        %v1677 = vunpack.c.l.s4 1983009808
        %v1678 = vunpack.c.0.s8 %v1677
        %v1679 = vlaneseq
        %v1680 = vshrl.u32 %v1679, 7
        %v1681 = vsub.s32 %v1678, %v1680
        %v1682 = vrot.slane %v1626, %v1681
        %v1683 = vcombine.low %v1675, %v1682
        %v1684 = vcombine.high %v1675, %v1682
        %v1686 = vunpack.c.l.s4 1983009808
        %v1687 = vunpack.c.0.s8 %v1686
        %v1688 = vlaneseq
        %v1689 = vshrl.u32 %v1688, 7
        %v1690 = vsub.s32 %v1687, %v1689
        %v1691 = vrot.slane %v1627, %v1690
        %v1693 = vunpack.c.l.s4 1983009808
        %v1694 = vunpack.c.0.s8 %v1693
        %v1695 = vlaneseq
        %v1696 = vshrl.u32 %v1695, 7
        %v1697 = vsub.s32 %v1694, %v1696
        %v1698 = vrot.slane %v1628, %v1697
        %v1699 = vcombine.low %v1691, %v1698
        %v1700 = vcombine.high %v1691, %v1698
        %v1702 = vshrl.u32 %v1651, 16
        %v1704 = vrot.slane %v1702, 6
        %v1705 = vshll.u32 %v1651, 16
        %v1707 = vrot.slane %v1705, 7
        %v1708 = vor.u32 %v1704, %v1707
        %v1709 = vrot.slane %v1708, 2
        %v1711 = vshll.u32 %v1652, 16
        %v1713 = vrot.slane %v1711, 7
        %v1714 = vsel %vm413, %v1709, %v1713
        %v1716 = vshrl.u32 %v1667, 16
        %v1718 = vrot.slane %v1716, 6
        %v1719 = vshll.u32 %v1667, 16
        %v1721 = vrot.slane %v1719, 7
        %v1722 = vor.u32 %v1718, %v1721
        %v1723 = vrot.slane %v1722, 2
        %v1725 = vshll.u32 %v1668, 16
        %v1727 = vrot.slane %v1725, 7
        %v1728 = vsel %vm413, %v1723, %v1727
        %v1730 = vshrl.u32 %v1683, 16
        %v1732 = vrot.slane %v1730, 6
        %v1733 = vshll.u32 %v1683, 16
        %v1735 = vrot.slane %v1733, 7
        %v1736 = vor.u32 %v1732, %v1735
        %v1737 = vrot.slane %v1736, 2
        %v1739 = vshll.u32 %v1684, 16
        %v1741 = vrot.slane %v1739, 7
        %v1742 = vsel %vm413, %v1737, %v1741
        %v1744 = vshrl.u32 %v1699, 16
        %v1746 = vrot.slane %v1744, 6
        %v1747 = vshll.u32 %v1699, 16
        %v1749 = vrot.slane %v1747, 7
        %v1750 = vor.u32 %v1746, %v1749
        %v1751 = vrot.slane %v1750, 2
        %v1753 = vshll.u32 %v1700, 16
        %v1755 = vrot.slane %v1753, 7
        %v1756 = vsel %vm413, %v1751, %v1755
        %s1757 = scalar_lea.vmem [#allocation2], 768
        %v1758 = vld [vmem:[%s1757] sm:$0xf]
        %v1759 = vld [vmem:[%s1757 + $0x4] sm:$0xf]
        %v1760 = vld [vmem:[%s1757 + $0x8] sm:$0xf]
        %v1761 = vld [vmem:[%s1757 + $0xc] sm:$0xf]
        %v1762 = vld [vmem:[%s1757 + $0x10] sm:$0xf]
        %v1763 = vld [vmem:[%s1757 + $0x14] sm:$0xf]
        %v1764 = vld [vmem:[%s1757 + $0x18] sm:$0xf]
        %v1765 = vld [vmem:[%s1757 + $0x1c] sm:$0xf]
        %v1766 = vld [vmem:[%s1757 + $0x20] sm:$0xf]
        %v1767 = vld [vmem:[%s1757 + $0x24] sm:$0xf]
        %v1768 = vld [vmem:[%s1757 + $0x28] sm:$0xf]
        %v1769 = vld [vmem:[%s1757 + $0x2c] sm:$0xf]
        %v1770 = vld [vmem:[%s1757 + $0x30] sm:$0xf]
        %v1771 = vld [vmem:[%s1757 + $0x34] sm:$0xf]
        %v1772 = vld [vmem:[%s1757 + $0x38] sm:$0xf]
        %v1773 = vld [vmem:[%s1757 + $0x3c] sm:$0xf]
        %v1774 = vld [vmem:[%s1757 + $0x40] sm:$0xf]
        %v1775 = vld [vmem:[%s1757 + $0x44] sm:$0xf]
        %v1776 = vld [vmem:[%s1757 + $0x48] sm:$0xf]
        %v1777 = vld [vmem:[%s1757 + $0x4c] sm:$0xf]
        %v1778 = vld [vmem:[%s1757 + $0x50] sm:$0xf]
        %v1779 = vld [vmem:[%s1757 + $0x54] sm:$0xf]
        %v1780 = vld [vmem:[%s1757 + $0x58] sm:$0xf]
        %v1781 = vld [vmem:[%s1757 + $0x5c] sm:$0xf]
        %v1782 = vld [vmem:[%s1757 + $0x60] sm:$0xf]
        %v1783 = vld [vmem:[%s1757 + $0x64] sm:$0xf]
        %v1784 = vld [vmem:[%s1757 + $0x68] sm:$0xf]
        %v1785 = vld [vmem:[%s1757 + $0x6c] sm:$0xf]
        %v1786 = vld [vmem:[%s1757 + $0x70] sm:$0xf]
        %v1787 = vld [vmem:[%s1757 + $0x74] sm:$0xf]
        %v1788 = vld [vmem:[%s1757 + $0x78] sm:$0xf]
        %v1789 = vld [vmem:[%s1757 + $0x7c] sm:$0xf]
        %v1790 = vld [vmem:[%s1757 + $0x80] sm:$0xf]
        %v1791 = vld [vmem:[%s1757 + $0x84] sm:$0xf]
        %v1792 = vld [vmem:[%s1757 + $0x88] sm:$0xf]
        %v1793 = vld [vmem:[%s1757 + $0x8c] sm:$0xf]
        %v1794 = vld [vmem:[%s1757 + $0x90] sm:$0xf]
        %v1795 = vld [vmem:[%s1757 + $0x94] sm:$0xf]
        %v1796 = vld [vmem:[%s1757 + $0x98] sm:$0xf]
        %v1797 = vld [vmem:[%s1757 + $0x9c] sm:$0xf]
        %v1798 = vld [vmem:[%s1757 + $0xa0] sm:$0xf]
        %v1799 = vld [vmem:[%s1757 + $0xa4] sm:$0xf]
        %v1800 = vld [vmem:[%s1757 + $0xa8] sm:$0xf]
        %v1801 = vld [vmem:[%s1757 + $0xac] sm:$0xf]
        %v1802 = vld [vmem:[%s1757 + $0xb0] sm:$0xf]
        %v1803 = vld [vmem:[%s1757 + $0xb4] sm:$0xf]
        %v1804 = vld [vmem:[%s1757 + $0xb8] sm:$0xf]
        %v1805 = vld [vmem:[%s1757 + $0xbc] sm:$0xf]
        %v1806 = vld [vmem:[%s1757 + $0xc0] sm:$0xf]
        %v1807 = vld [vmem:[%s1757 + $0xc4] sm:$0xf]
        %v1808 = vld [vmem:[%s1757 + $0xc8] sm:$0xf]
        %v1809 = vld [vmem:[%s1757 + $0xcc] sm:$0xf]
        %v1810 = vld [vmem:[%s1757 + $0xd0] sm:$0xf]
        %v1811 = vld [vmem:[%s1757 + $0xd4] sm:$0xf]
        %v1812 = vld [vmem:[%s1757 + $0xd8] sm:$0xf]
        %v1813 = vld [vmem:[%s1757 + $0xdc] sm:$0xf]
        %v1814 = vld [vmem:[%s1757 + $0xe0] sm:$0xf]
        %v1815 = vld [vmem:[%s1757 + $0xe4] sm:$0xf]
        %v1816 = vld [vmem:[%s1757 + $0xe8] sm:$0xf]
        %v1817 = vld [vmem:[%s1757 + $0xec] sm:$0xf]
        %v1818 = vld [vmem:[%s1757 + $0xf0] sm:$0xf]
        %v1819 = vld [vmem:[%s1757 + $0xf4] sm:$0xf]
        %v1820 = vld [vmem:[%s1757 + $0xf8] sm:$0xf]
        %v1821 = vld [vmem:[%s1757 + $0xfc] sm:$0xf]
        %v1822 = vcombine.low %v1714, %v1728
        %v1823 = vcombine.high %v1714, %v1728
        %v1824 = vcombine.low %v1742, %v1756
        %v1825 = vcombine.high %v1742, %v1756
        %v1827 = vunpack.c.l.s4 1983009808
        %v1828 = vunpack.c.0.s8 %v1827
        %v1829 = vlaneseq
        %v1830 = vshrl.u32 %v1829, 7
        %v1831 = vsub.s32 %v1828, %v1830
        %v1832 = vrot.slane %v1822, %v1831
        %v1834 = vunpack.c.l.s4 1983009808
        %v1835 = vunpack.c.0.s8 %v1834
        %v1836 = vlaneseq
        %v1837 = vshrl.u32 %v1836, 7
        %v1838 = vsub.s32 %v1835, %v1837
        %v1839 = vrot.slane %v1823, %v1838
        %v1841 = vunpack.c.l.s4 1983009808
        %v1842 = vunpack.c.0.s8 %v1841
        %v1843 = vlaneseq
        %v1844 = vshrl.u32 %v1843, 7
        %v1845 = vsub.s32 %v1842, %v1844
        %v1846 = vrot.slane %v1824, %v1845
        %v1848 = vunpack.c.l.s4 1983009808
        %v1849 = vunpack.c.0.s8 %v1848
        %v1850 = vlaneseq
        %v1851 = vshrl.u32 %v1850, 7
        %v1852 = vsub.s32 %v1849, %v1851
        %v1853 = vrot.slane %v1825, %v1852
        %v1854 = vcombine.low %v1832, %v1846
        %v1855 = vcombine.high %v1832, %v1846
        %v1856 = vcombine.low %v1839, %v1853
        %v1857 = vcombine.high %v1839, %v1853
        %v1926 = vunpack.c.l.b16 %v1758
        %v1927 = vunpack.c.l.b16 %v1759
        %v1928 = vunpack.c.l.b16 %v1760
        %v1929 = vunpack.c.l.b16 %v1761
        %v1930 = vunpack.c.l.b16 %v1762
        %v1931 = vunpack.c.l.b16 %v1763
        %v1932 = vunpack.c.l.b16 %v1764
        %v1933 = vunpack.c.l.b16 %v1765
        %v1934 = vunpack.c.l.b16 %v1766
        %v1935 = vunpack.c.l.b16 %v1767
        %v1936 = vunpack.c.l.b16 %v1768
        %v1937 = vunpack.c.l.b16 %v1769
        %v1938 = vunpack.c.l.b16 %v1770
        %v1939 = vunpack.c.l.b16 %v1771
        %v1940 = vunpack.c.l.b16 %v1772
        %v1941 = vunpack.c.l.b16 %v1773
        %v1942 = vunpack.c.l.b16 %v1774
        %v1943 = vunpack.c.l.b16 %v1775
        %v1944 = vunpack.c.l.b16 %v1776
        %v1945 = vunpack.c.l.b16 %v1777
        %v1946 = vunpack.c.l.b16 %v1778
        %v1947 = vunpack.c.l.b16 %v1779
        %v1948 = vunpack.c.l.b16 %v1780
        %v1949 = vunpack.c.l.b16 %v1781
        %v1950 = vunpack.c.l.b16 %v1782
        %v1951 = vunpack.c.l.b16 %v1783
        %v1952 = vunpack.c.l.b16 %v1784
        %v1953 = vunpack.c.l.b16 %v1785
        %v1954 = vunpack.c.l.b16 %v1786
        %v1955 = vunpack.c.l.b16 %v1787
        %v1956 = vunpack.c.l.b16 %v1788
        %v1957 = vunpack.c.l.b16 %v1789
        %v1958 = vunpack.c.l.b16 %v1790
        %v1959 = vunpack.c.l.b16 %v1791
        %v1960 = vunpack.c.l.b16 %v1792
        %v1961 = vunpack.c.l.b16 %v1793
        %v1962 = vunpack.c.l.b16 %v1794
        %v1963 = vunpack.c.l.b16 %v1795
        %v1964 = vunpack.c.l.b16 %v1796
        %v1965 = vunpack.c.l.b16 %v1797
        %v1966 = vunpack.c.l.b16 %v1798
        %v1967 = vunpack.c.l.b16 %v1799
        %v1968 = vunpack.c.l.b16 %v1800
        %v1969 = vunpack.c.l.b16 %v1801
        %v1970 = vunpack.c.l.b16 %v1802
        %v1971 = vunpack.c.l.b16 %v1803
        %v1972 = vunpack.c.l.b16 %v1804
        %v1973 = vunpack.c.l.b16 %v1805
        %v1974 = vunpack.c.l.b16 %v1806
        %v1975 = vunpack.c.l.b16 %v1807
        %v1976 = vunpack.c.l.b16 %v1808
        %v1977 = vunpack.c.l.b16 %v1809
        %v1978 = vunpack.c.l.b16 %v1810
        %v1979 = vunpack.c.l.b16 %v1811
        %v1980 = vunpack.c.l.b16 %v1812
        %v1981 = vunpack.c.l.b16 %v1813
        %v1982 = vunpack.c.l.b16 %v1814
        %v1983 = vunpack.c.l.b16 %v1815
        %v1984 = vunpack.c.l.b16 %v1816
        %v1985 = vunpack.c.l.b16 %v1817
        %v1986 = vunpack.c.l.b16 %v1818
        %v1987 = vunpack.c.l.b16 %v1819
        %v1988 = vunpack.c.l.b16 %v1820
        %v1989 = vunpack.c.l.b16 %v1821
        %v1990 = vpack.c.b16 %v1927, %v1926
        %v1991 = vpack.c.b16 %v1929, %v1928
        %v1992 = vpack.c.b16 %v1931, %v1930
        %v1993 = vpack.c.b16 %v1933, %v1932
        %v1994 = vpack.c.b16 %v1935, %v1934
        %v1995 = vpack.c.b16 %v1937, %v1936
        %v1996 = vpack.c.b16 %v1939, %v1938
        %v1997 = vpack.c.b16 %v1941, %v1940
        %v1998 = vpack.c.b16 %v1943, %v1942
        %v1999 = vpack.c.b16 %v1945, %v1944
        %v2000 = vpack.c.b16 %v1947, %v1946
        %v2001 = vpack.c.b16 %v1949, %v1948
        %v2002 = vpack.c.b16 %v1951, %v1950
        %v2003 = vpack.c.b16 %v1953, %v1952
        %v2004 = vpack.c.b16 %v1955, %v1954
        %v2005 = vpack.c.b16 %v1957, %v1956
        %v2006 = vpack.c.b16 %v1959, %v1958
        %v2007 = vpack.c.b16 %v1961, %v1960
        %v2008 = vpack.c.b16 %v1963, %v1962
        %v2009 = vpack.c.b16 %v1965, %v1964
        %v2010 = vpack.c.b16 %v1967, %v1966
        %v2011 = vpack.c.b16 %v1969, %v1968
        %v2012 = vpack.c.b16 %v1971, %v1970
        %v2013 = vpack.c.b16 %v1973, %v1972
        %v2014 = vpack.c.b16 %v1975, %v1974
        %v2015 = vpack.c.b16 %v1977, %v1976
        %v2016 = vpack.c.b16 %v1979, %v1978
        %v2017 = vpack.c.b16 %v1981, %v1980
        %v2018 = vpack.c.b16 %v1983, %v1982
        %v2019 = vpack.c.b16 %v1985, %v1984
        %v2020 = vpack.c.b16 %v1987, %v1986
        %v2021 = vpack.c.b16 %v1989, %v1988
        %2054 = vmatprep.subr.bf16.mxu0 0
        %2055 = vmatpush1.bf16.msra.mxu0 %v1990
        %2056 = vmatprep.subr.bf16.mxu0 0
        %2057 = vmatpush1.bf16.msra.mxu0 %v1991
        %2058 = vmatprep.subr.bf16.mxu0 0
        %2059 = vmatpush1.bf16.msra.mxu0 %v1992
        %2060 = vmatprep.subr.bf16.mxu0 0
        %2061 = vmatpush1.bf16.msra.mxu0 %v1993
        %2062 = vmatprep.subr.bf16.mxu0 0
        %2063 = vmatpush1.bf16.msra.mxu0 %v1994
        %2064 = vmatprep.subr.bf16.mxu0 0
        %2065 = vmatpush1.bf16.msra.mxu0 %v1995
        %2066 = vmatprep.subr.bf16.mxu0 0
        %2067 = vmatpush1.bf16.msra.mxu0 %v1996
        %2068 = vmatprep.subr.bf16.mxu0 0
        %2069 = vmatpush1.bf16.msra.mxu0 %v1997
        %2070 = vmatprep.subr.bf16.mxu0 0
        %2071 = vmatpush1.bf16.msra.mxu0 %v1998
        %2072 = vmatprep.subr.bf16.mxu0 0
        %2073 = vmatpush1.bf16.msra.mxu0 %v1999
        %2074 = vmatprep.subr.bf16.mxu0 0
        %2075 = vmatpush1.bf16.msra.mxu0 %v2000
        %2076 = vmatprep.subr.bf16.mxu0 0
        %2077 = vmatpush1.bf16.msra.mxu0 %v2001
        %2078 = vmatprep.subr.bf16.mxu0 0
        %2079 = vmatpush1.bf16.msra.mxu0 %v2002
        %2080 = vmatprep.subr.bf16.mxu0 0
        %2081 = vmatpush1.bf16.msra.mxu0 %v2003
        %2082 = vmatprep.subr.bf16.mxu0 0
        %2083 = vmatpush1.bf16.msra.mxu0 %v2004
        %2084 = vmatprep.subr.bf16.mxu0 0
        %2085 = vmatpush1.bf16.msra.mxu0 %v2005
        %2086 = vmatprep.mubr.bf16.mxu0 %v1855
        %2087 = vmatmul.mubr.bf16.gmra.mrb[0].mxu0 %v1854
        %v2088 = vpop.f32.mrb[0].mxu0
        %v2089 = vadd.f32 0.0, %v2088
        %v2090 = vpop.f32.mrb[0].mxu0
        %v2091 = vpop.f32.mrb[0].mxu0
        %v2092 = vadd.f32 0.0, %v2091
        %v2093 = vpop.f32.mrb[0].mxu0
        %2094 = vdwg.mxu0
        %2095 = vmatprep.subr.bf16.mxu0 0
        %2096 = vmatpush1.bf16.msra.mxu0 %v2006
        %2097 = vmatprep.subr.bf16.mxu0 0
        %2098 = vmatpush1.bf16.msra.mxu0 %v2007
        %2099 = vmatprep.subr.bf16.mxu0 0
        %2100 = vmatpush1.bf16.msra.mxu0 %v2008
        %2101 = vmatprep.subr.bf16.mxu0 0
        %2102 = vmatpush1.bf16.msra.mxu0 %v2009
        %2103 = vmatprep.subr.bf16.mxu0 0
        %2104 = vmatpush1.bf16.msra.mxu0 %v2010
        %2105 = vmatprep.subr.bf16.mxu0 0
        %2106 = vmatpush1.bf16.msra.mxu0 %v2011
        %2107 = vmatprep.subr.bf16.mxu0 0
        %2108 = vmatpush1.bf16.msra.mxu0 %v2012
        %2109 = vmatprep.subr.bf16.mxu0 0
        %2110 = vmatpush1.bf16.msra.mxu0 %v2013
        %2111 = vmatprep.subr.bf16.mxu0 0
        %2112 = vmatpush1.bf16.msra.mxu0 %v2014
        %2113 = vmatprep.subr.bf16.mxu0 0
        %2114 = vmatpush1.bf16.msra.mxu0 %v2015
        %2115 = vmatprep.subr.bf16.mxu0 0
        %2116 = vmatpush1.bf16.msra.mxu0 %v2016
        %2117 = vmatprep.subr.bf16.mxu0 0
        %2118 = vmatpush1.bf16.msra.mxu0 %v2017
        %2119 = vmatprep.subr.bf16.mxu0 0
        %2120 = vmatpush1.bf16.msra.mxu0 %v2018
        %2121 = vmatprep.subr.bf16.mxu0 0
        %2122 = vmatpush1.bf16.msra.mxu0 %v2019
        %2123 = vmatprep.subr.bf16.mxu0 0
        %2124 = vmatpush1.bf16.msra.mxu0 %v2020
        %2125 = vmatprep.subr.bf16.mxu0 0
        %2126 = vmatpush1.bf16.msra.mxu0 %v2021
        %2127 = vmatprep.mubr.bf16.mxu0 %v1857
        %2128 = vmatmul.mubr.bf16.gmra.mrb[0].mxu0 %v1856
        %v2129 = vpop.f32.mrb[0].mxu0
        %v2130 = vadd.f32 %v2089, %v2129
        %v2131 = vpop.f32.mrb[0].mxu0
        %v2132 = vpop.f32.mrb[0].mxu0
        %v2133 = vadd.f32 %v2092, %v2132
        %v2134 = vpop.f32.mrb[0].mxu0
        %2135 = vdwg.mxu0
        %v2136 = vadd.f32 %v1619, %v2130
        %v2137 = vadd.f32 %v1620, %v2133
        %v2138 = vadd.f32 %v2136, %v2137
        %v2139 = vrot.slane %v2138, 4
        %v2140 = vadd.f32 %v2138, %v2139
        %v2141 = vrot.slane %v2140, 2
        %v2142 = vadd.f32 %v2140, %v2141
        %v2143 = vrot.slane %v2142, 1
        %v2144 = vadd.f32 %v2142, %v2143
        %v2145 = vmul.f32 %v2144, 0.0625
        %v2146 = vmul.f32 %v2136, %v2136
        %v2147 = vmul.f32 %v2137, %v2137
        %v2148 = vadd.f32 %v2146, %v2147
        %v2149 = vrot.slane %v2148, 4
        %v2150 = vadd.f32 %v2148, %v2149
        %v2151 = vrot.slane %v2150, 2
        %v2152 = vadd.f32 %v2150, %v2151
        %v2153 = vrot.slane %v2152, 1
        %v2154 = vadd.f32 %v2152, %v2153
        %v2155 = vmul.f32 %v2154, 0.0625
        %v2156 = vmul.f32 %v2145, %v2145
        %v2157 = vsub.f32 %v2155, %v2156
        %v2158 = vmax.f32 %v2157, 0.0
        %v2159 = vsub.f32 %v2136, %v2145
        %v2160 = vsub.f32 %v2137, %v2145
        %v2161 = vadd.f32 %v2158, 1e-05
        %v2162 = vrsqrt.pop %v2161
        %v2163 = vmul.f32 %v2159, %v2162
        %v2164 = vmul.f32 %v2160, %v2162
        %vm2165 = vcmp.gt.f32.partialorder %v2163, 0.0
        %vm2166 = vcmp.gt.f32.partialorder %v2164, 0.0
        %v2167 = vmul.f32 %v2163, 0.2
        %v2168 = vmul.f32 %v2164, 0.2
        %v2169 = vsel %vm2165, %v2163, %v2167
        %v2170 = vsel %vm2166, %v2164, %v2168
        %v2171 = vpack.c.bf16 %v2170, %v2169
        %v2173 = vunpack.c.l.b16 %v2171
        %v2174 = vunpack.c.h.b16 %v2171
        %v2175 = vpack.c.b16 %v2173, %v2173
        %v2176 = vpack.c.b16 %v2174, %v2174
        %2179 = vst [vmem:[%s185] sm:$0xf] %v2175
        %2180 = vst [vmem:[%s185 + $0x4] sm:$0xf] %v2176
        %p2181 = scmp.lt.s32.totalorder %s18, 1
        %s2182 = scalar_select %p2181, %s18, 1
        %p2183 = scmp.lt.s32.totalorder %s19, 0
        %s2184 = scalar_select %p2183, %s19, 0
        %s2185 = smul.addr %s2182, 2
        %s2186 = sadd.s32 %s2184, %s2185
        %s2187 = smul.addr %s2186, 4
        %s2188 = scalar_lea.vmem %s2, %s2187
        // Predicated region
        $region33: #{discriminator_forward.4} parent=27 // pred_check
          %p2189 = pneg %p98
        $region34: #{discriminator_forward.4} parent=27 // pred_check_branch
          %2191 = sbr.rel (%p2189) target = $region36
        $region35: #{discriminator_forward.4} parent=27 // pred_region
          _
        $region36: #{discriminator_forward.4} parent=27 // pred_fallthru
          _
      $region28: #{discriminator_forward.4} parent=5 // pred_fallthru
        _
      %p2192 = scmp.le.s32.totalorder 2, %s9
      // Predicated region
      $region37: #{discriminator_forward.4} parent=5 // pred_check
        %p2193 = pneg %p2192
      $region38: #{discriminator_forward.4} parent=5 // pred_check_branch
        %2195 = sbr.rel (%p2193) target = $region40
      $region39: #{discriminator_forward.4} parent=5 // pred_region
        %s2196 = ssub.s32 %s9, 2
        // Predicated region
        $region41: #{discriminator_forward.4} parent=39 // pred_check
          %p2197 = pneg %p104
        $region42: #{discriminator_forward.4} parent=39 // pred_check_branch
          %2199 = sbr.rel (%p2197) target = $region44
        $region43: #{discriminator_forward.4} parent=39 // pred_region
          %p2200 = scmp.lt.s32.totalorder %s20, 1
          %s2201 = scalar_select %p2200, %s20, 1
          %p2202 = scmp.lt.s32.totalorder %s21, 0
          %s2203 = scalar_select %p2202, %s21, 0
          %s2204 = smul.addr %s2201, 2
          %s2205 = sadd.s32 %s2203, %s2204
          %s2206 = smul.addr %s2205, 4
          %s2207 = scalar_lea.vmem %s2, %s2206
        $region44: #{discriminator_forward.4} parent=39 // pred_fallthru
          _
      $region40: #{discriminator_forward.4} parent=5 // pred_fallthru
        _
    $region6: #{discriminator_forward.4} parent=1 // loop_footer
      %s13 = sadd.s32 1, %s9
    $region7: #{discriminator_forward.4} parent=1 // loop_footer_branch
      %8 = sbr.rel target = $region3
    $region8: #{discriminator_forward.4} parent=1 // loop_exit
      _
    %2208 = vsyncpa [#allocation3], 1
    %s2209 = scalar_lea.sflag [#allocation3], 1
    %2210 = vsyncpa %s2209, 1

// kernel: discriminator_forward.5
$region0: #{discriminator_forward.5}
  #allocation0 [shape = 'u32[]', space=smem, size = 0x4, offset = 0x4, fixed_abs, tag = 'smem constant byte address 0x4 - core index']
  #allocation1 [shape = 'u32[144,128]{1,0:T(1,128)}', space=vmem, size = 0x12000, scoped, tag = 'internal scratch']
  #allocation2 [shape = 'f32[2,1024]{1,0:T(2,128)}', space=vmem, size = 0x2000, scoped, tag = 'scratch operand']
  %s0 = inlined_call_operand.vmem [shape: bf16[2,2048], index: 0, kind: input, shape index: {}]
  %s1 = inlined_call_operand.hbm [shape: bf16[2,2048,1024], index: 1, kind: input, shape index: {}]
  %s2 = inlined_call_operand.hbm [shape: bf16[2,1024,128], index: 2, kind: input, shape index: {}]
  %s3 = inlined_call_operand.vmem [shape: f32[2,2,128], index: 3, kind: output, shape index: {}]
  %s4 = sld [smem:[#allocation0]]
  $region61: #{discriminator_forward.5} parent=0
    _
  %s6 = ssub.s32 1, %s4
  %s7 = scalar_select 0, %s6, %s4
  $region1: #{discriminator_forward.5} parent=0
    #allocation3 [shape = 'u8[8388608]{0}', space=vmem, size = 0x800000, scoped, tag = 'input window, operand 1']
    #allocation4 [shape = 's32[2]{0}', space=sflag, size = 0x8, scoped, tag = 'scoped memory for discriminator_forward.5']
    #allocation5 [shape = 'u8[524288]{0}', space=vmem, size = 0x80000, scoped, tag = 'input window, operand 2']
    #allocation6 [shape = 's32[2]{0}', space=sflag, size = 0x8, scoped, tag = 'scoped memory for discriminator_forward.5']
    %8 = vsyncpa [#allocation4], 0
    %s9 = scalar_lea.sflag [#allocation4], 1
    %10 = vsyncpa %s9, 0
    %11 = vsyncpa [#allocation6], 0
    %s12 = scalar_lea.sflag [#allocation6], 1
    %13 = vsyncpa %s12, 0
    loop: start=0, step=1, limit=4
    $region2: #{discriminator_forward.5} parent=1 // loop_pre_header
      _
    $region3: #{discriminator_forward.5} parent=1 // loop_header
      %s15 = sphi 0, %s19
      %p16 = scmp.ge.s32.totalorder %s15, 4
      %s22 = sphi 0, %s34
      %s23 = sphi 0, %s30
      %s24 = sphi 0, %s22
      %s25 = sphi 0, %s23
      %s26 = sphi 0, %s24
      %s27 = sphi 0, %s25
      %s37 = sphi 0, %s39
      %s40 = sphi 0, %s37
      %s41 = sphi 0, %s40
      %s57 = sphi 0, %s41
      %s65 = sphi 0, %s67
      %s68 = sphi 0, %s65
      %s69 = sphi 0, %s68
      %s85 = sphi 0, %s69
      %s91 = sphi 0, %s93
      %s94 = sphi 0, %s91
      %s95 = sphi 0, %s94
      %s111 = sphi 0, %s95
      %s117 = sphi 0, %s119
      %s120 = sphi 0, %s117
      %s121 = sphi 0, %s120
      %s137 = sphi 0, %s121
    $region4: #{discriminator_forward.5} parent=1 // loop_header_branch
      %18 = sbr.rel (%p16) target = $region8
    $region5: #{discriminator_forward.5} parent=1 // loop_body
      %s20 = ssub.s32 %s15, 1
      %s21 = ssub.s32 %s15, 2
      %s28 = sadd.s32 1, %s23
      %p29 = scmp.ge.s32.totalorder %s28, 1
      %s30 = scalar_select %p29, 0, %s28
      %s31 = sadd.s32 1, %s22
      %s32 = scalar_select %p29, %s31, %s22
      %p33 = scmp.ge.s32.totalorder %s32, 2
      %s34 = scalar_select %p33, 0, %s32
      %s35 = ssub.s32 %s23, %s30
      %p36 = scmp.eq.s32.totalorder %s35, 0
      %s38 = sadd.s32 %s37, 1
      %s39 = scalar_select %p36, %s37, %s38
      %p42 = pneg %p36
      %p43 = scmp.eq.s32.totalorder %s15, 1
      %p44 = por %p42, %p43
      %p45 = scmp.ne.s32.totalorder %s37, %s40
      %p46 = scmp.eq.s32.totalorder %s15, 0
      %p47 = por %p45, %p46
      %p48 = scmp.ne.s32.totalorder %s37, %s40
      %p49 = scmp.eq.s32.totalorder %s20, 1
      %p50 = por %p48, %p49
      %p51 = scmp.ne.s32.totalorder %s40, %s41
      %p52 = scmp.eq.s32.totalorder %s20, 0
      %p53 = por %p51, %p52
      %p54 = scmp.ne.s32.totalorder %s40, %s41
      %p55 = scmp.eq.s32.totalorder %s21, 1
      %p56 = por %p54, %p55
      %p58 = scmp.ne.s32.totalorder %s41, %s57
      %p59 = scmp.eq.s32.totalorder %s21, 0
      %p60 = por %p58, %p59
      %s61 = ssub.s32 %s22, %s34
      %s62 = ssub.s32 %s23, %s30
      %s63 = sor.u32 %s61, %s62
      %p64 = scmp.eq.s32.totalorder %s63, 0
      %s66 = sadd.s32 %s65, 1
      %s67 = scalar_select %p64, %s65, %s66
      %p70 = pneg %p64
      %p71 = scmp.eq.s32.totalorder %s15, 1
      %p72 = por %p70, %p71
      %p73 = scmp.ne.s32.totalorder %s65, %s68
      %p74 = scmp.eq.s32.totalorder %s15, 0
      %p75 = por %p73, %p74
      %p76 = scmp.ne.s32.totalorder %s65, %s68
      %p77 = scmp.eq.s32.totalorder %s20, 1
      %p78 = por %p76, %p77
      %p79 = scmp.ne.s32.totalorder %s68, %s69
      %p80 = scmp.eq.s32.totalorder %s20, 0
      %p81 = por %p79, %p80
      %p82 = scmp.ne.s32.totalorder %s68, %s69
      %p83 = scmp.eq.s32.totalorder %s21, 1
      %p84 = por %p82, %p83
      %p86 = scmp.ne.s32.totalorder %s69, %s85
      %p87 = scmp.eq.s32.totalorder %s21, 0
      %p88 = por %p86, %p87
      %s89 = ssub.s32 %s22, %s34
      %p90 = scmp.eq.s32.totalorder %s89, 0
      %s92 = sadd.s32 %s91, 1
      %s93 = scalar_select %p90, %s91, %s92
      %p96 = pneg %p90
      %p97 = scmp.eq.s32.totalorder %s15, 1
      %p98 = por %p96, %p97
      %p99 = scmp.ne.s32.totalorder %s91, %s94
      %p100 = scmp.eq.s32.totalorder %s15, 0
      %p101 = por %p99, %p100
      %p102 = scmp.ne.s32.totalorder %s91, %s94
      %p103 = scmp.eq.s32.totalorder %s20, 1
      %p104 = por %p102, %p103
      %p105 = scmp.ne.s32.totalorder %s94, %s95
      %p106 = scmp.eq.s32.totalorder %s20, 0
      %p107 = por %p105, %p106
      %p108 = scmp.ne.s32.totalorder %s94, %s95
      %p109 = scmp.eq.s32.totalorder %s21, 1
      %p110 = por %p108, %p109
      %p112 = scmp.ne.s32.totalorder %s95, %s111
      %p113 = scmp.eq.s32.totalorder %s21, 0
      %p114 = por %p112, %p113
      %s115 = ssub.s32 %s22, %s34
      %p116 = scmp.eq.s32.totalorder %s115, 0
      %s118 = sadd.s32 %s117, 1
      %s119 = scalar_select %p116, %s117, %s118
      %p122 = pneg %p116
      %p123 = scmp.eq.s32.totalorder %s15, 1
      %p124 = por %p122, %p123
      %p125 = scmp.ne.s32.totalorder %s117, %s120
      %p126 = scmp.eq.s32.totalorder %s15, 0
      %p127 = por %p125, %p126
      %p128 = scmp.ne.s32.totalorder %s117, %s120
      %p129 = scmp.eq.s32.totalorder %s20, 1
      %p130 = por %p128, %p129
      %p131 = scmp.ne.s32.totalorder %s120, %s121
      %p132 = scmp.eq.s32.totalorder %s20, 0
      %p133 = por %p131, %p132
      %p134 = scmp.ne.s32.totalorder %s120, %s121
      %p135 = scmp.eq.s32.totalorder %s21, 1
      %p136 = por %p134, %p135
      %p138 = scmp.ne.s32.totalorder %s121, %s137
      %p139 = scmp.eq.s32.totalorder %s21, 0
      %p140 = por %p138, %p139
      %p141 = scmp.le.s32.totalorder 1, %s15
      %p142 = scmp.lt.s32.totalorder %s15, 3
      %p143 = pnand %p141, %p142
      %p144 = pneg %p143
      // Predicated region
      $region9: #{discriminator_forward.5} parent=5 // pred_check
        _
      $region10: #{discriminator_forward.5} parent=5 // pred_check_branch
        %146 = sbr.rel (%p143) target = $region12
      $region11: #{discriminator_forward.5} parent=5 // pred_region
        %s147 = ssub.s32 %s15, 1
        // Predicated region
        $region13: #{discriminator_forward.5} parent=11 // pred_check
          %p148 = pneg %p53
        $region14: #{discriminator_forward.5} parent=11 // pred_check_branch
          %150 = sbr.rel (%p148) target = $region16
        $region15: #{discriminator_forward.5} parent=11 // pred_region
          %s151 = smul.u32 16, %s25
          %p152 = scmp.lt.s32.totalorder %s151, 15
          %s153 = scalar_select %p152, %s151, 15
          %s154 = scalar_lea.vmem %s0, %s153
          %s155 = smul.u32 16, %s25
        $region16: #{discriminator_forward.5} parent=11 // pred_fallthru
          _
      $region12: #{discriminator_forward.5} parent=5 // pred_fallthru
        _
      %p156 = scmp.lt.s32.totalorder %s15, 2
      // Predicated region
      $region17: #{discriminator_forward.5} parent=5 // pred_check
        %p157 = pneg %p156
      $region18: #{discriminator_forward.5} parent=5 // pred_check_branch
        %159 = sbr.rel (%p157) target = $region20
      $region19: #{discriminator_forward.5} parent=5 // pred_region
        // Predicated region
        $region21: #{discriminator_forward.5} parent=19 // pred_check
          %p160 = pneg %p75
        $region22: #{discriminator_forward.5} parent=19 // pred_check_branch
          %162 = sbr.rel (%p160) target = $region24
        $region23: #{discriminator_forward.5} parent=19 // pred_region
          %s163 = sand.u32 %s65, 1
          %s164 = scalar_lea.sflag [#allocation4], %s163
          %s165 = sand.u32 %s65, 1
          %s166 = smul.addr %s165, 8192
          %s167 = scalar_lea.vmem [#allocation3], %s166
          %s168 = smul.u32 256, %s23
          %s170 = ssub.s32 131072, 131072
          %171 = vsyncadd %s164, %s170
          %s172 = smul.addr %s168, 8
          %s173 = smul.addr %s22, 2048
          %s174 = sadd.s32 %s172, %s173
          %s175 = smul.addr %s174, 64
          %s176 = scalar_lea.hbm %s1, %s175
          %s177 = sshll.u32 %s167, 4
          %s178 = int_to_ptr.vmem [resolvable:$true] %s177
          %183 = dma.hbm_to_vmem [thread:$0]  %s176, 131072, %s178, %s164, 512, 512, 32
        $region24: #{discriminator_forward.5} parent=19 // pred_fallthru
          _
        // Predicated region
        $region25: #{discriminator_forward.5} parent=19 // pred_check
          %p184 = pneg %p101
        $region26: #{discriminator_forward.5} parent=19 // pred_check_branch
          %186 = sbr.rel (%p184) target = $region28
        $region27: #{discriminator_forward.5} parent=19 // pred_region
          %s187 = sand.u32 %s91, 1
          %s188 = scalar_lea.sflag [#allocation6], %s187
          %s189 = sand.u32 %s91, 1
          %s190 = smul.addr %s189, 512
          %s191 = scalar_lea.vmem [#allocation5], %s190
          %s193 = ssub.s32 8192, 8192
          %194 = vsyncadd %s188, %s193
          %s195 = smul.addr %s22, 128
          %s196 = smul.addr %s195, 64
          %s197 = scalar_lea.hbm %s2, %s196
          %s198 = sshll.u32 %s191, 4
          %s199 = int_to_ptr.vmem [resolvable:$true] %s198
          %204 = dma.hbm_to_vmem [thread:$0]  %s197, 8192, %s199, %s188, 64, 64, 4
        $region28: #{discriminator_forward.5} parent=19 // pred_fallthru
          _
      $region20: #{discriminator_forward.5} parent=5 // pred_fallthru
        _
      %p205 = scmp.le.s32.totalorder 1, %s15
      %p206 = scmp.lt.s32.totalorder %s15, 3
      %p207 = pnand %p205, %p206
      %p208 = pneg %p207
      // Predicated region
      $region29: #{discriminator_forward.5} parent=5 // pred_check
        _
      $region30: #{discriminator_forward.5} parent=5 // pred_check_branch
        %210 = sbr.rel (%p207) target = $region32
      $region31: #{discriminator_forward.5} parent=5 // pred_region
        %s211 = ssub.s32 %s15, 1
        %s212 = sand.u32 %s68, 1
        %s213 = scalar_lea.sflag [#allocation4], %s212
        %s214 = sand.u32 %s68, 1
        %s215 = smul.addr %s214, 8192
        %s216 = scalar_lea.vmem [#allocation3], %s215
        // Predicated region
        $region33: #{discriminator_forward.5} parent=31 // pred_check
          %p217 = pneg %p81
        $region34: #{discriminator_forward.5} parent=31 // pred_check_branch
          %219 = sbr.rel (%p217) target = $region36
        $region35: #{discriminator_forward.5} parent=31 // pred_region
          %220 = dma.done %s213, 131072
        $region36: #{discriminator_forward.5} parent=31 // pred_fallthru
          _
        %s221 = sand.u32 %s94, 1
        %s222 = scalar_lea.sflag [#allocation6], %s221
        %s223 = sand.u32 %s94, 1
        %s224 = smul.addr %s223, 512
        %s225 = scalar_lea.vmem [#allocation5], %s224
        // Predicated region
        $region37: #{discriminator_forward.5} parent=31 // pred_check
          %p226 = pneg %p107
        $region38: #{discriminator_forward.5} parent=31 // pred_check_branch
          %228 = sbr.rel (%p226) target = $region40
        $region39: #{discriminator_forward.5} parent=31 // pred_region
          %229 = dma.done %s222, 8192
        $region40: #{discriminator_forward.5} parent=31 // pred_fallthru
          _
        %s230 = smul.u32 16, %s25
        %p231 = scmp.lt.s32.totalorder %s230, 15
        %s232 = scalar_select %p231, %s230, 15
        %s233 = scalar_lea.vmem %s0, %s232
        %p234 = pneg %p53
        %p235 = pneg %p50
        %s236 = sand.u32 %s68, 1
        %s237 = scalar_lea.sflag [#allocation4], %s236
        %s238 = sand.u32 %s68, 1
        %s239 = smul.addr %s238, 8192
        %s240 = scalar_lea.vmem [#allocation3], %s239
        %p241 = pneg %p81
        %p242 = pneg %p78
        %s243 = sand.u32 %s94, 1
        %s244 = scalar_lea.sflag [#allocation6], %s243
        %s245 = sand.u32 %s94, 1
        %s246 = smul.addr %s245, 512
        %s247 = scalar_lea.vmem [#allocation5], %s246
        %p248 = pneg %p107
        %p249 = pneg %p104
        %p250 = pneg %p133
        %p251 = pneg %p130
        %p252 = scmp.lt.s32.totalorder %s24, 1
        %s253 = scalar_select %p252, %s24, 1
        %s254 = smul.addr %s253, 2
        %s255 = scalar_lea.vmem %s3, %s254
        %s256 = smul.u32 16, %s25
        %p257 = scmp.lt.s32.totalorder %s256, 15
        %s258 = scalar_select %p257, %s256, 15
        %s259 = scalar_lea.vmem %s0, %s258
        %s260 = smul.u32 16, %s25
        %s261 = smul.u32 256, %s25
        %p262 = scmp.lt.s32.totalorder %s24, 1
        %s263 = scalar_select %p262, %s24, 1
        %s264 = smul.addr %s263, 2
        %s265 = scalar_lea.vmem %s3, %s264
        %p267 = scmp.eq.s32.totalorder %s25, 0
        // Predicated region
        $region41: #{discriminator_forward.5} parent=31 // pred_check
          %p268 = pneg %p267
        $region42: #{discriminator_forward.5} parent=31 // pred_check_branch
          %270 = sbr.rel (%p268) target = $region44
        $region43: #{discriminator_forward.5} parent=31 // pred_region
          %271 = vst [vmem:[#allocation2] sm:$0xff] 0.0
          %272 = vst [vmem:[#allocation2 + $0x8] sm:$0xff] 0.0
        $region44: #{discriminator_forward.5} parent=31 // pred_fallthru
          _
        %v273 = vld [vmem:[#allocation2] sm:$0xff]
        %v274 = vld [vmem:[#allocation2 + $0x8] sm:$0xff]
        %v275 = vld [vmem:[%s259] sm:$0xff]
        %v276 = vld [vmem:[%s259 + $0x8] sm:$0xff]
        %v277 = vld [vmem:[%s216] sm:$0xff]
        %v278 = vld [vmem:[%s216 + $0x8] sm:$0xff]
        %v279 = vld [vmem:[%s216 + $0x10] sm:$0xff]
        %v280 = vld [vmem:[%s216 + $0x18] sm:$0xff]
        %v281 = vld [vmem:[%s216 + $0x20] sm:$0xff]
        %v282 = vld [vmem:[%s216 + $0x28] sm:$0xff]
        %v283 = vld [vmem:[%s216 + $0x30] sm:$0xff]
        %v284 = vld [vmem:[%s216 + $0x38] sm:$0xff]
        %v285 = vld [vmem:[%s216 + $0x40] sm:$0xff]
        %v286 = vld [vmem:[%s216 + $0x48] sm:$0xff]
        %v287 = vld [vmem:[%s216 + $0x50] sm:$0xff]
        %v288 = vld [vmem:[%s216 + $0x58] sm:$0xff]
        %v289 = vld [vmem:[%s216 + $0x60] sm:$0xff]
        %v290 = vld [vmem:[%s216 + $0x68] sm:$0xff]
        %v291 = vld [vmem:[%s216 + $0x70] sm:$0xff]
        %v292 = vld [vmem:[%s216 + $0x78] sm:$0xff]
        %v293 = vld [vmem:[%s216 + $0x80] sm:$0xff]
        %v294 = vld [vmem:[%s216 + $0x88] sm:$0xff]
        %v295 = vld [vmem:[%s216 + $0x90] sm:$0xff]
        %v296 = vld [vmem:[%s216 + $0x98] sm:$0xff]
        %v297 = vld [vmem:[%s216 + $0xa0] sm:$0xff]
        %v298 = vld [vmem:[%s216 + $0xa8] sm:$0xff]
        %v299 = vld [vmem:[%s216 + $0xb0] sm:$0xff]
        %v300 = vld [vmem:[%s216 + $0xb8] sm:$0xff]
        %v301 = vld [vmem:[%s216 + $0xc0] sm:$0xff]
        %v302 = vld [vmem:[%s216 + $0xc8] sm:$0xff]
        %v303 = vld [vmem:[%s216 + $0xd0] sm:$0xff]
        %v304 = vld [vmem:[%s216 + $0xd8] sm:$0xff]
        %v305 = vld [vmem:[%s216 + $0xe0] sm:$0xff]
        %v306 = vld [vmem:[%s216 + $0xe8] sm:$0xff]
        %v307 = vld [vmem:[%s216 + $0xf0] sm:$0xff]
        %v308 = vld [vmem:[%s216 + $0xf8] sm:$0xff]
        %v309 = vld [vmem:[%s216 + $0x100] sm:$0xff]
        %v310 = vld [vmem:[%s216 + $0x108] sm:$0xff]
        %v311 = vld [vmem:[%s216 + $0x110] sm:$0xff]
        %v312 = vld [vmem:[%s216 + $0x118] sm:$0xff]
        %v313 = vld [vmem:[%s216 + $0x120] sm:$0xff]
        %v314 = vld [vmem:[%s216 + $0x128] sm:$0xff]
        %v315 = vld [vmem:[%s216 + $0x130] sm:$0xff]
        %v316 = vld [vmem:[%s216 + $0x138] sm:$0xff]
        %v317 = vld [vmem:[%s216 + $0x140] sm:$0xff]
        %v318 = vld [vmem:[%s216 + $0x148] sm:$0xff]
        %v319 = vld [vmem:[%s216 + $0x150] sm:$0xff]
        %v320 = vld [vmem:[%s216 + $0x158] sm:$0xff]
        %v321 = vld [vmem:[%s216 + $0x160] sm:$0xff]
        %v322 = vld [vmem:[%s216 + $0x168] sm:$0xff]
        %v323 = vld [vmem:[%s216 + $0x170] sm:$0xff]
        %v324 = vld [vmem:[%s216 + $0x178] sm:$0xff]
        %v325 = vld [vmem:[%s216 + $0x180] sm:$0xff]
        %v326 = vld [vmem:[%s216 + $0x188] sm:$0xff]
        %v327 = vld [vmem:[%s216 + $0x190] sm:$0xff]
        %v328 = vld [vmem:[%s216 + $0x198] sm:$0xff]
        %v329 = vld [vmem:[%s216 + $0x1a0] sm:$0xff]
        %v330 = vld [vmem:[%s216 + $0x1a8] sm:$0xff]
        %v331 = vld [vmem:[%s216 + $0x1b0] sm:$0xff]
        %v332 = vld [vmem:[%s216 + $0x1b8] sm:$0xff]
        %v333 = vld [vmem:[%s216 + $0x1c0] sm:$0xff]
        %v334 = vld [vmem:[%s216 + $0x1c8] sm:$0xff]
        %v335 = vld [vmem:[%s216 + $0x1d0] sm:$0xff]
        %v336 = vld [vmem:[%s216 + $0x1d8] sm:$0xff]
        %v337 = vld [vmem:[%s216 + $0x1e0] sm:$0xff]
        %v338 = vld [vmem:[%s216 + $0x1e8] sm:$0xff]
        %v339 = vld [vmem:[%s216 + $0x1f0] sm:$0xff]
        %v340 = vld [vmem:[%s216 + $0x1f8] sm:$0xff]
        %v341 = vld [vmem:[%s216 + $0x200] sm:$0xff]
        %v342 = vld [vmem:[%s216 + $0x208] sm:$0xff]
        %v343 = vld [vmem:[%s216 + $0x210] sm:$0xff]
        %v344 = vld [vmem:[%s216 + $0x218] sm:$0xff]
        %v345 = vld [vmem:[%s216 + $0x220] sm:$0xff]
        %v346 = vld [vmem:[%s216 + $0x228] sm:$0xff]
        %v347 = vld [vmem:[%s216 + $0x230] sm:$0xff]
        %v348 = vld [vmem:[%s216 + $0x238] sm:$0xff]
        %v349 = vld [vmem:[%s216 + $0x240] sm:$0xff]
        %v350 = vld [vmem:[%s216 + $0x248] sm:$0xff]
        %v351 = vld [vmem:[%s216 + $0x250] sm:$0xff]
        %v352 = vld [vmem:[%s216 + $0x258] sm:$0xff]
        %v353 = vld [vmem:[%s216 + $0x260] sm:$0xff]
        %v354 = vld [vmem:[%s216 + $0x268] sm:$0xff]
        %v355 = vld [vmem:[%s216 + $0x270] sm:$0xff]
        %v356 = vld [vmem:[%s216 + $0x278] sm:$0xff]
        %v357 = vld [vmem:[%s216 + $0x280] sm:$0xff]
        %v358 = vld [vmem:[%s216 + $0x288] sm:$0xff]
        %v359 = vld [vmem:[%s216 + $0x290] sm:$0xff]
        %v360 = vld [vmem:[%s216 + $0x298] sm:$0xff]
        %v361 = vld [vmem:[%s216 + $0x2a0] sm:$0xff]
        %v362 = vld [vmem:[%s216 + $0x2a8] sm:$0xff]
        %v363 = vld [vmem:[%s216 + $0x2b0] sm:$0xff]
        %v364 = vld [vmem:[%s216 + $0x2b8] sm:$0xff]
        %v365 = vld [vmem:[%s216 + $0x2c0] sm:$0xff]
        %v366 = vld [vmem:[%s216 + $0x2c8] sm:$0xff]
        %v367 = vld [vmem:[%s216 + $0x2d0] sm:$0xff]
        %v368 = vld [vmem:[%s216 + $0x2d8] sm:$0xff]
        %v369 = vld [vmem:[%s216 + $0x2e0] sm:$0xff]
        %v370 = vld [vmem:[%s216 + $0x2e8] sm:$0xff]
        %v371 = vld [vmem:[%s216 + $0x2f0] sm:$0xff]
        %v372 = vld [vmem:[%s216 + $0x2f8] sm:$0xff]
        %v373 = vld [vmem:[%s216 + $0x300] sm:$0xff]
        %v374 = vld [vmem:[%s216 + $0x308] sm:$0xff]
        %v375 = vld [vmem:[%s216 + $0x310] sm:$0xff]
        %v376 = vld [vmem:[%s216 + $0x318] sm:$0xff]
        %v377 = vld [vmem:[%s216 + $0x320] sm:$0xff]
        %v378 = vld [vmem:[%s216 + $0x328] sm:$0xff]
        %v379 = vld [vmem:[%s216 + $0x330] sm:$0xff]
        %v380 = vld [vmem:[%s216 + $0x338] sm:$0xff]
        %v381 = vld [vmem:[%s216 + $0x340] sm:$0xff]
        %v382 = vld [vmem:[%s216 + $0x348] sm:$0xff]
        %v383 = vld [vmem:[%s216 + $0x350] sm:$0xff]
        %v384 = vld [vmem:[%s216 + $0x358] sm:$0xff]
        %v385 = vld [vmem:[%s216 + $0x360] sm:$0xff]
        %v386 = vld [vmem:[%s216 + $0x368] sm:$0xff]
        %v387 = vld [vmem:[%s216 + $0x370] sm:$0xff]
        %v388 = vld [vmem:[%s216 + $0x378] sm:$0xff]
        %v389 = vld [vmem:[%s216 + $0x380] sm:$0xff]
        %v390 = vld [vmem:[%s216 + $0x388] sm:$0xff]
        %v391 = vld [vmem:[%s216 + $0x390] sm:$0xff]
        %v392 = vld [vmem:[%s216 + $0x398] sm:$0xff]
        %v393 = vld [vmem:[%s216 + $0x3a0] sm:$0xff]
        %v394 = vld [vmem:[%s216 + $0x3a8] sm:$0xff]
        %v395 = vld [vmem:[%s216 + $0x3b0] sm:$0xff]
        %v396 = vld [vmem:[%s216 + $0x3b8] sm:$0xff]
        %v397 = vld [vmem:[%s216 + $0x3c0] sm:$0xff]
        %v398 = vld [vmem:[%s216 + $0x3c8] sm:$0xff]
        %v399 = vld [vmem:[%s216 + $0x3d0] sm:$0xff]
        %v400 = vld [vmem:[%s216 + $0x3d8] sm:$0xff]
        %v401 = vld [vmem:[%s216 + $0x3e0] sm:$0xff]
        %v402 = vld [vmem:[%s216 + $0x3e8] sm:$0xff]
        %v403 = vld [vmem:[%s216 + $0x3f0] sm:$0xff]
        %v404 = vld [vmem:[%s216 + $0x3f8] sm:$0xff]
        %v405 = vld [vmem:[%s216 + $0x400] sm:$0xff]
        %v406 = vld [vmem:[%s216 + $0x408] sm:$0xff]
        %v407 = vld [vmem:[%s216 + $0x410] sm:$0xff]
        %v408 = vld [vmem:[%s216 + $0x418] sm:$0xff]
        %v409 = vld [vmem:[%s216 + $0x420] sm:$0xff]
        %v410 = vld [vmem:[%s216 + $0x428] sm:$0xff]
        %v411 = vld [vmem:[%s216 + $0x430] sm:$0xff]
        %v412 = vld [vmem:[%s216 + $0x438] sm:$0xff]
        %v413 = vld [vmem:[%s216 + $0x440] sm:$0xff]
        %v414 = vld [vmem:[%s216 + $0x448] sm:$0xff]
        %v415 = vld [vmem:[%s216 + $0x450] sm:$0xff]
        %v416 = vld [vmem:[%s216 + $0x458] sm:$0xff]
        %v417 = vld [vmem:[%s216 + $0x460] sm:$0xff]
        %v418 = vld [vmem:[%s216 + $0x468] sm:$0xff]
        %v419 = vld [vmem:[%s216 + $0x470] sm:$0xff]
        %v420 = vld [vmem:[%s216 + $0x478] sm:$0xff]
        %v421 = vld [vmem:[%s216 + $0x480] sm:$0xff]
        %v422 = vld [vmem:[%s216 + $0x488] sm:$0xff]
        %v423 = vld [vmem:[%s216 + $0x490] sm:$0xff]
        %v424 = vld [vmem:[%s216 + $0x498] sm:$0xff]
        %v425 = vld [vmem:[%s216 + $0x4a0] sm:$0xff]
        %v426 = vld [vmem:[%s216 + $0x4a8] sm:$0xff]
        %v427 = vld [vmem:[%s216 + $0x4b0] sm:$0xff]
        %v428 = vld [vmem:[%s216 + $0x4b8] sm:$0xff]
        %v429 = vld [vmem:[%s216 + $0x4c0] sm:$0xff]
        %v430 = vld [vmem:[%s216 + $0x4c8] sm:$0xff]
        %v431 = vld [vmem:[%s216 + $0x4d0] sm:$0xff]
        %v432 = vld [vmem:[%s216 + $0x4d8] sm:$0xff]
        %v433 = vld [vmem:[%s216 + $0x4e0] sm:$0xff]
        %v434 = vld [vmem:[%s216 + $0x4e8] sm:$0xff]
        %v435 = vld [vmem:[%s216 + $0x4f0] sm:$0xff]
        %v436 = vld [vmem:[%s216 + $0x4f8] sm:$0xff]
        %v437 = vld [vmem:[%s216 + $0x500] sm:$0xff]
        %v438 = vld [vmem:[%s216 + $0x508] sm:$0xff]
        %v439 = vld [vmem:[%s216 + $0x510] sm:$0xff]
        %v440 = vld [vmem:[%s216 + $0x518] sm:$0xff]
        %v441 = vld [vmem:[%s216 + $0x520] sm:$0xff]
        %v442 = vld [vmem:[%s216 + $0x528] sm:$0xff]
        %v443 = vld [vmem:[%s216 + $0x530] sm:$0xff]
        %v444 = vld [vmem:[%s216 + $0x538] sm:$0xff]
        %v445 = vld [vmem:[%s216 + $0x540] sm:$0xff]
        %v446 = vld [vmem:[%s216 + $0x548] sm:$0xff]
        %v447 = vld [vmem:[%s216 + $0x550] sm:$0xff]
        %v448 = vld [vmem:[%s216 + $0x558] sm:$0xff]
        %v449 = vld [vmem:[%s216 + $0x560] sm:$0xff]
        %v450 = vld [vmem:[%s216 + $0x568] sm:$0xff]
        %v451 = vld [vmem:[%s216 + $0x570] sm:$0xff]
        %v452 = vld [vmem:[%s216 + $0x578] sm:$0xff]
        %v453 = vld [vmem:[%s216 + $0x580] sm:$0xff]
        %v454 = vld [vmem:[%s216 + $0x588] sm:$0xff]
        %v455 = vld [vmem:[%s216 + $0x590] sm:$0xff]
        %v456 = vld [vmem:[%s216 + $0x598] sm:$0xff]
        %v457 = vld [vmem:[%s216 + $0x5a0] sm:$0xff]
        %v458 = vld [vmem:[%s216 + $0x5a8] sm:$0xff]
        %v459 = vld [vmem:[%s216 + $0x5b0] sm:$0xff]
        %v460 = vld [vmem:[%s216 + $0x5b8] sm:$0xff]
        %v461 = vld [vmem:[%s216 + $0x5c0] sm:$0xff]
        %v462 = vld [vmem:[%s216 + $0x5c8] sm:$0xff]
        %v463 = vld [vmem:[%s216 + $0x5d0] sm:$0xff]
        %v464 = vld [vmem:[%s216 + $0x5d8] sm:$0xff]
        %v465 = vld [vmem:[%s216 + $0x5e0] sm:$0xff]
        %v466 = vld [vmem:[%s216 + $0x5e8] sm:$0xff]
        %v467 = vld [vmem:[%s216 + $0x5f0] sm:$0xff]
        %v468 = vld [vmem:[%s216 + $0x5f8] sm:$0xff]
        %v469 = vld [vmem:[%s216 + $0x600] sm:$0xff]
        %v470 = vld [vmem:[%s216 + $0x608] sm:$0xff]
        %v471 = vld [vmem:[%s216 + $0x610] sm:$0xff]
        %v472 = vld [vmem:[%s216 + $0x618] sm:$0xff]
        %v473 = vld [vmem:[%s216 + $0x620] sm:$0xff]
        %v474 = vld [vmem:[%s216 + $0x628] sm:$0xff]
        %v475 = vld [vmem:[%s216 + $0x630] sm:$0xff]
        %v476 = vld [vmem:[%s216 + $0x638] sm:$0xff]
        %v477 = vld [vmem:[%s216 + $0x640] sm:$0xff]
        %v478 = vld [vmem:[%s216 + $0x648] sm:$0xff]
        %v479 = vld [vmem:[%s216 + $0x650] sm:$0xff]
        %v480 = vld [vmem:[%s216 + $0x658] sm:$0xff]
        %v481 = vld [vmem:[%s216 + $0x660] sm:$0xff]
        %v482 = vld [vmem:[%s216 + $0x668] sm:$0xff]
        %v483 = vld [vmem:[%s216 + $0x670] sm:$0xff]
        %v484 = vld [vmem:[%s216 + $0x678] sm:$0xff]
        %v485 = vld [vmem:[%s216 + $0x680] sm:$0xff]
        %v486 = vld [vmem:[%s216 + $0x688] sm:$0xff]
        %v487 = vld [vmem:[%s216 + $0x690] sm:$0xff]
        %v488 = vld [vmem:[%s216 + $0x698] sm:$0xff]
        %v489 = vld [vmem:[%s216 + $0x6a0] sm:$0xff]
        %v490 = vld [vmem:[%s216 + $0x6a8] sm:$0xff]
        %v491 = vld [vmem:[%s216 + $0x6b0] sm:$0xff]
        %v492 = vld [vmem:[%s216 + $0x6b8] sm:$0xff]
        %v493 = vld [vmem:[%s216 + $0x6c0] sm:$0xff]
        %v494 = vld [vmem:[%s216 + $0x6c8] sm:$0xff]
        %v495 = vld [vmem:[%s216 + $0x6d0] sm:$0xff]
        %v496 = vld [vmem:[%s216 + $0x6d8] sm:$0xff]
        %v497 = vld [vmem:[%s216 + $0x6e0] sm:$0xff]
        %v498 = vld [vmem:[%s216 + $0x6e8] sm:$0xff]
        %v499 = vld [vmem:[%s216 + $0x6f0] sm:$0xff]
        %v500 = vld [vmem:[%s216 + $0x6f8] sm:$0xff]
        %v501 = vld [vmem:[%s216 + $0x700] sm:$0xff]
        %v502 = vld [vmem:[%s216 + $0x708] sm:$0xff]
        %v503 = vld [vmem:[%s216 + $0x710] sm:$0xff]
        %v504 = vld [vmem:[%s216 + $0x718] sm:$0xff]
        %v505 = vld [vmem:[%s216 + $0x720] sm:$0xff]
        %v506 = vld [vmem:[%s216 + $0x728] sm:$0xff]
        %v507 = vld [vmem:[%s216 + $0x730] sm:$0xff]
        %v508 = vld [vmem:[%s216 + $0x738] sm:$0xff]
        %v509 = vld [vmem:[%s216 + $0x740] sm:$0xff]
        %v510 = vld [vmem:[%s216 + $0x748] sm:$0xff]
        %v511 = vld [vmem:[%s216 + $0x750] sm:$0xff]
        %v512 = vld [vmem:[%s216 + $0x758] sm:$0xff]
        %v513 = vld [vmem:[%s216 + $0x760] sm:$0xff]
        %v514 = vld [vmem:[%s216 + $0x768] sm:$0xff]
        %v515 = vld [vmem:[%s216 + $0x770] sm:$0xff]
        %v516 = vld [vmem:[%s216 + $0x778] sm:$0xff]
        %v517 = vld [vmem:[%s216 + $0x780] sm:$0xff]
        %v518 = vld [vmem:[%s216 + $0x788] sm:$0xff]
        %v519 = vld [vmem:[%s216 + $0x790] sm:$0xff]
        %v520 = vld [vmem:[%s216 + $0x798] sm:$0xff]
        %v521 = vld [vmem:[%s216 + $0x7a0] sm:$0xff]
        %v522 = vld [vmem:[%s216 + $0x7a8] sm:$0xff]
        %v523 = vld [vmem:[%s216 + $0x7b0] sm:$0xff]
        %v524 = vld [vmem:[%s216 + $0x7b8] sm:$0xff]
        %v525 = vld [vmem:[%s216 + $0x7c0] sm:$0xff]
        %v526 = vld [vmem:[%s216 + $0x7c8] sm:$0xff]
        %v527 = vld [vmem:[%s216 + $0x7d0] sm:$0xff]
        %v528 = vld [vmem:[%s216 + $0x7d8] sm:$0xff]
        %v529 = vld [vmem:[%s216 + $0x7e0] sm:$0xff]
        %v530 = vld [vmem:[%s216 + $0x7e8] sm:$0xff]
        %v531 = vld [vmem:[%s216 + $0x7f0] sm:$0xff]
        %v532 = vld [vmem:[%s216 + $0x7f8] sm:$0xff]
        %v533 = vld [vmem:[%s216 + $0x800] sm:$0xff]
        %v534 = vld [vmem:[%s216 + $0x808] sm:$0xff]
        %v535 = vld [vmem:[%s216 + $0x810] sm:$0xff]
        %v536 = vld [vmem:[%s216 + $0x818] sm:$0xff]
        %v537 = vld [vmem:[%s216 + $0x820] sm:$0xff]
        %v538 = vld [vmem:[%s216 + $0x828] sm:$0xff]
        %v539 = vld [vmem:[%s216 + $0x830] sm:$0xff]
        %v540 = vld [vmem:[%s216 + $0x838] sm:$0xff]
        %v541 = vld [vmem:[%s216 + $0x840] sm:$0xff]
        %v542 = vld [vmem:[%s216 + $0x848] sm:$0xff]
        %v543 = vld [vmem:[%s216 + $0x850] sm:$0xff]
        %v544 = vld [vmem:[%s216 + $0x858] sm:$0xff]
        %v545 = vld [vmem:[%s216 + $0x860] sm:$0xff]
        %v546 = vld [vmem:[%s216 + $0x868] sm:$0xff]
        %v547 = vld [vmem:[%s216 + $0x870] sm:$0xff]
        %v548 = vld [vmem:[%s216 + $0x878] sm:$0xff]
        %v549 = vld [vmem:[%s216 + $0x880] sm:$0xff]
        %v550 = vld [vmem:[%s216 + $0x888] sm:$0xff]
        %v551 = vld [vmem:[%s216 + $0x890] sm:$0xff]
        %v552 = vld [vmem:[%s216 + $0x898] sm:$0xff]
        %v553 = vld [vmem:[%s216 + $0x8a0] sm:$0xff]
        %v554 = vld [vmem:[%s216 + $0x8a8] sm:$0xff]
        %v555 = vld [vmem:[%s216 + $0x8b0] sm:$0xff]
        %v556 = vld [vmem:[%s216 + $0x8b8] sm:$0xff]
        %v557 = vld [vmem:[%s216 + $0x8c0] sm:$0xff]
        %v558 = vld [vmem:[%s216 + $0x8c8] sm:$0xff]
        %v559 = vld [vmem:[%s216 + $0x8d0] sm:$0xff]
        %v560 = vld [vmem:[%s216 + $0x8d8] sm:$0xff]
        %v561 = vld [vmem:[%s216 + $0x8e0] sm:$0xff]
        %v562 = vld [vmem:[%s216 + $0x8e8] sm:$0xff]
        %v563 = vld [vmem:[%s216 + $0x8f0] sm:$0xff]
        %v564 = vld [vmem:[%s216 + $0x8f8] sm:$0xff]
        %v565 = vld [vmem:[%s216 + $0x900] sm:$0xff]
        %v566 = vld [vmem:[%s216 + $0x908] sm:$0xff]
        %v567 = vld [vmem:[%s216 + $0x910] sm:$0xff]
        %v568 = vld [vmem:[%s216 + $0x918] sm:$0xff]
        %v569 = vld [vmem:[%s216 + $0x920] sm:$0xff]
        %v570 = vld [vmem:[%s216 + $0x928] sm:$0xff]
        %v571 = vld [vmem:[%s216 + $0x930] sm:$0xff]
        %v572 = vld [vmem:[%s216 + $0x938] sm:$0xff]
        %v573 = vld [vmem:[%s216 + $0x940] sm:$0xff]
        %v574 = vld [vmem:[%s216 + $0x948] sm:$0xff]
        %v575 = vld [vmem:[%s216 + $0x950] sm:$0xff]
        %v576 = vld [vmem:[%s216 + $0x958] sm:$0xff]
        %v577 = vld [vmem:[%s216 + $0x960] sm:$0xff]
        %v578 = vld [vmem:[%s216 + $0x968] sm:$0xff]
        %v579 = vld [vmem:[%s216 + $0x970] sm:$0xff]
        %v580 = vld [vmem:[%s216 + $0x978] sm:$0xff]
        %v581 = vld [vmem:[%s216 + $0x980] sm:$0xff]
        %v582 = vld [vmem:[%s216 + $0x988] sm:$0xff]
        %v583 = vld [vmem:[%s216 + $0x990] sm:$0xff]
        %v584 = vld [vmem:[%s216 + $0x998] sm:$0xff]
        %v585 = vld [vmem:[%s216 + $0x9a0] sm:$0xff]
        %v586 = vld [vmem:[%s216 + $0x9a8] sm:$0xff]
        %v587 = vld [vmem:[%s216 + $0x9b0] sm:$0xff]
        %v588 = vld [vmem:[%s216 + $0x9b8] sm:$0xff]
        %v589 = vld [vmem:[%s216 + $0x9c0] sm:$0xff]
        %v590 = vld [vmem:[%s216 + $0x9c8] sm:$0xff]
        %v591 = vld [vmem:[%s216 + $0x9d0] sm:$0xff]
        %v592 = vld [vmem:[%s216 + $0x9d8] sm:$0xff]
        %v593 = vld [vmem:[%s216 + $0x9e0] sm:$0xff]
        %v594 = vld [vmem:[%s216 + $0x9e8] sm:$0xff]
        %v595 = vld [vmem:[%s216 + $0x9f0] sm:$0xff]
        %v596 = vld [vmem:[%s216 + $0x9f8] sm:$0xff]
        %v597 = vld [vmem:[%s216 + $0xa00] sm:$0xff]
        %v598 = vld [vmem:[%s216 + $0xa08] sm:$0xff]
        %v599 = vld [vmem:[%s216 + $0xa10] sm:$0xff]
        %v600 = vld [vmem:[%s216 + $0xa18] sm:$0xff]
        %v601 = vld [vmem:[%s216 + $0xa20] sm:$0xff]
        %v602 = vld [vmem:[%s216 + $0xa28] sm:$0xff]
        %v603 = vld [vmem:[%s216 + $0xa30] sm:$0xff]
        %v604 = vld [vmem:[%s216 + $0xa38] sm:$0xff]
        %v605 = vld [vmem:[%s216 + $0xa40] sm:$0xff]
        %v606 = vld [vmem:[%s216 + $0xa48] sm:$0xff]
        %v607 = vld [vmem:[%s216 + $0xa50] sm:$0xff]
        %v608 = vld [vmem:[%s216 + $0xa58] sm:$0xff]
        %v609 = vld [vmem:[%s216 + $0xa60] sm:$0xff]
        %v610 = vld [vmem:[%s216 + $0xa68] sm:$0xff]
        %v611 = vld [vmem:[%s216 + $0xa70] sm:$0xff]
        %v612 = vld [vmem:[%s216 + $0xa78] sm:$0xff]
        %v613 = vld [vmem:[%s216 + $0xa80] sm:$0xff]
        %v614 = vld [vmem:[%s216 + $0xa88] sm:$0xff]
        %v615 = vld [vmem:[%s216 + $0xa90] sm:$0xff]
        %v616 = vld [vmem:[%s216 + $0xa98] sm:$0xff]
        %v617 = vld [vmem:[%s216 + $0xaa0] sm:$0xff]
        %v618 = vld [vmem:[%s216 + $0xaa8] sm:$0xff]
        %v619 = vld [vmem:[%s216 + $0xab0] sm:$0xff]
        %v620 = vld [vmem:[%s216 + $0xab8] sm:$0xff]
        %v621 = vld [vmem:[%s216 + $0xac0] sm:$0xff]
        %v622 = vld [vmem:[%s216 + $0xac8] sm:$0xff]
        %v623 = vld [vmem:[%s216 + $0xad0] sm:$0xff]
        %v624 = vld [vmem:[%s216 + $0xad8] sm:$0xff]
        %v625 = vld [vmem:[%s216 + $0xae0] sm:$0xff]
        %v626 = vld [vmem:[%s216 + $0xae8] sm:$0xff]
        %v627 = vld [vmem:[%s216 + $0xaf0] sm:$0xff]
        %v628 = vld [vmem:[%s216 + $0xaf8] sm:$0xff]
        %v629 = vld [vmem:[%s216 + $0xb00] sm:$0xff]
        %v630 = vld [vmem:[%s216 + $0xb08] sm:$0xff]
        %v631 = vld [vmem:[%s216 + $0xb10] sm:$0xff]
        %v632 = vld [vmem:[%s216 + $0xb18] sm:$0xff]
        %v633 = vld [vmem:[%s216 + $0xb20] sm:$0xff]
        %v634 = vld [vmem:[%s216 + $0xb28] sm:$0xff]
        %v635 = vld [vmem:[%s216 + $0xb30] sm:$0xff]
        %v636 = vld [vmem:[%s216 + $0xb38] sm:$0xff]
        %v637 = vld [vmem:[%s216 + $0xb40] sm:$0xff]
        %v638 = vld [vmem:[%s216 + $0xb48] sm:$0xff]
        %v639 = vld [vmem:[%s216 + $0xb50] sm:$0xff]
        %v640 = vld [vmem:[%s216 + $0xb58] sm:$0xff]
        %v641 = vld [vmem:[%s216 + $0xb60] sm:$0xff]
        %v642 = vld [vmem:[%s216 + $0xb68] sm:$0xff]
        %v643 = vld [vmem:[%s216 + $0xb70] sm:$0xff]
        %v644 = vld [vmem:[%s216 + $0xb78] sm:$0xff]
        %v645 = vld [vmem:[%s216 + $0xb80] sm:$0xff]
        %v646 = vld [vmem:[%s216 + $0xb88] sm:$0xff]
        %v647 = vld [vmem:[%s216 + $0xb90] sm:$0xff]
        %v648 = vld [vmem:[%s216 + $0xb98] sm:$0xff]
        %v649 = vld [vmem:[%s216 + $0xba0] sm:$0xff]
        %v650 = vld [vmem:[%s216 + $0xba8] sm:$0xff]
        %v651 = vld [vmem:[%s216 + $0xbb0] sm:$0xff]
        %v652 = vld [vmem:[%s216 + $0xbb8] sm:$0xff]
        %v653 = vld [vmem:[%s216 + $0xbc0] sm:$0xff]
        %v654 = vld [vmem:[%s216 + $0xbc8] sm:$0xff]
        %v655 = vld [vmem:[%s216 + $0xbd0] sm:$0xff]
        %v656 = vld [vmem:[%s216 + $0xbd8] sm:$0xff]
        %v657 = vld [vmem:[%s216 + $0xbe0] sm:$0xff]
        %v658 = vld [vmem:[%s216 + $0xbe8] sm:$0xff]
        %v659 = vld [vmem:[%s216 + $0xbf0] sm:$0xff]
        %v660 = vld [vmem:[%s216 + $0xbf8] sm:$0xff]
        %v661 = vld [vmem:[%s216 + $0xc00] sm:$0xff]
        %v662 = vld [vmem:[%s216 + $0xc08] sm:$0xff]
        %v663 = vld [vmem:[%s216 + $0xc10] sm:$0xff]
        %v664 = vld [vmem:[%s216 + $0xc18] sm:$0xff]
        %v665 = vld [vmem:[%s216 + $0xc20] sm:$0xff]
        %v666 = vld [vmem:[%s216 + $0xc28] sm:$0xff]
        %v667 = vld [vmem:[%s216 + $0xc30] sm:$0xff]
        %v668 = vld [vmem:[%s216 + $0xc38] sm:$0xff]
        %v669 = vld [vmem:[%s216 + $0xc40] sm:$0xff]
        %v670 = vld [vmem:[%s216 + $0xc48] sm:$0xff]
        %v671 = vld [vmem:[%s216 + $0xc50] sm:$0xff]
        %v672 = vld [vmem:[%s216 + $0xc58] sm:$0xff]
        %v673 = vld [vmem:[%s216 + $0xc60] sm:$0xff]
        %v674 = vld [vmem:[%s216 + $0xc68] sm:$0xff]
        %v675 = vld [vmem:[%s216 + $0xc70] sm:$0xff]
        %v676 = vld [vmem:[%s216 + $0xc78] sm:$0xff]
        %v677 = vld [vmem:[%s216 + $0xc80] sm:$0xff]
        %v678 = vld [vmem:[%s216 + $0xc88] sm:$0xff]
        %v679 = vld [vmem:[%s216 + $0xc90] sm:$0xff]
        %v680 = vld [vmem:[%s216 + $0xc98] sm:$0xff]
        %v681 = vld [vmem:[%s216 + $0xca0] sm:$0xff]
        %v682 = vld [vmem:[%s216 + $0xca8] sm:$0xff]
        %v683 = vld [vmem:[%s216 + $0xcb0] sm:$0xff]
        %v684 = vld [vmem:[%s216 + $0xcb8] sm:$0xff]
        %v685 = vld [vmem:[%s216 + $0xcc0] sm:$0xff]
        %v686 = vld [vmem:[%s216 + $0xcc8] sm:$0xff]
        %v687 = vld [vmem:[%s216 + $0xcd0] sm:$0xff]
        %v688 = vld [vmem:[%s216 + $0xcd8] sm:$0xff]
        %v689 = vld [vmem:[%s216 + $0xce0] sm:$0xff]
        %v690 = vld [vmem:[%s216 + $0xce8] sm:$0xff]
        %v691 = vld [vmem:[%s216 + $0xcf0] sm:$0xff]
        %v692 = vld [vmem:[%s216 + $0xcf8] sm:$0xff]
        %v693 = vld [vmem:[%s216 + $0xd00] sm:$0xff]
        %v694 = vld [vmem:[%s216 + $0xd08] sm:$0xff]
        %v695 = vld [vmem:[%s216 + $0xd10] sm:$0xff]
        %v696 = vld [vmem:[%s216 + $0xd18] sm:$0xff]
        %v697 = vld [vmem:[%s216 + $0xd20] sm:$0xff]
        %v698 = vld [vmem:[%s216 + $0xd28] sm:$0xff]
        %v699 = vld [vmem:[%s216 + $0xd30] sm:$0xff]
        %v700 = vld [vmem:[%s216 + $0xd38] sm:$0xff]
        %v701 = vld [vmem:[%s216 + $0xd40] sm:$0xff]
        %v702 = vld [vmem:[%s216 + $0xd48] sm:$0xff]
        %v703 = vld [vmem:[%s216 + $0xd50] sm:$0xff]
        %v704 = vld [vmem:[%s216 + $0xd58] sm:$0xff]
        %v705 = vld [vmem:[%s216 + $0xd60] sm:$0xff]
        %v706 = vld [vmem:[%s216 + $0xd68] sm:$0xff]
        %v707 = vld [vmem:[%s216 + $0xd70] sm:$0xff]
        %v708 = vld [vmem:[%s216 + $0xd78] sm:$0xff]
        %v709 = vld [vmem:[%s216 + $0xd80] sm:$0xff]
        %v710 = vld [vmem:[%s216 + $0xd88] sm:$0xff]
        %v711 = vld [vmem:[%s216 + $0xd90] sm:$0xff]
        %v712 = vld [vmem:[%s216 + $0xd98] sm:$0xff]
        %v713 = vld [vmem:[%s216 + $0xda0] sm:$0xff]
        %v714 = vld [vmem:[%s216 + $0xda8] sm:$0xff]
        %v715 = vld [vmem:[%s216 + $0xdb0] sm:$0xff]
        %v716 = vld [vmem:[%s216 + $0xdb8] sm:$0xff]
        %v717 = vld [vmem:[%s216 + $0xdc0] sm:$0xff]
        %v718 = vld [vmem:[%s216 + $0xdc8] sm:$0xff]
        %v719 = vld [vmem:[%s216 + $0xdd0] sm:$0xff]
        %v720 = vld [vmem:[%s216 + $0xdd8] sm:$0xff]
        %v721 = vld [vmem:[%s216 + $0xde0] sm:$0xff]
        %v722 = vld [vmem:[%s216 + $0xde8] sm:$0xff]
        %v723 = vld [vmem:[%s216 + $0xdf0] sm:$0xff]
        %v724 = vld [vmem:[%s216 + $0xdf8] sm:$0xff]
        %v725 = vld [vmem:[%s216 + $0xe00] sm:$0xff]
        %v726 = vld [vmem:[%s216 + $0xe08] sm:$0xff]
        %v727 = vld [vmem:[%s216 + $0xe10] sm:$0xff]
        %v728 = vld [vmem:[%s216 + $0xe18] sm:$0xff]
        %v729 = vld [vmem:[%s216 + $0xe20] sm:$0xff]
        %v730 = vld [vmem:[%s216 + $0xe28] sm:$0xff]
        %v731 = vld [vmem:[%s216 + $0xe30] sm:$0xff]
        %v732 = vld [vmem:[%s216 + $0xe38] sm:$0xff]
        %v733 = vld [vmem:[%s216 + $0xe40] sm:$0xff]
        %v734 = vld [vmem:[%s216 + $0xe48] sm:$0xff]
        %v735 = vld [vmem:[%s216 + $0xe50] sm:$0xff]
        %v736 = vld [vmem:[%s216 + $0xe58] sm:$0xff]
        %v737 = vld [vmem:[%s216 + $0xe60] sm:$0xff]
        %v738 = vld [vmem:[%s216 + $0xe68] sm:$0xff]
        %v739 = vld [vmem:[%s216 + $0xe70] sm:$0xff]
        %v740 = vld [vmem:[%s216 + $0xe78] sm:$0xff]
        %v741 = vld [vmem:[%s216 + $0xe80] sm:$0xff]
        %v742 = vld [vmem:[%s216 + $0xe88] sm:$0xff]
        %v743 = vld [vmem:[%s216 + $0xe90] sm:$0xff]
        %v744 = vld [vmem:[%s216 + $0xe98] sm:$0xff]
        %v745 = vld [vmem:[%s216 + $0xea0] sm:$0xff]
        %v746 = vld [vmem:[%s216 + $0xea8] sm:$0xff]
        %v747 = vld [vmem:[%s216 + $0xeb0] sm:$0xff]
        %v748 = vld [vmem:[%s216 + $0xeb8] sm:$0xff]
        %v749 = vld [vmem:[%s216 + $0xec0] sm:$0xff]
        %v750 = vld [vmem:[%s216 + $0xec8] sm:$0xff]
        %v751 = vld [vmem:[%s216 + $0xed0] sm:$0xff]
        %v752 = vld [vmem:[%s216 + $0xed8] sm:$0xff]
        %v753 = vld [vmem:[%s216 + $0xee0] sm:$0xff]
        %v754 = vld [vmem:[%s216 + $0xee8] sm:$0xff]
        %v755 = vld [vmem:[%s216 + $0xef0] sm:$0xff]
        %v756 = vld [vmem:[%s216 + $0xef8] sm:$0xff]
        %v757 = vld [vmem:[%s216 + $0xf00] sm:$0xff]
        %v758 = vld [vmem:[%s216 + $0xf08] sm:$0xff]
        %v759 = vld [vmem:[%s216 + $0xf10] sm:$0xff]
        %v760 = vld [vmem:[%s216 + $0xf18] sm:$0xff]
        %v761 = vld [vmem:[%s216 + $0xf20] sm:$0xff]
        %v762 = vld [vmem:[%s216 + $0xf28] sm:$0xff]
        %v763 = vld [vmem:[%s216 + $0xf30] sm:$0xff]
        %v764 = vld [vmem:[%s216 + $0xf38] sm:$0xff]
        %v765 = vld [vmem:[%s216 + $0xf40] sm:$0xff]
        %v766 = vld [vmem:[%s216 + $0xf48] sm:$0xff]
        %v767 = vld [vmem:[%s216 + $0xf50] sm:$0xff]
        %v768 = vld [vmem:[%s216 + $0xf58] sm:$0xff]
        %v769 = vld [vmem:[%s216 + $0xf60] sm:$0xff]
        %v770 = vld [vmem:[%s216 + $0xf68] sm:$0xff]
        %v771 = vld [vmem:[%s216 + $0xf70] sm:$0xff]
        %v772 = vld [vmem:[%s216 + $0xf78] sm:$0xff]
        %v773 = vld [vmem:[%s216 + $0xf80] sm:$0xff]
        %v774 = vld [vmem:[%s216 + $0xf88] sm:$0xff]
        %v775 = vld [vmem:[%s216 + $0xf90] sm:$0xff]
        %v776 = vld [vmem:[%s216 + $0xf98] sm:$0xff]
        %v777 = vld [vmem:[%s216 + $0xfa0] sm:$0xff]
        %v778 = vld [vmem:[%s216 + $0xfa8] sm:$0xff]
        %v779 = vld [vmem:[%s216 + $0xfb0] sm:$0xff]
        %v780 = vld [vmem:[%s216 + $0xfb8] sm:$0xff]
        %v781 = vld [vmem:[%s216 + $0xfc0] sm:$0xff]
        %v782 = vld [vmem:[%s216 + $0xfc8] sm:$0xff]
        %v783 = vld [vmem:[%s216 + $0xfd0] sm:$0xff]
        %v784 = vld [vmem:[%s216 + $0xfd8] sm:$0xff]
        %v785 = vld [vmem:[%s216 + $0xfe0] sm:$0xff]
        %v786 = vld [vmem:[%s216 + $0xfe8] sm:$0xff]
        %v787 = vld [vmem:[%s216 + $0xff0] sm:$0xff]
        %v788 = vld [vmem:[%s216 + $0xff8] sm:$0xff]
        %v789 = vld [vmem:[%s216 + $0x1000] sm:$0xff]
        %v790 = vld [vmem:[%s216 + $0x1008] sm:$0xff]
        %v791 = vld [vmem:[%s216 + $0x1010] sm:$0xff]
        %v792 = vld [vmem:[%s216 + $0x1018] sm:$0xff]
        %v793 = vld [vmem:[%s216 + $0x1020] sm:$0xff]
        %v794 = vld [vmem:[%s216 + $0x1028] sm:$0xff]
        %v795 = vld [vmem:[%s216 + $0x1030] sm:$0xff]
        %v796 = vld [vmem:[%s216 + $0x1038] sm:$0xff]
        %v797 = vld [vmem:[%s216 + $0x1040] sm:$0xff]
        %v798 = vld [vmem:[%s216 + $0x1048] sm:$0xff]
        %v799 = vld [vmem:[%s216 + $0x1050] sm:$0xff]
        %v800 = vld [vmem:[%s216 + $0x1058] sm:$0xff]
        %v801 = vld [vmem:[%s216 + $0x1060] sm:$0xff]
        %v802 = vld [vmem:[%s216 + $0x1068] sm:$0xff]
        %v803 = vld [vmem:[%s216 + $0x1070] sm:$0xff]
        %v804 = vld [vmem:[%s216 + $0x1078] sm:$0xff]
        %v805 = vld [vmem:[%s216 + $0x1080] sm:$0xff]
        %v806 = vld [vmem:[%s216 + $0x1088] sm:$0xff]
        %v807 = vld [vmem:[%s216 + $0x1090] sm:$0xff]
        %v808 = vld [vmem:[%s216 + $0x1098] sm:$0xff]
        %v809 = vld [vmem:[%s216 + $0x10a0] sm:$0xff]
        %v810 = vld [vmem:[%s216 + $0x10a8] sm:$0xff]
        %v811 = vld [vmem:[%s216 + $0x10b0] sm:$0xff]
        %v812 = vld [vmem:[%s216 + $0x10b8] sm:$0xff]
        %v813 = vld [vmem:[%s216 + $0x10c0] sm:$0xff]
        %v814 = vld [vmem:[%s216 + $0x10c8] sm:$0xff]
        %v815 = vld [vmem:[%s216 + $0x10d0] sm:$0xff]
        %v816 = vld [vmem:[%s216 + $0x10d8] sm:$0xff]
        %v817 = vld [vmem:[%s216 + $0x10e0] sm:$0xff]
        %v818 = vld [vmem:[%s216 + $0x10e8] sm:$0xff]
        %v819 = vld [vmem:[%s216 + $0x10f0] sm:$0xff]
        %v820 = vld [vmem:[%s216 + $0x10f8] sm:$0xff]
        %v821 = vld [vmem:[%s216 + $0x1100] sm:$0xff]
        %v822 = vld [vmem:[%s216 + $0x1108] sm:$0xff]
        %v823 = vld [vmem:[%s216 + $0x1110] sm:$0xff]
        %v824 = vld [vmem:[%s216 + $0x1118] sm:$0xff]
        %v825 = vld [vmem:[%s216 + $0x1120] sm:$0xff]
        %v826 = vld [vmem:[%s216 + $0x1128] sm:$0xff]
        %v827 = vld [vmem:[%s216 + $0x1130] sm:$0xff]
        %v828 = vld [vmem:[%s216 + $0x1138] sm:$0xff]
        %v829 = vld [vmem:[%s216 + $0x1140] sm:$0xff]
        %v830 = vld [vmem:[%s216 + $0x1148] sm:$0xff]
        %v831 = vld [vmem:[%s216 + $0x1150] sm:$0xff]
        %v832 = vld [vmem:[%s216 + $0x1158] sm:$0xff]
        %v833 = vld [vmem:[%s216 + $0x1160] sm:$0xff]
        %v834 = vld [vmem:[%s216 + $0x1168] sm:$0xff]
        %v835 = vld [vmem:[%s216 + $0x1170] sm:$0xff]
        %v836 = vld [vmem:[%s216 + $0x1178] sm:$0xff]
        %v837 = vld [vmem:[%s216 + $0x1180] sm:$0xff]
        %v838 = vld [vmem:[%s216 + $0x1188] sm:$0xff]
        %v839 = vld [vmem:[%s216 + $0x1190] sm:$0xff]
        %v840 = vld [vmem:[%s216 + $0x1198] sm:$0xff]
        %v841 = vld [vmem:[%s216 + $0x11a0] sm:$0xff]
        %v842 = vld [vmem:[%s216 + $0x11a8] sm:$0xff]
        %v843 = vld [vmem:[%s216 + $0x11b0] sm:$0xff]
        %v844 = vld [vmem:[%s216 + $0x11b8] sm:$0xff]
        %v845 = vld [vmem:[%s216 + $0x11c0] sm:$0xff]
        %v846 = vld [vmem:[%s216 + $0x11c8] sm:$0xff]
        %v847 = vld [vmem:[%s216 + $0x11d0] sm:$0xff]
        %v848 = vld [vmem:[%s216 + $0x11d8] sm:$0xff]
        %v849 = vld [vmem:[%s216 + $0x11e0] sm:$0xff]
        %v850 = vld [vmem:[%s216 + $0x11e8] sm:$0xff]
        %v851 = vld [vmem:[%s216 + $0x11f0] sm:$0xff]
        %v852 = vld [vmem:[%s216 + $0x11f8] sm:$0xff]
        %v853 = vld [vmem:[%s216 + $0x1200] sm:$0xff]
        %v854 = vld [vmem:[%s216 + $0x1208] sm:$0xff]
        %v855 = vld [vmem:[%s216 + $0x1210] sm:$0xff]
        %v856 = vld [vmem:[%s216 + $0x1218] sm:$0xff]
        %v857 = vld [vmem:[%s216 + $0x1220] sm:$0xff]
        %v858 = vld [vmem:[%s216 + $0x1228] sm:$0xff]
        %v859 = vld [vmem:[%s216 + $0x1230] sm:$0xff]
        %v860 = vld [vmem:[%s216 + $0x1238] sm:$0xff]
        %v861 = vld [vmem:[%s216 + $0x1240] sm:$0xff]
        %v862 = vld [vmem:[%s216 + $0x1248] sm:$0xff]
        %v863 = vld [vmem:[%s216 + $0x1250] sm:$0xff]
        %v864 = vld [vmem:[%s216 + $0x1258] sm:$0xff]
        %v865 = vld [vmem:[%s216 + $0x1260] sm:$0xff]
        %v866 = vld [vmem:[%s216 + $0x1268] sm:$0xff]
        %v867 = vld [vmem:[%s216 + $0x1270] sm:$0xff]
        %v868 = vld [vmem:[%s216 + $0x1278] sm:$0xff]
        %v869 = vld [vmem:[%s216 + $0x1280] sm:$0xff]
        %v870 = vld [vmem:[%s216 + $0x1288] sm:$0xff]
        %v871 = vld [vmem:[%s216 + $0x1290] sm:$0xff]
        %v872 = vld [vmem:[%s216 + $0x1298] sm:$0xff]
        %v873 = vld [vmem:[%s216 + $0x12a0] sm:$0xff]
        %v874 = vld [vmem:[%s216 + $0x12a8] sm:$0xff]
        %v875 = vld [vmem:[%s216 + $0x12b0] sm:$0xff]
        %v876 = vld [vmem:[%s216 + $0x12b8] sm:$0xff]
        %v877 = vld [vmem:[%s216 + $0x12c0] sm:$0xff]
        %v878 = vld [vmem:[%s216 + $0x12c8] sm:$0xff]
        %v879 = vld [vmem:[%s216 + $0x12d0] sm:$0xff]
        %v880 = vld [vmem:[%s216 + $0x12d8] sm:$0xff]
        %v881 = vld [vmem:[%s216 + $0x12e0] sm:$0xff]
        %v882 = vld [vmem:[%s216 + $0x12e8] sm:$0xff]
        %v883 = vld [vmem:[%s216 + $0x12f0] sm:$0xff]
        %v884 = vld [vmem:[%s216 + $0x12f8] sm:$0xff]
        %v885 = vld [vmem:[%s216 + $0x1300] sm:$0xff]
        %v886 = vld [vmem:[%s216 + $0x1308] sm:$0xff]
        %v887 = vld [vmem:[%s216 + $0x1310] sm:$0xff]
        %v888 = vld [vmem:[%s216 + $0x1318] sm:$0xff]
        %v889 = vld [vmem:[%s216 + $0x1320] sm:$0xff]
        %v890 = vld [vmem:[%s216 + $0x1328] sm:$0xff]
        %v891 = vld [vmem:[%s216 + $0x1330] sm:$0xff]
        %v892 = vld [vmem:[%s216 + $0x1338] sm:$0xff]
        %v893 = vld [vmem:[%s216 + $0x1340] sm:$0xff]
        %v894 = vld [vmem:[%s216 + $0x1348] sm:$0xff]
        %v895 = vld [vmem:[%s216 + $0x1350] sm:$0xff]
        %v896 = vld [vmem:[%s216 + $0x1358] sm:$0xff]
        %v897 = vld [vmem:[%s216 + $0x1360] sm:$0xff]
        %v898 = vld [vmem:[%s216 + $0x1368] sm:$0xff]
        %v899 = vld [vmem:[%s216 + $0x1370] sm:$0xff]
        %v900 = vld [vmem:[%s216 + $0x1378] sm:$0xff]
        %v901 = vld [vmem:[%s216 + $0x1380] sm:$0xff]
        %v902 = vld [vmem:[%s216 + $0x1388] sm:$0xff]
        %v903 = vld [vmem:[%s216 + $0x1390] sm:$0xff]
        %v904 = vld [vmem:[%s216 + $0x1398] sm:$0xff]
        %v905 = vld [vmem:[%s216 + $0x13a0] sm:$0xff]
        %v906 = vld [vmem:[%s216 + $0x13a8] sm:$0xff]
        %v907 = vld [vmem:[%s216 + $0x13b0] sm:$0xff]
        %v908 = vld [vmem:[%s216 + $0x13b8] sm:$0xff]
        %v909 = vld [vmem:[%s216 + $0x13c0] sm:$0xff]
        %v910 = vld [vmem:[%s216 + $0x13c8] sm:$0xff]
        %v911 = vld [vmem:[%s216 + $0x13d0] sm:$0xff]
        %v912 = vld [vmem:[%s216 + $0x13d8] sm:$0xff]
        %v913 = vld [vmem:[%s216 + $0x13e0] sm:$0xff]
        %v914 = vld [vmem:[%s216 + $0x13e8] sm:$0xff]
        %v915 = vld [vmem:[%s216 + $0x13f0] sm:$0xff]
        %v916 = vld [vmem:[%s216 + $0x13f8] sm:$0xff]
        %v917 = vld [vmem:[%s216 + $0x1400] sm:$0xff]
        %v918 = vld [vmem:[%s216 + $0x1408] sm:$0xff]
        %v919 = vld [vmem:[%s216 + $0x1410] sm:$0xff]
        %v920 = vld [vmem:[%s216 + $0x1418] sm:$0xff]
        %v921 = vld [vmem:[%s216 + $0x1420] sm:$0xff]
        %v922 = vld [vmem:[%s216 + $0x1428] sm:$0xff]
        %v923 = vld [vmem:[%s216 + $0x1430] sm:$0xff]
        %v924 = vld [vmem:[%s216 + $0x1438] sm:$0xff]
        %v925 = vld [vmem:[%s216 + $0x1440] sm:$0xff]
        %v926 = vld [vmem:[%s216 + $0x1448] sm:$0xff]
        %v927 = vld [vmem:[%s216 + $0x1450] sm:$0xff]
        %v928 = vld [vmem:[%s216 + $0x1458] sm:$0xff]
        %v929 = vld [vmem:[%s216 + $0x1460] sm:$0xff]
        %v930 = vld [vmem:[%s216 + $0x1468] sm:$0xff]
        %v931 = vld [vmem:[%s216 + $0x1470] sm:$0xff]
        %v932 = vld [vmem:[%s216 + $0x1478] sm:$0xff]
        %v933 = vld [vmem:[%s216 + $0x1480] sm:$0xff]
        %v934 = vld [vmem:[%s216 + $0x1488] sm:$0xff]
        %v935 = vld [vmem:[%s216 + $0x1490] sm:$0xff]
        %v936 = vld [vmem:[%s216 + $0x1498] sm:$0xff]
        %v937 = vld [vmem:[%s216 + $0x14a0] sm:$0xff]
        %v938 = vld [vmem:[%s216 + $0x14a8] sm:$0xff]
        %v939 = vld [vmem:[%s216 + $0x14b0] sm:$0xff]
        %v940 = vld [vmem:[%s216 + $0x14b8] sm:$0xff]
        %v941 = vld [vmem:[%s216 + $0x14c0] sm:$0xff]
        %v942 = vld [vmem:[%s216 + $0x14c8] sm:$0xff]
        %v943 = vld [vmem:[%s216 + $0x14d0] sm:$0xff]
        %v944 = vld [vmem:[%s216 + $0x14d8] sm:$0xff]
        %v945 = vld [vmem:[%s216 + $0x14e0] sm:$0xff]
        %v946 = vld [vmem:[%s216 + $0x14e8] sm:$0xff]
        %v947 = vld [vmem:[%s216 + $0x14f0] sm:$0xff]
        %v948 = vld [vmem:[%s216 + $0x14f8] sm:$0xff]
        %v949 = vld [vmem:[%s216 + $0x1500] sm:$0xff]
        %v950 = vld [vmem:[%s216 + $0x1508] sm:$0xff]
        %v951 = vld [vmem:[%s216 + $0x1510] sm:$0xff]
        %v952 = vld [vmem:[%s216 + $0x1518] sm:$0xff]
        %v953 = vld [vmem:[%s216 + $0x1520] sm:$0xff]
        %v954 = vld [vmem:[%s216 + $0x1528] sm:$0xff]
        %v955 = vld [vmem:[%s216 + $0x1530] sm:$0xff]
        %v956 = vld [vmem:[%s216 + $0x1538] sm:$0xff]
        %v957 = vld [vmem:[%s216 + $0x1540] sm:$0xff]
        %v958 = vld [vmem:[%s216 + $0x1548] sm:$0xff]
        %v959 = vld [vmem:[%s216 + $0x1550] sm:$0xff]
        %v960 = vld [vmem:[%s216 + $0x1558] sm:$0xff]
        %v961 = vld [vmem:[%s216 + $0x1560] sm:$0xff]
        %v962 = vld [vmem:[%s216 + $0x1568] sm:$0xff]
        %v963 = vld [vmem:[%s216 + $0x1570] sm:$0xff]
        %v964 = vld [vmem:[%s216 + $0x1578] sm:$0xff]
        %v965 = vld [vmem:[%s216 + $0x1580] sm:$0xff]
        %v966 = vld [vmem:[%s216 + $0x1588] sm:$0xff]
        %v967 = vld [vmem:[%s216 + $0x1590] sm:$0xff]
        %v968 = vld [vmem:[%s216 + $0x1598] sm:$0xff]
        %v969 = vld [vmem:[%s216 + $0x15a0] sm:$0xff]
        %v970 = vld [vmem:[%s216 + $0x15a8] sm:$0xff]
        %v971 = vld [vmem:[%s216 + $0x15b0] sm:$0xff]
        %v972 = vld [vmem:[%s216 + $0x15b8] sm:$0xff]
        %v973 = vld [vmem:[%s216 + $0x15c0] sm:$0xff]
        %v974 = vld [vmem:[%s216 + $0x15c8] sm:$0xff]
        %v975 = vld [vmem:[%s216 + $0x15d0] sm:$0xff]
        %v976 = vld [vmem:[%s216 + $0x15d8] sm:$0xff]
        %v977 = vld [vmem:[%s216 + $0x15e0] sm:$0xff]
        %v978 = vld [vmem:[%s216 + $0x15e8] sm:$0xff]
        %v979 = vld [vmem:[%s216 + $0x15f0] sm:$0xff]
        %v980 = vld [vmem:[%s216 + $0x15f8] sm:$0xff]
        %v981 = vld [vmem:[%s216 + $0x1600] sm:$0xff]
        %v982 = vld [vmem:[%s216 + $0x1608] sm:$0xff]
        %v983 = vld [vmem:[%s216 + $0x1610] sm:$0xff]
        %v984 = vld [vmem:[%s216 + $0x1618] sm:$0xff]
        %v985 = vld [vmem:[%s216 + $0x1620] sm:$0xff]
        %v986 = vld [vmem:[%s216 + $0x1628] sm:$0xff]
        %v987 = vld [vmem:[%s216 + $0x1630] sm:$0xff]
        %v988 = vld [vmem:[%s216 + $0x1638] sm:$0xff]
        %v989 = vld [vmem:[%s216 + $0x1640] sm:$0xff]
        %v990 = vld [vmem:[%s216 + $0x1648] sm:$0xff]
        %v991 = vld [vmem:[%s216 + $0x1650] sm:$0xff]
        %v992 = vld [vmem:[%s216 + $0x1658] sm:$0xff]
        %v993 = vld [vmem:[%s216 + $0x1660] sm:$0xff]
        %v994 = vld [vmem:[%s216 + $0x1668] sm:$0xff]
        %v995 = vld [vmem:[%s216 + $0x1670] sm:$0xff]
        %v996 = vld [vmem:[%s216 + $0x1678] sm:$0xff]
        %v997 = vld [vmem:[%s216 + $0x1680] sm:$0xff]
        %v998 = vld [vmem:[%s216 + $0x1688] sm:$0xff]
        %v999 = vld [vmem:[%s216 + $0x1690] sm:$0xff]
        %v1000 = vld [vmem:[%s216 + $0x1698] sm:$0xff]
        %v1001 = vld [vmem:[%s216 + $0x16a0] sm:$0xff]
        %v1002 = vld [vmem:[%s216 + $0x16a8] sm:$0xff]
        %v1003 = vld [vmem:[%s216 + $0x16b0] sm:$0xff]
        %v1004 = vld [vmem:[%s216 + $0x16b8] sm:$0xff]
        %v1005 = vld [vmem:[%s216 + $0x16c0] sm:$0xff]
        %v1006 = vld [vmem:[%s216 + $0x16c8] sm:$0xff]
        %v1007 = vld [vmem:[%s216 + $0x16d0] sm:$0xff]
        %v1008 = vld [vmem:[%s216 + $0x16d8] sm:$0xff]
        %v1009 = vld [vmem:[%s216 + $0x16e0] sm:$0xff]
        %v1010 = vld [vmem:[%s216 + $0x16e8] sm:$0xff]
        %v1011 = vld [vmem:[%s216 + $0x16f0] sm:$0xff]
        %v1012 = vld [vmem:[%s216 + $0x16f8] sm:$0xff]
        %v1013 = vld [vmem:[%s216 + $0x1700] sm:$0xff]
        %v1014 = vld [vmem:[%s216 + $0x1708] sm:$0xff]
        %v1015 = vld [vmem:[%s216 + $0x1710] sm:$0xff]
        %v1016 = vld [vmem:[%s216 + $0x1718] sm:$0xff]
        %v1017 = vld [vmem:[%s216 + $0x1720] sm:$0xff]
        %v1018 = vld [vmem:[%s216 + $0x1728] sm:$0xff]
        %v1019 = vld [vmem:[%s216 + $0x1730] sm:$0xff]
        %v1020 = vld [vmem:[%s216 + $0x1738] sm:$0xff]
        %v1021 = vld [vmem:[%s216 + $0x1740] sm:$0xff]
        %v1022 = vld [vmem:[%s216 + $0x1748] sm:$0xff]
        %v1023 = vld [vmem:[%s216 + $0x1750] sm:$0xff]
        %v1024 = vld [vmem:[%s216 + $0x1758] sm:$0xff]
        %v1025 = vld [vmem:[%s216 + $0x1760] sm:$0xff]
        %v1026 = vld [vmem:[%s216 + $0x1768] sm:$0xff]
        %v1027 = vld [vmem:[%s216 + $0x1770] sm:$0xff]
        %v1028 = vld [vmem:[%s216 + $0x1778] sm:$0xff]
        %v1029 = vld [vmem:[%s216 + $0x1780] sm:$0xff]
        %v1030 = vld [vmem:[%s216 + $0x1788] sm:$0xff]
        %v1031 = vld [vmem:[%s216 + $0x1790] sm:$0xff]
        %v1032 = vld [vmem:[%s216 + $0x1798] sm:$0xff]
        %v1033 = vld [vmem:[%s216 + $0x17a0] sm:$0xff]
        %v1034 = vld [vmem:[%s216 + $0x17a8] sm:$0xff]
        %v1035 = vld [vmem:[%s216 + $0x17b0] sm:$0xff]
        %v1036 = vld [vmem:[%s216 + $0x17b8] sm:$0xff]
        %v1037 = vld [vmem:[%s216 + $0x17c0] sm:$0xff]
        %v1038 = vld [vmem:[%s216 + $0x17c8] sm:$0xff]
        %v1039 = vld [vmem:[%s216 + $0x17d0] sm:$0xff]
        %v1040 = vld [vmem:[%s216 + $0x17d8] sm:$0xff]
        %v1041 = vld [vmem:[%s216 + $0x17e0] sm:$0xff]
        %v1042 = vld [vmem:[%s216 + $0x17e8] sm:$0xff]
        %v1043 = vld [vmem:[%s216 + $0x17f0] sm:$0xff]
        %v1044 = vld [vmem:[%s216 + $0x17f8] sm:$0xff]
        %v1045 = vld [vmem:[%s216 + $0x1800] sm:$0xff]
        %v1046 = vld [vmem:[%s216 + $0x1808] sm:$0xff]
        %v1047 = vld [vmem:[%s216 + $0x1810] sm:$0xff]
        %v1048 = vld [vmem:[%s216 + $0x1818] sm:$0xff]
        %v1049 = vld [vmem:[%s216 + $0x1820] sm:$0xff]
        %v1050 = vld [vmem:[%s216 + $0x1828] sm:$0xff]
        %v1051 = vld [vmem:[%s216 + $0x1830] sm:$0xff]
        %v1052 = vld [vmem:[%s216 + $0x1838] sm:$0xff]
        %v1053 = vld [vmem:[%s216 + $0x1840] sm:$0xff]
        %v1054 = vld [vmem:[%s216 + $0x1848] sm:$0xff]
        %v1055 = vld [vmem:[%s216 + $0x1850] sm:$0xff]
        %v1056 = vld [vmem:[%s216 + $0x1858] sm:$0xff]
        %v1057 = vld [vmem:[%s216 + $0x1860] sm:$0xff]
        %v1058 = vld [vmem:[%s216 + $0x1868] sm:$0xff]
        %v1059 = vld [vmem:[%s216 + $0x1870] sm:$0xff]
        %v1060 = vld [vmem:[%s216 + $0x1878] sm:$0xff]
        %v1061 = vld [vmem:[%s216 + $0x1880] sm:$0xff]
        %v1062 = vld [vmem:[%s216 + $0x1888] sm:$0xff]
        %v1063 = vld [vmem:[%s216 + $0x1890] sm:$0xff]
        %v1064 = vld [vmem:[%s216 + $0x1898] sm:$0xff]
        %v1065 = vld [vmem:[%s216 + $0x18a0] sm:$0xff]
        %v1066 = vld [vmem:[%s216 + $0x18a8] sm:$0xff]
        %v1067 = vld [vmem:[%s216 + $0x18b0] sm:$0xff]
        %v1068 = vld [vmem:[%s216 + $0x18b8] sm:$0xff]
        %v1069 = vld [vmem:[%s216 + $0x18c0] sm:$0xff]
        %v1070 = vld [vmem:[%s216 + $0x18c8] sm:$0xff]
        %v1071 = vld [vmem:[%s216 + $0x18d0] sm:$0xff]
        %v1072 = vld [vmem:[%s216 + $0x18d8] sm:$0xff]
        %v1073 = vld [vmem:[%s216 + $0x18e0] sm:$0xff]
        %v1074 = vld [vmem:[%s216 + $0x18e8] sm:$0xff]
        %v1075 = vld [vmem:[%s216 + $0x18f0] sm:$0xff]
        %v1076 = vld [vmem:[%s216 + $0x18f8] sm:$0xff]
        %v1077 = vld [vmem:[%s216 + $0x1900] sm:$0xff]
        %v1078 = vld [vmem:[%s216 + $0x1908] sm:$0xff]
        %v1079 = vld [vmem:[%s216 + $0x1910] sm:$0xff]
        %v1080 = vld [vmem:[%s216 + $0x1918] sm:$0xff]
        %v1081 = vld [vmem:[%s216 + $0x1920] sm:$0xff]
        %v1082 = vld [vmem:[%s216 + $0x1928] sm:$0xff]
        %v1083 = vld [vmem:[%s216 + $0x1930] sm:$0xff]
        %v1084 = vld [vmem:[%s216 + $0x1938] sm:$0xff]
        %v1085 = vld [vmem:[%s216 + $0x1940] sm:$0xff]
        %v1086 = vld [vmem:[%s216 + $0x1948] sm:$0xff]
        %v1087 = vld [vmem:[%s216 + $0x1950] sm:$0xff]
        %v1088 = vld [vmem:[%s216 + $0x1958] sm:$0xff]
        %v1089 = vld [vmem:[%s216 + $0x1960] sm:$0xff]
        %v1090 = vld [vmem:[%s216 + $0x1968] sm:$0xff]
        %v1091 = vld [vmem:[%s216 + $0x1970] sm:$0xff]
        %v1092 = vld [vmem:[%s216 + $0x1978] sm:$0xff]
        %v1093 = vld [vmem:[%s216 + $0x1980] sm:$0xff]
        %v1094 = vld [vmem:[%s216 + $0x1988] sm:$0xff]
        %v1095 = vld [vmem:[%s216 + $0x1990] sm:$0xff]
        %v1096 = vld [vmem:[%s216 + $0x1998] sm:$0xff]
        %v1097 = vld [vmem:[%s216 + $0x19a0] sm:$0xff]
        %v1098 = vld [vmem:[%s216 + $0x19a8] sm:$0xff]
        %v1099 = vld [vmem:[%s216 + $0x19b0] sm:$0xff]
        %v1100 = vld [vmem:[%s216 + $0x19b8] sm:$0xff]
        %v1101 = vld [vmem:[%s216 + $0x19c0] sm:$0xff]
        %v1102 = vld [vmem:[%s216 + $0x19c8] sm:$0xff]
        %v1103 = vld [vmem:[%s216 + $0x19d0] sm:$0xff]
        %v1104 = vld [vmem:[%s216 + $0x19d8] sm:$0xff]
        %v1105 = vld [vmem:[%s216 + $0x19e0] sm:$0xff]
        %v1106 = vld [vmem:[%s216 + $0x19e8] sm:$0xff]
        %v1107 = vld [vmem:[%s216 + $0x19f0] sm:$0xff]
        %v1108 = vld [vmem:[%s216 + $0x19f8] sm:$0xff]
        %v1109 = vld [vmem:[%s216 + $0x1a00] sm:$0xff]
        %v1110 = vld [vmem:[%s216 + $0x1a08] sm:$0xff]
        %v1111 = vld [vmem:[%s216 + $0x1a10] sm:$0xff]
        %v1112 = vld [vmem:[%s216 + $0x1a18] sm:$0xff]
        %v1113 = vld [vmem:[%s216 + $0x1a20] sm:$0xff]
        %v1114 = vld [vmem:[%s216 + $0x1a28] sm:$0xff]
        %v1115 = vld [vmem:[%s216 + $0x1a30] sm:$0xff]
        %v1116 = vld [vmem:[%s216 + $0x1a38] sm:$0xff]
        %v1117 = vld [vmem:[%s216 + $0x1a40] sm:$0xff]
        %v1118 = vld [vmem:[%s216 + $0x1a48] sm:$0xff]
        %v1119 = vld [vmem:[%s216 + $0x1a50] sm:$0xff]
        %v1120 = vld [vmem:[%s216 + $0x1a58] sm:$0xff]
        %v1121 = vld [vmem:[%s216 + $0x1a60] sm:$0xff]
        %v1122 = vld [vmem:[%s216 + $0x1a68] sm:$0xff]
        %v1123 = vld [vmem:[%s216 + $0x1a70] sm:$0xff]
        %v1124 = vld [vmem:[%s216 + $0x1a78] sm:$0xff]
        %v1125 = vld [vmem:[%s216 + $0x1a80] sm:$0xff]
        %v1126 = vld [vmem:[%s216 + $0x1a88] sm:$0xff]
        %v1127 = vld [vmem:[%s216 + $0x1a90] sm:$0xff]
        %v1128 = vld [vmem:[%s216 + $0x1a98] sm:$0xff]
        %v1129 = vld [vmem:[%s216 + $0x1aa0] sm:$0xff]
        %v1130 = vld [vmem:[%s216 + $0x1aa8] sm:$0xff]
        %v1131 = vld [vmem:[%s216 + $0x1ab0] sm:$0xff]
        %v1132 = vld [vmem:[%s216 + $0x1ab8] sm:$0xff]
        %v1133 = vld [vmem:[%s216 + $0x1ac0] sm:$0xff]
        %v1134 = vld [vmem:[%s216 + $0x1ac8] sm:$0xff]
        %v1135 = vld [vmem:[%s216 + $0x1ad0] sm:$0xff]
        %v1136 = vld [vmem:[%s216 + $0x1ad8] sm:$0xff]
        %v1137 = vld [vmem:[%s216 + $0x1ae0] sm:$0xff]
        %v1138 = vld [vmem:[%s216 + $0x1ae8] sm:$0xff]
        %v1139 = vld [vmem:[%s216 + $0x1af0] sm:$0xff]
        %v1140 = vld [vmem:[%s216 + $0x1af8] sm:$0xff]
        %v1141 = vld [vmem:[%s216 + $0x1b00] sm:$0xff]
        %v1142 = vld [vmem:[%s216 + $0x1b08] sm:$0xff]
        %v1143 = vld [vmem:[%s216 + $0x1b10] sm:$0xff]
        %v1144 = vld [vmem:[%s216 + $0x1b18] sm:$0xff]
        %v1145 = vld [vmem:[%s216 + $0x1b20] sm:$0xff]
        %v1146 = vld [vmem:[%s216 + $0x1b28] sm:$0xff]
        %v1147 = vld [vmem:[%s216 + $0x1b30] sm:$0xff]
        %v1148 = vld [vmem:[%s216 + $0x1b38] sm:$0xff]
        %v1149 = vld [vmem:[%s216 + $0x1b40] sm:$0xff]
        %v1150 = vld [vmem:[%s216 + $0x1b48] sm:$0xff]
        %v1151 = vld [vmem:[%s216 + $0x1b50] sm:$0xff]
        %v1152 = vld [vmem:[%s216 + $0x1b58] sm:$0xff]
        %v1153 = vld [vmem:[%s216 + $0x1b60] sm:$0xff]
        %v1154 = vld [vmem:[%s216 + $0x1b68] sm:$0xff]
        %v1155 = vld [vmem:[%s216 + $0x1b70] sm:$0xff]
        %v1156 = vld [vmem:[%s216 + $0x1b78] sm:$0xff]
        %v1157 = vld [vmem:[%s216 + $0x1b80] sm:$0xff]
        %v1158 = vld [vmem:[%s216 + $0x1b88] sm:$0xff]
        %v1159 = vld [vmem:[%s216 + $0x1b90] sm:$0xff]
        %v1160 = vld [vmem:[%s216 + $0x1b98] sm:$0xff]
        %v1161 = vld [vmem:[%s216 + $0x1ba0] sm:$0xff]
        %v1162 = vld [vmem:[%s216 + $0x1ba8] sm:$0xff]
        %v1163 = vld [vmem:[%s216 + $0x1bb0] sm:$0xff]
        %v1164 = vld [vmem:[%s216 + $0x1bb8] sm:$0xff]
        %v1165 = vld [vmem:[%s216 + $0x1bc0] sm:$0xff]
        %v1166 = vld [vmem:[%s216 + $0x1bc8] sm:$0xff]
        %v1167 = vld [vmem:[%s216 + $0x1bd0] sm:$0xff]
        %v1168 = vld [vmem:[%s216 + $0x1bd8] sm:$0xff]
        %v1169 = vld [vmem:[%s216 + $0x1be0] sm:$0xff]
        %v1170 = vld [vmem:[%s216 + $0x1be8] sm:$0xff]
        %v1171 = vld [vmem:[%s216 + $0x1bf0] sm:$0xff]
        %v1172 = vld [vmem:[%s216 + $0x1bf8] sm:$0xff]
        %v1173 = vld [vmem:[%s216 + $0x1c00] sm:$0xff]
        %v1174 = vld [vmem:[%s216 + $0x1c08] sm:$0xff]
        %v1175 = vld [vmem:[%s216 + $0x1c10] sm:$0xff]
        %v1176 = vld [vmem:[%s216 + $0x1c18] sm:$0xff]
        %v1177 = vld [vmem:[%s216 + $0x1c20] sm:$0xff]
        %v1178 = vld [vmem:[%s216 + $0x1c28] sm:$0xff]
        %v1179 = vld [vmem:[%s216 + $0x1c30] sm:$0xff]
        %v1180 = vld [vmem:[%s216 + $0x1c38] sm:$0xff]
        %v1181 = vld [vmem:[%s216 + $0x1c40] sm:$0xff]
        %v1182 = vld [vmem:[%s216 + $0x1c48] sm:$0xff]
        %v1183 = vld [vmem:[%s216 + $0x1c50] sm:$0xff]
        %v1184 = vld [vmem:[%s216 + $0x1c58] sm:$0xff]
        %v1185 = vld [vmem:[%s216 + $0x1c60] sm:$0xff]
        %v1186 = vld [vmem:[%s216 + $0x1c68] sm:$0xff]
        %v1187 = vld [vmem:[%s216 + $0x1c70] sm:$0xff]
        %v1188 = vld [vmem:[%s216 + $0x1c78] sm:$0xff]
        %v1189 = vld [vmem:[%s216 + $0x1c80] sm:$0xff]
        %v1190 = vld [vmem:[%s216 + $0x1c88] sm:$0xff]
        %v1191 = vld [vmem:[%s216 + $0x1c90] sm:$0xff]
        %v1192 = vld [vmem:[%s216 + $0x1c98] sm:$0xff]
        %v1193 = vld [vmem:[%s216 + $0x1ca0] sm:$0xff]
        %v1194 = vld [vmem:[%s216 + $0x1ca8] sm:$0xff]
        %v1195 = vld [vmem:[%s216 + $0x1cb0] sm:$0xff]
        %v1196 = vld [vmem:[%s216 + $0x1cb8] sm:$0xff]
        %v1197 = vld [vmem:[%s216 + $0x1cc0] sm:$0xff]
        %v1198 = vld [vmem:[%s216 + $0x1cc8] sm:$0xff]
        %v1199 = vld [vmem:[%s216 + $0x1cd0] sm:$0xff]
        %v1200 = vld [vmem:[%s216 + $0x1cd8] sm:$0xff]
        %v1201 = vld [vmem:[%s216 + $0x1ce0] sm:$0xff]
        %v1202 = vld [vmem:[%s216 + $0x1ce8] sm:$0xff]
        %v1203 = vld [vmem:[%s216 + $0x1cf0] sm:$0xff]
        %v1204 = vld [vmem:[%s216 + $0x1cf8] sm:$0xff]
        %v1205 = vld [vmem:[%s216 + $0x1d00] sm:$0xff]
        %v1206 = vld [vmem:[%s216 + $0x1d08] sm:$0xff]
        %v1207 = vld [vmem:[%s216 + $0x1d10] sm:$0xff]
        %v1208 = vld [vmem:[%s216 + $0x1d18] sm:$0xff]
        %v1209 = vld [vmem:[%s216 + $0x1d20] sm:$0xff]
        %v1210 = vld [vmem:[%s216 + $0x1d28] sm:$0xff]
        %v1211 = vld [vmem:[%s216 + $0x1d30] sm:$0xff]
        %v1212 = vld [vmem:[%s216 + $0x1d38] sm:$0xff]
        %v1213 = vld [vmem:[%s216 + $0x1d40] sm:$0xff]
        %v1214 = vld [vmem:[%s216 + $0x1d48] sm:$0xff]
        %v1215 = vld [vmem:[%s216 + $0x1d50] sm:$0xff]
        %v1216 = vld [vmem:[%s216 + $0x1d58] sm:$0xff]
        %v1217 = vld [vmem:[%s216 + $0x1d60] sm:$0xff]
        %v1218 = vld [vmem:[%s216 + $0x1d68] sm:$0xff]
        %v1219 = vld [vmem:[%s216 + $0x1d70] sm:$0xff]
        %v1220 = vld [vmem:[%s216 + $0x1d78] sm:$0xff]
        %v1221 = vld [vmem:[%s216 + $0x1d80] sm:$0xff]
        %v1222 = vld [vmem:[%s216 + $0x1d88] sm:$0xff]
        %v1223 = vld [vmem:[%s216 + $0x1d90] sm:$0xff]
        %v1224 = vld [vmem:[%s216 + $0x1d98] sm:$0xff]
        %v1225 = vld [vmem:[%s216 + $0x1da0] sm:$0xff]
        %v1226 = vld [vmem:[%s216 + $0x1da8] sm:$0xff]
        %v1227 = vld [vmem:[%s216 + $0x1db0] sm:$0xff]
        %v1228 = vld [vmem:[%s216 + $0x1db8] sm:$0xff]
        %v1229 = vld [vmem:[%s216 + $0x1dc0] sm:$0xff]
        %v1230 = vld [vmem:[%s216 + $0x1dc8] sm:$0xff]
        %v1231 = vld [vmem:[%s216 + $0x1dd0] sm:$0xff]
        %v1232 = vld [vmem:[%s216 + $0x1dd8] sm:$0xff]
        %v1233 = vld [vmem:[%s216 + $0x1de0] sm:$0xff]
        %v1234 = vld [vmem:[%s216 + $0x1de8] sm:$0xff]
        %v1235 = vld [vmem:[%s216 + $0x1df0] sm:$0xff]
        %v1236 = vld [vmem:[%s216 + $0x1df8] sm:$0xff]
        %v1237 = vld [vmem:[%s216 + $0x1e00] sm:$0xff]
        %v1238 = vld [vmem:[%s216 + $0x1e08] sm:$0xff]
        %v1239 = vld [vmem:[%s216 + $0x1e10] sm:$0xff]
        %v1240 = vld [vmem:[%s216 + $0x1e18] sm:$0xff]
        %v1241 = vld [vmem:[%s216 + $0x1e20] sm:$0xff]
        %v1242 = vld [vmem:[%s216 + $0x1e28] sm:$0xff]
        %v1243 = vld [vmem:[%s216 + $0x1e30] sm:$0xff]
        %v1244 = vld [vmem:[%s216 + $0x1e38] sm:$0xff]
        %v1245 = vld [vmem:[%s216 + $0x1e40] sm:$0xff]
        %v1246 = vld [vmem:[%s216 + $0x1e48] sm:$0xff]
        %v1247 = vld [vmem:[%s216 + $0x1e50] sm:$0xff]
        %v1248 = vld [vmem:[%s216 + $0x1e58] sm:$0xff]
        %v1249 = vld [vmem:[%s216 + $0x1e60] sm:$0xff]
        %v1250 = vld [vmem:[%s216 + $0x1e68] sm:$0xff]
        %v1251 = vld [vmem:[%s216 + $0x1e70] sm:$0xff]
        %v1252 = vld [vmem:[%s216 + $0x1e78] sm:$0xff]
        %v1253 = vld [vmem:[%s216 + $0x1e80] sm:$0xff]
        %v1254 = vld [vmem:[%s216 + $0x1e88] sm:$0xff]
        %v1255 = vld [vmem:[%s216 + $0x1e90] sm:$0xff]
        %v1256 = vld [vmem:[%s216 + $0x1e98] sm:$0xff]
        %v1257 = vld [vmem:[%s216 + $0x1ea0] sm:$0xff]
        %v1258 = vld [vmem:[%s216 + $0x1ea8] sm:$0xff]
        %v1259 = vld [vmem:[%s216 + $0x1eb0] sm:$0xff]
        %v1260 = vld [vmem:[%s216 + $0x1eb8] sm:$0xff]
        %v1261 = vld [vmem:[%s216 + $0x1ec0] sm:$0xff]
        %v1262 = vld [vmem:[%s216 + $0x1ec8] sm:$0xff]
        %v1263 = vld [vmem:[%s216 + $0x1ed0] sm:$0xff]
        %v1264 = vld [vmem:[%s216 + $0x1ed8] sm:$0xff]
        %v1265 = vld [vmem:[%s216 + $0x1ee0] sm:$0xff]
        %v1266 = vld [vmem:[%s216 + $0x1ee8] sm:$0xff]
        %v1267 = vld [vmem:[%s216 + $0x1ef0] sm:$0xff]
        %v1268 = vld [vmem:[%s216 + $0x1ef8] sm:$0xff]
        %v1269 = vld [vmem:[%s216 + $0x1f00] sm:$0xff]
        %v1270 = vld [vmem:[%s216 + $0x1f08] sm:$0xff]
        %v1271 = vld [vmem:[%s216 + $0x1f10] sm:$0xff]
        %v1272 = vld [vmem:[%s216 + $0x1f18] sm:$0xff]
        %v1273 = vld [vmem:[%s216 + $0x1f20] sm:$0xff]
        %v1274 = vld [vmem:[%s216 + $0x1f28] sm:$0xff]
        %v1275 = vld [vmem:[%s216 + $0x1f30] sm:$0xff]
        %v1276 = vld [vmem:[%s216 + $0x1f38] sm:$0xff]
        %v1277 = vld [vmem:[%s216 + $0x1f40] sm:$0xff]
        %v1278 = vld [vmem:[%s216 + $0x1f48] sm:$0xff]
        %v1279 = vld [vmem:[%s216 + $0x1f50] sm:$0xff]
        %v1280 = vld [vmem:[%s216 + $0x1f58] sm:$0xff]
        %v1281 = vld [vmem:[%s216 + $0x1f60] sm:$0xff]
        %v1282 = vld [vmem:[%s216 + $0x1f68] sm:$0xff]
        %v1283 = vld [vmem:[%s216 + $0x1f70] sm:$0xff]
        %v1284 = vld [vmem:[%s216 + $0x1f78] sm:$0xff]
        %v1285 = vld [vmem:[%s216 + $0x1f80] sm:$0xff]
        %v1286 = vld [vmem:[%s216 + $0x1f88] sm:$0xff]
        %v1287 = vld [vmem:[%s216 + $0x1f90] sm:$0xff]
        %v1288 = vld [vmem:[%s216 + $0x1f98] sm:$0xff]
        %v1289 = vld [vmem:[%s216 + $0x1fa0] sm:$0xff]
        %v1290 = vld [vmem:[%s216 + $0x1fa8] sm:$0xff]
        %v1291 = vld [vmem:[%s216 + $0x1fb0] sm:$0xff]
        %v1292 = vld [vmem:[%s216 + $0x1fb8] sm:$0xff]
        %v1293 = vld [vmem:[%s216 + $0x1fc0] sm:$0xff]
        %v1294 = vld [vmem:[%s216 + $0x1fc8] sm:$0xff]
        %v1295 = vld [vmem:[%s216 + $0x1fd0] sm:$0xff]
        %v1296 = vld [vmem:[%s216 + $0x1fd8] sm:$0xff]
        %v1297 = vld [vmem:[%s216 + $0x1fe0] sm:$0xff]
        %v1298 = vld [vmem:[%s216 + $0x1fe8] sm:$0xff]
        %v1299 = vld [vmem:[%s216 + $0x1ff0] sm:$0xff]
        %v1300 = vld [vmem:[%s216 + $0x1ff8] sm:$0xff]
        %v1303 = vcombine.high %v275, %v275
        %v1305 = vunpack.c.l.s4 1966171168
        %v1306 = vunpack.c.0.s8 %v1305
        %v1307 = vlaneseq
        %v1308 = vshrl.u32 %v1307, 7
        %v1309 = vsub.s32 %v1306, %v1308
        %v1310 = vrot.slane %v275, %v1309
        %v1312 = vunpack.c.l.s4 1966171168
        %v1313 = vunpack.c.0.s8 %v1312
        %v1314 = vlaneseq
        %v1315 = vshrl.u32 %v1314, 7
        %v1316 = vsub.s32 %v1313, %v1315
        %v1317 = vrot.slane %v1303, %v1316
        %v1318 = vcombine.high %v1310, %v1310
        %v1319 = vcombine.high %v1317, %v1317
        %v1321 = vunpack.c.l.s4 1966171168
        %v1322 = vunpack.c.0.s8 %v1321
        %v1323 = vlaneseq
        %v1324 = vshrl.u32 %v1323, 7
        %v1325 = vsub.s32 %v1322, %v1324
        %v1326 = vrot.slane %v1310, %v1325
        %v1328 = vunpack.c.l.s4 1966171168
        %v1329 = vunpack.c.0.s8 %v1328
        %v1330 = vlaneseq
        %v1331 = vshrl.u32 %v1330, 7
        %v1332 = vsub.s32 %v1329, %v1331
        %v1333 = vrot.slane %v1317, %v1332
        %v1335 = vunpack.c.l.s4 1966171168
        %v1336 = vunpack.c.0.s8 %v1335
        %v1337 = vlaneseq
        %v1338 = vshrl.u32 %v1337, 7
        %v1339 = vsub.s32 %v1336, %v1338
        %v1340 = vrot.slane %v1318, %v1339
        %v1342 = vunpack.c.l.s4 1966171168
        %v1343 = vunpack.c.0.s8 %v1342
        %v1344 = vlaneseq
        %v1345 = vshrl.u32 %v1344, 7
        %v1346 = vsub.s32 %v1343, %v1345
        %v1347 = vrot.slane %v1319, %v1346
        %v1348 = vcombine.high %v1326, %v1326
        %v1349 = vcombine.high %v1333, %v1333
        %v1350 = vcombine.high %v1340, %v1340
        %v1351 = vcombine.high %v1347, %v1347
        %v1352 = vcombine.high %v276, %v276
        %v1354 = vunpack.c.l.s4 1966171168
        %v1355 = vunpack.c.0.s8 %v1354
        %v1356 = vlaneseq
        %v1357 = vshrl.u32 %v1356, 7
        %v1358 = vsub.s32 %v1355, %v1357
        %v1359 = vrot.slane %v276, %v1358
        %v1361 = vunpack.c.l.s4 1966171168
        %v1362 = vunpack.c.0.s8 %v1361
        %v1363 = vlaneseq
        %v1364 = vshrl.u32 %v1363, 7
        %v1365 = vsub.s32 %v1362, %v1364
        %v1366 = vrot.slane %v1352, %v1365
        %v1367 = vcombine.high %v1359, %v1359
        %v1368 = vcombine.high %v1366, %v1366
        %v1370 = vunpack.c.l.s4 1966171168
        %v1371 = vunpack.c.0.s8 %v1370
        %v1372 = vlaneseq
        %v1373 = vshrl.u32 %v1372, 7
        %v1374 = vsub.s32 %v1371, %v1373
        %v1375 = vrot.slane %v1359, %v1374
        %v1377 = vunpack.c.l.s4 1966171168
        %v1378 = vunpack.c.0.s8 %v1377
        %v1379 = vlaneseq
        %v1380 = vshrl.u32 %v1379, 7
        %v1381 = vsub.s32 %v1378, %v1380
        %v1382 = vrot.slane %v1366, %v1381
        %v1384 = vunpack.c.l.s4 1966171168
        %v1385 = vunpack.c.0.s8 %v1384
        %v1386 = vlaneseq
        %v1387 = vshrl.u32 %v1386, 7
        %v1388 = vsub.s32 %v1385, %v1387
        %v1389 = vrot.slane %v1367, %v1388
        %v1391 = vunpack.c.l.s4 1966171168
        %v1392 = vunpack.c.0.s8 %v1391
        %v1393 = vlaneseq
        %v1394 = vshrl.u32 %v1393, 7
        %v1395 = vsub.s32 %v1392, %v1394
        %v1396 = vrot.slane %v1368, %v1395
        %v1397 = vcombine.high %v1375, %v1375
        %v1398 = vcombine.high %v1382, %v1382
        %v1399 = vcombine.high %v1389, %v1389
        %v1400 = vcombine.high %v1396, %v1396
        %v2441 = vunpack.c.l.b16 %v277
        %v2442 = vunpack.c.h.b16 %v277
        %v2443 = vunpack.c.l.b16 %v278
        %v2444 = vunpack.c.h.b16 %v278
        %v2445 = vunpack.c.l.b16 %v279
        %v2446 = vunpack.c.h.b16 %v279
        %v2447 = vunpack.c.l.b16 %v280
        %v2448 = vunpack.c.h.b16 %v280
        %v2449 = vunpack.c.l.b16 %v281
        %v2450 = vunpack.c.h.b16 %v281
        %v2451 = vunpack.c.l.b16 %v282
        %v2452 = vunpack.c.h.b16 %v282
        %v2453 = vunpack.c.l.b16 %v283
        %v2454 = vunpack.c.h.b16 %v283
        %v2455 = vunpack.c.l.b16 %v284
        %v2456 = vunpack.c.h.b16 %v284
        %v2457 = vunpack.c.l.b16 %v285
        %v2458 = vunpack.c.h.b16 %v285
        %v2459 = vunpack.c.l.b16 %v286
        %v2460 = vunpack.c.h.b16 %v286
        %v2461 = vunpack.c.l.b16 %v287
        %v2462 = vunpack.c.h.b16 %v287
        %v2463 = vunpack.c.l.b16 %v288
        %v2464 = vunpack.c.h.b16 %v288
        %v2465 = vunpack.c.l.b16 %v289
        %v2466 = vunpack.c.h.b16 %v289
        %v2467 = vunpack.c.l.b16 %v290
        %v2468 = vunpack.c.h.b16 %v290
        %v2469 = vunpack.c.l.b16 %v291
        %v2470 = vunpack.c.h.b16 %v291
        %v2471 = vunpack.c.l.b16 %v292
        %v2472 = vunpack.c.h.b16 %v292
        %v2473 = vunpack.c.l.b16 %v293
        %v2474 = vunpack.c.h.b16 %v293
        %v2475 = vunpack.c.l.b16 %v294
        %v2476 = vunpack.c.h.b16 %v294
        %v2477 = vunpack.c.l.b16 %v295
        %v2478 = vunpack.c.h.b16 %v295
        %v2479 = vunpack.c.l.b16 %v296
        %v2480 = vunpack.c.h.b16 %v296
        %v2481 = vunpack.c.l.b16 %v297
        %v2482 = vunpack.c.h.b16 %v297
        %v2483 = vunpack.c.l.b16 %v298
        %v2484 = vunpack.c.h.b16 %v298
        %v2485 = vunpack.c.l.b16 %v299
        %v2486 = vunpack.c.h.b16 %v299
        %v2487 = vunpack.c.l.b16 %v300
        %v2488 = vunpack.c.h.b16 %v300
        %v2489 = vunpack.c.l.b16 %v301
        %v2490 = vunpack.c.h.b16 %v301
        %v2491 = vunpack.c.l.b16 %v302
        %v2492 = vunpack.c.h.b16 %v302
        %v2493 = vunpack.c.l.b16 %v303
        %v2494 = vunpack.c.h.b16 %v303
        %v2495 = vunpack.c.l.b16 %v304
        %v2496 = vunpack.c.h.b16 %v304
        %v2497 = vunpack.c.l.b16 %v305
        %v2498 = vunpack.c.h.b16 %v305
        %v2499 = vunpack.c.l.b16 %v306
        %v2500 = vunpack.c.h.b16 %v306
        %v2501 = vunpack.c.l.b16 %v307
        %v2502 = vunpack.c.h.b16 %v307
        %v2503 = vunpack.c.l.b16 %v308
        %v2504 = vunpack.c.h.b16 %v308
        %v2505 = vunpack.c.l.b16 %v309
        %v2506 = vunpack.c.h.b16 %v309
        %v2507 = vunpack.c.l.b16 %v310
        %v2508 = vunpack.c.h.b16 %v310
        %v2509 = vunpack.c.l.b16 %v311
        %v2510 = vunpack.c.h.b16 %v311
        %v2511 = vunpack.c.l.b16 %v312
        %v2512 = vunpack.c.h.b16 %v312
        %v2513 = vunpack.c.l.b16 %v313
        %v2514 = vunpack.c.h.b16 %v313
        %v2515 = vunpack.c.l.b16 %v314
        %v2516 = vunpack.c.h.b16 %v314
        %v2517 = vunpack.c.l.b16 %v315
        %v2518 = vunpack.c.h.b16 %v315
        %v2519 = vunpack.c.l.b16 %v316
        %v2520 = vunpack.c.h.b16 %v316
        %v2521 = vunpack.c.l.b16 %v317
        %v2522 = vunpack.c.h.b16 %v317
        %v2523 = vunpack.c.l.b16 %v318
        %v2524 = vunpack.c.h.b16 %v318
        %v2525 = vunpack.c.l.b16 %v319
        %v2526 = vunpack.c.h.b16 %v319
        %v2527 = vunpack.c.l.b16 %v320
        %v2528 = vunpack.c.h.b16 %v320
        %v2529 = vunpack.c.l.b16 %v321
        %v2530 = vunpack.c.h.b16 %v321
        %v2531 = vunpack.c.l.b16 %v322
        %v2532 = vunpack.c.h.b16 %v322
        %v2533 = vunpack.c.l.b16 %v323
        %v2534 = vunpack.c.h.b16 %v323
        %v2535 = vunpack.c.l.b16 %v324
        %v2536 = vunpack.c.h.b16 %v324
        %v2537 = vunpack.c.l.b16 %v325
        %v2538 = vunpack.c.h.b16 %v325
        %v2539 = vunpack.c.l.b16 %v326
        %v2540 = vunpack.c.h.b16 %v326
        %v2541 = vunpack.c.l.b16 %v327
        %v2542 = vunpack.c.h.b16 %v327
        %v2543 = vunpack.c.l.b16 %v328
        %v2544 = vunpack.c.h.b16 %v328
        %v2545 = vunpack.c.l.b16 %v329
        %v2546 = vunpack.c.h.b16 %v329
        %v2547 = vunpack.c.l.b16 %v330
        %v2548 = vunpack.c.h.b16 %v330
        %v2549 = vunpack.c.l.b16 %v331
        %v2550 = vunpack.c.h.b16 %v331
        %v2551 = vunpack.c.l.b16 %v332
        %v2552 = vunpack.c.h.b16 %v332
        %v2553 = vunpack.c.l.b16 %v333
        %v2554 = vunpack.c.h.b16 %v333
        %v2555 = vunpack.c.l.b16 %v334
        %v2556 = vunpack.c.h.b16 %v334
        %v2557 = vunpack.c.l.b16 %v335
        %v2558 = vunpack.c.h.b16 %v335
        %v2559 = vunpack.c.l.b16 %v336
        %v2560 = vunpack.c.h.b16 %v336
        %v2561 = vunpack.c.l.b16 %v337
        %v2562 = vunpack.c.h.b16 %v337
        %v2563 = vunpack.c.l.b16 %v338
        %v2564 = vunpack.c.h.b16 %v338
        %v2565 = vunpack.c.l.b16 %v339
        %v2566 = vunpack.c.h.b16 %v339
        %v2567 = vunpack.c.l.b16 %v340
        %v2568 = vunpack.c.h.b16 %v340
        %v2569 = vunpack.c.l.b16 %v341
        %v2570 = vunpack.c.h.b16 %v341
        %v2571 = vunpack.c.l.b16 %v342
        %v2572 = vunpack.c.h.b16 %v342
        %v2573 = vunpack.c.l.b16 %v343
        %v2574 = vunpack.c.h.b16 %v343
        %v2575 = vunpack.c.l.b16 %v344
        %v2576 = vunpack.c.h.b16 %v344
        %v2577 = vunpack.c.l.b16 %v345
        %v2578 = vunpack.c.h.b16 %v345
        %v2579 = vunpack.c.l.b16 %v346
        %v2580 = vunpack.c.h.b16 %v346
        %v2581 = vunpack.c.l.b16 %v347
        %v2582 = vunpack.c.h.b16 %v347
        %v2583 = vunpack.c.l.b16 %v348
        %v2584 = vunpack.c.h.b16 %v348
        %v2585 = vunpack.c.l.b16 %v349
        %v2586 = vunpack.c.h.b16 %v349
        %v2587 = vunpack.c.l.b16 %v350
        %v2588 = vunpack.c.h.b16 %v350
        %v2589 = vunpack.c.l.b16 %v351
        %v2590 = vunpack.c.h.b16 %v351
        %v2591 = vunpack.c.l.b16 %v352
        %v2592 = vunpack.c.h.b16 %v352
        %v2593 = vunpack.c.l.b16 %v353
        %v2594 = vunpack.c.h.b16 %v353
        %v2595 = vunpack.c.l.b16 %v354
        %v2596 = vunpack.c.h.b16 %v354
        %v2597 = vunpack.c.l.b16 %v355
        %v2598 = vunpack.c.h.b16 %v355
        %v2599 = vunpack.c.l.b16 %v356
        %v2600 = vunpack.c.h.b16 %v356
        %v2601 = vunpack.c.l.b16 %v357
        %v2602 = vunpack.c.h.b16 %v357
        %v2603 = vunpack.c.l.b16 %v358
        %v2604 = vunpack.c.h.b16 %v358
        %v2605 = vunpack.c.l.b16 %v359
        %v2606 = vunpack.c.h.b16 %v359
        %v2607 = vunpack.c.l.b16 %v360
        %v2608 = vunpack.c.h.b16 %v360
        %v2609 = vunpack.c.l.b16 %v361
        %v2610 = vunpack.c.h.b16 %v361
        %v2611 = vunpack.c.l.b16 %v362
        %v2612 = vunpack.c.h.b16 %v362
        %v2613 = vunpack.c.l.b16 %v363
        %v2614 = vunpack.c.h.b16 %v363
        %v2615 = vunpack.c.l.b16 %v364
        %v2616 = vunpack.c.h.b16 %v364
        %v2617 = vunpack.c.l.b16 %v365
        %v2618 = vunpack.c.h.b16 %v365
        %v2619 = vunpack.c.l.b16 %v366
        %v2620 = vunpack.c.h.b16 %v366
        %v2621 = vunpack.c.l.b16 %v367
        %v2622 = vunpack.c.h.b16 %v367
        %v2623 = vunpack.c.l.b16 %v368
        %v2624 = vunpack.c.h.b16 %v368
        %v2625 = vunpack.c.l.b16 %v369
        %v2626 = vunpack.c.h.b16 %v369
        %v2627 = vunpack.c.l.b16 %v370
        %v2628 = vunpack.c.h.b16 %v370
        %v2629 = vunpack.c.l.b16 %v371
        %v2630 = vunpack.c.h.b16 %v371
        %v2631 = vunpack.c.l.b16 %v372
        %v2632 = vunpack.c.h.b16 %v372
        %v2633 = vunpack.c.l.b16 %v373
        %v2634 = vunpack.c.h.b16 %v373
        %v2635 = vunpack.c.l.b16 %v374
        %v2636 = vunpack.c.h.b16 %v374
        %v2637 = vunpack.c.l.b16 %v375
        %v2638 = vunpack.c.h.b16 %v375
        %v2639 = vunpack.c.l.b16 %v376
        %v2640 = vunpack.c.h.b16 %v376
        %v2641 = vunpack.c.l.b16 %v377
        %v2642 = vunpack.c.h.b16 %v377
        %v2643 = vunpack.c.l.b16 %v378
        %v2644 = vunpack.c.h.b16 %v378
        %v2645 = vunpack.c.l.b16 %v379
        %v2646 = vunpack.c.h.b16 %v379
        %v2647 = vunpack.c.l.b16 %v380
        %v2648 = vunpack.c.h.b16 %v380
        %v2649 = vunpack.c.l.b16 %v381
        %v2650 = vunpack.c.h.b16 %v381
        %v2651 = vunpack.c.l.b16 %v382
        %v2652 = vunpack.c.h.b16 %v382
        %v2653 = vunpack.c.l.b16 %v383
        %v2654 = vunpack.c.h.b16 %v383
        %v2655 = vunpack.c.l.b16 %v384
        %v2656 = vunpack.c.h.b16 %v384
        %v2657 = vunpack.c.l.b16 %v385
        %v2658 = vunpack.c.h.b16 %v385
        %v2659 = vunpack.c.l.b16 %v386
        %v2660 = vunpack.c.h.b16 %v386
        %v2661 = vunpack.c.l.b16 %v387
        %v2662 = vunpack.c.h.b16 %v387
        %v2663 = vunpack.c.l.b16 %v388
        %v2664 = vunpack.c.h.b16 %v388
        %v2665 = vunpack.c.l.b16 %v389
        %v2666 = vunpack.c.h.b16 %v389
        %v2667 = vunpack.c.l.b16 %v390
        %v2668 = vunpack.c.h.b16 %v390
        %v2669 = vunpack.c.l.b16 %v391
        %v2670 = vunpack.c.h.b16 %v391
        %v2671 = vunpack.c.l.b16 %v392
        %v2672 = vunpack.c.h.b16 %v392
        %v2673 = vunpack.c.l.b16 %v393
        %v2674 = vunpack.c.h.b16 %v393
        %v2675 = vunpack.c.l.b16 %v394
        %v2676 = vunpack.c.h.b16 %v394
        %v2677 = vunpack.c.l.b16 %v395
        %v2678 = vunpack.c.h.b16 %v395
        %v2679 = vunpack.c.l.b16 %v396
        %v2680 = vunpack.c.h.b16 %v396
        %v2681 = vunpack.c.l.b16 %v397
        %v2682 = vunpack.c.h.b16 %v397
        %v2683 = vunpack.c.l.b16 %v398
        %v2684 = vunpack.c.h.b16 %v398
        %v2685 = vunpack.c.l.b16 %v399
        %v2686 = vunpack.c.h.b16 %v399
        %v2687 = vunpack.c.l.b16 %v400
        %v2688 = vunpack.c.h.b16 %v400
        %v2689 = vunpack.c.l.b16 %v401
        %v2690 = vunpack.c.h.b16 %v401
        %v2691 = vunpack.c.l.b16 %v402
        %v2692 = vunpack.c.h.b16 %v402
        %v2693 = vunpack.c.l.b16 %v403
        %v2694 = vunpack.c.h.b16 %v403
        %v2695 = vunpack.c.l.b16 %v404
        %v2696 = vunpack.c.h.b16 %v404
        %v2697 = vunpack.c.l.b16 %v405
        %v2698 = vunpack.c.h.b16 %v405
        %v2699 = vunpack.c.l.b16 %v406
        %v2700 = vunpack.c.h.b16 %v406
        %v2701 = vunpack.c.l.b16 %v407
        %v2702 = vunpack.c.h.b16 %v407
        %v2703 = vunpack.c.l.b16 %v408
        %v2704 = vunpack.c.h.b16 %v408
        %v2705 = vunpack.c.l.b16 %v409
        %v2706 = vunpack.c.h.b16 %v409
        %v2707 = vunpack.c.l.b16 %v410
        %v2708 = vunpack.c.h.b16 %v410
        %v2709 = vunpack.c.l.b16 %v411
        %v2710 = vunpack.c.h.b16 %v411
        %v2711 = vunpack.c.l.b16 %v412
        %v2712 = vunpack.c.h.b16 %v412
        %v2713 = vunpack.c.l.b16 %v413
        %v2714 = vunpack.c.h.b16 %v413
        %v2715 = vunpack.c.l.b16 %v414
        %v2716 = vunpack.c.h.b16 %v414
        %v2717 = vunpack.c.l.b16 %v415
        %v2718 = vunpack.c.h.b16 %v415
        %v2719 = vunpack.c.l.b16 %v416
        %v2720 = vunpack.c.h.b16 %v416
        %v2721 = vunpack.c.l.b16 %v417
        %v2722 = vunpack.c.h.b16 %v417
        %v2723 = vunpack.c.l.b16 %v418
        %v2724 = vunpack.c.h.b16 %v418
        %v2725 = vunpack.c.l.b16 %v419
        %v2726 = vunpack.c.h.b16 %v419
        %v2727 = vunpack.c.l.b16 %v420
        %v2728 = vunpack.c.h.b16 %v420
        %v2729 = vunpack.c.l.b16 %v421
        %v2730 = vunpack.c.h.b16 %v421
        %v2731 = vunpack.c.l.b16 %v422
        %v2732 = vunpack.c.h.b16 %v422
        %v2733 = vunpack.c.l.b16 %v423
        %v2734 = vunpack.c.h.b16 %v423
        %v2735 = vunpack.c.l.b16 %v424
        %v2736 = vunpack.c.h.b16 %v424
        %v2737 = vunpack.c.l.b16 %v425
        %v2738 = vunpack.c.h.b16 %v425
        %v2739 = vunpack.c.l.b16 %v426
        %v2740 = vunpack.c.h.b16 %v426
        %v2741 = vunpack.c.l.b16 %v427
        %v2742 = vunpack.c.h.b16 %v427
        %v2743 = vunpack.c.l.b16 %v428
        %v2744 = vunpack.c.h.b16 %v428
        %v2745 = vunpack.c.l.b16 %v429
        %v2746 = vunpack.c.h.b16 %v429
        %v2747 = vunpack.c.l.b16 %v430
        %v2748 = vunpack.c.h.b16 %v430
        %v2749 = vunpack.c.l.b16 %v431
        %v2750 = vunpack.c.h.b16 %v431
        %v2751 = vunpack.c.l.b16 %v432
        %v2752 = vunpack.c.h.b16 %v432
        %v2753 = vunpack.c.l.b16 %v433
        %v2754 = vunpack.c.h.b16 %v433
        %v2755 = vunpack.c.l.b16 %v434
        %v2756 = vunpack.c.h.b16 %v434
        %v2757 = vunpack.c.l.b16 %v435
        %v2758 = vunpack.c.h.b16 %v435
        %v2759 = vunpack.c.l.b16 %v436
        %v2760 = vunpack.c.h.b16 %v436
        %v2761 = vunpack.c.l.b16 %v437
        %v2762 = vunpack.c.h.b16 %v437
        %v2763 = vunpack.c.l.b16 %v438
        %v2764 = vunpack.c.h.b16 %v438
        %v2765 = vunpack.c.l.b16 %v439
        %v2766 = vunpack.c.h.b16 %v439
        %v2767 = vunpack.c.l.b16 %v440
        %v2768 = vunpack.c.h.b16 %v440
        %v2769 = vunpack.c.l.b16 %v441
        %v2770 = vunpack.c.h.b16 %v441
        %v2771 = vunpack.c.l.b16 %v442
        %v2772 = vunpack.c.h.b16 %v442
        %v2773 = vunpack.c.l.b16 %v443
        %v2774 = vunpack.c.h.b16 %v443
        %v2775 = vunpack.c.l.b16 %v444
        %v2776 = vunpack.c.h.b16 %v444
        %v2777 = vunpack.c.l.b16 %v445
        %v2778 = vunpack.c.h.b16 %v445
        %v2779 = vunpack.c.l.b16 %v446
        %v2780 = vunpack.c.h.b16 %v446
        %v2781 = vunpack.c.l.b16 %v447
        %v2782 = vunpack.c.h.b16 %v447
        %v2783 = vunpack.c.l.b16 %v448
        %v2784 = vunpack.c.h.b16 %v448
        %v2785 = vunpack.c.l.b16 %v449
        %v2786 = vunpack.c.h.b16 %v449
        %v2787 = vunpack.c.l.b16 %v450
        %v2788 = vunpack.c.h.b16 %v450
        %v2789 = vunpack.c.l.b16 %v451
        %v2790 = vunpack.c.h.b16 %v451
        %v2791 = vunpack.c.l.b16 %v452
        %v2792 = vunpack.c.h.b16 %v452
        %v2793 = vunpack.c.l.b16 %v453
        %v2794 = vunpack.c.h.b16 %v453
        %v2795 = vunpack.c.l.b16 %v454
        %v2796 = vunpack.c.h.b16 %v454
        %v2797 = vunpack.c.l.b16 %v455
        %v2798 = vunpack.c.h.b16 %v455
        %v2799 = vunpack.c.l.b16 %v456
        %v2800 = vunpack.c.h.b16 %v456
        %v2801 = vunpack.c.l.b16 %v457
        %v2802 = vunpack.c.h.b16 %v457
        %v2803 = vunpack.c.l.b16 %v458
        %v2804 = vunpack.c.h.b16 %v458
        %v2805 = vunpack.c.l.b16 %v459
        %v2806 = vunpack.c.h.b16 %v459
        %v2807 = vunpack.c.l.b16 %v460
        %v2808 = vunpack.c.h.b16 %v460
        %v2809 = vunpack.c.l.b16 %v461
        %v2810 = vunpack.c.h.b16 %v461
        %v2811 = vunpack.c.l.b16 %v462
        %v2812 = vunpack.c.h.b16 %v462
        %v2813 = vunpack.c.l.b16 %v463
        %v2814 = vunpack.c.h.b16 %v463
        %v2815 = vunpack.c.l.b16 %v464
        %v2816 = vunpack.c.h.b16 %v464
        %v2817 = vunpack.c.l.b16 %v465
        %v2818 = vunpack.c.h.b16 %v465
        %v2819 = vunpack.c.l.b16 %v466
        %v2820 = vunpack.c.h.b16 %v466
        %v2821 = vunpack.c.l.b16 %v467
        %v2822 = vunpack.c.h.b16 %v467
        %v2823 = vunpack.c.l.b16 %v468
        %v2824 = vunpack.c.h.b16 %v468
        %v2825 = vunpack.c.l.b16 %v469
        %v2826 = vunpack.c.h.b16 %v469
        %v2827 = vunpack.c.l.b16 %v470
        %v2828 = vunpack.c.h.b16 %v470
        %v2829 = vunpack.c.l.b16 %v471
        %v2830 = vunpack.c.h.b16 %v471
        %v2831 = vunpack.c.l.b16 %v472
        %v2832 = vunpack.c.h.b16 %v472
        %v2833 = vunpack.c.l.b16 %v473
        %v2834 = vunpack.c.h.b16 %v473
        %v2835 = vunpack.c.l.b16 %v474
        %v2836 = vunpack.c.h.b16 %v474
        %v2837 = vunpack.c.l.b16 %v475
        %v2838 = vunpack.c.h.b16 %v475
        %v2839 = vunpack.c.l.b16 %v476
        %v2840 = vunpack.c.h.b16 %v476
        %v2841 = vunpack.c.l.b16 %v477
        %v2842 = vunpack.c.h.b16 %v477
        %v2843 = vunpack.c.l.b16 %v478
        %v2844 = vunpack.c.h.b16 %v478
        %v2845 = vunpack.c.l.b16 %v479
        %v2846 = vunpack.c.h.b16 %v479
        %v2847 = vunpack.c.l.b16 %v480
        %v2848 = vunpack.c.h.b16 %v480
        %v2849 = vunpack.c.l.b16 %v481
        %v2850 = vunpack.c.h.b16 %v481
        %v2851 = vunpack.c.l.b16 %v482
        %v2852 = vunpack.c.h.b16 %v482
        %v2853 = vunpack.c.l.b16 %v483
        %v2854 = vunpack.c.h.b16 %v483
        %v2855 = vunpack.c.l.b16 %v484
        %v2856 = vunpack.c.h.b16 %v484
        %v2857 = vunpack.c.l.b16 %v485
        %v2858 = vunpack.c.h.b16 %v485
        %v2859 = vunpack.c.l.b16 %v486
        %v2860 = vunpack.c.h.b16 %v486
        %v2861 = vunpack.c.l.b16 %v487
        %v2862 = vunpack.c.h.b16 %v487
        %v2863 = vunpack.c.l.b16 %v488
        %v2864 = vunpack.c.h.b16 %v488
        %v2865 = vunpack.c.l.b16 %v489
        %v2866 = vunpack.c.h.b16 %v489
        %v2867 = vunpack.c.l.b16 %v490
        %v2868 = vunpack.c.h.b16 %v490
        %v2869 = vunpack.c.l.b16 %v491
        %v2870 = vunpack.c.h.b16 %v491
        %v2871 = vunpack.c.l.b16 %v492
        %v2872 = vunpack.c.h.b16 %v492
        %v2873 = vunpack.c.l.b16 %v493
        %v2874 = vunpack.c.h.b16 %v493
        %v2875 = vunpack.c.l.b16 %v494
        %v2876 = vunpack.c.h.b16 %v494
        %v2877 = vunpack.c.l.b16 %v495
        %v2878 = vunpack.c.h.b16 %v495
        %v2879 = vunpack.c.l.b16 %v496
        %v2880 = vunpack.c.h.b16 %v496
        %v2881 = vunpack.c.l.b16 %v497
        %v2882 = vunpack.c.h.b16 %v497
        %v2883 = vunpack.c.l.b16 %v498
        %v2884 = vunpack.c.h.b16 %v498
        %v2885 = vunpack.c.l.b16 %v499
        %v2886 = vunpack.c.h.b16 %v499
        %v2887 = vunpack.c.l.b16 %v500
        %v2888 = vunpack.c.h.b16 %v500
        %v2889 = vunpack.c.l.b16 %v501
        %v2890 = vunpack.c.h.b16 %v501
        %v2891 = vunpack.c.l.b16 %v502
        %v2892 = vunpack.c.h.b16 %v502
        %v2893 = vunpack.c.l.b16 %v503
        %v2894 = vunpack.c.h.b16 %v503
        %v2895 = vunpack.c.l.b16 %v504
        %v2896 = vunpack.c.h.b16 %v504
        %v2897 = vunpack.c.l.b16 %v505
        %v2898 = vunpack.c.h.b16 %v505
        %v2899 = vunpack.c.l.b16 %v506
        %v2900 = vunpack.c.h.b16 %v506
        %v2901 = vunpack.c.l.b16 %v507
        %v2902 = vunpack.c.h.b16 %v507
        %v2903 = vunpack.c.l.b16 %v508
        %v2904 = vunpack.c.h.b16 %v508
        %v2905 = vunpack.c.l.b16 %v509
        %v2906 = vunpack.c.h.b16 %v509
        %v2907 = vunpack.c.l.b16 %v510
        %v2908 = vunpack.c.h.b16 %v510
        %v2909 = vunpack.c.l.b16 %v511
        %v2910 = vunpack.c.h.b16 %v511
        %v2911 = vunpack.c.l.b16 %v512
        %v2912 = vunpack.c.h.b16 %v512
        %v2913 = vunpack.c.l.b16 %v513
        %v2914 = vunpack.c.h.b16 %v513
        %v2915 = vunpack.c.l.b16 %v514
        %v2916 = vunpack.c.h.b16 %v514
        %v2917 = vunpack.c.l.b16 %v515
        %v2918 = vunpack.c.h.b16 %v515
        %v2919 = vunpack.c.l.b16 %v516
        %v2920 = vunpack.c.h.b16 %v516
        %v2921 = vunpack.c.l.b16 %v517
        %v2922 = vunpack.c.h.b16 %v517
        %v2923 = vunpack.c.l.b16 %v518
        %v2924 = vunpack.c.h.b16 %v518
        %v2925 = vunpack.c.l.b16 %v519
        %v2926 = vunpack.c.h.b16 %v519
        %v2927 = vunpack.c.l.b16 %v520
        %v2928 = vunpack.c.h.b16 %v520
        %v2929 = vunpack.c.l.b16 %v521
        %v2930 = vunpack.c.h.b16 %v521
        %v2931 = vunpack.c.l.b16 %v522
        %v2932 = vunpack.c.h.b16 %v522
        %v2933 = vunpack.c.l.b16 %v523
        %v2934 = vunpack.c.h.b16 %v523
        %v2935 = vunpack.c.l.b16 %v524
        %v2936 = vunpack.c.h.b16 %v524
        %v2937 = vunpack.c.l.b16 %v525
        %v2938 = vunpack.c.h.b16 %v525
        %v2939 = vunpack.c.l.b16 %v526
        %v2940 = vunpack.c.h.b16 %v526
        %v2941 = vunpack.c.l.b16 %v527
        %v2942 = vunpack.c.h.b16 %v527
        %v2943 = vunpack.c.l.b16 %v528
        %v2944 = vunpack.c.h.b16 %v528
        %v2945 = vunpack.c.l.b16 %v529
        %v2946 = vunpack.c.h.b16 %v529
        %v2947 = vunpack.c.l.b16 %v530
        %v2948 = vunpack.c.h.b16 %v530
        %v2949 = vunpack.c.l.b16 %v531
        %v2950 = vunpack.c.h.b16 %v531
        %v2951 = vunpack.c.l.b16 %v532
        %v2952 = vunpack.c.h.b16 %v532
        %v2953 = vunpack.c.l.b16 %v533
        %v2954 = vunpack.c.h.b16 %v533
        %v2955 = vunpack.c.l.b16 %v534
        %v2956 = vunpack.c.h.b16 %v534
        %v2957 = vunpack.c.l.b16 %v535
        %v2958 = vunpack.c.h.b16 %v535
        %v2959 = vunpack.c.l.b16 %v536
        %v2960 = vunpack.c.h.b16 %v536
        %v2961 = vunpack.c.l.b16 %v537
        %v2962 = vunpack.c.h.b16 %v537
        %v2963 = vunpack.c.l.b16 %v538
        %v2964 = vunpack.c.h.b16 %v538
        %v2965 = vunpack.c.l.b16 %v539
        %v2966 = vunpack.c.h.b16 %v539
        %v2967 = vunpack.c.l.b16 %v540
        %v2968 = vunpack.c.h.b16 %v540
        %v2969 = vunpack.c.l.b16 %v541
        %v2970 = vunpack.c.h.b16 %v541
        %v2971 = vunpack.c.l.b16 %v542
        %v2972 = vunpack.c.h.b16 %v542
        %v2973 = vunpack.c.l.b16 %v543
        %v2974 = vunpack.c.h.b16 %v543
        %v2975 = vunpack.c.l.b16 %v544
        %v2976 = vunpack.c.h.b16 %v544
        %v2977 = vunpack.c.l.b16 %v545
        %v2978 = vunpack.c.h.b16 %v545
        %v2979 = vunpack.c.l.b16 %v546
        %v2980 = vunpack.c.h.b16 %v546
        %v2981 = vunpack.c.l.b16 %v547
        %v2982 = vunpack.c.h.b16 %v547
        %v2983 = vunpack.c.l.b16 %v548
        %v2984 = vunpack.c.h.b16 %v548
        %v2985 = vunpack.c.l.b16 %v549
        %v2986 = vunpack.c.h.b16 %v549
        %v2987 = vunpack.c.l.b16 %v550
        %v2988 = vunpack.c.h.b16 %v550
        %v2989 = vunpack.c.l.b16 %v551
        %v2990 = vunpack.c.h.b16 %v551
        %v2991 = vunpack.c.l.b16 %v552
        %v2992 = vunpack.c.h.b16 %v552
        %v2993 = vunpack.c.l.b16 %v553
        %v2994 = vunpack.c.h.b16 %v553
        %v2995 = vunpack.c.l.b16 %v554
        %v2996 = vunpack.c.h.b16 %v554
        %v2997 = vunpack.c.l.b16 %v555
        %v2998 = vunpack.c.h.b16 %v555
        %v2999 = vunpack.c.l.b16 %v556
        %v3000 = vunpack.c.h.b16 %v556
        %v3001 = vunpack.c.l.b16 %v557
        %v3002 = vunpack.c.h.b16 %v557
        %v3003 = vunpack.c.l.b16 %v558
        %v3004 = vunpack.c.h.b16 %v558
        %v3005 = vunpack.c.l.b16 %v559
        %v3006 = vunpack.c.h.b16 %v559
        %v3007 = vunpack.c.l.b16 %v560
        %v3008 = vunpack.c.h.b16 %v560
        %v3009 = vunpack.c.l.b16 %v561
        %v3010 = vunpack.c.h.b16 %v561
        %v3011 = vunpack.c.l.b16 %v562
        %v3012 = vunpack.c.h.b16 %v562
        %v3013 = vunpack.c.l.b16 %v563
        %v3014 = vunpack.c.h.b16 %v563
        %v3015 = vunpack.c.l.b16 %v564
        %v3016 = vunpack.c.h.b16 %v564
        %v3017 = vunpack.c.l.b16 %v565
        %v3018 = vunpack.c.h.b16 %v565
        %v3019 = vunpack.c.l.b16 %v566
        %v3020 = vunpack.c.h.b16 %v566
        %v3021 = vunpack.c.l.b16 %v567
        %v3022 = vunpack.c.h.b16 %v567
        %v3023 = vunpack.c.l.b16 %v568
        %v3024 = vunpack.c.h.b16 %v568
        %v3025 = vunpack.c.l.b16 %v569
        %v3026 = vunpack.c.h.b16 %v569
        %v3027 = vunpack.c.l.b16 %v570
        %v3028 = vunpack.c.h.b16 %v570
        %v3029 = vunpack.c.l.b16 %v571
        %v3030 = vunpack.c.h.b16 %v571
        %v3031 = vunpack.c.l.b16 %v572
        %v3032 = vunpack.c.h.b16 %v572
        %v3033 = vunpack.c.l.b16 %v573
        %v3034 = vunpack.c.h.b16 %v573
        %v3035 = vunpack.c.l.b16 %v574
        %v3036 = vunpack.c.h.b16 %v574
        %v3037 = vunpack.c.l.b16 %v575
        %v3038 = vunpack.c.h.b16 %v575
        %v3039 = vunpack.c.l.b16 %v576
        %v3040 = vunpack.c.h.b16 %v576
        %v3041 = vunpack.c.l.b16 %v577
        %v3042 = vunpack.c.h.b16 %v577
        %v3043 = vunpack.c.l.b16 %v578
        %v3044 = vunpack.c.h.b16 %v578
        %v3045 = vunpack.c.l.b16 %v579
        %v3046 = vunpack.c.h.b16 %v579
        %v3047 = vunpack.c.l.b16 %v580
        %v3048 = vunpack.c.h.b16 %v580
        %v3049 = vunpack.c.l.b16 %v581
        %v3050 = vunpack.c.h.b16 %v581
        %v3051 = vunpack.c.l.b16 %v582
        %v3052 = vunpack.c.h.b16 %v582
        %v3053 = vunpack.c.l.b16 %v583
        %v3054 = vunpack.c.h.b16 %v583
        %v3055 = vunpack.c.l.b16 %v584
        %v3056 = vunpack.c.h.b16 %v584
        %v3057 = vunpack.c.l.b16 %v585
        %v3058 = vunpack.c.h.b16 %v585
        %v3059 = vunpack.c.l.b16 %v586
        %v3060 = vunpack.c.h.b16 %v586
        %v3061 = vunpack.c.l.b16 %v587
        %v3062 = vunpack.c.h.b16 %v587
        %v3063 = vunpack.c.l.b16 %v588
        %v3064 = vunpack.c.h.b16 %v588
        %v3065 = vunpack.c.l.b16 %v589
        %v3066 = vunpack.c.h.b16 %v589
        %v3067 = vunpack.c.l.b16 %v590
        %v3068 = vunpack.c.h.b16 %v590
        %v3069 = vunpack.c.l.b16 %v591
        %v3070 = vunpack.c.h.b16 %v591
        %v3071 = vunpack.c.l.b16 %v592
        %v3072 = vunpack.c.h.b16 %v592
        %v3073 = vunpack.c.l.b16 %v593
        %v3074 = vunpack.c.h.b16 %v593
        %v3075 = vunpack.c.l.b16 %v594
        %v3076 = vunpack.c.h.b16 %v594
        %v3077 = vunpack.c.l.b16 %v595
        %v3078 = vunpack.c.h.b16 %v595
        %v3079 = vunpack.c.l.b16 %v596
        %v3080 = vunpack.c.h.b16 %v596
        %v3081 = vunpack.c.l.b16 %v597
        %v3082 = vunpack.c.h.b16 %v597
        %v3083 = vunpack.c.l.b16 %v598
        %v3084 = vunpack.c.h.b16 %v598
        %v3085 = vunpack.c.l.b16 %v599
        %v3086 = vunpack.c.h.b16 %v599
        %v3087 = vunpack.c.l.b16 %v600
        %v3088 = vunpack.c.h.b16 %v600
        %v3089 = vunpack.c.l.b16 %v601
        %v3090 = vunpack.c.h.b16 %v601
        %v3091 = vunpack.c.l.b16 %v602
        %v3092 = vunpack.c.h.b16 %v602
        %v3093 = vunpack.c.l.b16 %v603
        %v3094 = vunpack.c.h.b16 %v603
        %v3095 = vunpack.c.l.b16 %v604
        %v3096 = vunpack.c.h.b16 %v604
        %v3097 = vunpack.c.l.b16 %v605
        %v3098 = vunpack.c.h.b16 %v605
        %v3099 = vunpack.c.l.b16 %v606
        %v3100 = vunpack.c.h.b16 %v606
        %v3101 = vunpack.c.l.b16 %v607
        %v3102 = vunpack.c.h.b16 %v607
        %v3103 = vunpack.c.l.b16 %v608
        %v3104 = vunpack.c.h.b16 %v608
        %v3105 = vunpack.c.l.b16 %v609
        %v3106 = vunpack.c.h.b16 %v609
        %v3107 = vunpack.c.l.b16 %v610
        %v3108 = vunpack.c.h.b16 %v610
        %v3109 = vunpack.c.l.b16 %v611
        %v3110 = vunpack.c.h.b16 %v611
        %v3111 = vunpack.c.l.b16 %v612
        %v3112 = vunpack.c.h.b16 %v612
        %v3113 = vunpack.c.l.b16 %v613
        %v3114 = vunpack.c.h.b16 %v613
        %v3115 = vunpack.c.l.b16 %v614
        %v3116 = vunpack.c.h.b16 %v614
        %v3117 = vunpack.c.l.b16 %v615
        %v3118 = vunpack.c.h.b16 %v615
        %v3119 = vunpack.c.l.b16 %v616
        %v3120 = vunpack.c.h.b16 %v616
        %v3121 = vunpack.c.l.b16 %v617
        %v3122 = vunpack.c.h.b16 %v617
        %v3123 = vunpack.c.l.b16 %v618
        %v3124 = vunpack.c.h.b16 %v618
        %v3125 = vunpack.c.l.b16 %v619
        %v3126 = vunpack.c.h.b16 %v619
        %v3127 = vunpack.c.l.b16 %v620
        %v3128 = vunpack.c.h.b16 %v620
        %v3129 = vunpack.c.l.b16 %v621
        %v3130 = vunpack.c.h.b16 %v621
        %v3131 = vunpack.c.l.b16 %v622
        %v3132 = vunpack.c.h.b16 %v622
        %v3133 = vunpack.c.l.b16 %v623
        %v3134 = vunpack.c.h.b16 %v623
        %v3135 = vunpack.c.l.b16 %v624
        %v3136 = vunpack.c.h.b16 %v624
        %v3137 = vunpack.c.l.b16 %v625
        %v3138 = vunpack.c.h.b16 %v625
        %v3139 = vunpack.c.l.b16 %v626
        %v3140 = vunpack.c.h.b16 %v626
        %v3141 = vunpack.c.l.b16 %v627
        %v3142 = vunpack.c.h.b16 %v627
        %v3143 = vunpack.c.l.b16 %v628
        %v3144 = vunpack.c.h.b16 %v628
        %v3145 = vunpack.c.l.b16 %v629
        %v3146 = vunpack.c.h.b16 %v629
        %v3147 = vunpack.c.l.b16 %v630
        %v3148 = vunpack.c.h.b16 %v630
        %v3149 = vunpack.c.l.b16 %v631
        %v3150 = vunpack.c.h.b16 %v631
        %v3151 = vunpack.c.l.b16 %v632
        %v3152 = vunpack.c.h.b16 %v632
        %v3153 = vunpack.c.l.b16 %v633
        %v3154 = vunpack.c.h.b16 %v633
        %v3155 = vunpack.c.l.b16 %v634
        %v3156 = vunpack.c.h.b16 %v634
        %v3157 = vunpack.c.l.b16 %v635
        %v3158 = vunpack.c.h.b16 %v635
        %v3159 = vunpack.c.l.b16 %v636
        %v3160 = vunpack.c.h.b16 %v636
        %v3161 = vunpack.c.l.b16 %v637
        %v3162 = vunpack.c.h.b16 %v637
        %v3163 = vunpack.c.l.b16 %v638
        %v3164 = vunpack.c.h.b16 %v638
        %v3165 = vunpack.c.l.b16 %v639
        %v3166 = vunpack.c.h.b16 %v639
        %v3167 = vunpack.c.l.b16 %v640
        %v3168 = vunpack.c.h.b16 %v640
        %v3169 = vunpack.c.l.b16 %v641
        %v3170 = vunpack.c.h.b16 %v641
        %v3171 = vunpack.c.l.b16 %v642
        %v3172 = vunpack.c.h.b16 %v642
        %v3173 = vunpack.c.l.b16 %v643
        %v3174 = vunpack.c.h.b16 %v643
        %v3175 = vunpack.c.l.b16 %v644
        %v3176 = vunpack.c.h.b16 %v644
        %v3177 = vunpack.c.l.b16 %v645
        %v3178 = vunpack.c.h.b16 %v645
        %v3179 = vunpack.c.l.b16 %v646
        %v3180 = vunpack.c.h.b16 %v646
        %v3181 = vunpack.c.l.b16 %v647
        %v3182 = vunpack.c.h.b16 %v647
        %v3183 = vunpack.c.l.b16 %v648
        %v3184 = vunpack.c.h.b16 %v648
        %v3185 = vunpack.c.l.b16 %v649
        %v3186 = vunpack.c.h.b16 %v649
        %v3187 = vunpack.c.l.b16 %v650
        %v3188 = vunpack.c.h.b16 %v650
        %v3189 = vunpack.c.l.b16 %v651
        %v3190 = vunpack.c.h.b16 %v651
        %v3191 = vunpack.c.l.b16 %v652
        %v3192 = vunpack.c.h.b16 %v652
        %v3193 = vunpack.c.l.b16 %v653
        %v3194 = vunpack.c.h.b16 %v653
        %v3195 = vunpack.c.l.b16 %v654
        %v3196 = vunpack.c.h.b16 %v654
        %v3197 = vunpack.c.l.b16 %v655
        %v3198 = vunpack.c.h.b16 %v655
        %v3199 = vunpack.c.l.b16 %v656
        %v3200 = vunpack.c.h.b16 %v656
        %v3201 = vunpack.c.l.b16 %v657
        %v3202 = vunpack.c.h.b16 %v657
        %v3203 = vunpack.c.l.b16 %v658
        %v3204 = vunpack.c.h.b16 %v658
        %v3205 = vunpack.c.l.b16 %v659
        %v3206 = vunpack.c.h.b16 %v659
        %v3207 = vunpack.c.l.b16 %v660
        %v3208 = vunpack.c.h.b16 %v660
        %v3209 = vunpack.c.l.b16 %v661
        %v3210 = vunpack.c.h.b16 %v661
        %v3211 = vunpack.c.l.b16 %v662
        %v3212 = vunpack.c.h.b16 %v662
        %v3213 = vunpack.c.l.b16 %v663
        %v3214 = vunpack.c.h.b16 %v663
        %v3215 = vunpack.c.l.b16 %v664
        %v3216 = vunpack.c.h.b16 %v664
        %v3217 = vunpack.c.l.b16 %v665
        %v3218 = vunpack.c.h.b16 %v665
        %v3219 = vunpack.c.l.b16 %v666
        %v3220 = vunpack.c.h.b16 %v666
        %v3221 = vunpack.c.l.b16 %v667
        %v3222 = vunpack.c.h.b16 %v667
        %v3223 = vunpack.c.l.b16 %v668
        %v3224 = vunpack.c.h.b16 %v668
        %v3225 = vunpack.c.l.b16 %v669
        %v3226 = vunpack.c.h.b16 %v669
        %v3227 = vunpack.c.l.b16 %v670
        %v3228 = vunpack.c.h.b16 %v670
        %v3229 = vunpack.c.l.b16 %v671
        %v3230 = vunpack.c.h.b16 %v671
        %v3231 = vunpack.c.l.b16 %v672
        %v3232 = vunpack.c.h.b16 %v672
        %v3233 = vunpack.c.l.b16 %v673
        %v3234 = vunpack.c.h.b16 %v673
        %v3235 = vunpack.c.l.b16 %v674
        %v3236 = vunpack.c.h.b16 %v674
        %v3237 = vunpack.c.l.b16 %v675
        %v3238 = vunpack.c.h.b16 %v675
        %v3239 = vunpack.c.l.b16 %v676
        %v3240 = vunpack.c.h.b16 %v676
        %v3241 = vunpack.c.l.b16 %v677
        %v3242 = vunpack.c.h.b16 %v677
        %v3243 = vunpack.c.l.b16 %v678
        %v3244 = vunpack.c.h.b16 %v678
        %v3245 = vunpack.c.l.b16 %v679
        %v3246 = vunpack.c.h.b16 %v679
        %v3247 = vunpack.c.l.b16 %v680
        %v3248 = vunpack.c.h.b16 %v680
        %v3249 = vunpack.c.l.b16 %v681
        %v3250 = vunpack.c.h.b16 %v681
        %v3251 = vunpack.c.l.b16 %v682
        %v3252 = vunpack.c.h.b16 %v682
        %v3253 = vunpack.c.l.b16 %v683
        %v3254 = vunpack.c.h.b16 %v683
        %v3255 = vunpack.c.l.b16 %v684
        %v3256 = vunpack.c.h.b16 %v684
        %v3257 = vunpack.c.l.b16 %v685
        %v3258 = vunpack.c.h.b16 %v685
        %v3259 = vunpack.c.l.b16 %v686
        %v3260 = vunpack.c.h.b16 %v686
        %v3261 = vunpack.c.l.b16 %v687
        %v3262 = vunpack.c.h.b16 %v687
        %v3263 = vunpack.c.l.b16 %v688
        %v3264 = vunpack.c.h.b16 %v688
        %v3265 = vunpack.c.l.b16 %v689
        %v3266 = vunpack.c.h.b16 %v689
        %v3267 = vunpack.c.l.b16 %v690
        %v3268 = vunpack.c.h.b16 %v690
        %v3269 = vunpack.c.l.b16 %v691
        %v3270 = vunpack.c.h.b16 %v691
        %v3271 = vunpack.c.l.b16 %v692
        %v3272 = vunpack.c.h.b16 %v692
        %v3273 = vunpack.c.l.b16 %v693
        %v3274 = vunpack.c.h.b16 %v693
        %v3275 = vunpack.c.l.b16 %v694
        %v3276 = vunpack.c.h.b16 %v694
        %v3277 = vunpack.c.l.b16 %v695
        %v3278 = vunpack.c.h.b16 %v695
        %v3279 = vunpack.c.l.b16 %v696
        %v3280 = vunpack.c.h.b16 %v696
        %v3281 = vunpack.c.l.b16 %v697
        %v3282 = vunpack.c.h.b16 %v697
        %v3283 = vunpack.c.l.b16 %v698
        %v3284 = vunpack.c.h.b16 %v698
        %v3285 = vunpack.c.l.b16 %v699
        %v3286 = vunpack.c.h.b16 %v699
        %v3287 = vunpack.c.l.b16 %v700
        %v3288 = vunpack.c.h.b16 %v700
        %v3289 = vunpack.c.l.b16 %v701
        %v3290 = vunpack.c.h.b16 %v701
        %v3291 = vunpack.c.l.b16 %v702
        %v3292 = vunpack.c.h.b16 %v702
        %v3293 = vunpack.c.l.b16 %v703
        %v3294 = vunpack.c.h.b16 %v703
        %v3295 = vunpack.c.l.b16 %v704
        %v3296 = vunpack.c.h.b16 %v704
        %v3297 = vunpack.c.l.b16 %v705
        %v3298 = vunpack.c.h.b16 %v705
        %v3299 = vunpack.c.l.b16 %v706
        %v3300 = vunpack.c.h.b16 %v706
        %v3301 = vunpack.c.l.b16 %v707
        %v3302 = vunpack.c.h.b16 %v707
        %v3303 = vunpack.c.l.b16 %v708
        %v3304 = vunpack.c.h.b16 %v708
        %v3305 = vunpack.c.l.b16 %v709
        %v3306 = vunpack.c.h.b16 %v709
        %v3307 = vunpack.c.l.b16 %v710
        %v3308 = vunpack.c.h.b16 %v710
        %v3309 = vunpack.c.l.b16 %v711
        %v3310 = vunpack.c.h.b16 %v711
        %v3311 = vunpack.c.l.b16 %v712
        %v3312 = vunpack.c.h.b16 %v712
        %v3313 = vunpack.c.l.b16 %v713
        %v3314 = vunpack.c.h.b16 %v713
        %v3315 = vunpack.c.l.b16 %v714
        %v3316 = vunpack.c.h.b16 %v714
        %v3317 = vunpack.c.l.b16 %v715
        %v3318 = vunpack.c.h.b16 %v715
        %v3319 = vunpack.c.l.b16 %v716
        %v3320 = vunpack.c.h.b16 %v716
        %v3321 = vunpack.c.l.b16 %v717
        %v3322 = vunpack.c.h.b16 %v717
        %v3323 = vunpack.c.l.b16 %v718
        %v3324 = vunpack.c.h.b16 %v718
        %v3325 = vunpack.c.l.b16 %v719
        %v3326 = vunpack.c.h.b16 %v719
        %v3327 = vunpack.c.l.b16 %v720
        %v3328 = vunpack.c.h.b16 %v720
        %v3329 = vunpack.c.l.b16 %v721
        %v3330 = vunpack.c.h.b16 %v721
        %v3331 = vunpack.c.l.b16 %v722
        %v3332 = vunpack.c.h.b16 %v722
        %v3333 = vunpack.c.l.b16 %v723
        %v3334 = vunpack.c.h.b16 %v723
        %v3335 = vunpack.c.l.b16 %v724
        %v3336 = vunpack.c.h.b16 %v724
        %v3337 = vunpack.c.l.b16 %v725
        %v3338 = vunpack.c.h.b16 %v725
        %v3339 = vunpack.c.l.b16 %v726
        %v3340 = vunpack.c.h.b16 %v726
        %v3341 = vunpack.c.l.b16 %v727
        %v3342 = vunpack.c.h.b16 %v727
        %v3343 = vunpack.c.l.b16 %v728
        %v3344 = vunpack.c.h.b16 %v728
        %v3345 = vunpack.c.l.b16 %v729
        %v3346 = vunpack.c.h.b16 %v729
        %v3347 = vunpack.c.l.b16 %v730
        %v3348 = vunpack.c.h.b16 %v730
        %v3349 = vunpack.c.l.b16 %v731
        %v3350 = vunpack.c.h.b16 %v731
        %v3351 = vunpack.c.l.b16 %v732
        %v3352 = vunpack.c.h.b16 %v732
        %v3353 = vunpack.c.l.b16 %v733
        %v3354 = vunpack.c.h.b16 %v733
        %v3355 = vunpack.c.l.b16 %v734
        %v3356 = vunpack.c.h.b16 %v734
        %v3357 = vunpack.c.l.b16 %v735
        %v3358 = vunpack.c.h.b16 %v735
        %v3359 = vunpack.c.l.b16 %v736
        %v3360 = vunpack.c.h.b16 %v736
        %v3361 = vunpack.c.l.b16 %v737
        %v3362 = vunpack.c.h.b16 %v737
        %v3363 = vunpack.c.l.b16 %v738
        %v3364 = vunpack.c.h.b16 %v738
        %v3365 = vunpack.c.l.b16 %v739
        %v3366 = vunpack.c.h.b16 %v739
        %v3367 = vunpack.c.l.b16 %v740
        %v3368 = vunpack.c.h.b16 %v740
        %v3369 = vunpack.c.l.b16 %v741
        %v3370 = vunpack.c.h.b16 %v741
        %v3371 = vunpack.c.l.b16 %v742
        %v3372 = vunpack.c.h.b16 %v742
        %v3373 = vunpack.c.l.b16 %v743
        %v3374 = vunpack.c.h.b16 %v743
        %v3375 = vunpack.c.l.b16 %v744
        %v3376 = vunpack.c.h.b16 %v744
        %v3377 = vunpack.c.l.b16 %v745
        %v3378 = vunpack.c.h.b16 %v745
        %v3379 = vunpack.c.l.b16 %v746
        %v3380 = vunpack.c.h.b16 %v746
        %v3381 = vunpack.c.l.b16 %v747
        %v3382 = vunpack.c.h.b16 %v747
        %v3383 = vunpack.c.l.b16 %v748
        %v3384 = vunpack.c.h.b16 %v748
        %v3385 = vunpack.c.l.b16 %v749
        %v3386 = vunpack.c.h.b16 %v749
        %v3387 = vunpack.c.l.b16 %v750
        %v3388 = vunpack.c.h.b16 %v750
        %v3389 = vunpack.c.l.b16 %v751
        %v3390 = vunpack.c.h.b16 %v751
        %v3391 = vunpack.c.l.b16 %v752
        %v3392 = vunpack.c.h.b16 %v752
        %v3393 = vunpack.c.l.b16 %v753
        %v3394 = vunpack.c.h.b16 %v753
        %v3395 = vunpack.c.l.b16 %v754
        %v3396 = vunpack.c.h.b16 %v754
        %v3397 = vunpack.c.l.b16 %v755
        %v3398 = vunpack.c.h.b16 %v755
        %v3399 = vunpack.c.l.b16 %v756
        %v3400 = vunpack.c.h.b16 %v756
        %v3401 = vunpack.c.l.b16 %v757
        %v3402 = vunpack.c.h.b16 %v757
        %v3403 = vunpack.c.l.b16 %v758
        %v3404 = vunpack.c.h.b16 %v758
        %v3405 = vunpack.c.l.b16 %v759
        %v3406 = vunpack.c.h.b16 %v759
        %v3407 = vunpack.c.l.b16 %v760
        %v3408 = vunpack.c.h.b16 %v760
        %v3409 = vunpack.c.l.b16 %v761
        %v3410 = vunpack.c.h.b16 %v761
        %v3411 = vunpack.c.l.b16 %v762
        %v3412 = vunpack.c.h.b16 %v762
        %v3413 = vunpack.c.l.b16 %v763
        %v3414 = vunpack.c.h.b16 %v763
        %v3415 = vunpack.c.l.b16 %v764
        %v3416 = vunpack.c.h.b16 %v764
        %v3417 = vunpack.c.l.b16 %v765
        %v3418 = vunpack.c.h.b16 %v765
        %v3419 = vunpack.c.l.b16 %v766
        %v3420 = vunpack.c.h.b16 %v766
        %v3421 = vunpack.c.l.b16 %v767
        %v3422 = vunpack.c.h.b16 %v767
        %v3423 = vunpack.c.l.b16 %v768
        %v3424 = vunpack.c.h.b16 %v768
        %v3425 = vunpack.c.l.b16 %v769
        %v3426 = vunpack.c.h.b16 %v769
        %v3427 = vunpack.c.l.b16 %v770
        %v3428 = vunpack.c.h.b16 %v770
        %v3429 = vunpack.c.l.b16 %v771
        %v3430 = vunpack.c.h.b16 %v771
        %v3431 = vunpack.c.l.b16 %v772
        %v3432 = vunpack.c.h.b16 %v772
        %v3433 = vunpack.c.l.b16 %v773
        %v3434 = vunpack.c.h.b16 %v773
        %v3435 = vunpack.c.l.b16 %v774
        %v3436 = vunpack.c.h.b16 %v774
        %v3437 = vunpack.c.l.b16 %v775
        %v3438 = vunpack.c.h.b16 %v775
        %v3439 = vunpack.c.l.b16 %v776
        %v3440 = vunpack.c.h.b16 %v776
        %v3441 = vunpack.c.l.b16 %v777
        %v3442 = vunpack.c.h.b16 %v777
        %v3443 = vunpack.c.l.b16 %v778
        %v3444 = vunpack.c.h.b16 %v778
        %v3445 = vunpack.c.l.b16 %v779
        %v3446 = vunpack.c.h.b16 %v779
        %v3447 = vunpack.c.l.b16 %v780
        %v3448 = vunpack.c.h.b16 %v780
        %v3449 = vunpack.c.l.b16 %v781
        %v3450 = vunpack.c.h.b16 %v781
        %v3451 = vunpack.c.l.b16 %v782
        %v3452 = vunpack.c.h.b16 %v782
        %v3453 = vunpack.c.l.b16 %v783
        %v3454 = vunpack.c.h.b16 %v783
        %v3455 = vunpack.c.l.b16 %v784
        %v3456 = vunpack.c.h.b16 %v784
        %v3457 = vunpack.c.l.b16 %v785
        %v3458 = vunpack.c.h.b16 %v785
        %v3459 = vunpack.c.l.b16 %v786
        %v3460 = vunpack.c.h.b16 %v786
        %v3461 = vunpack.c.l.b16 %v787
        %v3462 = vunpack.c.h.b16 %v787
        %v3463 = vunpack.c.l.b16 %v788
        %v3464 = vunpack.c.h.b16 %v788
        %v3465 = vunpack.c.l.b16 %v789
        %v3466 = vunpack.c.h.b16 %v789
        %v3467 = vunpack.c.l.b16 %v790
        %v3468 = vunpack.c.h.b16 %v790
        %v3469 = vunpack.c.l.b16 %v791
        %v3470 = vunpack.c.h.b16 %v791
        %v3471 = vunpack.c.l.b16 %v792
        %v3472 = vunpack.c.h.b16 %v792
        %v3473 = vunpack.c.l.b16 %v793
        %v3474 = vunpack.c.h.b16 %v793
        %v3475 = vunpack.c.l.b16 %v794
        %v3476 = vunpack.c.h.b16 %v794
        %v3477 = vunpack.c.l.b16 %v795
        %v3478 = vunpack.c.h.b16 %v795
        %v3479 = vunpack.c.l.b16 %v796
        %v3480 = vunpack.c.h.b16 %v796
        %v3481 = vunpack.c.l.b16 %v797
        %v3482 = vunpack.c.h.b16 %v797
        %v3483 = vunpack.c.l.b16 %v798
        %v3484 = vunpack.c.h.b16 %v798
        %v3485 = vunpack.c.l.b16 %v799
        %v3486 = vunpack.c.h.b16 %v799
        %v3487 = vunpack.c.l.b16 %v800
        %v3488 = vunpack.c.h.b16 %v800
        %v3489 = vunpack.c.l.b16 %v801
        %v3490 = vunpack.c.h.b16 %v801
        %v3491 = vunpack.c.l.b16 %v802
        %v3492 = vunpack.c.h.b16 %v802
        %v3493 = vunpack.c.l.b16 %v803
        %v3494 = vunpack.c.h.b16 %v803
        %v3495 = vunpack.c.l.b16 %v804
        %v3496 = vunpack.c.h.b16 %v804
        %v3497 = vunpack.c.l.b16 %v805
        %v3498 = vunpack.c.h.b16 %v805
        %v3499 = vunpack.c.l.b16 %v806
        %v3500 = vunpack.c.h.b16 %v806
        %v3501 = vunpack.c.l.b16 %v807
        %v3502 = vunpack.c.h.b16 %v807
        %v3503 = vunpack.c.l.b16 %v808
        %v3504 = vunpack.c.h.b16 %v808
        %v3505 = vunpack.c.l.b16 %v809
        %v3506 = vunpack.c.h.b16 %v809
        %v3507 = vunpack.c.l.b16 %v810
        %v3508 = vunpack.c.h.b16 %v810
        %v3509 = vunpack.c.l.b16 %v811
        %v3510 = vunpack.c.h.b16 %v811
        %v3511 = vunpack.c.l.b16 %v812
        %v3512 = vunpack.c.h.b16 %v812
        %v3513 = vunpack.c.l.b16 %v813
        %v3514 = vunpack.c.h.b16 %v813
        %v3515 = vunpack.c.l.b16 %v814
        %v3516 = vunpack.c.h.b16 %v814
        %v3517 = vunpack.c.l.b16 %v815
        %v3518 = vunpack.c.h.b16 %v815
        %v3519 = vunpack.c.l.b16 %v816
        %v3520 = vunpack.c.h.b16 %v816
        %v3521 = vunpack.c.l.b16 %v817
        %v3522 = vunpack.c.h.b16 %v817
        %v3523 = vunpack.c.l.b16 %v818
        %v3524 = vunpack.c.h.b16 %v818
        %v3525 = vunpack.c.l.b16 %v819
        %v3526 = vunpack.c.h.b16 %v819
        %v3527 = vunpack.c.l.b16 %v820
        %v3528 = vunpack.c.h.b16 %v820
        %v3529 = vunpack.c.l.b16 %v821
        %v3530 = vunpack.c.h.b16 %v821
        %v3531 = vunpack.c.l.b16 %v822
        %v3532 = vunpack.c.h.b16 %v822
        %v3533 = vunpack.c.l.b16 %v823
        %v3534 = vunpack.c.h.b16 %v823
        %v3535 = vunpack.c.l.b16 %v824
        %v3536 = vunpack.c.h.b16 %v824
        %v3537 = vunpack.c.l.b16 %v825
        %v3538 = vunpack.c.h.b16 %v825
        %v3539 = vunpack.c.l.b16 %v826
        %v3540 = vunpack.c.h.b16 %v826
        %v3541 = vunpack.c.l.b16 %v827
        %v3542 = vunpack.c.h.b16 %v827
        %v3543 = vunpack.c.l.b16 %v828
        %v3544 = vunpack.c.h.b16 %v828
        %v3545 = vunpack.c.l.b16 %v829
        %v3546 = vunpack.c.h.b16 %v829
        %v3547 = vunpack.c.l.b16 %v830
        %v3548 = vunpack.c.h.b16 %v830
        %v3549 = vunpack.c.l.b16 %v831
        %v3550 = vunpack.c.h.b16 %v831
        %v3551 = vunpack.c.l.b16 %v832
        %v3552 = vunpack.c.h.b16 %v832
        %v3553 = vunpack.c.l.b16 %v833
        %v3554 = vunpack.c.h.b16 %v833
        %v3555 = vunpack.c.l.b16 %v834
        %v3556 = vunpack.c.h.b16 %v834
        %v3557 = vunpack.c.l.b16 %v835
        %v3558 = vunpack.c.h.b16 %v835
        %v3559 = vunpack.c.l.b16 %v836
        %v3560 = vunpack.c.h.b16 %v836
        %v3561 = vunpack.c.l.b16 %v837
        %v3562 = vunpack.c.h.b16 %v837
        %v3563 = vunpack.c.l.b16 %v838
        %v3564 = vunpack.c.h.b16 %v838
        %v3565 = vunpack.c.l.b16 %v839
        %v3566 = vunpack.c.h.b16 %v839
        %v3567 = vunpack.c.l.b16 %v840
        %v3568 = vunpack.c.h.b16 %v840
        %v3569 = vunpack.c.l.b16 %v841
        %v3570 = vunpack.c.h.b16 %v841
        %v3571 = vunpack.c.l.b16 %v842
        %v3572 = vunpack.c.h.b16 %v842
        %v3573 = vunpack.c.l.b16 %v843
        %v3574 = vunpack.c.h.b16 %v843
        %v3575 = vunpack.c.l.b16 %v844
        %v3576 = vunpack.c.h.b16 %v844
        %v3577 = vunpack.c.l.b16 %v845
        %v3578 = vunpack.c.h.b16 %v845
        %v3579 = vunpack.c.l.b16 %v846
        %v3580 = vunpack.c.h.b16 %v846
        %v3581 = vunpack.c.l.b16 %v847
        %v3582 = vunpack.c.h.b16 %v847
        %v3583 = vunpack.c.l.b16 %v848
        %v3584 = vunpack.c.h.b16 %v848
        %v3585 = vunpack.c.l.b16 %v849
        %v3586 = vunpack.c.h.b16 %v849
        %v3587 = vunpack.c.l.b16 %v850
        %v3588 = vunpack.c.h.b16 %v850
        %v3589 = vunpack.c.l.b16 %v851
        %v3590 = vunpack.c.h.b16 %v851
        %v3591 = vunpack.c.l.b16 %v852
        %v3592 = vunpack.c.h.b16 %v852
        %v3593 = vunpack.c.l.b16 %v853
        %v3594 = vunpack.c.h.b16 %v853
        %v3595 = vunpack.c.l.b16 %v854
        %v3596 = vunpack.c.h.b16 %v854
        %v3597 = vunpack.c.l.b16 %v855
        %v3598 = vunpack.c.h.b16 %v855
        %v3599 = vunpack.c.l.b16 %v856
        %v3600 = vunpack.c.h.b16 %v856
        %v3601 = vunpack.c.l.b16 %v857
        %v3602 = vunpack.c.h.b16 %v857
        %v3603 = vunpack.c.l.b16 %v858
        %v3604 = vunpack.c.h.b16 %v858
        %v3605 = vunpack.c.l.b16 %v859
        %v3606 = vunpack.c.h.b16 %v859
        %v3607 = vunpack.c.l.b16 %v860
        %v3608 = vunpack.c.h.b16 %v860
        %v3609 = vunpack.c.l.b16 %v861
        %v3610 = vunpack.c.h.b16 %v861
        %v3611 = vunpack.c.l.b16 %v862
        %v3612 = vunpack.c.h.b16 %v862
        %v3613 = vunpack.c.l.b16 %v863
        %v3614 = vunpack.c.h.b16 %v863
        %v3615 = vunpack.c.l.b16 %v864
        %v3616 = vunpack.c.h.b16 %v864
        %v3617 = vunpack.c.l.b16 %v865
        %v3618 = vunpack.c.h.b16 %v865
        %v3619 = vunpack.c.l.b16 %v866
        %v3620 = vunpack.c.h.b16 %v866
        %v3621 = vunpack.c.l.b16 %v867
        %v3622 = vunpack.c.h.b16 %v867
        %v3623 = vunpack.c.l.b16 %v868
        %v3624 = vunpack.c.h.b16 %v868
        %v3625 = vunpack.c.l.b16 %v869
        %v3626 = vunpack.c.h.b16 %v869
        %v3627 = vunpack.c.l.b16 %v870
        %v3628 = vunpack.c.h.b16 %v870
        %v3629 = vunpack.c.l.b16 %v871
        %v3630 = vunpack.c.h.b16 %v871
        %v3631 = vunpack.c.l.b16 %v872
        %v3632 = vunpack.c.h.b16 %v872
        %v3633 = vunpack.c.l.b16 %v873
        %v3634 = vunpack.c.h.b16 %v873
        %v3635 = vunpack.c.l.b16 %v874
        %v3636 = vunpack.c.h.b16 %v874
        %v3637 = vunpack.c.l.b16 %v875
        %v3638 = vunpack.c.h.b16 %v875
        %v3639 = vunpack.c.l.b16 %v876
        %v3640 = vunpack.c.h.b16 %v876
        %v3641 = vunpack.c.l.b16 %v877
        %v3642 = vunpack.c.h.b16 %v877
        %v3643 = vunpack.c.l.b16 %v878
        %v3644 = vunpack.c.h.b16 %v878
        %v3645 = vunpack.c.l.b16 %v879
        %v3646 = vunpack.c.h.b16 %v879
        %v3647 = vunpack.c.l.b16 %v880
        %v3648 = vunpack.c.h.b16 %v880
        %v3649 = vunpack.c.l.b16 %v881
        %v3650 = vunpack.c.h.b16 %v881
        %v3651 = vunpack.c.l.b16 %v882
        %v3652 = vunpack.c.h.b16 %v882
        %v3653 = vunpack.c.l.b16 %v883
        %v3654 = vunpack.c.h.b16 %v883
        %v3655 = vunpack.c.l.b16 %v884
        %v3656 = vunpack.c.h.b16 %v884
        %v3657 = vunpack.c.l.b16 %v885
        %v3658 = vunpack.c.h.b16 %v885
        %v3659 = vunpack.c.l.b16 %v886
        %v3660 = vunpack.c.h.b16 %v886
        %v3661 = vunpack.c.l.b16 %v887
        %v3662 = vunpack.c.h.b16 %v887
        %v3663 = vunpack.c.l.b16 %v888
        %v3664 = vunpack.c.h.b16 %v888
        %v3665 = vunpack.c.l.b16 %v889
        %v3666 = vunpack.c.h.b16 %v889
        %v3667 = vunpack.c.l.b16 %v890
        %v3668 = vunpack.c.h.b16 %v890
        %v3669 = vunpack.c.l.b16 %v891
        %v3670 = vunpack.c.h.b16 %v891
        %v3671 = vunpack.c.l.b16 %v892
        %v3672 = vunpack.c.h.b16 %v892
        %v3673 = vunpack.c.l.b16 %v893
        %v3674 = vunpack.c.h.b16 %v893
        %v3675 = vunpack.c.l.b16 %v894
        %v3676 = vunpack.c.h.b16 %v894
        %v3677 = vunpack.c.l.b16 %v895
        %v3678 = vunpack.c.h.b16 %v895
        %v3679 = vunpack.c.l.b16 %v896
        %v3680 = vunpack.c.h.b16 %v896
        %v3681 = vunpack.c.l.b16 %v897
        %v3682 = vunpack.c.h.b16 %v897
        %v3683 = vunpack.c.l.b16 %v898
        %v3684 = vunpack.c.h.b16 %v898
        %v3685 = vunpack.c.l.b16 %v899
        %v3686 = vunpack.c.h.b16 %v899
        %v3687 = vunpack.c.l.b16 %v900
        %v3688 = vunpack.c.h.b16 %v900
        %v3689 = vunpack.c.l.b16 %v901
        %v3690 = vunpack.c.h.b16 %v901
        %v3691 = vunpack.c.l.b16 %v902
        %v3692 = vunpack.c.h.b16 %v902
        %v3693 = vunpack.c.l.b16 %v903
        %v3694 = vunpack.c.h.b16 %v903
        %v3695 = vunpack.c.l.b16 %v904
        %v3696 = vunpack.c.h.b16 %v904
        %v3697 = vunpack.c.l.b16 %v905
        %v3698 = vunpack.c.h.b16 %v905
        %v3699 = vunpack.c.l.b16 %v906
        %v3700 = vunpack.c.h.b16 %v906
        %v3701 = vunpack.c.l.b16 %v907
        %v3702 = vunpack.c.h.b16 %v907
        %v3703 = vunpack.c.l.b16 %v908
        %v3704 = vunpack.c.h.b16 %v908
        %v3705 = vunpack.c.l.b16 %v909
        %v3706 = vunpack.c.h.b16 %v909
        %v3707 = vunpack.c.l.b16 %v910
        %v3708 = vunpack.c.h.b16 %v910
        %v3709 = vunpack.c.l.b16 %v911
        %v3710 = vunpack.c.h.b16 %v911
        %v3711 = vunpack.c.l.b16 %v912
        %v3712 = vunpack.c.h.b16 %v912
        %v3713 = vunpack.c.l.b16 %v913
        %v3714 = vunpack.c.h.b16 %v913
        %v3715 = vunpack.c.l.b16 %v914
        %v3716 = vunpack.c.h.b16 %v914
        %v3717 = vunpack.c.l.b16 %v915
        %v3718 = vunpack.c.h.b16 %v915
        %v3719 = vunpack.c.l.b16 %v916
        %v3720 = vunpack.c.h.b16 %v916
        %v3721 = vunpack.c.l.b16 %v917
        %v3722 = vunpack.c.h.b16 %v917
        %v3723 = vunpack.c.l.b16 %v918
        %v3724 = vunpack.c.h.b16 %v918
        %v3725 = vunpack.c.l.b16 %v919
        %v3726 = vunpack.c.h.b16 %v919
        %v3727 = vunpack.c.l.b16 %v920
        %v3728 = vunpack.c.h.b16 %v920
        %v3729 = vunpack.c.l.b16 %v921
        %v3730 = vunpack.c.h.b16 %v921
        %v3731 = vunpack.c.l.b16 %v922
        %v3732 = vunpack.c.h.b16 %v922
        %v3733 = vunpack.c.l.b16 %v923
        %v3734 = vunpack.c.h.b16 %v923
        %v3735 = vunpack.c.l.b16 %v924
        %v3736 = vunpack.c.h.b16 %v924
        %v3737 = vunpack.c.l.b16 %v925
        %v3738 = vunpack.c.h.b16 %v925
        %v3739 = vunpack.c.l.b16 %v926
        %v3740 = vunpack.c.h.b16 %v926
        %v3741 = vunpack.c.l.b16 %v927
        %v3742 = vunpack.c.h.b16 %v927
        %v3743 = vunpack.c.l.b16 %v928
        %v3744 = vunpack.c.h.b16 %v928
        %v3745 = vunpack.c.l.b16 %v929
        %v3746 = vunpack.c.h.b16 %v929
        %v3747 = vunpack.c.l.b16 %v930
        %v3748 = vunpack.c.h.b16 %v930
        %v3749 = vunpack.c.l.b16 %v931
        %v3750 = vunpack.c.h.b16 %v931
        %v3751 = vunpack.c.l.b16 %v932
        %v3752 = vunpack.c.h.b16 %v932
        %v3753 = vunpack.c.l.b16 %v933
        %v3754 = vunpack.c.h.b16 %v933
        %v3755 = vunpack.c.l.b16 %v934
        %v3756 = vunpack.c.h.b16 %v934
        %v3757 = vunpack.c.l.b16 %v935
        %v3758 = vunpack.c.h.b16 %v935
        %v3759 = vunpack.c.l.b16 %v936
        %v3760 = vunpack.c.h.b16 %v936
        %v3761 = vunpack.c.l.b16 %v937
        %v3762 = vunpack.c.h.b16 %v937
        %v3763 = vunpack.c.l.b16 %v938
        %v3764 = vunpack.c.h.b16 %v938
        %v3765 = vunpack.c.l.b16 %v939
        %v3766 = vunpack.c.h.b16 %v939
        %v3767 = vunpack.c.l.b16 %v940
        %v3768 = vunpack.c.h.b16 %v940
        %v3769 = vunpack.c.l.b16 %v941
        %v3770 = vunpack.c.h.b16 %v941
        %v3771 = vunpack.c.l.b16 %v942
        %v3772 = vunpack.c.h.b16 %v942
        %v3773 = vunpack.c.l.b16 %v943
        %v3774 = vunpack.c.h.b16 %v943
        %v3775 = vunpack.c.l.b16 %v944
        %v3776 = vunpack.c.h.b16 %v944
        %v3777 = vunpack.c.l.b16 %v945
        %v3778 = vunpack.c.h.b16 %v945
        %v3779 = vunpack.c.l.b16 %v946
        %v3780 = vunpack.c.h.b16 %v946
        %v3781 = vunpack.c.l.b16 %v947
        %v3782 = vunpack.c.h.b16 %v947
        %v3783 = vunpack.c.l.b16 %v948
        %v3784 = vunpack.c.h.b16 %v948
        %v3785 = vunpack.c.l.b16 %v949
        %v3786 = vunpack.c.h.b16 %v949
        %v3787 = vunpack.c.l.b16 %v950
        %v3788 = vunpack.c.h.b16 %v950
        %v3789 = vunpack.c.l.b16 %v951
        %v3790 = vunpack.c.h.b16 %v951
        %v3791 = vunpack.c.l.b16 %v952
        %v3792 = vunpack.c.h.b16 %v952
        %v3793 = vunpack.c.l.b16 %v953
        %v3794 = vunpack.c.h.b16 %v953
        %v3795 = vunpack.c.l.b16 %v954
        %v3796 = vunpack.c.h.b16 %v954
        %v3797 = vunpack.c.l.b16 %v955
        %v3798 = vunpack.c.h.b16 %v955
        %v3799 = vunpack.c.l.b16 %v956
        %v3800 = vunpack.c.h.b16 %v956
        %v3801 = vunpack.c.l.b16 %v957
        %v3802 = vunpack.c.h.b16 %v957
        %v3803 = vunpack.c.l.b16 %v958
        %v3804 = vunpack.c.h.b16 %v958
        %v3805 = vunpack.c.l.b16 %v959
        %v3806 = vunpack.c.h.b16 %v959
        %v3807 = vunpack.c.l.b16 %v960
        %v3808 = vunpack.c.h.b16 %v960
        %v3809 = vunpack.c.l.b16 %v961
        %v3810 = vunpack.c.h.b16 %v961
        %v3811 = vunpack.c.l.b16 %v962
        %v3812 = vunpack.c.h.b16 %v962
        %v3813 = vunpack.c.l.b16 %v963
        %v3814 = vunpack.c.h.b16 %v963
        %v3815 = vunpack.c.l.b16 %v964
        %v3816 = vunpack.c.h.b16 %v964
        %v3817 = vunpack.c.l.b16 %v965
        %v3818 = vunpack.c.h.b16 %v965
        %v3819 = vunpack.c.l.b16 %v966
        %v3820 = vunpack.c.h.b16 %v966
        %v3821 = vunpack.c.l.b16 %v967
        %v3822 = vunpack.c.h.b16 %v967
        %v3823 = vunpack.c.l.b16 %v968
        %v3824 = vunpack.c.h.b16 %v968
        %v3825 = vunpack.c.l.b16 %v969
        %v3826 = vunpack.c.h.b16 %v969
        %v3827 = vunpack.c.l.b16 %v970
        %v3828 = vunpack.c.h.b16 %v970
        %v3829 = vunpack.c.l.b16 %v971
        %v3830 = vunpack.c.h.b16 %v971
        %v3831 = vunpack.c.l.b16 %v972
        %v3832 = vunpack.c.h.b16 %v972
        %v3833 = vunpack.c.l.b16 %v973
        %v3834 = vunpack.c.h.b16 %v973
        %v3835 = vunpack.c.l.b16 %v974
        %v3836 = vunpack.c.h.b16 %v974
        %v3837 = vunpack.c.l.b16 %v975
        %v3838 = vunpack.c.h.b16 %v975
        %v3839 = vunpack.c.l.b16 %v976
        %v3840 = vunpack.c.h.b16 %v976
        %v3841 = vunpack.c.l.b16 %v977
        %v3842 = vunpack.c.h.b16 %v977
        %v3843 = vunpack.c.l.b16 %v978
        %v3844 = vunpack.c.h.b16 %v978
        %v3845 = vunpack.c.l.b16 %v979
        %v3846 = vunpack.c.h.b16 %v979
        %v3847 = vunpack.c.l.b16 %v980
        %v3848 = vunpack.c.h.b16 %v980
        %v3849 = vunpack.c.l.b16 %v981
        %v3850 = vunpack.c.h.b16 %v981
        %v3851 = vunpack.c.l.b16 %v982
        %v3852 = vunpack.c.h.b16 %v982
        %v3853 = vunpack.c.l.b16 %v983
        %v3854 = vunpack.c.h.b16 %v983
        %v3855 = vunpack.c.l.b16 %v984
        %v3856 = vunpack.c.h.b16 %v984
        %v3857 = vunpack.c.l.b16 %v985
        %v3858 = vunpack.c.h.b16 %v985
        %v3859 = vunpack.c.l.b16 %v986
        %v3860 = vunpack.c.h.b16 %v986
        %v3861 = vunpack.c.l.b16 %v987
        %v3862 = vunpack.c.h.b16 %v987
        %v3863 = vunpack.c.l.b16 %v988
        %v3864 = vunpack.c.h.b16 %v988
        %v3865 = vunpack.c.l.b16 %v989
        %v3866 = vunpack.c.h.b16 %v989
        %v3867 = vunpack.c.l.b16 %v990
        %v3868 = vunpack.c.h.b16 %v990
        %v3869 = vunpack.c.l.b16 %v991
        %v3870 = vunpack.c.h.b16 %v991
        %v3871 = vunpack.c.l.b16 %v992
        %v3872 = vunpack.c.h.b16 %v992
        %v3873 = vunpack.c.l.b16 %v993
        %v3874 = vunpack.c.h.b16 %v993
        %v3875 = vunpack.c.l.b16 %v994
        %v3876 = vunpack.c.h.b16 %v994
        %v3877 = vunpack.c.l.b16 %v995
        %v3878 = vunpack.c.h.b16 %v995
        %v3879 = vunpack.c.l.b16 %v996
        %v3880 = vunpack.c.h.b16 %v996
        %v3881 = vunpack.c.l.b16 %v997
        %v3882 = vunpack.c.h.b16 %v997
        %v3883 = vunpack.c.l.b16 %v998
        %v3884 = vunpack.c.h.b16 %v998
        %v3885 = vunpack.c.l.b16 %v999
        %v3886 = vunpack.c.h.b16 %v999
        %v3887 = vunpack.c.l.b16 %v1000
        %v3888 = vunpack.c.h.b16 %v1000
        %v3889 = vunpack.c.l.b16 %v1001
        %v3890 = vunpack.c.h.b16 %v1001
        %v3891 = vunpack.c.l.b16 %v1002
        %v3892 = vunpack.c.h.b16 %v1002
        %v3893 = vunpack.c.l.b16 %v1003
        %v3894 = vunpack.c.h.b16 %v1003
        %v3895 = vunpack.c.l.b16 %v1004
        %v3896 = vunpack.c.h.b16 %v1004
        %v3897 = vunpack.c.l.b16 %v1005
        %v3898 = vunpack.c.h.b16 %v1005
        %v3899 = vunpack.c.l.b16 %v1006
        %v3900 = vunpack.c.h.b16 %v1006
        %v3901 = vunpack.c.l.b16 %v1007
        %v3902 = vunpack.c.h.b16 %v1007
        %v3903 = vunpack.c.l.b16 %v1008
        %v3904 = vunpack.c.h.b16 %v1008
        %v3905 = vunpack.c.l.b16 %v1009
        %v3906 = vunpack.c.h.b16 %v1009
        %v3907 = vunpack.c.l.b16 %v1010
        %v3908 = vunpack.c.h.b16 %v1010
        %v3909 = vunpack.c.l.b16 %v1011
        %v3910 = vunpack.c.h.b16 %v1011
        %v3911 = vunpack.c.l.b16 %v1012
        %v3912 = vunpack.c.h.b16 %v1012
        %v3913 = vunpack.c.l.b16 %v1013
        %v3914 = vunpack.c.h.b16 %v1013
        %v3915 = vunpack.c.l.b16 %v1014
        %v3916 = vunpack.c.h.b16 %v1014
        %v3917 = vunpack.c.l.b16 %v1015
        %v3918 = vunpack.c.h.b16 %v1015
        %v3919 = vunpack.c.l.b16 %v1016
        %v3920 = vunpack.c.h.b16 %v1016
        %v3921 = vunpack.c.l.b16 %v1017
        %v3922 = vunpack.c.h.b16 %v1017
        %v3923 = vunpack.c.l.b16 %v1018
        %v3924 = vunpack.c.h.b16 %v1018
        %v3925 = vunpack.c.l.b16 %v1019
        %v3926 = vunpack.c.h.b16 %v1019
        %v3927 = vunpack.c.l.b16 %v1020
        %v3928 = vunpack.c.h.b16 %v1020
        %v3929 = vunpack.c.l.b16 %v1021
        %v3930 = vunpack.c.h.b16 %v1021
        %v3931 = vunpack.c.l.b16 %v1022
        %v3932 = vunpack.c.h.b16 %v1022
        %v3933 = vunpack.c.l.b16 %v1023
        %v3934 = vunpack.c.h.b16 %v1023
        %v3935 = vunpack.c.l.b16 %v1024
        %v3936 = vunpack.c.h.b16 %v1024
        %v3937 = vunpack.c.l.b16 %v1025
        %v3938 = vunpack.c.h.b16 %v1025
        %v3939 = vunpack.c.l.b16 %v1026
        %v3940 = vunpack.c.h.b16 %v1026
        %v3941 = vunpack.c.l.b16 %v1027
        %v3942 = vunpack.c.h.b16 %v1027
        %v3943 = vunpack.c.l.b16 %v1028
        %v3944 = vunpack.c.h.b16 %v1028
        %v3945 = vunpack.c.l.b16 %v1029
        %v3946 = vunpack.c.h.b16 %v1029
        %v3947 = vunpack.c.l.b16 %v1030
        %v3948 = vunpack.c.h.b16 %v1030
        %v3949 = vunpack.c.l.b16 %v1031
        %v3950 = vunpack.c.h.b16 %v1031
        %v3951 = vunpack.c.l.b16 %v1032
        %v3952 = vunpack.c.h.b16 %v1032
        %v3953 = vunpack.c.l.b16 %v1033
        %v3954 = vunpack.c.h.b16 %v1033
        %v3955 = vunpack.c.l.b16 %v1034
        %v3956 = vunpack.c.h.b16 %v1034
        %v3957 = vunpack.c.l.b16 %v1035
        %v3958 = vunpack.c.h.b16 %v1035
        %v3959 = vunpack.c.l.b16 %v1036
        %v3960 = vunpack.c.h.b16 %v1036
        %v3961 = vunpack.c.l.b16 %v1037
        %v3962 = vunpack.c.h.b16 %v1037
        %v3963 = vunpack.c.l.b16 %v1038
        %v3964 = vunpack.c.h.b16 %v1038
        %v3965 = vunpack.c.l.b16 %v1039
        %v3966 = vunpack.c.h.b16 %v1039
        %v3967 = vunpack.c.l.b16 %v1040
        %v3968 = vunpack.c.h.b16 %v1040
        %v3969 = vunpack.c.l.b16 %v1041
        %v3970 = vunpack.c.h.b16 %v1041
        %v3971 = vunpack.c.l.b16 %v1042
        %v3972 = vunpack.c.h.b16 %v1042
        %v3973 = vunpack.c.l.b16 %v1043
        %v3974 = vunpack.c.h.b16 %v1043
        %v3975 = vunpack.c.l.b16 %v1044
        %v3976 = vunpack.c.h.b16 %v1044
        %v3977 = vunpack.c.l.b16 %v1045
        %v3978 = vunpack.c.h.b16 %v1045
        %v3979 = vunpack.c.l.b16 %v1046
        %v3980 = vunpack.c.h.b16 %v1046
        %v3981 = vunpack.c.l.b16 %v1047
        %v3982 = vunpack.c.h.b16 %v1047
        %v3983 = vunpack.c.l.b16 %v1048
        %v3984 = vunpack.c.h.b16 %v1048
        %v3985 = vunpack.c.l.b16 %v1049
        %v3986 = vunpack.c.h.b16 %v1049
        %v3987 = vunpack.c.l.b16 %v1050
        %v3988 = vunpack.c.h.b16 %v1050
        %v3989 = vunpack.c.l.b16 %v1051
        %v3990 = vunpack.c.h.b16 %v1051
        %v3991 = vunpack.c.l.b16 %v1052
        %v3992 = vunpack.c.h.b16 %v1052
        %v3993 = vunpack.c.l.b16 %v1053
        %v3994 = vunpack.c.h.b16 %v1053
        %v3995 = vunpack.c.l.b16 %v1054
        %v3996 = vunpack.c.h.b16 %v1054
        %v3997 = vunpack.c.l.b16 %v1055
        %v3998 = vunpack.c.h.b16 %v1055
        %v3999 = vunpack.c.l.b16 %v1056
        %v4000 = vunpack.c.h.b16 %v1056
        %v4001 = vunpack.c.l.b16 %v1057
        %v4002 = vunpack.c.h.b16 %v1057
        %v4003 = vunpack.c.l.b16 %v1058
        %v4004 = vunpack.c.h.b16 %v1058
        %v4005 = vunpack.c.l.b16 %v1059
        %v4006 = vunpack.c.h.b16 %v1059
        %v4007 = vunpack.c.l.b16 %v1060
        %v4008 = vunpack.c.h.b16 %v1060
        %v4009 = vunpack.c.l.b16 %v1061
        %v4010 = vunpack.c.h.b16 %v1061
        %v4011 = vunpack.c.l.b16 %v1062
        %v4012 = vunpack.c.h.b16 %v1062
        %v4013 = vunpack.c.l.b16 %v1063
        %v4014 = vunpack.c.h.b16 %v1063
        %v4015 = vunpack.c.l.b16 %v1064
        %v4016 = vunpack.c.h.b16 %v1064
        %v4017 = vunpack.c.l.b16 %v1065
        %v4018 = vunpack.c.h.b16 %v1065
        %v4019 = vunpack.c.l.b16 %v1066
        %v4020 = vunpack.c.h.b16 %v1066
        %v4021 = vunpack.c.l.b16 %v1067
        %v4022 = vunpack.c.h.b16 %v1067
        %v4023 = vunpack.c.l.b16 %v1068
        %v4024 = vunpack.c.h.b16 %v1068
        %v4025 = vunpack.c.l.b16 %v1069
        %v4026 = vunpack.c.h.b16 %v1069
        %v4027 = vunpack.c.l.b16 %v1070
        %v4028 = vunpack.c.h.b16 %v1070
        %v4029 = vunpack.c.l.b16 %v1071
        %v4030 = vunpack.c.h.b16 %v1071
        %v4031 = vunpack.c.l.b16 %v1072
        %v4032 = vunpack.c.h.b16 %v1072
        %v4033 = vunpack.c.l.b16 %v1073
        %v4034 = vunpack.c.h.b16 %v1073
        %v4035 = vunpack.c.l.b16 %v1074
        %v4036 = vunpack.c.h.b16 %v1074
        %v4037 = vunpack.c.l.b16 %v1075
        %v4038 = vunpack.c.h.b16 %v1075
        %v4039 = vunpack.c.l.b16 %v1076
        %v4040 = vunpack.c.h.b16 %v1076
        %v4041 = vunpack.c.l.b16 %v1077
        %v4042 = vunpack.c.h.b16 %v1077
        %v4043 = vunpack.c.l.b16 %v1078
        %v4044 = vunpack.c.h.b16 %v1078
        %v4045 = vunpack.c.l.b16 %v1079
        %v4046 = vunpack.c.h.b16 %v1079
        %v4047 = vunpack.c.l.b16 %v1080
        %v4048 = vunpack.c.h.b16 %v1080
        %v4049 = vunpack.c.l.b16 %v1081
        %v4050 = vunpack.c.h.b16 %v1081
        %v4051 = vunpack.c.l.b16 %v1082
        %v4052 = vunpack.c.h.b16 %v1082
        %v4053 = vunpack.c.l.b16 %v1083
        %v4054 = vunpack.c.h.b16 %v1083
        %v4055 = vunpack.c.l.b16 %v1084
        %v4056 = vunpack.c.h.b16 %v1084
        %v4057 = vunpack.c.l.b16 %v1085
        %v4058 = vunpack.c.h.b16 %v1085
        %v4059 = vunpack.c.l.b16 %v1086
        %v4060 = vunpack.c.h.b16 %v1086
        %v4061 = vunpack.c.l.b16 %v1087
        %v4062 = vunpack.c.h.b16 %v1087
        %v4063 = vunpack.c.l.b16 %v1088
        %v4064 = vunpack.c.h.b16 %v1088
        %v4065 = vunpack.c.l.b16 %v1089
        %v4066 = vunpack.c.h.b16 %v1089
        %v4067 = vunpack.c.l.b16 %v1090
        %v4068 = vunpack.c.h.b16 %v1090
        %v4069 = vunpack.c.l.b16 %v1091
        %v4070 = vunpack.c.h.b16 %v1091
        %v4071 = vunpack.c.l.b16 %v1092
        %v4072 = vunpack.c.h.b16 %v1092
        %v4073 = vunpack.c.l.b16 %v1093
        %v4074 = vunpack.c.h.b16 %v1093
        %v4075 = vunpack.c.l.b16 %v1094
        %v4076 = vunpack.c.h.b16 %v1094
        %v4077 = vunpack.c.l.b16 %v1095
        %v4078 = vunpack.c.h.b16 %v1095
        %v4079 = vunpack.c.l.b16 %v1096
        %v4080 = vunpack.c.h.b16 %v1096
        %v4081 = vunpack.c.l.b16 %v1097
        %v4082 = vunpack.c.h.b16 %v1097
        %v4083 = vunpack.c.l.b16 %v1098
        %v4084 = vunpack.c.h.b16 %v1098
        %v4085 = vunpack.c.l.b16 %v1099
        %v4086 = vunpack.c.h.b16 %v1099
        %v4087 = vunpack.c.l.b16 %v1100
        %v4088 = vunpack.c.h.b16 %v1100
        %v4089 = vunpack.c.l.b16 %v1101
        %v4090 = vunpack.c.h.b16 %v1101
        %v4091 = vunpack.c.l.b16 %v1102
        %v4092 = vunpack.c.h.b16 %v1102
        %v4093 = vunpack.c.l.b16 %v1103
        %v4094 = vunpack.c.h.b16 %v1103
        %v4095 = vunpack.c.l.b16 %v1104
        %v4096 = vunpack.c.h.b16 %v1104
        %v4097 = vunpack.c.l.b16 %v1105
        %v4098 = vunpack.c.h.b16 %v1105
        %v4099 = vunpack.c.l.b16 %v1106
        %v4100 = vunpack.c.h.b16 %v1106
        %v4101 = vunpack.c.l.b16 %v1107
        %v4102 = vunpack.c.h.b16 %v1107
        %v4103 = vunpack.c.l.b16 %v1108
        %v4104 = vunpack.c.h.b16 %v1108
        %v4105 = vunpack.c.l.b16 %v1109
        %v4106 = vunpack.c.h.b16 %v1109
        %v4107 = vunpack.c.l.b16 %v1110
        %v4108 = vunpack.c.h.b16 %v1110
        %v4109 = vunpack.c.l.b16 %v1111
        %v4110 = vunpack.c.h.b16 %v1111
        %v4111 = vunpack.c.l.b16 %v1112
        %v4112 = vunpack.c.h.b16 %v1112
        %v4113 = vunpack.c.l.b16 %v1113
        %v4114 = vunpack.c.h.b16 %v1113
        %v4115 = vunpack.c.l.b16 %v1114
        %v4116 = vunpack.c.h.b16 %v1114
        %v4117 = vunpack.c.l.b16 %v1115
        %v4118 = vunpack.c.h.b16 %v1115
        %v4119 = vunpack.c.l.b16 %v1116
        %v4120 = vunpack.c.h.b16 %v1116
        %v4121 = vunpack.c.l.b16 %v1117
        %v4122 = vunpack.c.h.b16 %v1117
        %v4123 = vunpack.c.l.b16 %v1118
        %v4124 = vunpack.c.h.b16 %v1118
        %v4125 = vunpack.c.l.b16 %v1119
        %v4126 = vunpack.c.h.b16 %v1119
        %v4127 = vunpack.c.l.b16 %v1120
        %v4128 = vunpack.c.h.b16 %v1120
        %v4129 = vunpack.c.l.b16 %v1121
        %v4130 = vunpack.c.h.b16 %v1121
        %v4131 = vunpack.c.l.b16 %v1122
        %v4132 = vunpack.c.h.b16 %v1122
        %v4133 = vunpack.c.l.b16 %v1123
        %v4134 = vunpack.c.h.b16 %v1123
        %v4135 = vunpack.c.l.b16 %v1124
        %v4136 = vunpack.c.h.b16 %v1124
        %v4137 = vunpack.c.l.b16 %v1125
        %v4138 = vunpack.c.h.b16 %v1125
        %v4139 = vunpack.c.l.b16 %v1126
        %v4140 = vunpack.c.h.b16 %v1126
        %v4141 = vunpack.c.l.b16 %v1127
        %v4142 = vunpack.c.h.b16 %v1127
        %v4143 = vunpack.c.l.b16 %v1128
        %v4144 = vunpack.c.h.b16 %v1128
        %v4145 = vunpack.c.l.b16 %v1129
        %v4146 = vunpack.c.h.b16 %v1129
        %v4147 = vunpack.c.l.b16 %v1130
        %v4148 = vunpack.c.h.b16 %v1130
        %v4149 = vunpack.c.l.b16 %v1131
        %v4150 = vunpack.c.h.b16 %v1131
        %v4151 = vunpack.c.l.b16 %v1132
        %v4152 = vunpack.c.h.b16 %v1132
        %v4153 = vunpack.c.l.b16 %v1133
        %v4154 = vunpack.c.h.b16 %v1133
        %v4155 = vunpack.c.l.b16 %v1134
        %v4156 = vunpack.c.h.b16 %v1134
        %v4157 = vunpack.c.l.b16 %v1135
        %v4158 = vunpack.c.h.b16 %v1135
        %v4159 = vunpack.c.l.b16 %v1136
        %v4160 = vunpack.c.h.b16 %v1136
        %v4161 = vunpack.c.l.b16 %v1137
        %v4162 = vunpack.c.h.b16 %v1137
        %v4163 = vunpack.c.l.b16 %v1138
        %v4164 = vunpack.c.h.b16 %v1138
        %v4165 = vunpack.c.l.b16 %v1139
        %v4166 = vunpack.c.h.b16 %v1139
        %v4167 = vunpack.c.l.b16 %v1140
        %v4168 = vunpack.c.h.b16 %v1140
        %v4169 = vunpack.c.l.b16 %v1141
        %v4170 = vunpack.c.h.b16 %v1141
        %v4171 = vunpack.c.l.b16 %v1142
        %v4172 = vunpack.c.h.b16 %v1142
        %v4173 = vunpack.c.l.b16 %v1143
        %v4174 = vunpack.c.h.b16 %v1143
        %v4175 = vunpack.c.l.b16 %v1144
        %v4176 = vunpack.c.h.b16 %v1144
        %v4177 = vunpack.c.l.b16 %v1145
        %v4178 = vunpack.c.h.b16 %v1145
        %v4179 = vunpack.c.l.b16 %v1146
        %v4180 = vunpack.c.h.b16 %v1146
        %v4181 = vunpack.c.l.b16 %v1147
        %v4182 = vunpack.c.h.b16 %v1147
        %v4183 = vunpack.c.l.b16 %v1148
        %v4184 = vunpack.c.h.b16 %v1148
        %v4185 = vunpack.c.l.b16 %v1149
        %v4186 = vunpack.c.h.b16 %v1149
        %v4187 = vunpack.c.l.b16 %v1150
        %v4188 = vunpack.c.h.b16 %v1150
        %v4189 = vunpack.c.l.b16 %v1151
        %v4190 = vunpack.c.h.b16 %v1151
        %v4191 = vunpack.c.l.b16 %v1152
        %v4192 = vunpack.c.h.b16 %v1152
        %v4193 = vunpack.c.l.b16 %v1153
        %v4194 = vunpack.c.h.b16 %v1153
        %v4195 = vunpack.c.l.b16 %v1154
        %v4196 = vunpack.c.h.b16 %v1154
        %v4197 = vunpack.c.l.b16 %v1155
        %v4198 = vunpack.c.h.b16 %v1155
        %v4199 = vunpack.c.l.b16 %v1156
        %v4200 = vunpack.c.h.b16 %v1156
        %v4201 = vunpack.c.l.b16 %v1157
        %v4202 = vunpack.c.h.b16 %v1157
        %v4203 = vunpack.c.l.b16 %v1158
        %v4204 = vunpack.c.h.b16 %v1158
        %v4205 = vunpack.c.l.b16 %v1159
        %v4206 = vunpack.c.h.b16 %v1159
        %v4207 = vunpack.c.l.b16 %v1160
        %v4208 = vunpack.c.h.b16 %v1160
        %v4209 = vunpack.c.l.b16 %v1161
        %v4210 = vunpack.c.h.b16 %v1161
        %v4211 = vunpack.c.l.b16 %v1162
        %v4212 = vunpack.c.h.b16 %v1162
        %v4213 = vunpack.c.l.b16 %v1163
        %v4214 = vunpack.c.h.b16 %v1163
        %v4215 = vunpack.c.l.b16 %v1164
        %v4216 = vunpack.c.h.b16 %v1164
        %v4217 = vunpack.c.l.b16 %v1165
        %v4218 = vunpack.c.h.b16 %v1165
        %v4219 = vunpack.c.l.b16 %v1166
        %v4220 = vunpack.c.h.b16 %v1166
        %v4221 = vunpack.c.l.b16 %v1167
        %v4222 = vunpack.c.h.b16 %v1167
        %v4223 = vunpack.c.l.b16 %v1168
        %v4224 = vunpack.c.h.b16 %v1168
        %v4225 = vunpack.c.l.b16 %v1169
        %v4226 = vunpack.c.h.b16 %v1169
        %v4227 = vunpack.c.l.b16 %v1170
        %v4228 = vunpack.c.h.b16 %v1170
        %v4229 = vunpack.c.l.b16 %v1171
        %v4230 = vunpack.c.h.b16 %v1171
        %v4231 = vunpack.c.l.b16 %v1172
        %v4232 = vunpack.c.h.b16 %v1172
        %v4233 = vunpack.c.l.b16 %v1173
        %v4234 = vunpack.c.h.b16 %v1173
        %v4235 = vunpack.c.l.b16 %v1174
        %v4236 = vunpack.c.h.b16 %v1174
        %v4237 = vunpack.c.l.b16 %v1175
        %v4238 = vunpack.c.h.b16 %v1175
        %v4239 = vunpack.c.l.b16 %v1176
        %v4240 = vunpack.c.h.b16 %v1176
        %v4241 = vunpack.c.l.b16 %v1177
        %v4242 = vunpack.c.h.b16 %v1177
        %v4243 = vunpack.c.l.b16 %v1178
        %v4244 = vunpack.c.h.b16 %v1178
        %v4245 = vunpack.c.l.b16 %v1179
        %v4246 = vunpack.c.h.b16 %v1179
        %v4247 = vunpack.c.l.b16 %v1180
        %v4248 = vunpack.c.h.b16 %v1180
        %v4249 = vunpack.c.l.b16 %v1181
        %v4250 = vunpack.c.h.b16 %v1181
        %v4251 = vunpack.c.l.b16 %v1182
        %v4252 = vunpack.c.h.b16 %v1182
        %v4253 = vunpack.c.l.b16 %v1183
        %v4254 = vunpack.c.h.b16 %v1183
        %v4255 = vunpack.c.l.b16 %v1184
        %v4256 = vunpack.c.h.b16 %v1184
        %v4257 = vunpack.c.l.b16 %v1185
        %v4258 = vunpack.c.h.b16 %v1185
        %v4259 = vunpack.c.l.b16 %v1186
        %v4260 = vunpack.c.h.b16 %v1186
        %v4261 = vunpack.c.l.b16 %v1187
        %v4262 = vunpack.c.h.b16 %v1187
        %v4263 = vunpack.c.l.b16 %v1188
        %v4264 = vunpack.c.h.b16 %v1188
        %v4265 = vunpack.c.l.b16 %v1189
        %v4266 = vunpack.c.h.b16 %v1189
        %v4267 = vunpack.c.l.b16 %v1190
        %v4268 = vunpack.c.h.b16 %v1190
        %v4269 = vunpack.c.l.b16 %v1191
        %v4270 = vunpack.c.h.b16 %v1191
        %v4271 = vunpack.c.l.b16 %v1192
        %v4272 = vunpack.c.h.b16 %v1192
        %v4273 = vunpack.c.l.b16 %v1193
        %v4274 = vunpack.c.h.b16 %v1193
        %v4275 = vunpack.c.l.b16 %v1194
        %v4276 = vunpack.c.h.b16 %v1194
        %v4277 = vunpack.c.l.b16 %v1195
        %v4278 = vunpack.c.h.b16 %v1195
        %v4279 = vunpack.c.l.b16 %v1196
        %v4280 = vunpack.c.h.b16 %v1196
        %v4281 = vunpack.c.l.b16 %v1197
        %v4282 = vunpack.c.h.b16 %v1197
        %v4283 = vunpack.c.l.b16 %v1198
        %v4284 = vunpack.c.h.b16 %v1198
        %v4285 = vunpack.c.l.b16 %v1199
        %v4286 = vunpack.c.h.b16 %v1199
        %v4287 = vunpack.c.l.b16 %v1200
        %v4288 = vunpack.c.h.b16 %v1200
        %v4289 = vunpack.c.l.b16 %v1201
        %v4290 = vunpack.c.h.b16 %v1201
        %v4291 = vunpack.c.l.b16 %v1202
        %v4292 = vunpack.c.h.b16 %v1202
        %v4293 = vunpack.c.l.b16 %v1203
        %v4294 = vunpack.c.h.b16 %v1203
        %v4295 = vunpack.c.l.b16 %v1204
        %v4296 = vunpack.c.h.b16 %v1204
        %v4297 = vunpack.c.l.b16 %v1205
        %v4298 = vunpack.c.h.b16 %v1205
        %v4299 = vunpack.c.l.b16 %v1206
        %v4300 = vunpack.c.h.b16 %v1206
        %v4301 = vunpack.c.l.b16 %v1207
        %v4302 = vunpack.c.h.b16 %v1207
        %v4303 = vunpack.c.l.b16 %v1208
        %v4304 = vunpack.c.h.b16 %v1208
        %v4305 = vunpack.c.l.b16 %v1209
        %v4306 = vunpack.c.h.b16 %v1209
        %v4307 = vunpack.c.l.b16 %v1210
        %v4308 = vunpack.c.h.b16 %v1210
        %v4309 = vunpack.c.l.b16 %v1211
        %v4310 = vunpack.c.h.b16 %v1211
        %v4311 = vunpack.c.l.b16 %v1212
        %v4312 = vunpack.c.h.b16 %v1212
        %v4313 = vunpack.c.l.b16 %v1213
        %v4314 = vunpack.c.h.b16 %v1213
        %v4315 = vunpack.c.l.b16 %v1214
        %v4316 = vunpack.c.h.b16 %v1214
        %v4317 = vunpack.c.l.b16 %v1215
        %v4318 = vunpack.c.h.b16 %v1215
        %v4319 = vunpack.c.l.b16 %v1216
        %v4320 = vunpack.c.h.b16 %v1216
        %v4321 = vunpack.c.l.b16 %v1217
        %v4322 = vunpack.c.h.b16 %v1217
        %v4323 = vunpack.c.l.b16 %v1218
        %v4324 = vunpack.c.h.b16 %v1218
        %v4325 = vunpack.c.l.b16 %v1219
        %v4326 = vunpack.c.h.b16 %v1219
        %v4327 = vunpack.c.l.b16 %v1220
        %v4328 = vunpack.c.h.b16 %v1220
        %v4329 = vunpack.c.l.b16 %v1221
        %v4330 = vunpack.c.h.b16 %v1221
        %v4331 = vunpack.c.l.b16 %v1222
        %v4332 = vunpack.c.h.b16 %v1222
        %v4333 = vunpack.c.l.b16 %v1223
        %v4334 = vunpack.c.h.b16 %v1223
        %v4335 = vunpack.c.l.b16 %v1224
        %v4336 = vunpack.c.h.b16 %v1224
        %v4337 = vunpack.c.l.b16 %v1225
        %v4338 = vunpack.c.h.b16 %v1225
        %v4339 = vunpack.c.l.b16 %v1226
        %v4340 = vunpack.c.h.b16 %v1226
        %v4341 = vunpack.c.l.b16 %v1227
        %v4342 = vunpack.c.h.b16 %v1227
        %v4343 = vunpack.c.l.b16 %v1228
        %v4344 = vunpack.c.h.b16 %v1228
        %v4345 = vunpack.c.l.b16 %v1229
        %v4346 = vunpack.c.h.b16 %v1229
        %v4347 = vunpack.c.l.b16 %v1230
        %v4348 = vunpack.c.h.b16 %v1230
        %v4349 = vunpack.c.l.b16 %v1231
        %v4350 = vunpack.c.h.b16 %v1231
        %v4351 = vunpack.c.l.b16 %v1232
        %v4352 = vunpack.c.h.b16 %v1232
        %v4353 = vunpack.c.l.b16 %v1233
        %v4354 = vunpack.c.h.b16 %v1233
        %v4355 = vunpack.c.l.b16 %v1234
        %v4356 = vunpack.c.h.b16 %v1234
        %v4357 = vunpack.c.l.b16 %v1235
        %v4358 = vunpack.c.h.b16 %v1235
        %v4359 = vunpack.c.l.b16 %v1236
        %v4360 = vunpack.c.h.b16 %v1236
        %v4361 = vunpack.c.l.b16 %v1237
        %v4362 = vunpack.c.h.b16 %v1237
        %v4363 = vunpack.c.l.b16 %v1238
        %v4364 = vunpack.c.h.b16 %v1238
        %v4365 = vunpack.c.l.b16 %v1239
        %v4366 = vunpack.c.h.b16 %v1239
        %v4367 = vunpack.c.l.b16 %v1240
        %v4368 = vunpack.c.h.b16 %v1240
        %v4369 = vunpack.c.l.b16 %v1241
        %v4370 = vunpack.c.h.b16 %v1241
        %v4371 = vunpack.c.l.b16 %v1242
        %v4372 = vunpack.c.h.b16 %v1242
        %v4373 = vunpack.c.l.b16 %v1243
        %v4374 = vunpack.c.h.b16 %v1243
        %v4375 = vunpack.c.l.b16 %v1244
        %v4376 = vunpack.c.h.b16 %v1244
        %v4377 = vunpack.c.l.b16 %v1245
        %v4378 = vunpack.c.h.b16 %v1245
        %v4379 = vunpack.c.l.b16 %v1246
        %v4380 = vunpack.c.h.b16 %v1246
        %v4381 = vunpack.c.l.b16 %v1247
        %v4382 = vunpack.c.h.b16 %v1247
        %v4383 = vunpack.c.l.b16 %v1248
        %v4384 = vunpack.c.h.b16 %v1248
        %v4385 = vunpack.c.l.b16 %v1249
        %v4386 = vunpack.c.h.b16 %v1249
        %v4387 = vunpack.c.l.b16 %v1250
        %v4388 = vunpack.c.h.b16 %v1250
        %v4389 = vunpack.c.l.b16 %v1251
        %v4390 = vunpack.c.h.b16 %v1251
        %v4391 = vunpack.c.l.b16 %v1252
        %v4392 = vunpack.c.h.b16 %v1252
        %v4393 = vunpack.c.l.b16 %v1253
        %v4394 = vunpack.c.h.b16 %v1253
        %v4395 = vunpack.c.l.b16 %v1254
        %v4396 = vunpack.c.h.b16 %v1254
        %v4397 = vunpack.c.l.b16 %v1255
        %v4398 = vunpack.c.h.b16 %v1255
        %v4399 = vunpack.c.l.b16 %v1256
        %v4400 = vunpack.c.h.b16 %v1256
        %v4401 = vunpack.c.l.b16 %v1257
        %v4402 = vunpack.c.h.b16 %v1257
        %v4403 = vunpack.c.l.b16 %v1258
        %v4404 = vunpack.c.h.b16 %v1258
        %v4405 = vunpack.c.l.b16 %v1259
        %v4406 = vunpack.c.h.b16 %v1259
        %v4407 = vunpack.c.l.b16 %v1260
        %v4408 = vunpack.c.h.b16 %v1260
        %v4409 = vunpack.c.l.b16 %v1261
        %v4410 = vunpack.c.h.b16 %v1261
        %v4411 = vunpack.c.l.b16 %v1262
        %v4412 = vunpack.c.h.b16 %v1262
        %v4413 = vunpack.c.l.b16 %v1263
        %v4414 = vunpack.c.h.b16 %v1263
        %v4415 = vunpack.c.l.b16 %v1264
        %v4416 = vunpack.c.h.b16 %v1264
        %v4417 = vunpack.c.l.b16 %v1265
        %v4418 = vunpack.c.h.b16 %v1265
        %v4419 = vunpack.c.l.b16 %v1266
        %v4420 = vunpack.c.h.b16 %v1266
        %v4421 = vunpack.c.l.b16 %v1267
        %v4422 = vunpack.c.h.b16 %v1267
        %v4423 = vunpack.c.l.b16 %v1268
        %v4424 = vunpack.c.h.b16 %v1268
        %v4425 = vunpack.c.l.b16 %v1269
        %v4426 = vunpack.c.h.b16 %v1269
        %v4427 = vunpack.c.l.b16 %v1270
        %v4428 = vunpack.c.h.b16 %v1270
        %v4429 = vunpack.c.l.b16 %v1271
        %v4430 = vunpack.c.h.b16 %v1271
        %v4431 = vunpack.c.l.b16 %v1272
        %v4432 = vunpack.c.h.b16 %v1272
        %v4433 = vunpack.c.l.b16 %v1273
        %v4434 = vunpack.c.h.b16 %v1273
        %v4435 = vunpack.c.l.b16 %v1274
        %v4436 = vunpack.c.h.b16 %v1274
        %v4437 = vunpack.c.l.b16 %v1275
        %v4438 = vunpack.c.h.b16 %v1275
        %v4439 = vunpack.c.l.b16 %v1276
        %v4440 = vunpack.c.h.b16 %v1276
        %v4441 = vunpack.c.l.b16 %v1277
        %v4442 = vunpack.c.h.b16 %v1277
        %v4443 = vunpack.c.l.b16 %v1278
        %v4444 = vunpack.c.h.b16 %v1278
        %v4445 = vunpack.c.l.b16 %v1279
        %v4446 = vunpack.c.h.b16 %v1279
        %v4447 = vunpack.c.l.b16 %v1280
        %v4448 = vunpack.c.h.b16 %v1280
        %v4449 = vunpack.c.l.b16 %v1281
        %v4450 = vunpack.c.h.b16 %v1281
        %v4451 = vunpack.c.l.b16 %v1282
        %v4452 = vunpack.c.h.b16 %v1282
        %v4453 = vunpack.c.l.b16 %v1283
        %v4454 = vunpack.c.h.b16 %v1283
        %v4455 = vunpack.c.l.b16 %v1284
        %v4456 = vunpack.c.h.b16 %v1284
        %v4457 = vunpack.c.l.b16 %v1285
        %v4458 = vunpack.c.h.b16 %v1285
        %v4459 = vunpack.c.l.b16 %v1286
        %v4460 = vunpack.c.h.b16 %v1286
        %v4461 = vunpack.c.l.b16 %v1287
        %v4462 = vunpack.c.h.b16 %v1287
        %v4463 = vunpack.c.l.b16 %v1288
        %v4464 = vunpack.c.h.b16 %v1288
        %v4465 = vunpack.c.l.b16 %v1289
        %v4466 = vunpack.c.h.b16 %v1289
        %v4467 = vunpack.c.l.b16 %v1290
        %v4468 = vunpack.c.h.b16 %v1290
        %v4469 = vunpack.c.l.b16 %v1291
        %v4470 = vunpack.c.h.b16 %v1291
        %v4471 = vunpack.c.l.b16 %v1292
        %v4472 = vunpack.c.h.b16 %v1292
        %v4473 = vunpack.c.l.b16 %v1293
        %v4474 = vunpack.c.h.b16 %v1293
        %v4475 = vunpack.c.l.b16 %v1294
        %v4476 = vunpack.c.h.b16 %v1294
        %v4477 = vunpack.c.l.b16 %v1295
        %v4478 = vunpack.c.h.b16 %v1295
        %v4479 = vunpack.c.l.b16 %v1296
        %v4480 = vunpack.c.h.b16 %v1296
        %v4481 = vunpack.c.l.b16 %v1297
        %v4482 = vunpack.c.h.b16 %v1297
        %v4483 = vunpack.c.l.b16 %v1298
        %v4484 = vunpack.c.h.b16 %v1298
        %v4485 = vunpack.c.l.b16 %v1299
        %v4486 = vunpack.c.h.b16 %v1299
        %v4487 = vunpack.c.l.b16 %v1300
        %v4488 = vunpack.c.h.b16 %v1300
        %v4489 = vpack.c.b16 %v2449, %v2441
        %v4490 = vpack.c.b16 %v2450, %v2442
        %v4491 = vpack.c.b16 %v2451, %v2443
        %v4492 = vpack.c.b16 %v2452, %v2444
        %v4493 = vpack.c.b16 %v2453, %v2445
        %v4494 = vpack.c.b16 %v2454, %v2446
        %v4495 = vpack.c.b16 %v2455, %v2447
        %v4496 = vpack.c.b16 %v2456, %v2448
        %v4497 = vpack.c.b16 %v2465, %v2457
        %v4498 = vpack.c.b16 %v2466, %v2458
        %v4499 = vpack.c.b16 %v2467, %v2459
        %v4500 = vpack.c.b16 %v2468, %v2460
        %v4501 = vpack.c.b16 %v2469, %v2461
        %v4502 = vpack.c.b16 %v2470, %v2462
        %v4503 = vpack.c.b16 %v2471, %v2463
        %v4504 = vpack.c.b16 %v2472, %v2464
        %v4505 = vpack.c.b16 %v2481, %v2473
        %v4506 = vpack.c.b16 %v2482, %v2474
        %v4507 = vpack.c.b16 %v2483, %v2475
        %v4508 = vpack.c.b16 %v2484, %v2476
        %v4509 = vpack.c.b16 %v2485, %v2477
        %v4510 = vpack.c.b16 %v2486, %v2478
        %v4511 = vpack.c.b16 %v2487, %v2479
        %v4512 = vpack.c.b16 %v2488, %v2480
        %v4513 = vpack.c.b16 %v2497, %v2489
        %v4514 = vpack.c.b16 %v2498, %v2490
        %v4515 = vpack.c.b16 %v2499, %v2491
        %v4516 = vpack.c.b16 %v2500, %v2492
        %v4517 = vpack.c.b16 %v2501, %v2493
        %v4518 = vpack.c.b16 %v2502, %v2494
        %v4519 = vpack.c.b16 %v2503, %v2495
        %v4520 = vpack.c.b16 %v2504, %v2496
        %v4521 = vpack.c.b16 %v2513, %v2505
        %v4522 = vpack.c.b16 %v2514, %v2506
        %v4523 = vpack.c.b16 %v2515, %v2507
        %v4524 = vpack.c.b16 %v2516, %v2508
        %v4525 = vpack.c.b16 %v2517, %v2509
        %v4526 = vpack.c.b16 %v2518, %v2510
        %v4527 = vpack.c.b16 %v2519, %v2511
        %v4528 = vpack.c.b16 %v2520, %v2512
        %v4529 = vpack.c.b16 %v2529, %v2521
        %v4530 = vpack.c.b16 %v2530, %v2522
        %v4531 = vpack.c.b16 %v2531, %v2523
        %v4532 = vpack.c.b16 %v2532, %v2524
        %v4533 = vpack.c.b16 %v2533, %v2525
        %v4534 = vpack.c.b16 %v2534, %v2526
        %v4535 = vpack.c.b16 %v2535, %v2527
        %v4536 = vpack.c.b16 %v2536, %v2528
        %v4537 = vpack.c.b16 %v2545, %v2537
        %v4538 = vpack.c.b16 %v2546, %v2538
        %v4539 = vpack.c.b16 %v2547, %v2539
        %v4540 = vpack.c.b16 %v2548, %v2540
        %v4541 = vpack.c.b16 %v2549, %v2541
        %v4542 = vpack.c.b16 %v2550, %v2542
        %v4543 = vpack.c.b16 %v2551, %v2543
        %v4544 = vpack.c.b16 %v2552, %v2544
        %v4545 = vpack.c.b16 %v2561, %v2553
        %v4546 = vpack.c.b16 %v2562, %v2554
        %v4547 = vpack.c.b16 %v2563, %v2555
        %v4548 = vpack.c.b16 %v2564, %v2556
        %v4549 = vpack.c.b16 %v2565, %v2557
        %v4550 = vpack.c.b16 %v2566, %v2558
        %v4551 = vpack.c.b16 %v2567, %v2559
        %v4552 = vpack.c.b16 %v2568, %v2560
        %v4553 = vpack.c.b16 %v2577, %v2569
        %v4554 = vpack.c.b16 %v2578, %v2570
        %v4555 = vpack.c.b16 %v2579, %v2571
        %v4556 = vpack.c.b16 %v2580, %v2572
        %v4557 = vpack.c.b16 %v2581, %v2573
        %v4558 = vpack.c.b16 %v2582, %v2574
        %v4559 = vpack.c.b16 %v2583, %v2575
        %v4560 = vpack.c.b16 %v2584, %v2576
        %v4561 = vpack.c.b16 %v2593, %v2585
        %v4562 = vpack.c.b16 %v2594, %v2586
        %v4563 = vpack.c.b16 %v2595, %v2587
        %v4564 = vpack.c.b16 %v2596, %v2588
        %v4565 = vpack.c.b16 %v2597, %v2589
        %v4566 = vpack.c.b16 %v2598, %v2590
        %v4567 = vpack.c.b16 %v2599, %v2591
        %v4568 = vpack.c.b16 %v2600, %v2592
        %v4569 = vpack.c.b16 %v2609, %v2601
        %v4570 = vpack.c.b16 %v2610, %v2602
        %v4571 = vpack.c.b16 %v2611, %v2603
        %v4572 = vpack.c.b16 %v2612, %v2604
        %v4573 = vpack.c.b16 %v2613, %v2605
        %v4574 = vpack.c.b16 %v2614, %v2606
        %v4575 = vpack.c.b16 %v2615, %v2607
        %v4576 = vpack.c.b16 %v2616, %v2608
        %v4577 = vpack.c.b16 %v2625, %v2617
        %v4578 = vpack.c.b16 %v2626, %v2618
        %v4579 = vpack.c.b16 %v2627, %v2619
        %v4580 = vpack.c.b16 %v2628, %v2620
        %v4581 = vpack.c.b16 %v2629, %v2621
        %v4582 = vpack.c.b16 %v2630, %v2622
        %v4583 = vpack.c.b16 %v2631, %v2623
        %v4584 = vpack.c.b16 %v2632, %v2624
        %v4585 = vpack.c.b16 %v2641, %v2633
        %v4586 = vpack.c.b16 %v2642, %v2634
        %v4587 = vpack.c.b16 %v2643, %v2635
        %v4588 = vpack.c.b16 %v2644, %v2636
        %v4589 = vpack.c.b16 %v2645, %v2637
        %v4590 = vpack.c.b16 %v2646, %v2638
        %v4591 = vpack.c.b16 %v2647, %v2639
        %v4592 = vpack.c.b16 %v2648, %v2640
        %v4593 = vpack.c.b16 %v2657, %v2649
        %v4594 = vpack.c.b16 %v2658, %v2650
        %v4595 = vpack.c.b16 %v2659, %v2651
        %v4596 = vpack.c.b16 %v2660, %v2652
        %v4597 = vpack.c.b16 %v2661, %v2653
        %v4598 = vpack.c.b16 %v2662, %v2654
        %v4599 = vpack.c.b16 %v2663, %v2655
        %v4600 = vpack.c.b16 %v2664, %v2656
        %v4601 = vpack.c.b16 %v2673, %v2665
        %v4602 = vpack.c.b16 %v2674, %v2666
        %v4603 = vpack.c.b16 %v2675, %v2667
        %v4604 = vpack.c.b16 %v2676, %v2668
        %v4605 = vpack.c.b16 %v2677, %v2669
        %v4606 = vpack.c.b16 %v2678, %v2670
        %v4607 = vpack.c.b16 %v2679, %v2671
        %v4608 = vpack.c.b16 %v2680, %v2672
        %v4609 = vpack.c.b16 %v2689, %v2681
        %v4610 = vpack.c.b16 %v2690, %v2682
        %v4611 = vpack.c.b16 %v2691, %v2683
        %v4612 = vpack.c.b16 %v2692, %v2684
        %v4613 = vpack.c.b16 %v2693, %v2685
        %v4614 = vpack.c.b16 %v2694, %v2686
        %v4615 = vpack.c.b16 %v2695, %v2687
        %v4616 = vpack.c.b16 %v2696, %v2688
        %v4617 = vpack.c.b16 %v2705, %v2697
        %v4618 = vpack.c.b16 %v2706, %v2698
        %v4619 = vpack.c.b16 %v2707, %v2699
        %v4620 = vpack.c.b16 %v2708, %v2700
        %v4621 = vpack.c.b16 %v2709, %v2701
        %v4622 = vpack.c.b16 %v2710, %v2702
        %v4623 = vpack.c.b16 %v2711, %v2703
        %v4624 = vpack.c.b16 %v2712, %v2704
        %v4625 = vpack.c.b16 %v2721, %v2713
        %v4626 = vpack.c.b16 %v2722, %v2714
        %v4627 = vpack.c.b16 %v2723, %v2715
        %v4628 = vpack.c.b16 %v2724, %v2716
        %v4629 = vpack.c.b16 %v2725, %v2717
        %v4630 = vpack.c.b16 %v2726, %v2718
        %v4631 = vpack.c.b16 %v2727, %v2719
        %v4632 = vpack.c.b16 %v2728, %v2720
        %v4633 = vpack.c.b16 %v2737, %v2729
        %v4634 = vpack.c.b16 %v2738, %v2730
        %v4635 = vpack.c.b16 %v2739, %v2731
        %v4636 = vpack.c.b16 %v2740, %v2732
        %v4637 = vpack.c.b16 %v2741, %v2733
        %v4638 = vpack.c.b16 %v2742, %v2734
        %v4639 = vpack.c.b16 %v2743, %v2735
        %v4640 = vpack.c.b16 %v2744, %v2736
        %v4641 = vpack.c.b16 %v2753, %v2745
        %v4642 = vpack.c.b16 %v2754, %v2746
        %v4643 = vpack.c.b16 %v2755, %v2747
        %v4644 = vpack.c.b16 %v2756, %v2748
        %v4645 = vpack.c.b16 %v2757, %v2749
        %v4646 = vpack.c.b16 %v2758, %v2750
        %v4647 = vpack.c.b16 %v2759, %v2751
        %v4648 = vpack.c.b16 %v2760, %v2752
        %v4649 = vpack.c.b16 %v2769, %v2761
        %v4650 = vpack.c.b16 %v2770, %v2762
        %v4651 = vpack.c.b16 %v2771, %v2763
        %v4652 = vpack.c.b16 %v2772, %v2764
        %v4653 = vpack.c.b16 %v2773, %v2765
        %v4654 = vpack.c.b16 %v2774, %v2766
        %v4655 = vpack.c.b16 %v2775, %v2767
        %v4656 = vpack.c.b16 %v2776, %v2768
        %v4657 = vpack.c.b16 %v2785, %v2777
        %v4658 = vpack.c.b16 %v2786, %v2778
        %v4659 = vpack.c.b16 %v2787, %v2779
        %v4660 = vpack.c.b16 %v2788, %v2780
        %v4661 = vpack.c.b16 %v2789, %v2781
        %v4662 = vpack.c.b16 %v2790, %v2782
        %v4663 = vpack.c.b16 %v2791, %v2783
        %v4664 = vpack.c.b16 %v2792, %v2784
        %v4665 = vpack.c.b16 %v2801, %v2793
        %v4666 = vpack.c.b16 %v2802, %v2794
        %v4667 = vpack.c.b16 %v2803, %v2795
        %v4668 = vpack.c.b16 %v2804, %v2796
        %v4669 = vpack.c.b16 %v2805, %v2797
        %v4670 = vpack.c.b16 %v2806, %v2798
        %v4671 = vpack.c.b16 %v2807, %v2799
        %v4672 = vpack.c.b16 %v2808, %v2800
        %v4673 = vpack.c.b16 %v2817, %v2809
        %v4674 = vpack.c.b16 %v2818, %v2810
        %v4675 = vpack.c.b16 %v2819, %v2811
        %v4676 = vpack.c.b16 %v2820, %v2812
        %v4677 = vpack.c.b16 %v2821, %v2813
        %v4678 = vpack.c.b16 %v2822, %v2814
        %v4679 = vpack.c.b16 %v2823, %v2815
        %v4680 = vpack.c.b16 %v2824, %v2816
        %v4681 = vpack.c.b16 %v2833, %v2825
        %v4682 = vpack.c.b16 %v2834, %v2826
        %v4683 = vpack.c.b16 %v2835, %v2827
        %v4684 = vpack.c.b16 %v2836, %v2828
        %v4685 = vpack.c.b16 %v2837, %v2829
        %v4686 = vpack.c.b16 %v2838, %v2830
        %v4687 = vpack.c.b16 %v2839, %v2831
        %v4688 = vpack.c.b16 %v2840, %v2832
        %v4689 = vpack.c.b16 %v2849, %v2841
        %v4690 = vpack.c.b16 %v2850, %v2842
        %v4691 = vpack.c.b16 %v2851, %v2843
        %v4692 = vpack.c.b16 %v2852, %v2844
        %v4693 = vpack.c.b16 %v2853, %v2845
        %v4694 = vpack.c.b16 %v2854, %v2846
        %v4695 = vpack.c.b16 %v2855, %v2847
        %v4696 = vpack.c.b16 %v2856, %v2848
        %v4697 = vpack.c.b16 %v2865, %v2857
        %v4698 = vpack.c.b16 %v2866, %v2858
        %v4699 = vpack.c.b16 %v2867, %v2859
        %v4700 = vpack.c.b16 %v2868, %v2860
        %v4701 = vpack.c.b16 %v2869, %v2861
        %v4702 = vpack.c.b16 %v2870, %v2862
        %v4703 = vpack.c.b16 %v2871, %v2863
        %v4704 = vpack.c.b16 %v2872, %v2864
        %v4705 = vpack.c.b16 %v2881, %v2873
        %v4706 = vpack.c.b16 %v2882, %v2874
        %v4707 = vpack.c.b16 %v2883, %v2875
        %v4708 = vpack.c.b16 %v2884, %v2876
        %v4709 = vpack.c.b16 %v2885, %v2877
        %v4710 = vpack.c.b16 %v2886, %v2878
        %v4711 = vpack.c.b16 %v2887, %v2879
        %v4712 = vpack.c.b16 %v2888, %v2880
        %v4713 = vpack.c.b16 %v2897, %v2889
        %v4714 = vpack.c.b16 %v2898, %v2890
        %v4715 = vpack.c.b16 %v2899, %v2891
        %v4716 = vpack.c.b16 %v2900, %v2892
        %v4717 = vpack.c.b16 %v2901, %v2893
        %v4718 = vpack.c.b16 %v2902, %v2894
        %v4719 = vpack.c.b16 %v2903, %v2895
        %v4720 = vpack.c.b16 %v2904, %v2896
        %v4721 = vpack.c.b16 %v2913, %v2905
        %v4722 = vpack.c.b16 %v2914, %v2906
        %v4723 = vpack.c.b16 %v2915, %v2907
        %v4724 = vpack.c.b16 %v2916, %v2908
        %v4725 = vpack.c.b16 %v2917, %v2909
        %v4726 = vpack.c.b16 %v2918, %v2910
        %v4727 = vpack.c.b16 %v2919, %v2911
        %v4728 = vpack.c.b16 %v2920, %v2912
        %v4729 = vpack.c.b16 %v2929, %v2921
        %v4730 = vpack.c.b16 %v2930, %v2922
        %v4731 = vpack.c.b16 %v2931, %v2923
        %v4732 = vpack.c.b16 %v2932, %v2924
        %v4733 = vpack.c.b16 %v2933, %v2925
        %v4734 = vpack.c.b16 %v2934, %v2926
        %v4735 = vpack.c.b16 %v2935, %v2927
        %v4736 = vpack.c.b16 %v2936, %v2928
        %v4737 = vpack.c.b16 %v2945, %v2937
        %v4738 = vpack.c.b16 %v2946, %v2938
        %v4739 = vpack.c.b16 %v2947, %v2939
        %v4740 = vpack.c.b16 %v2948, %v2940
        %v4741 = vpack.c.b16 %v2949, %v2941
        %v4742 = vpack.c.b16 %v2950, %v2942
        %v4743 = vpack.c.b16 %v2951, %v2943
        %v4744 = vpack.c.b16 %v2952, %v2944
        %v4745 = vpack.c.b16 %v2961, %v2953
        %v4746 = vpack.c.b16 %v2962, %v2954
        %v4747 = vpack.c.b16 %v2963, %v2955
        %v4748 = vpack.c.b16 %v2964, %v2956
        %v4749 = vpack.c.b16 %v2965, %v2957
        %v4750 = vpack.c.b16 %v2966, %v2958
        %v4751 = vpack.c.b16 %v2967, %v2959
        %v4752 = vpack.c.b16 %v2968, %v2960
        %v4753 = vpack.c.b16 %v2977, %v2969
        %v4754 = vpack.c.b16 %v2978, %v2970
        %v4755 = vpack.c.b16 %v2979, %v2971
        %v4756 = vpack.c.b16 %v2980, %v2972
        %v4757 = vpack.c.b16 %v2981, %v2973
        %v4758 = vpack.c.b16 %v2982, %v2974
        %v4759 = vpack.c.b16 %v2983, %v2975
        %v4760 = vpack.c.b16 %v2984, %v2976
        %v4761 = vpack.c.b16 %v2993, %v2985
        %v4762 = vpack.c.b16 %v2994, %v2986
        %v4763 = vpack.c.b16 %v2995, %v2987
        %v4764 = vpack.c.b16 %v2996, %v2988
        %v4765 = vpack.c.b16 %v2997, %v2989
        %v4766 = vpack.c.b16 %v2998, %v2990
        %v4767 = vpack.c.b16 %v2999, %v2991
        %v4768 = vpack.c.b16 %v3000, %v2992
        %v4769 = vpack.c.b16 %v3009, %v3001
        %v4770 = vpack.c.b16 %v3010, %v3002
        %v4771 = vpack.c.b16 %v3011, %v3003
        %v4772 = vpack.c.b16 %v3012, %v3004
        %v4773 = vpack.c.b16 %v3013, %v3005
        %v4774 = vpack.c.b16 %v3014, %v3006
        %v4775 = vpack.c.b16 %v3015, %v3007
        %v4776 = vpack.c.b16 %v3016, %v3008
        %v4777 = vpack.c.b16 %v3025, %v3017
        %v4778 = vpack.c.b16 %v3026, %v3018
        %v4779 = vpack.c.b16 %v3027, %v3019
        %v4780 = vpack.c.b16 %v3028, %v3020
        %v4781 = vpack.c.b16 %v3029, %v3021
        %v4782 = vpack.c.b16 %v3030, %v3022
        %v4783 = vpack.c.b16 %v3031, %v3023
        %v4784 = vpack.c.b16 %v3032, %v3024
        %v4785 = vpack.c.b16 %v3041, %v3033
        %v4786 = vpack.c.b16 %v3042, %v3034
        %v4787 = vpack.c.b16 %v3043, %v3035
        %v4788 = vpack.c.b16 %v3044, %v3036
        %v4789 = vpack.c.b16 %v3045, %v3037
        %v4790 = vpack.c.b16 %v3046, %v3038
        %v4791 = vpack.c.b16 %v3047, %v3039
        %v4792 = vpack.c.b16 %v3048, %v3040
        %v4793 = vpack.c.b16 %v3057, %v3049
        %v4794 = vpack.c.b16 %v3058, %v3050
        %v4795 = vpack.c.b16 %v3059, %v3051
        %v4796 = vpack.c.b16 %v3060, %v3052
        %v4797 = vpack.c.b16 %v3061, %v3053
        %v4798 = vpack.c.b16 %v3062, %v3054
        %v4799 = vpack.c.b16 %v3063, %v3055
        %v4800 = vpack.c.b16 %v3064, %v3056
        %v4801 = vpack.c.b16 %v3073, %v3065
        %v4802 = vpack.c.b16 %v3074, %v3066
        %v4803 = vpack.c.b16 %v3075, %v3067
        %v4804 = vpack.c.b16 %v3076, %v3068
        %v4805 = vpack.c.b16 %v3077, %v3069
        %v4806 = vpack.c.b16 %v3078, %v3070
        %v4807 = vpack.c.b16 %v3079, %v3071
        %v4808 = vpack.c.b16 %v3080, %v3072
        %v4809 = vpack.c.b16 %v3089, %v3081
        %v4810 = vpack.c.b16 %v3090, %v3082
        %v4811 = vpack.c.b16 %v3091, %v3083
        %v4812 = vpack.c.b16 %v3092, %v3084
        %v4813 = vpack.c.b16 %v3093, %v3085
        %v4814 = vpack.c.b16 %v3094, %v3086
        %v4815 = vpack.c.b16 %v3095, %v3087
        %v4816 = vpack.c.b16 %v3096, %v3088
        %v4817 = vpack.c.b16 %v3105, %v3097
        %v4818 = vpack.c.b16 %v3106, %v3098
        %v4819 = vpack.c.b16 %v3107, %v3099
        %v4820 = vpack.c.b16 %v3108, %v3100
        %v4821 = vpack.c.b16 %v3109, %v3101
        %v4822 = vpack.c.b16 %v3110, %v3102
        %v4823 = vpack.c.b16 %v3111, %v3103
        %v4824 = vpack.c.b16 %v3112, %v3104
        %v4825 = vpack.c.b16 %v3121, %v3113
        %v4826 = vpack.c.b16 %v3122, %v3114
        %v4827 = vpack.c.b16 %v3123, %v3115
        %v4828 = vpack.c.b16 %v3124, %v3116
        %v4829 = vpack.c.b16 %v3125, %v3117
        %v4830 = vpack.c.b16 %v3126, %v3118
        %v4831 = vpack.c.b16 %v3127, %v3119
        %v4832 = vpack.c.b16 %v3128, %v3120
        %v4833 = vpack.c.b16 %v3137, %v3129
        %v4834 = vpack.c.b16 %v3138, %v3130
        %v4835 = vpack.c.b16 %v3139, %v3131
        %v4836 = vpack.c.b16 %v3140, %v3132
        %v4837 = vpack.c.b16 %v3141, %v3133
        %v4838 = vpack.c.b16 %v3142, %v3134
        %v4839 = vpack.c.b16 %v3143, %v3135
        %v4840 = vpack.c.b16 %v3144, %v3136
        %v4841 = vpack.c.b16 %v3153, %v3145
        %v4842 = vpack.c.b16 %v3154, %v3146
        %v4843 = vpack.c.b16 %v3155, %v3147
        %v4844 = vpack.c.b16 %v3156, %v3148
        %v4845 = vpack.c.b16 %v3157, %v3149
        %v4846 = vpack.c.b16 %v3158, %v3150
        %v4847 = vpack.c.b16 %v3159, %v3151
        %v4848 = vpack.c.b16 %v3160, %v3152
        %v4849 = vpack.c.b16 %v3169, %v3161
        %v4850 = vpack.c.b16 %v3170, %v3162
        %v4851 = vpack.c.b16 %v3171, %v3163
        %v4852 = vpack.c.b16 %v3172, %v3164
        %v4853 = vpack.c.b16 %v3173, %v3165
        %v4854 = vpack.c.b16 %v3174, %v3166
        %v4855 = vpack.c.b16 %v3175, %v3167
        %v4856 = vpack.c.b16 %v3176, %v3168
        %v4857 = vpack.c.b16 %v3185, %v3177
        %v4858 = vpack.c.b16 %v3186, %v3178
        %v4859 = vpack.c.b16 %v3187, %v3179
        %v4860 = vpack.c.b16 %v3188, %v3180
        %v4861 = vpack.c.b16 %v3189, %v3181
        %v4862 = vpack.c.b16 %v3190, %v3182
        %v4863 = vpack.c.b16 %v3191, %v3183
        %v4864 = vpack.c.b16 %v3192, %v3184
        %v4865 = vpack.c.b16 %v3201, %v3193
        %v4866 = vpack.c.b16 %v3202, %v3194
        %v4867 = vpack.c.b16 %v3203, %v3195
        %v4868 = vpack.c.b16 %v3204, %v3196
        %v4869 = vpack.c.b16 %v3205, %v3197
        %v4870 = vpack.c.b16 %v3206, %v3198
        %v4871 = vpack.c.b16 %v3207, %v3199
        %v4872 = vpack.c.b16 %v3208, %v3200
        %v4873 = vpack.c.b16 %v3217, %v3209
        %v4874 = vpack.c.b16 %v3218, %v3210
        %v4875 = vpack.c.b16 %v3219, %v3211
        %v4876 = vpack.c.b16 %v3220, %v3212
        %v4877 = vpack.c.b16 %v3221, %v3213
        %v4878 = vpack.c.b16 %v3222, %v3214
        %v4879 = vpack.c.b16 %v3223, %v3215
        %v4880 = vpack.c.b16 %v3224, %v3216
        %v4881 = vpack.c.b16 %v3233, %v3225
        %v4882 = vpack.c.b16 %v3234, %v3226
        %v4883 = vpack.c.b16 %v3235, %v3227
        %v4884 = vpack.c.b16 %v3236, %v3228
        %v4885 = vpack.c.b16 %v3237, %v3229
        %v4886 = vpack.c.b16 %v3238, %v3230
        %v4887 = vpack.c.b16 %v3239, %v3231
        %v4888 = vpack.c.b16 %v3240, %v3232
        %v4889 = vpack.c.b16 %v3249, %v3241
        %v4890 = vpack.c.b16 %v3250, %v3242
        %v4891 = vpack.c.b16 %v3251, %v3243
        %v4892 = vpack.c.b16 %v3252, %v3244
        %v4893 = vpack.c.b16 %v3253, %v3245
        %v4894 = vpack.c.b16 %v3254, %v3246
        %v4895 = vpack.c.b16 %v3255, %v3247
        %v4896 = vpack.c.b16 %v3256, %v3248
        %v4897 = vpack.c.b16 %v3265, %v3257
        %v4898 = vpack.c.b16 %v3266, %v3258
        %v4899 = vpack.c.b16 %v3267, %v3259
        %v4900 = vpack.c.b16 %v3268, %v3260
        %v4901 = vpack.c.b16 %v3269, %v3261
        %v4902 = vpack.c.b16 %v3270, %v3262
        %v4903 = vpack.c.b16 %v3271, %v3263
        %v4904 = vpack.c.b16 %v3272, %v3264
        %v4905 = vpack.c.b16 %v3281, %v3273
        %v4906 = vpack.c.b16 %v3282, %v3274
        %v4907 = vpack.c.b16 %v3283, %v3275
        %v4908 = vpack.c.b16 %v3284, %v3276
        %v4909 = vpack.c.b16 %v3285, %v3277
        %v4910 = vpack.c.b16 %v3286, %v3278
        %v4911 = vpack.c.b16 %v3287, %v3279
        %v4912 = vpack.c.b16 %v3288, %v3280
        %v4913 = vpack.c.b16 %v3297, %v3289
        %v4914 = vpack.c.b16 %v3298, %v3290
        %v4915 = vpack.c.b16 %v3299, %v3291
        %v4916 = vpack.c.b16 %v3300, %v3292
        %v4917 = vpack.c.b16 %v3301, %v3293
        %v4918 = vpack.c.b16 %v3302, %v3294
        %v4919 = vpack.c.b16 %v3303, %v3295
        %v4920 = vpack.c.b16 %v3304, %v3296
        %v4921 = vpack.c.b16 %v3313, %v3305
        %v4922 = vpack.c.b16 %v3314, %v3306
        %v4923 = vpack.c.b16 %v3315, %v3307
        %v4924 = vpack.c.b16 %v3316, %v3308
        %v4925 = vpack.c.b16 %v3317, %v3309
        %v4926 = vpack.c.b16 %v3318, %v3310
        %v4927 = vpack.c.b16 %v3319, %v3311
        %v4928 = vpack.c.b16 %v3320, %v3312
        %v4929 = vpack.c.b16 %v3329, %v3321
        %v4930 = vpack.c.b16 %v3330, %v3322
        %v4931 = vpack.c.b16 %v3331, %v3323
        %v4932 = vpack.c.b16 %v3332, %v3324
        %v4933 = vpack.c.b16 %v3333, %v3325
        %v4934 = vpack.c.b16 %v3334, %v3326
        %v4935 = vpack.c.b16 %v3335, %v3327
        %v4936 = vpack.c.b16 %v3336, %v3328
        %v4937 = vpack.c.b16 %v3345, %v3337
        %v4938 = vpack.c.b16 %v3346, %v3338
        %v4939 = vpack.c.b16 %v3347, %v3339
        %v4940 = vpack.c.b16 %v3348, %v3340
        %v4941 = vpack.c.b16 %v3349, %v3341
        %v4942 = vpack.c.b16 %v3350, %v3342
        %v4943 = vpack.c.b16 %v3351, %v3343
        %v4944 = vpack.c.b16 %v3352, %v3344
        %v4945 = vpack.c.b16 %v3361, %v3353
        %v4946 = vpack.c.b16 %v3362, %v3354
        %v4947 = vpack.c.b16 %v3363, %v3355
        %v4948 = vpack.c.b16 %v3364, %v3356
        %v4949 = vpack.c.b16 %v3365, %v3357
        %v4950 = vpack.c.b16 %v3366, %v3358
        %v4951 = vpack.c.b16 %v3367, %v3359
        %v4952 = vpack.c.b16 %v3368, %v3360
        %v4953 = vpack.c.b16 %v3377, %v3369
        %v4954 = vpack.c.b16 %v3378, %v3370
        %v4955 = vpack.c.b16 %v3379, %v3371
        %v4956 = vpack.c.b16 %v3380, %v3372
        %v4957 = vpack.c.b16 %v3381, %v3373
        %v4958 = vpack.c.b16 %v3382, %v3374
        %v4959 = vpack.c.b16 %v3383, %v3375
        %v4960 = vpack.c.b16 %v3384, %v3376
        %v4961 = vpack.c.b16 %v3393, %v3385
        %v4962 = vpack.c.b16 %v3394, %v3386
        %v4963 = vpack.c.b16 %v3395, %v3387
        %v4964 = vpack.c.b16 %v3396, %v3388
        %v4965 = vpack.c.b16 %v3397, %v3389
        %v4966 = vpack.c.b16 %v3398, %v3390
        %v4967 = vpack.c.b16 %v3399, %v3391
        %v4968 = vpack.c.b16 %v3400, %v3392
        %v4969 = vpack.c.b16 %v3409, %v3401
        %v4970 = vpack.c.b16 %v3410, %v3402
        %v4971 = vpack.c.b16 %v3411, %v3403
        %v4972 = vpack.c.b16 %v3412, %v3404
        %v4973 = vpack.c.b16 %v3413, %v3405
        %v4974 = vpack.c.b16 %v3414, %v3406
        %v4975 = vpack.c.b16 %v3415, %v3407
        %v4976 = vpack.c.b16 %v3416, %v3408
        %v4977 = vpack.c.b16 %v3425, %v3417
        %v4978 = vpack.c.b16 %v3426, %v3418
        %v4979 = vpack.c.b16 %v3427, %v3419
        %v4980 = vpack.c.b16 %v3428, %v3420
        %v4981 = vpack.c.b16 %v3429, %v3421
        %v4982 = vpack.c.b16 %v3430, %v3422
        %v4983 = vpack.c.b16 %v3431, %v3423
        %v4984 = vpack.c.b16 %v3432, %v3424
        %v4985 = vpack.c.b16 %v3441, %v3433
        %v4986 = vpack.c.b16 %v3442, %v3434
        %v4987 = vpack.c.b16 %v3443, %v3435
        %v4988 = vpack.c.b16 %v3444, %v3436
        %v4989 = vpack.c.b16 %v3445, %v3437
        %v4990 = vpack.c.b16 %v3446, %v3438
        %v4991 = vpack.c.b16 %v3447, %v3439
        %v4992 = vpack.c.b16 %v3448, %v3440
        %v4993 = vpack.c.b16 %v3457, %v3449
        %v4994 = vpack.c.b16 %v3458, %v3450
        %v4995 = vpack.c.b16 %v3459, %v3451
        %v4996 = vpack.c.b16 %v3460, %v3452
        %v4997 = vpack.c.b16 %v3461, %v3453
        %v4998 = vpack.c.b16 %v3462, %v3454
        %v4999 = vpack.c.b16 %v3463, %v3455
        %v5000 = vpack.c.b16 %v3464, %v3456
        %v5001 = vpack.c.b16 %v3473, %v3465
        %v5002 = vpack.c.b16 %v3474, %v3466
        %v5003 = vpack.c.b16 %v3475, %v3467
        %v5004 = vpack.c.b16 %v3476, %v3468
        %v5005 = vpack.c.b16 %v3477, %v3469
        %v5006 = vpack.c.b16 %v3478, %v3470
        %v5007 = vpack.c.b16 %v3479, %v3471
        %v5008 = vpack.c.b16 %v3480, %v3472
        %v5009 = vpack.c.b16 %v3489, %v3481
        %v5010 = vpack.c.b16 %v3490, %v3482
        %v5011 = vpack.c.b16 %v3491, %v3483
        %v5012 = vpack.c.b16 %v3492, %v3484
        %v5013 = vpack.c.b16 %v3493, %v3485
        %v5014 = vpack.c.b16 %v3494, %v3486
        %v5015 = vpack.c.b16 %v3495, %v3487
        %v5016 = vpack.c.b16 %v3496, %v3488
        %v5017 = vpack.c.b16 %v3505, %v3497
        %v5018 = vpack.c.b16 %v3506, %v3498
        %v5019 = vpack.c.b16 %v3507, %v3499
        %v5020 = vpack.c.b16 %v3508, %v3500
        %v5021 = vpack.c.b16 %v3509, %v3501
        %v5022 = vpack.c.b16 %v3510, %v3502
        %v5023 = vpack.c.b16 %v3511, %v3503
        %v5024 = vpack.c.b16 %v3512, %v3504
        %v5025 = vpack.c.b16 %v3521, %v3513
        %v5026 = vpack.c.b16 %v3522, %v3514
        %v5027 = vpack.c.b16 %v3523, %v3515
        %v5028 = vpack.c.b16 %v3524, %v3516
        %v5029 = vpack.c.b16 %v3525, %v3517
        %v5030 = vpack.c.b16 %v3526, %v3518
        %v5031 = vpack.c.b16 %v3527, %v3519
        %v5032 = vpack.c.b16 %v3528, %v3520
        %v5033 = vpack.c.b16 %v3537, %v3529
        %v5034 = vpack.c.b16 %v3538, %v3530
        %v5035 = vpack.c.b16 %v3539, %v3531
        %v5036 = vpack.c.b16 %v3540, %v3532
        %v5037 = vpack.c.b16 %v3541, %v3533
        %v5038 = vpack.c.b16 %v3542, %v3534
        %v5039 = vpack.c.b16 %v3543, %v3535
        %v5040 = vpack.c.b16 %v3544, %v3536
        %v5041 = vpack.c.b16 %v3553, %v3545
        %v5042 = vpack.c.b16 %v3554, %v3546
        %v5043 = vpack.c.b16 %v3555, %v3547
        %v5044 = vpack.c.b16 %v3556, %v3548
        %v5045 = vpack.c.b16 %v3557, %v3549
        %v5046 = vpack.c.b16 %v3558, %v3550
        %v5047 = vpack.c.b16 %v3559, %v3551
        %v5048 = vpack.c.b16 %v3560, %v3552
        %v5049 = vpack.c.b16 %v3569, %v3561
        %v5050 = vpack.c.b16 %v3570, %v3562
        %v5051 = vpack.c.b16 %v3571, %v3563
        %v5052 = vpack.c.b16 %v3572, %v3564
        %v5053 = vpack.c.b16 %v3573, %v3565
        %v5054 = vpack.c.b16 %v3574, %v3566
        %v5055 = vpack.c.b16 %v3575, %v3567
        %v5056 = vpack.c.b16 %v3576, %v3568
        %v5057 = vpack.c.b16 %v3585, %v3577
        %v5058 = vpack.c.b16 %v3586, %v3578
        %v5059 = vpack.c.b16 %v3587, %v3579
        %v5060 = vpack.c.b16 %v3588, %v3580
        %v5061 = vpack.c.b16 %v3589, %v3581
        %v5062 = vpack.c.b16 %v3590, %v3582
        %v5063 = vpack.c.b16 %v3591, %v3583
        %v5064 = vpack.c.b16 %v3592, %v3584
        %v5065 = vpack.c.b16 %v3601, %v3593
        %v5066 = vpack.c.b16 %v3602, %v3594
        %v5067 = vpack.c.b16 %v3603, %v3595
        %v5068 = vpack.c.b16 %v3604, %v3596
        %v5069 = vpack.c.b16 %v3605, %v3597
        %v5070 = vpack.c.b16 %v3606, %v3598
        %v5071 = vpack.c.b16 %v3607, %v3599
        %v5072 = vpack.c.b16 %v3608, %v3600
        %v5073 = vpack.c.b16 %v3617, %v3609
        %v5074 = vpack.c.b16 %v3618, %v3610
        %v5075 = vpack.c.b16 %v3619, %v3611
        %v5076 = vpack.c.b16 %v3620, %v3612
        %v5077 = vpack.c.b16 %v3621, %v3613
        %v5078 = vpack.c.b16 %v3622, %v3614
        %v5079 = vpack.c.b16 %v3623, %v3615
        %v5080 = vpack.c.b16 %v3624, %v3616
        %v5081 = vpack.c.b16 %v3633, %v3625
        %v5082 = vpack.c.b16 %v3634, %v3626
        %v5083 = vpack.c.b16 %v3635, %v3627
        %v5084 = vpack.c.b16 %v3636, %v3628
        %v5085 = vpack.c.b16 %v3637, %v3629
        %v5086 = vpack.c.b16 %v3638, %v3630
        %v5087 = vpack.c.b16 %v3639, %v3631
        %v5088 = vpack.c.b16 %v3640, %v3632
        %v5089 = vpack.c.b16 %v3649, %v3641
        %v5090 = vpack.c.b16 %v3650, %v3642
        %v5091 = vpack.c.b16 %v3651, %v3643
        %v5092 = vpack.c.b16 %v3652, %v3644
        %v5093 = vpack.c.b16 %v3653, %v3645
        %v5094 = vpack.c.b16 %v3654, %v3646
        %v5095 = vpack.c.b16 %v3655, %v3647
        %v5096 = vpack.c.b16 %v3656, %v3648
        %v5097 = vpack.c.b16 %v3665, %v3657
        %v5098 = vpack.c.b16 %v3666, %v3658
        %v5099 = vpack.c.b16 %v3667, %v3659
        %v5100 = vpack.c.b16 %v3668, %v3660
        %v5101 = vpack.c.b16 %v3669, %v3661
        %v5102 = vpack.c.b16 %v3670, %v3662
        %v5103 = vpack.c.b16 %v3671, %v3663
        %v5104 = vpack.c.b16 %v3672, %v3664
        %v5105 = vpack.c.b16 %v3681, %v3673
        %v5106 = vpack.c.b16 %v3682, %v3674
        %v5107 = vpack.c.b16 %v3683, %v3675
        %v5108 = vpack.c.b16 %v3684, %v3676
        %v5109 = vpack.c.b16 %v3685, %v3677
        %v5110 = vpack.c.b16 %v3686, %v3678
        %v5111 = vpack.c.b16 %v3687, %v3679
        %v5112 = vpack.c.b16 %v3688, %v3680
        %v5113 = vpack.c.b16 %v3697, %v3689
        %v5114 = vpack.c.b16 %v3698, %v3690
        %v5115 = vpack.c.b16 %v3699, %v3691
        %v5116 = vpack.c.b16 %v3700, %v3692
        %v5117 = vpack.c.b16 %v3701, %v3693
        %v5118 = vpack.c.b16 %v3702, %v3694
        %v5119 = vpack.c.b16 %v3703, %v3695
        %v5120 = vpack.c.b16 %v3704, %v3696
        %v5121 = vpack.c.b16 %v3713, %v3705
        %v5122 = vpack.c.b16 %v3714, %v3706
        %v5123 = vpack.c.b16 %v3715, %v3707
        %v5124 = vpack.c.b16 %v3716, %v3708
        %v5125 = vpack.c.b16 %v3717, %v3709
        %v5126 = vpack.c.b16 %v3718, %v3710
        %v5127 = vpack.c.b16 %v3719, %v3711
        %v5128 = vpack.c.b16 %v3720, %v3712
        %v5129 = vpack.c.b16 %v3729, %v3721
        %v5130 = vpack.c.b16 %v3730, %v3722
        %v5131 = vpack.c.b16 %v3731, %v3723
        %v5132 = vpack.c.b16 %v3732, %v3724
        %v5133 = vpack.c.b16 %v3733, %v3725
        %v5134 = vpack.c.b16 %v3734, %v3726
        %v5135 = vpack.c.b16 %v3735, %v3727
        %v5136 = vpack.c.b16 %v3736, %v3728
        %v5137 = vpack.c.b16 %v3745, %v3737
        %v5138 = vpack.c.b16 %v3746, %v3738
        %v5139 = vpack.c.b16 %v3747, %v3739
        %v5140 = vpack.c.b16 %v3748, %v3740
        %v5141 = vpack.c.b16 %v3749, %v3741
        %v5142 = vpack.c.b16 %v3750, %v3742
        %v5143 = vpack.c.b16 %v3751, %v3743
        %v5144 = vpack.c.b16 %v3752, %v3744
        %v5145 = vpack.c.b16 %v3761, %v3753
        %v5146 = vpack.c.b16 %v3762, %v3754
        %v5147 = vpack.c.b16 %v3763, %v3755
        %v5148 = vpack.c.b16 %v3764, %v3756
        %v5149 = vpack.c.b16 %v3765, %v3757
        %v5150 = vpack.c.b16 %v3766, %v3758
        %v5151 = vpack.c.b16 %v3767, %v3759
        %v5152 = vpack.c.b16 %v3768, %v3760
        %v5153 = vpack.c.b16 %v3777, %v3769
        %v5154 = vpack.c.b16 %v3778, %v3770
        %v5155 = vpack.c.b16 %v3779, %v3771
        %v5156 = vpack.c.b16 %v3780, %v3772
        %v5157 = vpack.c.b16 %v3781, %v3773
        %v5158 = vpack.c.b16 %v3782, %v3774
        %v5159 = vpack.c.b16 %v3783, %v3775
        %v5160 = vpack.c.b16 %v3784, %v3776
        %v5161 = vpack.c.b16 %v3793, %v3785
        %v5162 = vpack.c.b16 %v3794, %v3786
        %v5163 = vpack.c.b16 %v3795, %v3787
        %v5164 = vpack.c.b16 %v3796, %v3788
        %v5165 = vpack.c.b16 %v3797, %v3789
        %v5166 = vpack.c.b16 %v3798, %v3790
        %v5167 = vpack.c.b16 %v3799, %v3791
        %v5168 = vpack.c.b16 %v3800, %v3792
        %v5169 = vpack.c.b16 %v3809, %v3801
        %v5170 = vpack.c.b16 %v3810, %v3802
        %v5171 = vpack.c.b16 %v3811, %v3803
        %v5172 = vpack.c.b16 %v3812, %v3804
        %v5173 = vpack.c.b16 %v3813, %v3805
        %v5174 = vpack.c.b16 %v3814, %v3806
        %v5175 = vpack.c.b16 %v3815, %v3807
        %v5176 = vpack.c.b16 %v3816, %v3808
        %v5177 = vpack.c.b16 %v3825, %v3817
        %v5178 = vpack.c.b16 %v3826, %v3818
        %v5179 = vpack.c.b16 %v3827, %v3819
        %v5180 = vpack.c.b16 %v3828, %v3820
        %v5181 = vpack.c.b16 %v3829, %v3821
        %v5182 = vpack.c.b16 %v3830, %v3822
        %v5183 = vpack.c.b16 %v3831, %v3823
        %v5184 = vpack.c.b16 %v3832, %v3824
        %v5185 = vpack.c.b16 %v3841, %v3833
        %v5186 = vpack.c.b16 %v3842, %v3834
        %v5187 = vpack.c.b16 %v3843, %v3835
        %v5188 = vpack.c.b16 %v3844, %v3836
        %v5189 = vpack.c.b16 %v3845, %v3837
        %v5190 = vpack.c.b16 %v3846, %v3838
        %v5191 = vpack.c.b16 %v3847, %v3839
        %v5192 = vpack.c.b16 %v3848, %v3840
        %v5193 = vpack.c.b16 %v3857, %v3849
        %v5194 = vpack.c.b16 %v3858, %v3850
        %v5195 = vpack.c.b16 %v3859, %v3851
        %v5196 = vpack.c.b16 %v3860, %v3852
        %v5197 = vpack.c.b16 %v3861, %v3853
        %v5198 = vpack.c.b16 %v3862, %v3854
        %v5199 = vpack.c.b16 %v3863, %v3855
        %v5200 = vpack.c.b16 %v3864, %v3856
        %v5201 = vpack.c.b16 %v3873, %v3865
        %v5202 = vpack.c.b16 %v3874, %v3866
        %v5203 = vpack.c.b16 %v3875, %v3867
        %v5204 = vpack.c.b16 %v3876, %v3868
        %v5205 = vpack.c.b16 %v3877, %v3869
        %v5206 = vpack.c.b16 %v3878, %v3870
        %v5207 = vpack.c.b16 %v3879, %v3871
        %v5208 = vpack.c.b16 %v3880, %v3872
        %v5209 = vpack.c.b16 %v3889, %v3881
        %v5210 = vpack.c.b16 %v3890, %v3882
        %v5211 = vpack.c.b16 %v3891, %v3883
        %v5212 = vpack.c.b16 %v3892, %v3884
        %v5213 = vpack.c.b16 %v3893, %v3885
        %v5214 = vpack.c.b16 %v3894, %v3886
        %v5215 = vpack.c.b16 %v3895, %v3887
        %v5216 = vpack.c.b16 %v3896, %v3888
        %v5217 = vpack.c.b16 %v3905, %v3897
        %v5218 = vpack.c.b16 %v3906, %v3898
        %v5219 = vpack.c.b16 %v3907, %v3899
        %v5220 = vpack.c.b16 %v3908, %v3900
        %v5221 = vpack.c.b16 %v3909, %v3901
        %v5222 = vpack.c.b16 %v3910, %v3902
        %v5223 = vpack.c.b16 %v3911, %v3903
        %v5224 = vpack.c.b16 %v3912, %v3904
        %v5225 = vpack.c.b16 %v3921, %v3913
        %v5226 = vpack.c.b16 %v3922, %v3914
        %v5227 = vpack.c.b16 %v3923, %v3915
        %v5228 = vpack.c.b16 %v3924, %v3916
        %v5229 = vpack.c.b16 %v3925, %v3917
        %v5230 = vpack.c.b16 %v3926, %v3918
        %v5231 = vpack.c.b16 %v3927, %v3919
        %v5232 = vpack.c.b16 %v3928, %v3920
        %v5233 = vpack.c.b16 %v3937, %v3929
        %v5234 = vpack.c.b16 %v3938, %v3930
        %v5235 = vpack.c.b16 %v3939, %v3931
        %v5236 = vpack.c.b16 %v3940, %v3932
        %v5237 = vpack.c.b16 %v3941, %v3933
        %v5238 = vpack.c.b16 %v3942, %v3934
        %v5239 = vpack.c.b16 %v3943, %v3935
        %v5240 = vpack.c.b16 %v3944, %v3936
        %v5241 = vpack.c.b16 %v3953, %v3945
        %v5242 = vpack.c.b16 %v3954, %v3946
        %v5243 = vpack.c.b16 %v3955, %v3947
        %v5244 = vpack.c.b16 %v3956, %v3948
        %v5245 = vpack.c.b16 %v3957, %v3949
        %v5246 = vpack.c.b16 %v3958, %v3950
        %v5247 = vpack.c.b16 %v3959, %v3951
        %v5248 = vpack.c.b16 %v3960, %v3952
        %v5249 = vpack.c.b16 %v3969, %v3961
        %v5250 = vpack.c.b16 %v3970, %v3962
        %v5251 = vpack.c.b16 %v3971, %v3963
        %v5252 = vpack.c.b16 %v3972, %v3964
        %v5253 = vpack.c.b16 %v3973, %v3965
        %v5254 = vpack.c.b16 %v3974, %v3966
        %v5255 = vpack.c.b16 %v3975, %v3967
        %v5256 = vpack.c.b16 %v3976, %v3968
        %v5257 = vpack.c.b16 %v3985, %v3977
        %v5258 = vpack.c.b16 %v3986, %v3978
        %v5259 = vpack.c.b16 %v3987, %v3979
        %v5260 = vpack.c.b16 %v3988, %v3980
        %v5261 = vpack.c.b16 %v3989, %v3981
        %v5262 = vpack.c.b16 %v3990, %v3982
        %v5263 = vpack.c.b16 %v3991, %v3983
        %v5264 = vpack.c.b16 %v3992, %v3984
        %v5265 = vpack.c.b16 %v4001, %v3993
        %v5266 = vpack.c.b16 %v4002, %v3994
        %v5267 = vpack.c.b16 %v4003, %v3995
        %v5268 = vpack.c.b16 %v4004, %v3996
        %v5269 = vpack.c.b16 %v4005, %v3997
        %v5270 = vpack.c.b16 %v4006, %v3998
        %v5271 = vpack.c.b16 %v4007, %v3999
        %v5272 = vpack.c.b16 %v4008, %v4000
        %v5273 = vpack.c.b16 %v4017, %v4009
        %v5274 = vpack.c.b16 %v4018, %v4010
        %v5275 = vpack.c.b16 %v4019, %v4011
        %v5276 = vpack.c.b16 %v4020, %v4012
        %v5277 = vpack.c.b16 %v4021, %v4013
        %v5278 = vpack.c.b16 %v4022, %v4014
        %v5279 = vpack.c.b16 %v4023, %v4015
        %v5280 = vpack.c.b16 %v4024, %v4016
        %v5281 = vpack.c.b16 %v4033, %v4025
        %v5282 = vpack.c.b16 %v4034, %v4026
        %v5283 = vpack.c.b16 %v4035, %v4027
        %v5284 = vpack.c.b16 %v4036, %v4028
        %v5285 = vpack.c.b16 %v4037, %v4029
        %v5286 = vpack.c.b16 %v4038, %v4030
        %v5287 = vpack.c.b16 %v4039, %v4031
        %v5288 = vpack.c.b16 %v4040, %v4032
        %v5289 = vpack.c.b16 %v4049, %v4041
        %v5290 = vpack.c.b16 %v4050, %v4042
        %v5291 = vpack.c.b16 %v4051, %v4043
        %v5292 = vpack.c.b16 %v4052, %v4044
        %v5293 = vpack.c.b16 %v4053, %v4045
        %v5294 = vpack.c.b16 %v4054, %v4046
        %v5295 = vpack.c.b16 %v4055, %v4047
        %v5296 = vpack.c.b16 %v4056, %v4048
        %v5297 = vpack.c.b16 %v4065, %v4057
        %v5298 = vpack.c.b16 %v4066, %v4058
        %v5299 = vpack.c.b16 %v4067, %v4059
        %v5300 = vpack.c.b16 %v4068, %v4060
        %v5301 = vpack.c.b16 %v4069, %v4061
        %v5302 = vpack.c.b16 %v4070, %v4062
        %v5303 = vpack.c.b16 %v4071, %v4063
        %v5304 = vpack.c.b16 %v4072, %v4064
        %v5305 = vpack.c.b16 %v4081, %v4073
        %v5306 = vpack.c.b16 %v4082, %v4074
        %v5307 = vpack.c.b16 %v4083, %v4075
        %v5308 = vpack.c.b16 %v4084, %v4076
        %v5309 = vpack.c.b16 %v4085, %v4077
        %v5310 = vpack.c.b16 %v4086, %v4078
        %v5311 = vpack.c.b16 %v4087, %v4079
        %v5312 = vpack.c.b16 %v4088, %v4080
        %v5313 = vpack.c.b16 %v4097, %v4089
        %v5314 = vpack.c.b16 %v4098, %v4090
        %v5315 = vpack.c.b16 %v4099, %v4091
        %v5316 = vpack.c.b16 %v4100, %v4092
        %v5317 = vpack.c.b16 %v4101, %v4093
        %v5318 = vpack.c.b16 %v4102, %v4094
        %v5319 = vpack.c.b16 %v4103, %v4095
        %v5320 = vpack.c.b16 %v4104, %v4096
        %v5321 = vpack.c.b16 %v4113, %v4105
        %v5322 = vpack.c.b16 %v4114, %v4106
        %v5323 = vpack.c.b16 %v4115, %v4107
        %v5324 = vpack.c.b16 %v4116, %v4108
        %v5325 = vpack.c.b16 %v4117, %v4109
        %v5326 = vpack.c.b16 %v4118, %v4110
        %v5327 = vpack.c.b16 %v4119, %v4111
        %v5328 = vpack.c.b16 %v4120, %v4112
        %v5329 = vpack.c.b16 %v4129, %v4121
        %v5330 = vpack.c.b16 %v4130, %v4122
        %v5331 = vpack.c.b16 %v4131, %v4123
        %v5332 = vpack.c.b16 %v4132, %v4124
        %v5333 = vpack.c.b16 %v4133, %v4125
        %v5334 = vpack.c.b16 %v4134, %v4126
        %v5335 = vpack.c.b16 %v4135, %v4127
        %v5336 = vpack.c.b16 %v4136, %v4128
        %v5337 = vpack.c.b16 %v4145, %v4137
        %v5338 = vpack.c.b16 %v4146, %v4138
        %v5339 = vpack.c.b16 %v4147, %v4139
        %v5340 = vpack.c.b16 %v4148, %v4140
        %v5341 = vpack.c.b16 %v4149, %v4141
        %v5342 = vpack.c.b16 %v4150, %v4142
        %v5343 = vpack.c.b16 %v4151, %v4143
        %v5344 = vpack.c.b16 %v4152, %v4144
        %v5345 = vpack.c.b16 %v4161, %v4153
        %v5346 = vpack.c.b16 %v4162, %v4154
        %v5347 = vpack.c.b16 %v4163, %v4155
        %v5348 = vpack.c.b16 %v4164, %v4156
        %v5349 = vpack.c.b16 %v4165, %v4157
        %v5350 = vpack.c.b16 %v4166, %v4158
        %v5351 = vpack.c.b16 %v4167, %v4159
        %v5352 = vpack.c.b16 %v4168, %v4160
        %v5353 = vpack.c.b16 %v4177, %v4169
        %v5354 = vpack.c.b16 %v4178, %v4170
        %v5355 = vpack.c.b16 %v4179, %v4171
        %v5356 = vpack.c.b16 %v4180, %v4172
        %v5357 = vpack.c.b16 %v4181, %v4173
        %v5358 = vpack.c.b16 %v4182, %v4174
        %v5359 = vpack.c.b16 %v4183, %v4175
        %v5360 = vpack.c.b16 %v4184, %v4176
        %v5361 = vpack.c.b16 %v4193, %v4185
        %v5362 = vpack.c.b16 %v4194, %v4186
        %v5363 = vpack.c.b16 %v4195, %v4187
        %v5364 = vpack.c.b16 %v4196, %v4188
        %v5365 = vpack.c.b16 %v4197, %v4189
        %v5366 = vpack.c.b16 %v4198, %v4190
        %v5367 = vpack.c.b16 %v4199, %v4191
        %v5368 = vpack.c.b16 %v4200, %v4192
        %v5369 = vpack.c.b16 %v4209, %v4201
        %v5370 = vpack.c.b16 %v4210, %v4202
        %v5371 = vpack.c.b16 %v4211, %v4203
        %v5372 = vpack.c.b16 %v4212, %v4204
        %v5373 = vpack.c.b16 %v4213, %v4205
        %v5374 = vpack.c.b16 %v4214, %v4206
        %v5375 = vpack.c.b16 %v4215, %v4207
        %v5376 = vpack.c.b16 %v4216, %v4208
        %v5377 = vpack.c.b16 %v4225, %v4217
        %v5378 = vpack.c.b16 %v4226, %v4218
        %v5379 = vpack.c.b16 %v4227, %v4219
        %v5380 = vpack.c.b16 %v4228, %v4220
        %v5381 = vpack.c.b16 %v4229, %v4221
        %v5382 = vpack.c.b16 %v4230, %v4222
        %v5383 = vpack.c.b16 %v4231, %v4223
        %v5384 = vpack.c.b16 %v4232, %v4224
        %v5385 = vpack.c.b16 %v4241, %v4233
        %v5386 = vpack.c.b16 %v4242, %v4234
        %v5387 = vpack.c.b16 %v4243, %v4235
        %v5388 = vpack.c.b16 %v4244, %v4236
        %v5389 = vpack.c.b16 %v4245, %v4237
        %v5390 = vpack.c.b16 %v4246, %v4238
        %v5391 = vpack.c.b16 %v4247, %v4239
        %v5392 = vpack.c.b16 %v4248, %v4240
        %v5393 = vpack.c.b16 %v4257, %v4249
        %v5394 = vpack.c.b16 %v4258, %v4250
        %v5395 = vpack.c.b16 %v4259, %v4251
        %v5396 = vpack.c.b16 %v4260, %v4252
        %v5397 = vpack.c.b16 %v4261, %v4253
        %v5398 = vpack.c.b16 %v4262, %v4254
        %v5399 = vpack.c.b16 %v4263, %v4255
        %v5400 = vpack.c.b16 %v4264, %v4256
        %v5401 = vpack.c.b16 %v4273, %v4265
        %v5402 = vpack.c.b16 %v4274, %v4266
        %v5403 = vpack.c.b16 %v4275, %v4267
        %v5404 = vpack.c.b16 %v4276, %v4268
        %v5405 = vpack.c.b16 %v4277, %v4269
        %v5406 = vpack.c.b16 %v4278, %v4270
        %v5407 = vpack.c.b16 %v4279, %v4271
        %v5408 = vpack.c.b16 %v4280, %v4272
        %v5409 = vpack.c.b16 %v4289, %v4281
        %v5410 = vpack.c.b16 %v4290, %v4282
        %v5411 = vpack.c.b16 %v4291, %v4283
        %v5412 = vpack.c.b16 %v4292, %v4284
        %v5413 = vpack.c.b16 %v4293, %v4285
        %v5414 = vpack.c.b16 %v4294, %v4286
        %v5415 = vpack.c.b16 %v4295, %v4287
        %v5416 = vpack.c.b16 %v4296, %v4288
        %v5417 = vpack.c.b16 %v4305, %v4297
        %v5418 = vpack.c.b16 %v4306, %v4298
        %v5419 = vpack.c.b16 %v4307, %v4299
        %v5420 = vpack.c.b16 %v4308, %v4300
        %v5421 = vpack.c.b16 %v4309, %v4301
        %v5422 = vpack.c.b16 %v4310, %v4302
        %v5423 = vpack.c.b16 %v4311, %v4303
        %v5424 = vpack.c.b16 %v4312, %v4304
        %v5425 = vpack.c.b16 %v4321, %v4313
        %v5426 = vpack.c.b16 %v4322, %v4314
        %v5427 = vpack.c.b16 %v4323, %v4315
        %v5428 = vpack.c.b16 %v4324, %v4316
        %v5429 = vpack.c.b16 %v4325, %v4317
        %v5430 = vpack.c.b16 %v4326, %v4318
        %v5431 = vpack.c.b16 %v4327, %v4319
        %v5432 = vpack.c.b16 %v4328, %v4320
        %v5433 = vpack.c.b16 %v4337, %v4329
        %v5434 = vpack.c.b16 %v4338, %v4330
        %v5435 = vpack.c.b16 %v4339, %v4331
        %v5436 = vpack.c.b16 %v4340, %v4332
        %v5437 = vpack.c.b16 %v4341, %v4333
        %v5438 = vpack.c.b16 %v4342, %v4334
        %v5439 = vpack.c.b16 %v4343, %v4335
        %v5440 = vpack.c.b16 %v4344, %v4336
        %v5441 = vpack.c.b16 %v4353, %v4345
        %v5442 = vpack.c.b16 %v4354, %v4346
        %v5443 = vpack.c.b16 %v4355, %v4347
        %v5444 = vpack.c.b16 %v4356, %v4348
        %v5445 = vpack.c.b16 %v4357, %v4349
        %v5446 = vpack.c.b16 %v4358, %v4350
        %v5447 = vpack.c.b16 %v4359, %v4351
        %v5448 = vpack.c.b16 %v4360, %v4352
        %v5449 = vpack.c.b16 %v4369, %v4361
        %v5450 = vpack.c.b16 %v4370, %v4362
        %v5451 = vpack.c.b16 %v4371, %v4363
        %v5452 = vpack.c.b16 %v4372, %v4364
        %v5453 = vpack.c.b16 %v4373, %v4365
        %v5454 = vpack.c.b16 %v4374, %v4366
        %v5455 = vpack.c.b16 %v4375, %v4367
        %v5456 = vpack.c.b16 %v4376, %v4368
        %v5457 = vpack.c.b16 %v4385, %v4377
        %v5458 = vpack.c.b16 %v4386, %v4378
        %v5459 = vpack.c.b16 %v4387, %v4379
        %v5460 = vpack.c.b16 %v4388, %v4380
        %v5461 = vpack.c.b16 %v4389, %v4381
        %v5462 = vpack.c.b16 %v4390, %v4382
        %v5463 = vpack.c.b16 %v4391, %v4383
        %v5464 = vpack.c.b16 %v4392, %v4384
        %v5465 = vpack.c.b16 %v4401, %v4393
        %v5466 = vpack.c.b16 %v4402, %v4394
        %v5467 = vpack.c.b16 %v4403, %v4395
        %v5468 = vpack.c.b16 %v4404, %v4396
        %v5469 = vpack.c.b16 %v4405, %v4397
        %v5470 = vpack.c.b16 %v4406, %v4398
        %v5471 = vpack.c.b16 %v4407, %v4399
        %v5472 = vpack.c.b16 %v4408, %v4400
        %v5473 = vpack.c.b16 %v4417, %v4409
        %v5474 = vpack.c.b16 %v4418, %v4410
        %v5475 = vpack.c.b16 %v4419, %v4411
        %v5476 = vpack.c.b16 %v4420, %v4412
        %v5477 = vpack.c.b16 %v4421, %v4413
        %v5478 = vpack.c.b16 %v4422, %v4414
        %v5479 = vpack.c.b16 %v4423, %v4415
        %v5480 = vpack.c.b16 %v4424, %v4416
        %v5481 = vpack.c.b16 %v4433, %v4425
        %v5482 = vpack.c.b16 %v4434, %v4426
        %v5483 = vpack.c.b16 %v4435, %v4427
        %v5484 = vpack.c.b16 %v4436, %v4428
        %v5485 = vpack.c.b16 %v4437, %v4429
        %v5486 = vpack.c.b16 %v4438, %v4430
        %v5487 = vpack.c.b16 %v4439, %v4431
        %v5488 = vpack.c.b16 %v4440, %v4432
        %v5489 = vpack.c.b16 %v4449, %v4441
        %v5490 = vpack.c.b16 %v4450, %v4442
        %v5491 = vpack.c.b16 %v4451, %v4443
        %v5492 = vpack.c.b16 %v4452, %v4444
        %v5493 = vpack.c.b16 %v4453, %v4445
        %v5494 = vpack.c.b16 %v4454, %v4446
        %v5495 = vpack.c.b16 %v4455, %v4447
        %v5496 = vpack.c.b16 %v4456, %v4448
        %v5497 = vpack.c.b16 %v4465, %v4457
        %v5498 = vpack.c.b16 %v4466, %v4458
        %v5499 = vpack.c.b16 %v4467, %v4459
        %v5500 = vpack.c.b16 %v4468, %v4460
        %v5501 = vpack.c.b16 %v4469, %v4461
        %v5502 = vpack.c.b16 %v4470, %v4462
        %v5503 = vpack.c.b16 %v4471, %v4463
        %v5504 = vpack.c.b16 %v4472, %v4464
        %v5505 = vpack.c.b16 %v4481, %v4473
        %v5506 = vpack.c.b16 %v4482, %v4474
        %v5507 = vpack.c.b16 %v4483, %v4475
        %v5508 = vpack.c.b16 %v4484, %v4476
        %v5509 = vpack.c.b16 %v4485, %v4477
        %v5510 = vpack.c.b16 %v4486, %v4478
        %v5511 = vpack.c.b16 %v4487, %v4479
        %v5512 = vpack.c.b16 %v4488, %v4480
        %6537 = vmatprep.subr.bf16.mxu0 %v4490
        %6538 = vmatpush1.bf16.msra.mxu0 %v4489
        %6539 = vmatprep.subr.bf16.mxu0 %v4498
        %6540 = vmatpush1.bf16.msra.mxu0 %v4497
        %6541 = vmatprep.subr.bf16.mxu0 %v4506
        %6542 = vmatpush1.bf16.msra.mxu0 %v4505
        %6543 = vmatprep.subr.bf16.mxu0 %v4514
        %6544 = vmatpush1.bf16.msra.mxu0 %v4513
        %6545 = vmatprep.subr.bf16.mxu0 %v4522
        %6546 = vmatpush1.bf16.msra.mxu0 %v4521
        %6547 = vmatprep.subr.bf16.mxu0 %v4530
        %6548 = vmatpush1.bf16.msra.mxu0 %v4529
        %6549 = vmatprep.subr.bf16.mxu0 %v4538
        %6550 = vmatpush1.bf16.msra.mxu0 %v4537
        %6551 = vmatprep.subr.bf16.mxu0 %v4546
        %6552 = vmatpush1.bf16.msra.mxu0 %v4545
        %6553 = vmatprep.subr.bf16.mxu0 %v4554
        %6554 = vmatpush1.bf16.msra.mxu0 %v4553
        %6555 = vmatprep.subr.bf16.mxu0 %v4562
        %6556 = vmatpush1.bf16.msra.mxu0 %v4561
        %6557 = vmatprep.subr.bf16.mxu0 %v4570
        %6558 = vmatpush1.bf16.msra.mxu0 %v4569
        %6559 = vmatprep.subr.bf16.mxu0 %v4578
        %6560 = vmatpush1.bf16.msra.mxu0 %v4577
        %6561 = vmatprep.subr.bf16.mxu0 %v4586
        %6562 = vmatpush1.bf16.msra.mxu0 %v4585
        %6563 = vmatprep.subr.bf16.mxu0 %v4594
        %6564 = vmatpush1.bf16.msra.mxu0 %v4593
        %6565 = vmatprep.subr.bf16.mxu0 %v4602
        %6566 = vmatpush1.bf16.msra.mxu0 %v4601
        %6567 = vmatprep.subr.bf16.mxu0 %v4610
        %6568 = vmatpush1.bf16.msra.mxu0 %v4609
        %6569 = vmatprep.mubr.bf16.mxu0 %v1340
        %6570 = vmatmul.mubr.bf16.gmra.mrb[0].mxu0 %v1326
        %v6571 = vpop.f32.mrb[0].mxu0
        %v6572 = vadd.f32 0.0, %v6571
        %v6573 = vpop.f32.mrb[0].mxu0
        %v6574 = vadd.f32 0.0, %v6573
        %v6575 = vpop.f32.mrb[0].mxu0
        %v6576 = vpop.f32.mrb[0].mxu0
        %6577 = vdwg.mxu0
        %6578 = vmatprep.subr.bf16.mxu0 %v4618
        %6579 = vmatpush1.bf16.msra.mxu0 %v4617
        %6580 = vmatprep.subr.bf16.mxu0 %v4626
        %6581 = vmatpush1.bf16.msra.mxu0 %v4625
        %6582 = vmatprep.subr.bf16.mxu0 %v4634
        %6583 = vmatpush1.bf16.msra.mxu0 %v4633
        %6584 = vmatprep.subr.bf16.mxu0 %v4642
        %6585 = vmatpush1.bf16.msra.mxu0 %v4641
        %6586 = vmatprep.subr.bf16.mxu0 %v4650
        %6587 = vmatpush1.bf16.msra.mxu0 %v4649
        %6588 = vmatprep.subr.bf16.mxu0 %v4658
        %6589 = vmatpush1.bf16.msra.mxu0 %v4657
        %6590 = vmatprep.subr.bf16.mxu0 %v4666
        %6591 = vmatpush1.bf16.msra.mxu0 %v4665
        %6592 = vmatprep.subr.bf16.mxu0 %v4674
        %6593 = vmatpush1.bf16.msra.mxu0 %v4673
        %6594 = vmatprep.subr.bf16.mxu0 %v4682
        %6595 = vmatpush1.bf16.msra.mxu0 %v4681
        %6596 = vmatprep.subr.bf16.mxu0 %v4690
        %6597 = vmatpush1.bf16.msra.mxu0 %v4689
        %6598 = vmatprep.subr.bf16.mxu0 %v4698
        %6599 = vmatpush1.bf16.msra.mxu0 %v4697
        %6600 = vmatprep.subr.bf16.mxu0 %v4706
        %6601 = vmatpush1.bf16.msra.mxu0 %v4705
        %6602 = vmatprep.subr.bf16.mxu0 %v4714
        %6603 = vmatpush1.bf16.msra.mxu0 %v4713
        %6604 = vmatprep.subr.bf16.mxu0 %v4722
        %6605 = vmatpush1.bf16.msra.mxu0 %v4721
        %6606 = vmatprep.subr.bf16.mxu0 %v4730
        %6607 = vmatpush1.bf16.msra.mxu0 %v4729
        %6608 = vmatprep.subr.bf16.mxu0 %v4738
        %6609 = vmatpush1.bf16.msra.mxu0 %v4737
        %6610 = vmatprep.mubr.bf16.mxu0 %v1350
        %6611 = vmatmul.mubr.bf16.gmra.mrb[0].mxu0 %v1348
        %v6612 = vpop.f32.mrb[0].mxu0
        %v6613 = vadd.f32 %v6572, %v6612
        %v6614 = vpop.f32.mrb[0].mxu0
        %v6615 = vadd.f32 %v6574, %v6614
        %v6616 = vpop.f32.mrb[0].mxu0
        %v6617 = vpop.f32.mrb[0].mxu0
        %6618 = vdwg.mxu0
        %6619 = vmatprep.subr.bf16.mxu0 %v4746
        %6620 = vmatpush1.bf16.msra.mxu0 %v4745
        %6621 = vmatprep.subr.bf16.mxu0 %v4754
        %6622 = vmatpush1.bf16.msra.mxu0 %v4753
        %6623 = vmatprep.subr.bf16.mxu0 %v4762
        %6624 = vmatpush1.bf16.msra.mxu0 %v4761
        %6625 = vmatprep.subr.bf16.mxu0 %v4770
        %6626 = vmatpush1.bf16.msra.mxu0 %v4769
        %6627 = vmatprep.subr.bf16.mxu0 %v4778
        %6628 = vmatpush1.bf16.msra.mxu0 %v4777
        %6629 = vmatprep.subr.bf16.mxu0 %v4786
        %6630 = vmatpush1.bf16.msra.mxu0 %v4785
        %6631 = vmatprep.subr.bf16.mxu0 %v4794
        %6632 = vmatpush1.bf16.msra.mxu0 %v4793
        %6633 = vmatprep.subr.bf16.mxu0 %v4802
        %6634 = vmatpush1.bf16.msra.mxu0 %v4801
        %6635 = vmatprep.subr.bf16.mxu0 %v4810
        %6636 = vmatpush1.bf16.msra.mxu0 %v4809
        %6637 = vmatprep.subr.bf16.mxu0 %v4818
        %6638 = vmatpush1.bf16.msra.mxu0 %v4817
        %6639 = vmatprep.subr.bf16.mxu0 %v4826
        %6640 = vmatpush1.bf16.msra.mxu0 %v4825
        %6641 = vmatprep.subr.bf16.mxu0 %v4834
        %6642 = vmatpush1.bf16.msra.mxu0 %v4833
        %6643 = vmatprep.subr.bf16.mxu0 %v4842
        %6644 = vmatpush1.bf16.msra.mxu0 %v4841
        %6645 = vmatprep.subr.bf16.mxu0 %v4850
        %6646 = vmatpush1.bf16.msra.mxu0 %v4849
        %6647 = vmatprep.subr.bf16.mxu0 %v4858
        %6648 = vmatpush1.bf16.msra.mxu0 %v4857
        %6649 = vmatprep.subr.bf16.mxu0 %v4866
        %6650 = vmatpush1.bf16.msra.mxu0 %v4865
        %6651 = vmatprep.mubr.bf16.mxu0 %v1347
        %6652 = vmatmul.mubr.bf16.gmra.mrb[0].mxu0 %v1333
        %v6653 = vpop.f32.mrb[0].mxu0
        %v6654 = vadd.f32 %v6613, %v6653
        %v6655 = vpop.f32.mrb[0].mxu0
        %v6656 = vadd.f32 %v6615, %v6655
        %v6657 = vpop.f32.mrb[0].mxu0
        %v6658 = vpop.f32.mrb[0].mxu0
        %6659 = vdwg.mxu0
        %6660 = vmatprep.subr.bf16.mxu0 %v4874
        %6661 = vmatpush1.bf16.msra.mxu0 %v4873
        %6662 = vmatprep.subr.bf16.mxu0 %v4882
        %6663 = vmatpush1.bf16.msra.mxu0 %v4881
        %6664 = vmatprep.subr.bf16.mxu0 %v4890
        %6665 = vmatpush1.bf16.msra.mxu0 %v4889
        %6666 = vmatprep.subr.bf16.mxu0 %v4898
        %6667 = vmatpush1.bf16.msra.mxu0 %v4897
        %6668 = vmatprep.subr.bf16.mxu0 %v4906
        %6669 = vmatpush1.bf16.msra.mxu0 %v4905
        %6670 = vmatprep.subr.bf16.mxu0 %v4914
        %6671 = vmatpush1.bf16.msra.mxu0 %v4913
        %6672 = vmatprep.subr.bf16.mxu0 %v4922
        %6673 = vmatpush1.bf16.msra.mxu0 %v4921
        %6674 = vmatprep.subr.bf16.mxu0 %v4930
        %6675 = vmatpush1.bf16.msra.mxu0 %v4929
        %6676 = vmatprep.subr.bf16.mxu0 %v4938
        %6677 = vmatpush1.bf16.msra.mxu0 %v4937
        %6678 = vmatprep.subr.bf16.mxu0 %v4946
        %6679 = vmatpush1.bf16.msra.mxu0 %v4945
        %6680 = vmatprep.subr.bf16.mxu0 %v4954
        %6681 = vmatpush1.bf16.msra.mxu0 %v4953
        %6682 = vmatprep.subr.bf16.mxu0 %v4962
        %6683 = vmatpush1.bf16.msra.mxu0 %v4961
        %6684 = vmatprep.subr.bf16.mxu0 %v4970
        %6685 = vmatpush1.bf16.msra.mxu0 %v4969
        %6686 = vmatprep.subr.bf16.mxu0 %v4978
        %6687 = vmatpush1.bf16.msra.mxu0 %v4977
        %6688 = vmatprep.subr.bf16.mxu0 %v4986
        %6689 = vmatpush1.bf16.msra.mxu0 %v4985
        %6690 = vmatprep.subr.bf16.mxu0 %v4994
        %6691 = vmatpush1.bf16.msra.mxu0 %v4993
        %6692 = vmatprep.mubr.bf16.mxu0 %v1351
        %6693 = vmatmul.mubr.bf16.gmra.mrb[0].mxu0 %v1349
        %v6694 = vpop.f32.mrb[0].mxu0
        %v6695 = vadd.f32 %v6654, %v6694
        %v6696 = vpop.f32.mrb[0].mxu0
        %v6697 = vadd.f32 %v6656, %v6696
        %v6698 = vpop.f32.mrb[0].mxu0
        %v6699 = vpop.f32.mrb[0].mxu0
        %6700 = vdwg.mxu0
        %6701 = vmatprep.subr.bf16.mxu0 %v5002
        %6702 = vmatpush1.bf16.msra.mxu0 %v5001
        %6703 = vmatprep.subr.bf16.mxu0 %v5010
        %6704 = vmatpush1.bf16.msra.mxu0 %v5009
        %6705 = vmatprep.subr.bf16.mxu0 %v5018
        %6706 = vmatpush1.bf16.msra.mxu0 %v5017
        %6707 = vmatprep.subr.bf16.mxu0 %v5026
        %6708 = vmatpush1.bf16.msra.mxu0 %v5025
        %6709 = vmatprep.subr.bf16.mxu0 %v5034
        %6710 = vmatpush1.bf16.msra.mxu0 %v5033
        %6711 = vmatprep.subr.bf16.mxu0 %v5042
        %6712 = vmatpush1.bf16.msra.mxu0 %v5041
        %6713 = vmatprep.subr.bf16.mxu0 %v5050
        %6714 = vmatpush1.bf16.msra.mxu0 %v5049
        %6715 = vmatprep.subr.bf16.mxu0 %v5058
        %6716 = vmatpush1.bf16.msra.mxu0 %v5057
        %6717 = vmatprep.subr.bf16.mxu0 %v5066
        %6718 = vmatpush1.bf16.msra.mxu0 %v5065
        %6719 = vmatprep.subr.bf16.mxu0 %v5074
        %6720 = vmatpush1.bf16.msra.mxu0 %v5073
        %6721 = vmatprep.subr.bf16.mxu0 %v5082
        %6722 = vmatpush1.bf16.msra.mxu0 %v5081
        %6723 = vmatprep.subr.bf16.mxu0 %v5090
        %6724 = vmatpush1.bf16.msra.mxu0 %v5089
        %6725 = vmatprep.subr.bf16.mxu0 %v5098
        %6726 = vmatpush1.bf16.msra.mxu0 %v5097
        %6727 = vmatprep.subr.bf16.mxu0 %v5106
        %6728 = vmatpush1.bf16.msra.mxu0 %v5105
        %6729 = vmatprep.subr.bf16.mxu0 %v5114
        %6730 = vmatpush1.bf16.msra.mxu0 %v5113
        %6731 = vmatprep.subr.bf16.mxu0 %v5122
        %6732 = vmatpush1.bf16.msra.mxu0 %v5121
        %6733 = vmatprep.mubr.bf16.mxu0 %v1389
        %6734 = vmatmul.mubr.bf16.gmra.mrb[0].mxu0 %v1375
        %v6735 = vpop.f32.mrb[0].mxu0
        %v6736 = vadd.f32 %v6695, %v6735
        %v6737 = vpop.f32.mrb[0].mxu0
        %v6738 = vadd.f32 %v6697, %v6737
        %v6739 = vpop.f32.mrb[0].mxu0
        %v6740 = vpop.f32.mrb[0].mxu0
        %6741 = vdwg.mxu0
        %6742 = vmatprep.subr.bf16.mxu0 %v5130
        %6743 = vmatpush1.bf16.msra.mxu0 %v5129
        %6744 = vmatprep.subr.bf16.mxu0 %v5138
        %6745 = vmatpush1.bf16.msra.mxu0 %v5137
        %6746 = vmatprep.subr.bf16.mxu0 %v5146
        %6747 = vmatpush1.bf16.msra.mxu0 %v5145
        %6748 = vmatprep.subr.bf16.mxu0 %v5154
        %6749 = vmatpush1.bf16.msra.mxu0 %v5153
        %6750 = vmatprep.subr.bf16.mxu0 %v5162
        %6751 = vmatpush1.bf16.msra.mxu0 %v5161
        %6752 = vmatprep.subr.bf16.mxu0 %v5170
        %6753 = vmatpush1.bf16.msra.mxu0 %v5169
        %6754 = vmatprep.subr.bf16.mxu0 %v5178
        %6755 = vmatpush1.bf16.msra.mxu0 %v5177
        %6756 = vmatprep.subr.bf16.mxu0 %v5186
        %6757 = vmatpush1.bf16.msra.mxu0 %v5185
        %6758 = vmatprep.subr.bf16.mxu0 %v5194
        %6759 = vmatpush1.bf16.msra.mxu0 %v5193
        %6760 = vmatprep.subr.bf16.mxu0 %v5202
        %6761 = vmatpush1.bf16.msra.mxu0 %v5201
        %6762 = vmatprep.subr.bf16.mxu0 %v5210
        %6763 = vmatpush1.bf16.msra.mxu0 %v5209
        %6764 = vmatprep.subr.bf16.mxu0 %v5218
        %6765 = vmatpush1.bf16.msra.mxu0 %v5217
        %6766 = vmatprep.subr.bf16.mxu0 %v5226
        %6767 = vmatpush1.bf16.msra.mxu0 %v5225
        %6768 = vmatprep.subr.bf16.mxu0 %v5234
        %6769 = vmatpush1.bf16.msra.mxu0 %v5233
        %6770 = vmatprep.subr.bf16.mxu0 %v5242
        %6771 = vmatpush1.bf16.msra.mxu0 %v5241
        %6772 = vmatprep.subr.bf16.mxu0 %v5250
        %6773 = vmatpush1.bf16.msra.mxu0 %v5249
        %6774 = vmatprep.mubr.bf16.mxu0 %v1399
        %6775 = vmatmul.mubr.bf16.gmra.mrb[0].mxu0 %v1397
        %v6776 = vpop.f32.mrb[0].mxu0
        %v6777 = vadd.f32 %v6736, %v6776
        %v6778 = vpop.f32.mrb[0].mxu0
        %v6779 = vadd.f32 %v6738, %v6778
        %v6780 = vpop.f32.mrb[0].mxu0
        %v6781 = vpop.f32.mrb[0].mxu0
        %6782 = vdwg.mxu0
        %6783 = vmatprep.subr.bf16.mxu0 %v5258
        %6784 = vmatpush1.bf16.msra.mxu0 %v5257
        %6785 = vmatprep.subr.bf16.mxu0 %v5266
        %6786 = vmatpush1.bf16.msra.mxu0 %v5265
        %6787 = vmatprep.subr.bf16.mxu0 %v5274
        %6788 = vmatpush1.bf16.msra.mxu0 %v5273
        %6789 = vmatprep.subr.bf16.mxu0 %v5282
        %6790 = vmatpush1.bf16.msra.mxu0 %v5281
        %6791 = vmatprep.subr.bf16.mxu0 %v5290
        %6792 = vmatpush1.bf16.msra.mxu0 %v5289
        %6793 = vmatprep.subr.bf16.mxu0 %v5298
        %6794 = vmatpush1.bf16.msra.mxu0 %v5297
        %6795 = vmatprep.subr.bf16.mxu0 %v5306
        %6796 = vmatpush1.bf16.msra.mxu0 %v5305
        %6797 = vmatprep.subr.bf16.mxu0 %v5314
        %6798 = vmatpush1.bf16.msra.mxu0 %v5313
        %6799 = vmatprep.subr.bf16.mxu0 %v5322
        %6800 = vmatpush1.bf16.msra.mxu0 %v5321
        %6801 = vmatprep.subr.bf16.mxu0 %v5330
        %6802 = vmatpush1.bf16.msra.mxu0 %v5329
        %6803 = vmatprep.subr.bf16.mxu0 %v5338
        %6804 = vmatpush1.bf16.msra.mxu0 %v5337
        %6805 = vmatprep.subr.bf16.mxu0 %v5346
        %6806 = vmatpush1.bf16.msra.mxu0 %v5345
        %6807 = vmatprep.subr.bf16.mxu0 %v5354
        %6808 = vmatpush1.bf16.msra.mxu0 %v5353
        %6809 = vmatprep.subr.bf16.mxu0 %v5362
        %6810 = vmatpush1.bf16.msra.mxu0 %v5361
        %6811 = vmatprep.subr.bf16.mxu0 %v5370
        %6812 = vmatpush1.bf16.msra.mxu0 %v5369
        %6813 = vmatprep.subr.bf16.mxu0 %v5378
        %6814 = vmatpush1.bf16.msra.mxu0 %v5377
        %6815 = vmatprep.mubr.bf16.mxu0 %v1396
        %6816 = vmatmul.mubr.bf16.gmra.mrb[0].mxu0 %v1382
        %v6817 = vpop.f32.mrb[0].mxu0
        %v6818 = vadd.f32 %v6777, %v6817
        %v6819 = vpop.f32.mrb[0].mxu0
        %v6820 = vadd.f32 %v6779, %v6819
        %v6821 = vpop.f32.mrb[0].mxu0
        %v6822 = vpop.f32.mrb[0].mxu0
        %6823 = vdwg.mxu0
        %6824 = vmatprep.subr.bf16.mxu0 %v5386
        %6825 = vmatpush1.bf16.msra.mxu0 %v5385
        %6826 = vmatprep.subr.bf16.mxu0 %v5394
        %6827 = vmatpush1.bf16.msra.mxu0 %v5393
        %6828 = vmatprep.subr.bf16.mxu0 %v5402
        %6829 = vmatpush1.bf16.msra.mxu0 %v5401
        %6830 = vmatprep.subr.bf16.mxu0 %v5410
        %6831 = vmatpush1.bf16.msra.mxu0 %v5409
        %6832 = vmatprep.subr.bf16.mxu0 %v5418
        %6833 = vmatpush1.bf16.msra.mxu0 %v5417
        %6834 = vmatprep.subr.bf16.mxu0 %v5426
        %6835 = vmatpush1.bf16.msra.mxu0 %v5425
        %6836 = vmatprep.subr.bf16.mxu0 %v5434
        %6837 = vmatpush1.bf16.msra.mxu0 %v5433
        %6838 = vmatprep.subr.bf16.mxu0 %v5442
        %6839 = vmatpush1.bf16.msra.mxu0 %v5441
        %6840 = vmatprep.subr.bf16.mxu0 %v5450
        %6841 = vmatpush1.bf16.msra.mxu0 %v5449
        %6842 = vmatprep.subr.bf16.mxu0 %v5458
        %6843 = vmatpush1.bf16.msra.mxu0 %v5457
        %6844 = vmatprep.subr.bf16.mxu0 %v5466
        %6845 = vmatpush1.bf16.msra.mxu0 %v5465
        %6846 = vmatprep.subr.bf16.mxu0 %v5474
        %6847 = vmatpush1.bf16.msra.mxu0 %v5473
        %6848 = vmatprep.subr.bf16.mxu0 %v5482
        %6849 = vmatpush1.bf16.msra.mxu0 %v5481
        %6850 = vmatprep.subr.bf16.mxu0 %v5490
        %6851 = vmatpush1.bf16.msra.mxu0 %v5489
        %6852 = vmatprep.subr.bf16.mxu0 %v5498
        %6853 = vmatpush1.bf16.msra.mxu0 %v5497
        %6854 = vmatprep.subr.bf16.mxu0 %v5506
        %6855 = vmatpush1.bf16.msra.mxu0 %v5505
        %6856 = vmatprep.mubr.bf16.mxu0 %v1400
        %6857 = vmatmul.mubr.bf16.gmra.mrb[0].mxu0 %v1398
        %v6858 = vpop.f32.mrb[0].mxu0
        %v6859 = vadd.f32 %v6818, %v6858
        %v6860 = vpop.f32.mrb[0].mxu0
        %v6861 = vadd.f32 %v6820, %v6860
        %v6862 = vpop.f32.mrb[0].mxu0
        %v6863 = vpop.f32.mrb[0].mxu0
        %6864 = vdwg.mxu0
        %6865 = vmatprep.subr.bf16.mxu0 %v4492
        %6866 = vmatpush1.bf16.msra.mxu0 %v4491
        %6867 = vmatprep.subr.bf16.mxu0 %v4500
        %6868 = vmatpush1.bf16.msra.mxu0 %v4499
        %6869 = vmatprep.subr.bf16.mxu0 %v4508
        %6870 = vmatpush1.bf16.msra.mxu0 %v4507
        %6871 = vmatprep.subr.bf16.mxu0 %v4516
        %6872 = vmatpush1.bf16.msra.mxu0 %v4515
        %6873 = vmatprep.subr.bf16.mxu0 %v4524
        %6874 = vmatpush1.bf16.msra.mxu0 %v4523
        %6875 = vmatprep.subr.bf16.mxu0 %v4532
        %6876 = vmatpush1.bf16.msra.mxu0 %v4531
        %6877 = vmatprep.subr.bf16.mxu0 %v4540
        %6878 = vmatpush1.bf16.msra.mxu0 %v4539
        %6879 = vmatprep.subr.bf16.mxu0 %v4548
        %6880 = vmatpush1.bf16.msra.mxu0 %v4547
        %6881 = vmatprep.subr.bf16.mxu0 %v4556
        %6882 = vmatpush1.bf16.msra.mxu0 %v4555
        %6883 = vmatprep.subr.bf16.mxu0 %v4564
        %6884 = vmatpush1.bf16.msra.mxu0 %v4563
        %6885 = vmatprep.subr.bf16.mxu0 %v4572
        %6886 = vmatpush1.bf16.msra.mxu0 %v4571
        %6887 = vmatprep.subr.bf16.mxu0 %v4580
        %6888 = vmatpush1.bf16.msra.mxu0 %v4579
        %6889 = vmatprep.subr.bf16.mxu0 %v4588
        %6890 = vmatpush1.bf16.msra.mxu0 %v4587
        %6891 = vmatprep.subr.bf16.mxu0 %v4596
        %6892 = vmatpush1.bf16.msra.mxu0 %v4595
        %6893 = vmatprep.subr.bf16.mxu0 %v4604
        %6894 = vmatpush1.bf16.msra.mxu0 %v4603
        %6895 = vmatprep.subr.bf16.mxu0 %v4612
        %6896 = vmatpush1.bf16.msra.mxu0 %v4611
        %6897 = vmatprep.mubr.bf16.mxu0 %v1340
        %6898 = vmatmul.mubr.bf16.gmra.mrb[0].mxu0 %v1326
        %v6899 = vpop.f32.mrb[0].mxu0
        %v6900 = vadd.f32 0.0, %v6899
        %v6901 = vpop.f32.mrb[0].mxu0
        %v6902 = vadd.f32 0.0, %v6901
        %v6903 = vpop.f32.mrb[0].mxu0
        %v6904 = vpop.f32.mrb[0].mxu0
        %6905 = vdwg.mxu0
        %6906 = vmatprep.subr.bf16.mxu0 %v4620
        %6907 = vmatpush1.bf16.msra.mxu0 %v4619
        %6908 = vmatprep.subr.bf16.mxu0 %v4628
        %6909 = vmatpush1.bf16.msra.mxu0 %v4627
        %6910 = vmatprep.subr.bf16.mxu0 %v4636
        %6911 = vmatpush1.bf16.msra.mxu0 %v4635
        %6912 = vmatprep.subr.bf16.mxu0 %v4644
        %6913 = vmatpush1.bf16.msra.mxu0 %v4643
        %6914 = vmatprep.subr.bf16.mxu0 %v4652
        %6915 = vmatpush1.bf16.msra.mxu0 %v4651
        %6916 = vmatprep.subr.bf16.mxu0 %v4660
        %6917 = vmatpush1.bf16.msra.mxu0 %v4659
        %6918 = vmatprep.subr.bf16.mxu0 %v4668
        %6919 = vmatpush1.bf16.msra.mxu0 %v4667
        %6920 = vmatprep.subr.bf16.mxu0 %v4676
        %6921 = vmatpush1.bf16.msra.mxu0 %v4675
        %6922 = vmatprep.subr.bf16.mxu0 %v4684
        %6923 = vmatpush1.bf16.msra.mxu0 %v4683
        %6924 = vmatprep.subr.bf16.mxu0 %v4692
        %6925 = vmatpush1.bf16.msra.mxu0 %v4691
        %6926 = vmatprep.subr.bf16.mxu0 %v4700
        %6927 = vmatpush1.bf16.msra.mxu0 %v4699
        %6928 = vmatprep.subr.bf16.mxu0 %v4708
        %6929 = vmatpush1.bf16.msra.mxu0 %v4707
        %6930 = vmatprep.subr.bf16.mxu0 %v4716
        %6931 = vmatpush1.bf16.msra.mxu0 %v4715
        %6932 = vmatprep.subr.bf16.mxu0 %v4724
        %6933 = vmatpush1.bf16.msra.mxu0 %v4723
        %6934 = vmatprep.subr.bf16.mxu0 %v4732
        %6935 = vmatpush1.bf16.msra.mxu0 %v4731
        %6936 = vmatprep.subr.bf16.mxu0 %v4740
        %6937 = vmatpush1.bf16.msra.mxu0 %v4739
        %6938 = vmatprep.mubr.bf16.mxu0 %v1350
        %6939 = vmatmul.mubr.bf16.gmra.mrb[0].mxu0 %v1348
        %v6940 = vpop.f32.mrb[0].mxu0
        %v6941 = vadd.f32 %v6900, %v6940
        %v6942 = vpop.f32.mrb[0].mxu0
        %v6943 = vadd.f32 %v6902, %v6942
        %v6944 = vpop.f32.mrb[0].mxu0
        %v6945 = vpop.f32.mrb[0].mxu0
        %6946 = vdwg.mxu0
        %6947 = vmatprep.subr.bf16.mxu0 %v4748
        %6948 = vmatpush1.bf16.msra.mxu0 %v4747
        %6949 = vmatprep.subr.bf16.mxu0 %v4756
        %6950 = vmatpush1.bf16.msra.mxu0 %v4755
        %6951 = vmatprep.subr.bf16.mxu0 %v4764
        %6952 = vmatpush1.bf16.msra.mxu0 %v4763
        %6953 = vmatprep.subr.bf16.mxu0 %v4772
        %6954 = vmatpush1.bf16.msra.mxu0 %v4771
        %6955 = vmatprep.subr.bf16.mxu0 %v4780
        %6956 = vmatpush1.bf16.msra.mxu0 %v4779
        %6957 = vmatprep.subr.bf16.mxu0 %v4788
        %6958 = vmatpush1.bf16.msra.mxu0 %v4787
        %6959 = vmatprep.subr.bf16.mxu0 %v4796
        %6960 = vmatpush1.bf16.msra.mxu0 %v4795
        %6961 = vmatprep.subr.bf16.mxu0 %v4804
        %6962 = vmatpush1.bf16.msra.mxu0 %v4803
        %6963 = vmatprep.subr.bf16.mxu0 %v4812
        %6964 = vmatpush1.bf16.msra.mxu0 %v4811
        %6965 = vmatprep.subr.bf16.mxu0 %v4820
        %6966 = vmatpush1.bf16.msra.mxu0 %v4819
        %6967 = vmatprep.subr.bf16.mxu0 %v4828
        %6968 = vmatpush1.bf16.msra.mxu0 %v4827
        %6969 = vmatprep.subr.bf16.mxu0 %v4836
        %6970 = vmatpush1.bf16.msra.mxu0 %v4835
        %6971 = vmatprep.subr.bf16.mxu0 %v4844
        %6972 = vmatpush1.bf16.msra.mxu0 %v4843
        %6973 = vmatprep.subr.bf16.mxu0 %v4852
        %6974 = vmatpush1.bf16.msra.mxu0 %v4851
        %6975 = vmatprep.subr.bf16.mxu0 %v4860
        %6976 = vmatpush1.bf16.msra.mxu0 %v4859
        %6977 = vmatprep.subr.bf16.mxu0 %v4868
        %6978 = vmatpush1.bf16.msra.mxu0 %v4867
        %6979 = vmatprep.mubr.bf16.mxu0 %v1347
        %6980 = vmatmul.mubr.bf16.gmra.mrb[0].mxu0 %v1333
        %v6981 = vpop.f32.mrb[0].mxu0
        %v6982 = vadd.f32 %v6941, %v6981
        %v6983 = vpop.f32.mrb[0].mxu0
        %v6984 = vadd.f32 %v6943, %v6983
        %v6985 = vpop.f32.mrb[0].mxu0
        %v6986 = vpop.f32.mrb[0].mxu0
        %6987 = vdwg.mxu0
        %6988 = vmatprep.subr.bf16.mxu0 %v4876
        %6989 = vmatpush1.bf16.msra.mxu0 %v4875
        %6990 = vmatprep.subr.bf16.mxu0 %v4884
        %6991 = vmatpush1.bf16.msra.mxu0 %v4883
        %6992 = vmatprep.subr.bf16.mxu0 %v4892
        %6993 = vmatpush1.bf16.msra.mxu0 %v4891
        %6994 = vmatprep.subr.bf16.mxu0 %v4900
        %6995 = vmatpush1.bf16.msra.mxu0 %v4899
        %6996 = vmatprep.subr.bf16.mxu0 %v4908
        %6997 = vmatpush1.bf16.msra.mxu0 %v4907
        %6998 = vmatprep.subr.bf16.mxu0 %v4916
        %6999 = vmatpush1.bf16.msra.mxu0 %v4915
        %7000 = vmatprep.subr.bf16.mxu0 %v4924
        %7001 = vmatpush1.bf16.msra.mxu0 %v4923
        %7002 = vmatprep.subr.bf16.mxu0 %v4932
        %7003 = vmatpush1.bf16.msra.mxu0 %v4931
        %7004 = vmatprep.subr.bf16.mxu0 %v4940
        %7005 = vmatpush1.bf16.msra.mxu0 %v4939
        %7006 = vmatprep.subr.bf16.mxu0 %v4948
        %7007 = vmatpush1.bf16.msra.mxu0 %v4947
        %7008 = vmatprep.subr.bf16.mxu0 %v4956
        %7009 = vmatpush1.bf16.msra.mxu0 %v4955
        %7010 = vmatprep.subr.bf16.mxu0 %v4964
        %7011 = vmatpush1.bf16.msra.mxu0 %v4963
        %7012 = vmatprep.subr.bf16.mxu0 %v4972
        %7013 = vmatpush1.bf16.msra.mxu0 %v4971
        %7014 = vmatprep.subr.bf16.mxu0 %v4980
        %7015 = vmatpush1.bf16.msra.mxu0 %v4979
        %7016 = vmatprep.subr.bf16.mxu0 %v4988
        %7017 = vmatpush1.bf16.msra.mxu0 %v4987
        %7018 = vmatprep.subr.bf16.mxu0 %v4996
        %7019 = vmatpush1.bf16.msra.mxu0 %v4995
        %7020 = vmatprep.mubr.bf16.mxu0 %v1351
        %7021 = vmatmul.mubr.bf16.gmra.mrb[0].mxu0 %v1349
        %v7022 = vpop.f32.mrb[0].mxu0
        %v7023 = vadd.f32 %v6982, %v7022
        %v7024 = vpop.f32.mrb[0].mxu0
        %v7025 = vadd.f32 %v6984, %v7024
        %v7026 = vpop.f32.mrb[0].mxu0
        %v7027 = vpop.f32.mrb[0].mxu0
        %7028 = vdwg.mxu0
        %7029 = vmatprep.subr.bf16.mxu0 %v5004
        %7030 = vmatpush1.bf16.msra.mxu0 %v5003
        %7031 = vmatprep.subr.bf16.mxu0 %v5012
        %7032 = vmatpush1.bf16.msra.mxu0 %v5011
        %7033 = vmatprep.subr.bf16.mxu0 %v5020
        %7034 = vmatpush1.bf16.msra.mxu0 %v5019
        %7035 = vmatprep.subr.bf16.mxu0 %v5028
        %7036 = vmatpush1.bf16.msra.mxu0 %v5027
        %7037 = vmatprep.subr.bf16.mxu0 %v5036
        %7038 = vmatpush1.bf16.msra.mxu0 %v5035
        %7039 = vmatprep.subr.bf16.mxu0 %v5044
        %7040 = vmatpush1.bf16.msra.mxu0 %v5043
        %7041 = vmatprep.subr.bf16.mxu0 %v5052
        %7042 = vmatpush1.bf16.msra.mxu0 %v5051
        %7043 = vmatprep.subr.bf16.mxu0 %v5060
        %7044 = vmatpush1.bf16.msra.mxu0 %v5059
        %7045 = vmatprep.subr.bf16.mxu0 %v5068
        %7046 = vmatpush1.bf16.msra.mxu0 %v5067
        %7047 = vmatprep.subr.bf16.mxu0 %v5076
        %7048 = vmatpush1.bf16.msra.mxu0 %v5075
        %7049 = vmatprep.subr.bf16.mxu0 %v5084
        %7050 = vmatpush1.bf16.msra.mxu0 %v5083
        %7051 = vmatprep.subr.bf16.mxu0 %v5092
        %7052 = vmatpush1.bf16.msra.mxu0 %v5091
        %7053 = vmatprep.subr.bf16.mxu0 %v5100
        %7054 = vmatpush1.bf16.msra.mxu0 %v5099
        %7055 = vmatprep.subr.bf16.mxu0 %v5108
        %7056 = vmatpush1.bf16.msra.mxu0 %v5107
        %7057 = vmatprep.subr.bf16.mxu0 %v5116
        %7058 = vmatpush1.bf16.msra.mxu0 %v5115
        %7059 = vmatprep.subr.bf16.mxu0 %v5124
        %7060 = vmatpush1.bf16.msra.mxu0 %v5123
        %7061 = vmatprep.mubr.bf16.mxu0 %v1389
        %7062 = vmatmul.mubr.bf16.gmra.mrb[0].mxu0 %v1375
        %v7063 = vpop.f32.mrb[0].mxu0
        %v7064 = vadd.f32 %v7023, %v7063
        %v7065 = vpop.f32.mrb[0].mxu0
        %v7066 = vadd.f32 %v7025, %v7065
        %v7067 = vpop.f32.mrb[0].mxu0
        %v7068 = vpop.f32.mrb[0].mxu0
        %7069 = vdwg.mxu0
        %7070 = vmatprep.subr.bf16.mxu0 %v5132
        %7071 = vmatpush1.bf16.msra.mxu0 %v5131
        %7072 = vmatprep.subr.bf16.mxu0 %v5140
        %7073 = vmatpush1.bf16.msra.mxu0 %v5139
        %7074 = vmatprep.subr.bf16.mxu0 %v5148
        %7075 = vmatpush1.bf16.msra.mxu0 %v5147
        %7076 = vmatprep.subr.bf16.mxu0 %v5156
        %7077 = vmatpush1.bf16.msra.mxu0 %v5155
        %7078 = vmatprep.subr.bf16.mxu0 %v5164
        %7079 = vmatpush1.bf16.msra.mxu0 %v5163
        %7080 = vmatprep.subr.bf16.mxu0 %v5172
        %7081 = vmatpush1.bf16.msra.mxu0 %v5171
        %7082 = vmatprep.subr.bf16.mxu0 %v5180
        %7083 = vmatpush1.bf16.msra.mxu0 %v5179
        %7084 = vmatprep.subr.bf16.mxu0 %v5188
        %7085 = vmatpush1.bf16.msra.mxu0 %v5187
        %7086 = vmatprep.subr.bf16.mxu0 %v5196
        %7087 = vmatpush1.bf16.msra.mxu0 %v5195
        %7088 = vmatprep.subr.bf16.mxu0 %v5204
        %7089 = vmatpush1.bf16.msra.mxu0 %v5203
        %7090 = vmatprep.subr.bf16.mxu0 %v5212
        %7091 = vmatpush1.bf16.msra.mxu0 %v5211
        %7092 = vmatprep.subr.bf16.mxu0 %v5220
        %7093 = vmatpush1.bf16.msra.mxu0 %v5219
        %7094 = vmatprep.subr.bf16.mxu0 %v5228
        %7095 = vmatpush1.bf16.msra.mxu0 %v5227
        %7096 = vmatprep.subr.bf16.mxu0 %v5236
        %7097 = vmatpush1.bf16.msra.mxu0 %v5235
        %7098 = vmatprep.subr.bf16.mxu0 %v5244
        %7099 = vmatpush1.bf16.msra.mxu0 %v5243
        %7100 = vmatprep.subr.bf16.mxu0 %v5252
        %7101 = vmatpush1.bf16.msra.mxu0 %v5251
        %7102 = vmatprep.mubr.bf16.mxu0 %v1399
        %7103 = vmatmul.mubr.bf16.gmra.mrb[0].mxu0 %v1397
        %v7104 = vpop.f32.mrb[0].mxu0
        %v7105 = vadd.f32 %v7064, %v7104
        %v7106 = vpop.f32.mrb[0].mxu0
        %v7107 = vadd.f32 %v7066, %v7106
        %v7108 = vpop.f32.mrb[0].mxu0
        %v7109 = vpop.f32.mrb[0].mxu0
        %7110 = vdwg.mxu0
        %7111 = vmatprep.subr.bf16.mxu0 %v5260
        %7112 = vmatpush1.bf16.msra.mxu0 %v5259
        %7113 = vmatprep.subr.bf16.mxu0 %v5268
        %7114 = vmatpush1.bf16.msra.mxu0 %v5267
        %7115 = vmatprep.subr.bf16.mxu0 %v5276
        %7116 = vmatpush1.bf16.msra.mxu0 %v5275
        %7117 = vmatprep.subr.bf16.mxu0 %v5284
        %7118 = vmatpush1.bf16.msra.mxu0 %v5283
        %7119 = vmatprep.subr.bf16.mxu0 %v5292
        %7120 = vmatpush1.bf16.msra.mxu0 %v5291
        %7121 = vmatprep.subr.bf16.mxu0 %v5300
        %7122 = vmatpush1.bf16.msra.mxu0 %v5299
        %7123 = vmatprep.subr.bf16.mxu0 %v5308
        %7124 = vmatpush1.bf16.msra.mxu0 %v5307
        %7125 = vmatprep.subr.bf16.mxu0 %v5316
        %7126 = vmatpush1.bf16.msra.mxu0 %v5315
        %7127 = vmatprep.subr.bf16.mxu0 %v5324
        %7128 = vmatpush1.bf16.msra.mxu0 %v5323
        %7129 = vmatprep.subr.bf16.mxu0 %v5332
        %7130 = vmatpush1.bf16.msra.mxu0 %v5331
        %7131 = vmatprep.subr.bf16.mxu0 %v5340
        %7132 = vmatpush1.bf16.msra.mxu0 %v5339
        %7133 = vmatprep.subr.bf16.mxu0 %v5348
        %7134 = vmatpush1.bf16.msra.mxu0 %v5347
        %7135 = vmatprep.subr.bf16.mxu0 %v5356
        %7136 = vmatpush1.bf16.msra.mxu0 %v5355
        %7137 = vmatprep.subr.bf16.mxu0 %v5364
        %7138 = vmatpush1.bf16.msra.mxu0 %v5363
        %7139 = vmatprep.subr.bf16.mxu0 %v5372
        %7140 = vmatpush1.bf16.msra.mxu0 %v5371
        %7141 = vmatprep.subr.bf16.mxu0 %v5380
        %7142 = vmatpush1.bf16.msra.mxu0 %v5379
        %7143 = vmatprep.mubr.bf16.mxu0 %v1396
        %7144 = vmatmul.mubr.bf16.gmra.mrb[0].mxu0 %v1382
        %v7145 = vpop.f32.mrb[0].mxu0
        %v7146 = vadd.f32 %v7105, %v7145
        %v7147 = vpop.f32.mrb[0].mxu0
        %v7148 = vadd.f32 %v7107, %v7147
        %v7149 = vpop.f32.mrb[0].mxu0
        %v7150 = vpop.f32.mrb[0].mxu0
        %7151 = vdwg.mxu0
        %7152 = vmatprep.subr.bf16.mxu0 %v5388
        %7153 = vmatpush1.bf16.msra.mxu0 %v5387
        %7154 = vmatprep.subr.bf16.mxu0 %v5396
        %7155 = vmatpush1.bf16.msra.mxu0 %v5395
        %7156 = vmatprep.subr.bf16.mxu0 %v5404
        %7157 = vmatpush1.bf16.msra.mxu0 %v5403
        %7158 = vmatprep.subr.bf16.mxu0 %v5412
        %7159 = vmatpush1.bf16.msra.mxu0 %v5411
        %7160 = vmatprep.subr.bf16.mxu0 %v5420
        %7161 = vmatpush1.bf16.msra.mxu0 %v5419
        %7162 = vmatprep.subr.bf16.mxu0 %v5428
        %7163 = vmatpush1.bf16.msra.mxu0 %v5427
        %7164 = vmatprep.subr.bf16.mxu0 %v5436
        %7165 = vmatpush1.bf16.msra.mxu0 %v5435
        %7166 = vmatprep.subr.bf16.mxu0 %v5444
        %7167 = vmatpush1.bf16.msra.mxu0 %v5443
        %7168 = vmatprep.subr.bf16.mxu0 %v5452
        %7169 = vmatpush1.bf16.msra.mxu0 %v5451
        %7170 = vmatprep.subr.bf16.mxu0 %v5460
        %7171 = vmatpush1.bf16.msra.mxu0 %v5459
        %7172 = vmatprep.subr.bf16.mxu0 %v5468
        %7173 = vmatpush1.bf16.msra.mxu0 %v5467
        %7174 = vmatprep.subr.bf16.mxu0 %v5476
        %7175 = vmatpush1.bf16.msra.mxu0 %v5475
        %7176 = vmatprep.subr.bf16.mxu0 %v5484
        %7177 = vmatpush1.bf16.msra.mxu0 %v5483
        %7178 = vmatprep.subr.bf16.mxu0 %v5492
        %7179 = vmatpush1.bf16.msra.mxu0 %v5491
        %7180 = vmatprep.subr.bf16.mxu0 %v5500
        %7181 = vmatpush1.bf16.msra.mxu0 %v5499
        %7182 = vmatprep.subr.bf16.mxu0 %v5508
        %7183 = vmatpush1.bf16.msra.mxu0 %v5507
        %7184 = vmatprep.mubr.bf16.mxu0 %v1400
        %7185 = vmatmul.mubr.bf16.gmra.mrb[0].mxu0 %v1398
        %v7186 = vpop.f32.mrb[0].mxu0
        %v7187 = vadd.f32 %v7146, %v7186
        %v7188 = vpop.f32.mrb[0].mxu0
        %v7189 = vadd.f32 %v7148, %v7188
        %v7190 = vpop.f32.mrb[0].mxu0
        %v7191 = vpop.f32.mrb[0].mxu0
        %7192 = vdwg.mxu0
        %7193 = vmatprep.subr.bf16.mxu0 %v4494
        %7194 = vmatpush1.bf16.msra.mxu0 %v4493
        %7195 = vmatprep.subr.bf16.mxu0 %v4502
        %7196 = vmatpush1.bf16.msra.mxu0 %v4501
        %7197 = vmatprep.subr.bf16.mxu0 %v4510
        %7198 = vmatpush1.bf16.msra.mxu0 %v4509
        %7199 = vmatprep.subr.bf16.mxu0 %v4518
        %7200 = vmatpush1.bf16.msra.mxu0 %v4517
        %7201 = vmatprep.subr.bf16.mxu0 %v4526
        %7202 = vmatpush1.bf16.msra.mxu0 %v4525
        %7203 = vmatprep.subr.bf16.mxu0 %v4534
        %7204 = vmatpush1.bf16.msra.mxu0 %v4533
        %7205 = vmatprep.subr.bf16.mxu0 %v4542
        %7206 = vmatpush1.bf16.msra.mxu0 %v4541
        %7207 = vmatprep.subr.bf16.mxu0 %v4550
        %7208 = vmatpush1.bf16.msra.mxu0 %v4549
        %7209 = vmatprep.subr.bf16.mxu0 %v4558
        %7210 = vmatpush1.bf16.msra.mxu0 %v4557
        %7211 = vmatprep.subr.bf16.mxu0 %v4566
        %7212 = vmatpush1.bf16.msra.mxu0 %v4565
        %7213 = vmatprep.subr.bf16.mxu0 %v4574
        %7214 = vmatpush1.bf16.msra.mxu0 %v4573
        %7215 = vmatprep.subr.bf16.mxu0 %v4582
        %7216 = vmatpush1.bf16.msra.mxu0 %v4581
        %7217 = vmatprep.subr.bf16.mxu0 %v4590
        %7218 = vmatpush1.bf16.msra.mxu0 %v4589
        %7219 = vmatprep.subr.bf16.mxu0 %v4598
        %7220 = vmatpush1.bf16.msra.mxu0 %v4597
        %7221 = vmatprep.subr.bf16.mxu0 %v4606
        %7222 = vmatpush1.bf16.msra.mxu0 %v4605
        %7223 = vmatprep.subr.bf16.mxu0 %v4614
        %7224 = vmatpush1.bf16.msra.mxu0 %v4613
        %7225 = vmatprep.mubr.bf16.mxu0 %v1340
        %7226 = vmatmul.mubr.bf16.gmra.mrb[0].mxu0 %v1326
        %v7227 = vpop.f32.mrb[0].mxu0
        %v7228 = vadd.f32 0.0, %v7227
        %v7229 = vpop.f32.mrb[0].mxu0
        %v7230 = vadd.f32 0.0, %v7229
        %v7231 = vpop.f32.mrb[0].mxu0
        %v7232 = vpop.f32.mrb[0].mxu0
        %7233 = vdwg.mxu0
        %7234 = vmatprep.subr.bf16.mxu0 %v4622
        %7235 = vmatpush1.bf16.msra.mxu0 %v4621
        %7236 = vmatprep.subr.bf16.mxu0 %v4630
        %7237 = vmatpush1.bf16.msra.mxu0 %v4629
        %7238 = vmatprep.subr.bf16.mxu0 %v4638
        %7239 = vmatpush1.bf16.msra.mxu0 %v4637
        %7240 = vmatprep.subr.bf16.mxu0 %v4646
        %7241 = vmatpush1.bf16.msra.mxu0 %v4645
        %7242 = vmatprep.subr.bf16.mxu0 %v4654
        %7243 = vmatpush1.bf16.msra.mxu0 %v4653
        %7244 = vmatprep.subr.bf16.mxu0 %v4662
        %7245 = vmatpush1.bf16.msra.mxu0 %v4661
        %7246 = vmatprep.subr.bf16.mxu0 %v4670
        %7247 = vmatpush1.bf16.msra.mxu0 %v4669
        %7248 = vmatprep.subr.bf16.mxu0 %v4678
        %7249 = vmatpush1.bf16.msra.mxu0 %v4677
        %7250 = vmatprep.subr.bf16.mxu0 %v4686
        %7251 = vmatpush1.bf16.msra.mxu0 %v4685
        %7252 = vmatprep.subr.bf16.mxu0 %v4694
        %7253 = vmatpush1.bf16.msra.mxu0 %v4693
        %7254 = vmatprep.subr.bf16.mxu0 %v4702
        %7255 = vmatpush1.bf16.msra.mxu0 %v4701
        %7256 = vmatprep.subr.bf16.mxu0 %v4710
        %7257 = vmatpush1.bf16.msra.mxu0 %v4709
        %7258 = vmatprep.subr.bf16.mxu0 %v4718
        %7259 = vmatpush1.bf16.msra.mxu0 %v4717
        %7260 = vmatprep.subr.bf16.mxu0 %v4726
        %7261 = vmatpush1.bf16.msra.mxu0 %v4725
        %7262 = vmatprep.subr.bf16.mxu0 %v4734
        %7263 = vmatpush1.bf16.msra.mxu0 %v4733
        %7264 = vmatprep.subr.bf16.mxu0 %v4742
        %7265 = vmatpush1.bf16.msra.mxu0 %v4741
        %7266 = vmatprep.mubr.bf16.mxu0 %v1350
        %7267 = vmatmul.mubr.bf16.gmra.mrb[0].mxu0 %v1348
        %v7268 = vpop.f32.mrb[0].mxu0
        %v7269 = vadd.f32 %v7228, %v7268
        %v7270 = vpop.f32.mrb[0].mxu0
        %v7271 = vadd.f32 %v7230, %v7270
        %v7272 = vpop.f32.mrb[0].mxu0
        %v7273 = vpop.f32.mrb[0].mxu0
        %7274 = vdwg.mxu0
        %7275 = vmatprep.subr.bf16.mxu0 %v4750
        %7276 = vmatpush1.bf16.msra.mxu0 %v4749
        %7277 = vmatprep.subr.bf16.mxu0 %v4758
        %7278 = vmatpush1.bf16.msra.mxu0 %v4757
        %7279 = vmatprep.subr.bf16.mxu0 %v4766
        %7280 = vmatpush1.bf16.msra.mxu0 %v4765
        %7281 = vmatprep.subr.bf16.mxu0 %v4774
        %7282 = vmatpush1.bf16.msra.mxu0 %v4773
        %7283 = vmatprep.subr.bf16.mxu0 %v4782
        %7284 = vmatpush1.bf16.msra.mxu0 %v4781
        %7285 = vmatprep.subr.bf16.mxu0 %v4790
        %7286 = vmatpush1.bf16.msra.mxu0 %v4789
        %7287 = vmatprep.subr.bf16.mxu0 %v4798
        %7288 = vmatpush1.bf16.msra.mxu0 %v4797
        %7289 = vmatprep.subr.bf16.mxu0 %v4806
        %7290 = vmatpush1.bf16.msra.mxu0 %v4805
        %7291 = vmatprep.subr.bf16.mxu0 %v4814
        %7292 = vmatpush1.bf16.msra.mxu0 %v4813
        %7293 = vmatprep.subr.bf16.mxu0 %v4822
        %7294 = vmatpush1.bf16.msra.mxu0 %v4821
        %7295 = vmatprep.subr.bf16.mxu0 %v4830
        %7296 = vmatpush1.bf16.msra.mxu0 %v4829
        %7297 = vmatprep.subr.bf16.mxu0 %v4838
        %7298 = vmatpush1.bf16.msra.mxu0 %v4837
        %7299 = vmatprep.subr.bf16.mxu0 %v4846
        %7300 = vmatpush1.bf16.msra.mxu0 %v4845
        %7301 = vmatprep.subr.bf16.mxu0 %v4854
        %7302 = vmatpush1.bf16.msra.mxu0 %v4853
        %7303 = vmatprep.subr.bf16.mxu0 %v4862
        %7304 = vmatpush1.bf16.msra.mxu0 %v4861
        %7305 = vmatprep.subr.bf16.mxu0 %v4870
        %7306 = vmatpush1.bf16.msra.mxu0 %v4869
        %7307 = vmatprep.mubr.bf16.mxu0 %v1347
        %7308 = vmatmul.mubr.bf16.gmra.mrb[0].mxu0 %v1333
        %v7309 = vpop.f32.mrb[0].mxu0
        %v7310 = vadd.f32 %v7269, %v7309
        %v7311 = vpop.f32.mrb[0].mxu0
        %v7312 = vadd.f32 %v7271, %v7311
        %v7313 = vpop.f32.mrb[0].mxu0
        %v7314 = vpop.f32.mrb[0].mxu0
        %7315 = vdwg.mxu0
        %7316 = vmatprep.subr.bf16.mxu0 %v4878
        %7317 = vmatpush1.bf16.msra.mxu0 %v4877
        %7318 = vmatprep.subr.bf16.mxu0 %v4886
        %7319 = vmatpush1.bf16.msra.mxu0 %v4885
        %7320 = vmatprep.subr.bf16.mxu0 %v4894
        %7321 = vmatpush1.bf16.msra.mxu0 %v4893
        %7322 = vmatprep.subr.bf16.mxu0 %v4902
        %7323 = vmatpush1.bf16.msra.mxu0 %v4901
        %7324 = vmatprep.subr.bf16.mxu0 %v4910
        %7325 = vmatpush1.bf16.msra.mxu0 %v4909
        %7326 = vmatprep.subr.bf16.mxu0 %v4918
        %7327 = vmatpush1.bf16.msra.mxu0 %v4917
        %7328 = vmatprep.subr.bf16.mxu0 %v4926
        %7329 = vmatpush1.bf16.msra.mxu0 %v4925
        %7330 = vmatprep.subr.bf16.mxu0 %v4934
        %7331 = vmatpush1.bf16.msra.mxu0 %v4933
        %7332 = vmatprep.subr.bf16.mxu0 %v4942
        %7333 = vmatpush1.bf16.msra.mxu0 %v4941
        %7334 = vmatprep.subr.bf16.mxu0 %v4950
        %7335 = vmatpush1.bf16.msra.mxu0 %v4949
        %7336 = vmatprep.subr.bf16.mxu0 %v4958
        %7337 = vmatpush1.bf16.msra.mxu0 %v4957
        %7338 = vmatprep.subr.bf16.mxu0 %v4966
        %7339 = vmatpush1.bf16.msra.mxu0 %v4965
        %7340 = vmatprep.subr.bf16.mxu0 %v4974
        %7341 = vmatpush1.bf16.msra.mxu0 %v4973
        %7342 = vmatprep.subr.bf16.mxu0 %v4982
        %7343 = vmatpush1.bf16.msra.mxu0 %v4981
        %7344 = vmatprep.subr.bf16.mxu0 %v4990
        %7345 = vmatpush1.bf16.msra.mxu0 %v4989
        %7346 = vmatprep.subr.bf16.mxu0 %v4998
        %7347 = vmatpush1.bf16.msra.mxu0 %v4997
        %7348 = vmatprep.mubr.bf16.mxu0 %v1351
        %7349 = vmatmul.mubr.bf16.gmra.mrb[0].mxu0 %v1349
        %v7350 = vpop.f32.mrb[0].mxu0
        %v7351 = vadd.f32 %v7310, %v7350
        %v7352 = vpop.f32.mrb[0].mxu0
        %v7353 = vadd.f32 %v7312, %v7352
        %v7354 = vpop.f32.mrb[0].mxu0
        %v7355 = vpop.f32.mrb[0].mxu0
        %7356 = vdwg.mxu0
        %7357 = vmatprep.subr.bf16.mxu0 %v5006
        %7358 = vmatpush1.bf16.msra.mxu0 %v5005
        %7359 = vmatprep.subr.bf16.mxu0 %v5014
        %7360 = vmatpush1.bf16.msra.mxu0 %v5013
        %7361 = vmatprep.subr.bf16.mxu0 %v5022
        %7362 = vmatpush1.bf16.msra.mxu0 %v5021
        %7363 = vmatprep.subr.bf16.mxu0 %v5030
        %7364 = vmatpush1.bf16.msra.mxu0 %v5029
        %7365 = vmatprep.subr.bf16.mxu0 %v5038
        %7366 = vmatpush1.bf16.msra.mxu0 %v5037
        %7367 = vmatprep.subr.bf16.mxu0 %v5046
        %7368 = vmatpush1.bf16.msra.mxu0 %v5045
        %7369 = vmatprep.subr.bf16.mxu0 %v5054
        %7370 = vmatpush1.bf16.msra.mxu0 %v5053
        %7371 = vmatprep.subr.bf16.mxu0 %v5062
        %7372 = vmatpush1.bf16.msra.mxu0 %v5061
        %7373 = vmatprep.subr.bf16.mxu0 %v5070
        %7374 = vmatpush1.bf16.msra.mxu0 %v5069
        %7375 = vmatprep.subr.bf16.mxu0 %v5078
        %7376 = vmatpush1.bf16.msra.mxu0 %v5077
        %7377 = vmatprep.subr.bf16.mxu0 %v5086
        %7378 = vmatpush1.bf16.msra.mxu0 %v5085
        %7379 = vmatprep.subr.bf16.mxu0 %v5094
        %7380 = vmatpush1.bf16.msra.mxu0 %v5093
        %7381 = vmatprep.subr.bf16.mxu0 %v5102
        %7382 = vmatpush1.bf16.msra.mxu0 %v5101
        %7383 = vmatprep.subr.bf16.mxu0 %v5110
        %7384 = vmatpush1.bf16.msra.mxu0 %v5109
        %7385 = vmatprep.subr.bf16.mxu0 %v5118
        %7386 = vmatpush1.bf16.msra.mxu0 %v5117
        %7387 = vmatprep.subr.bf16.mxu0 %v5126
        %7388 = vmatpush1.bf16.msra.mxu0 %v5125
        %7389 = vmatprep.mubr.bf16.mxu0 %v1389
        %7390 = vmatmul.mubr.bf16.gmra.mrb[0].mxu0 %v1375
        %v7391 = vpop.f32.mrb[0].mxu0
        %v7392 = vadd.f32 %v7351, %v7391
        %v7393 = vpop.f32.mrb[0].mxu0
        %v7394 = vadd.f32 %v7353, %v7393
        %v7395 = vpop.f32.mrb[0].mxu0
        %v7396 = vpop.f32.mrb[0].mxu0
        %7397 = vdwg.mxu0
        %7398 = vmatprep.subr.bf16.mxu0 %v5134
        %7399 = vmatpush1.bf16.msra.mxu0 %v5133
        %7400 = vmatprep.subr.bf16.mxu0 %v5142
        %7401 = vmatpush1.bf16.msra.mxu0 %v5141
        %7402 = vmatprep.subr.bf16.mxu0 %v5150
        %7403 = vmatpush1.bf16.msra.mxu0 %v5149
        %7404 = vmatprep.subr.bf16.mxu0 %v5158
        %7405 = vmatpush1.bf16.msra.mxu0 %v5157
        %7406 = vmatprep.subr.bf16.mxu0 %v5166
        %7407 = vmatpush1.bf16.msra.mxu0 %v5165
        %7408 = vmatprep.subr.bf16.mxu0 %v5174
        %7409 = vmatpush1.bf16.msra.mxu0 %v5173
        %7410 = vmatprep.subr.bf16.mxu0 %v5182
        %7411 = vmatpush1.bf16.msra.mxu0 %v5181
        %7412 = vmatprep.subr.bf16.mxu0 %v5190
        %7413 = vmatpush1.bf16.msra.mxu0 %v5189
        %7414 = vmatprep.subr.bf16.mxu0 %v5198
        %7415 = vmatpush1.bf16.msra.mxu0 %v5197
        %7416 = vmatprep.subr.bf16.mxu0 %v5206
        %7417 = vmatpush1.bf16.msra.mxu0 %v5205
        %7418 = vmatprep.subr.bf16.mxu0 %v5214
        %7419 = vmatpush1.bf16.msra.mxu0 %v5213
        %7420 = vmatprep.subr.bf16.mxu0 %v5222
        %7421 = vmatpush1.bf16.msra.mxu0 %v5221
        %7422 = vmatprep.subr.bf16.mxu0 %v5230
        %7423 = vmatpush1.bf16.msra.mxu0 %v5229
        %7424 = vmatprep.subr.bf16.mxu0 %v5238
        %7425 = vmatpush1.bf16.msra.mxu0 %v5237
        %7426 = vmatprep.subr.bf16.mxu0 %v5246
        %7427 = vmatpush1.bf16.msra.mxu0 %v5245
        %7428 = vmatprep.subr.bf16.mxu0 %v5254
        %7429 = vmatpush1.bf16.msra.mxu0 %v5253
        %7430 = vmatprep.mubr.bf16.mxu0 %v1399
        %7431 = vmatmul.mubr.bf16.gmra.mrb[0].mxu0 %v1397
        %v7432 = vpop.f32.mrb[0].mxu0
        %v7433 = vadd.f32 %v7392, %v7432
        %v7434 = vpop.f32.mrb[0].mxu0
        %v7435 = vadd.f32 %v7394, %v7434
        %v7436 = vpop.f32.mrb[0].mxu0
        %v7437 = vpop.f32.mrb[0].mxu0
        %7438 = vdwg.mxu0
        %7439 = vmatprep.subr.bf16.mxu0 %v5262
        %7440 = vmatpush1.bf16.msra.mxu0 %v5261
        %7441 = vmatprep.subr.bf16.mxu0 %v5270
        %7442 = vmatpush1.bf16.msra.mxu0 %v5269
        %7443 = vmatprep.subr.bf16.mxu0 %v5278
        %7444 = vmatpush1.bf16.msra.mxu0 %v5277
        %7445 = vmatprep.subr.bf16.mxu0 %v5286
        %7446 = vmatpush1.bf16.msra.mxu0 %v5285
        %7447 = vmatprep.subr.bf16.mxu0 %v5294
        %7448 = vmatpush1.bf16.msra.mxu0 %v5293
        %7449 = vmatprep.subr.bf16.mxu0 %v5302
        %7450 = vmatpush1.bf16.msra.mxu0 %v5301
        %7451 = vmatprep.subr.bf16.mxu0 %v5310
        %7452 = vmatpush1.bf16.msra.mxu0 %v5309
        %7453 = vmatprep.subr.bf16.mxu0 %v5318
        %7454 = vmatpush1.bf16.msra.mxu0 %v5317
        %7455 = vmatprep.subr.bf16.mxu0 %v5326
        %7456 = vmatpush1.bf16.msra.mxu0 %v5325
        %7457 = vmatprep.subr.bf16.mxu0 %v5334
        %7458 = vmatpush1.bf16.msra.mxu0 %v5333
        %7459 = vmatprep.subr.bf16.mxu0 %v5342
        %7460 = vmatpush1.bf16.msra.mxu0 %v5341
        %7461 = vmatprep.subr.bf16.mxu0 %v5350
        %7462 = vmatpush1.bf16.msra.mxu0 %v5349
        %7463 = vmatprep.subr.bf16.mxu0 %v5358
        %7464 = vmatpush1.bf16.msra.mxu0 %v5357
        %7465 = vmatprep.subr.bf16.mxu0 %v5366
        %7466 = vmatpush1.bf16.msra.mxu0 %v5365
        %7467 = vmatprep.subr.bf16.mxu0 %v5374
        %7468 = vmatpush1.bf16.msra.mxu0 %v5373
        %7469 = vmatprep.subr.bf16.mxu0 %v5382
        %7470 = vmatpush1.bf16.msra.mxu0 %v5381
        %7471 = vmatprep.mubr.bf16.mxu0 %v1396
        %7472 = vmatmul.mubr.bf16.gmra.mrb[0].mxu0 %v1382
        %v7473 = vpop.f32.mrb[0].mxu0
        %v7474 = vadd.f32 %v7433, %v7473
        %v7475 = vpop.f32.mrb[0].mxu0
        %v7476 = vadd.f32 %v7435, %v7475
        %v7477 = vpop.f32.mrb[0].mxu0
        %v7478 = vpop.f32.mrb[0].mxu0
        %7479 = vdwg.mxu0
        %7480 = vmatprep.subr.bf16.mxu0 %v5390
        %7481 = vmatpush1.bf16.msra.mxu0 %v5389
        %7482 = vmatprep.subr.bf16.mxu0 %v5398
        %7483 = vmatpush1.bf16.msra.mxu0 %v5397
        %7484 = vmatprep.subr.bf16.mxu0 %v5406
        %7485 = vmatpush1.bf16.msra.mxu0 %v5405
        %7486 = vmatprep.subr.bf16.mxu0 %v5414
        %7487 = vmatpush1.bf16.msra.mxu0 %v5413
        %7488 = vmatprep.subr.bf16.mxu0 %v5422
        %7489 = vmatpush1.bf16.msra.mxu0 %v5421
        %7490 = vmatprep.subr.bf16.mxu0 %v5430
        %7491 = vmatpush1.bf16.msra.mxu0 %v5429
        %7492 = vmatprep.subr.bf16.mxu0 %v5438
        %7493 = vmatpush1.bf16.msra.mxu0 %v5437
        %7494 = vmatprep.subr.bf16.mxu0 %v5446
        %7495 = vmatpush1.bf16.msra.mxu0 %v5445
        %7496 = vmatprep.subr.bf16.mxu0 %v5454
        %7497 = vmatpush1.bf16.msra.mxu0 %v5453
        %7498 = vmatprep.subr.bf16.mxu0 %v5462
        %7499 = vmatpush1.bf16.msra.mxu0 %v5461
        %7500 = vmatprep.subr.bf16.mxu0 %v5470
        %7501 = vmatpush1.bf16.msra.mxu0 %v5469
        %7502 = vmatprep.subr.bf16.mxu0 %v5478
        %7503 = vmatpush1.bf16.msra.mxu0 %v5477
        %7504 = vmatprep.subr.bf16.mxu0 %v5486
        %7505 = vmatpush1.bf16.msra.mxu0 %v5485
        %7506 = vmatprep.subr.bf16.mxu0 %v5494
        %7507 = vmatpush1.bf16.msra.mxu0 %v5493
        %7508 = vmatprep.subr.bf16.mxu0 %v5502
        %7509 = vmatpush1.bf16.msra.mxu0 %v5501
        %7510 = vmatprep.subr.bf16.mxu0 %v5510
        %7511 = vmatpush1.bf16.msra.mxu0 %v5509
        %7512 = vmatprep.mubr.bf16.mxu0 %v1400
        %7513 = vmatmul.mubr.bf16.gmra.mrb[0].mxu0 %v1398
        %v7514 = vpop.f32.mrb[0].mxu0
        %v7515 = vadd.f32 %v7474, %v7514
        %v7516 = vpop.f32.mrb[0].mxu0
        %v7517 = vadd.f32 %v7476, %v7516
        %v7518 = vpop.f32.mrb[0].mxu0
        %v7519 = vpop.f32.mrb[0].mxu0
        %7520 = vdwg.mxu0
        %7521 = vmatprep.subr.bf16.mxu0 %v4496
        %7522 = vmatpush1.bf16.msra.mxu0 %v4495
        %7523 = vmatprep.subr.bf16.mxu0 %v4504
        %7524 = vmatpush1.bf16.msra.mxu0 %v4503
        %7525 = vmatprep.subr.bf16.mxu0 %v4512
        %7526 = vmatpush1.bf16.msra.mxu0 %v4511
        %7527 = vmatprep.subr.bf16.mxu0 %v4520
        %7528 = vmatpush1.bf16.msra.mxu0 %v4519
        %7529 = vmatprep.subr.bf16.mxu0 %v4528
        %7530 = vmatpush1.bf16.msra.mxu0 %v4527
        %7531 = vmatprep.subr.bf16.mxu0 %v4536
        %7532 = vmatpush1.bf16.msra.mxu0 %v4535
        %7533 = vmatprep.subr.bf16.mxu0 %v4544
        %7534 = vmatpush1.bf16.msra.mxu0 %v4543
        %7535 = vmatprep.subr.bf16.mxu0 %v4552
        %7536 = vmatpush1.bf16.msra.mxu0 %v4551
        %7537 = vmatprep.subr.bf16.mxu0 %v4560
        %7538 = vmatpush1.bf16.msra.mxu0 %v4559
        %7539 = vmatprep.subr.bf16.mxu0 %v4568
        %7540 = vmatpush1.bf16.msra.mxu0 %v4567
        %7541 = vmatprep.subr.bf16.mxu0 %v4576
        %7542 = vmatpush1.bf16.msra.mxu0 %v4575
        %7543 = vmatprep.subr.bf16.mxu0 %v4584
        %7544 = vmatpush1.bf16.msra.mxu0 %v4583
        %7545 = vmatprep.subr.bf16.mxu0 %v4592
        %7546 = vmatpush1.bf16.msra.mxu0 %v4591
        %7547 = vmatprep.subr.bf16.mxu0 %v4600
        %7548 = vmatpush1.bf16.msra.mxu0 %v4599
        %7549 = vmatprep.subr.bf16.mxu0 %v4608
        %7550 = vmatpush1.bf16.msra.mxu0 %v4607
        %7551 = vmatprep.subr.bf16.mxu0 %v4616
        %7552 = vmatpush1.bf16.msra.mxu0 %v4615
        %7553 = vmatprep.mubr.bf16.mxu0 %v1340
        %7554 = vmatmul.mubr.bf16.gmra.mrb[0].mxu0 %v1326
        %v7555 = vpop.f32.mrb[0].mxu0
        %v7556 = vadd.f32 0.0, %v7555
        %v7557 = vpop.f32.mrb[0].mxu0
        %v7558 = vadd.f32 0.0, %v7557
        %v7559 = vpop.f32.mrb[0].mxu0
        %v7560 = vpop.f32.mrb[0].mxu0
        %7561 = vdwg.mxu0
        %7562 = vmatprep.subr.bf16.mxu0 %v4624
        %7563 = vmatpush1.bf16.msra.mxu0 %v4623
        %7564 = vmatprep.subr.bf16.mxu0 %v4632
        %7565 = vmatpush1.bf16.msra.mxu0 %v4631
        %7566 = vmatprep.subr.bf16.mxu0 %v4640
        %7567 = vmatpush1.bf16.msra.mxu0 %v4639
        %7568 = vmatprep.subr.bf16.mxu0 %v4648
        %7569 = vmatpush1.bf16.msra.mxu0 %v4647
        %7570 = vmatprep.subr.bf16.mxu0 %v4656
        %7571 = vmatpush1.bf16.msra.mxu0 %v4655
        %7572 = vmatprep.subr.bf16.mxu0 %v4664
        %7573 = vmatpush1.bf16.msra.mxu0 %v4663
        %7574 = vmatprep.subr.bf16.mxu0 %v4672
        %7575 = vmatpush1.bf16.msra.mxu0 %v4671
        %7576 = vmatprep.subr.bf16.mxu0 %v4680
        %7577 = vmatpush1.bf16.msra.mxu0 %v4679
        %7578 = vmatprep.subr.bf16.mxu0 %v4688
        %7579 = vmatpush1.bf16.msra.mxu0 %v4687
        %7580 = vmatprep.subr.bf16.mxu0 %v4696
        %7581 = vmatpush1.bf16.msra.mxu0 %v4695
        %7582 = vmatprep.subr.bf16.mxu0 %v4704
        %7583 = vmatpush1.bf16.msra.mxu0 %v4703
        %7584 = vmatprep.subr.bf16.mxu0 %v4712
        %7585 = vmatpush1.bf16.msra.mxu0 %v4711
        %7586 = vmatprep.subr.bf16.mxu0 %v4720
        %7587 = vmatpush1.bf16.msra.mxu0 %v4719
        %7588 = vmatprep.subr.bf16.mxu0 %v4728
        %7589 = vmatpush1.bf16.msra.mxu0 %v4727
        %7590 = vmatprep.subr.bf16.mxu0 %v4736
        %7591 = vmatpush1.bf16.msra.mxu0 %v4735
        %7592 = vmatprep.subr.bf16.mxu0 %v4744
        %7593 = vmatpush1.bf16.msra.mxu0 %v4743
        %7594 = vmatprep.mubr.bf16.mxu0 %v1350
        %7595 = vmatmul.mubr.bf16.gmra.mrb[0].mxu0 %v1348
        %v7596 = vpop.f32.mrb[0].mxu0
        %v7597 = vadd.f32 %v7556, %v7596
        %v7598 = vpop.f32.mrb[0].mxu0
        %v7599 = vadd.f32 %v7558, %v7598
        %v7600 = vpop.f32.mrb[0].mxu0
        %v7601 = vpop.f32.mrb[0].mxu0
        %7602 = vdwg.mxu0
        %7603 = vmatprep.subr.bf16.mxu0 %v4752
        %7604 = vmatpush1.bf16.msra.mxu0 %v4751
        %7605 = vmatprep.subr.bf16.mxu0 %v4760
        %7606 = vmatpush1.bf16.msra.mxu0 %v4759
        %7607 = vmatprep.subr.bf16.mxu0 %v4768
        %7608 = vmatpush1.bf16.msra.mxu0 %v4767
        %7609 = vmatprep.subr.bf16.mxu0 %v4776
        %7610 = vmatpush1.bf16.msra.mxu0 %v4775
        %7611 = vmatprep.subr.bf16.mxu0 %v4784
        %7612 = vmatpush1.bf16.msra.mxu0 %v4783
        %7613 = vmatprep.subr.bf16.mxu0 %v4792
        %7614 = vmatpush1.bf16.msra.mxu0 %v4791
        %7615 = vmatprep.subr.bf16.mxu0 %v4800
        %7616 = vmatpush1.bf16.msra.mxu0 %v4799
        %7617 = vmatprep.subr.bf16.mxu0 %v4808
        %7618 = vmatpush1.bf16.msra.mxu0 %v4807
        %7619 = vmatprep.subr.bf16.mxu0 %v4816
        %7620 = vmatpush1.bf16.msra.mxu0 %v4815
        %7621 = vmatprep.subr.bf16.mxu0 %v4824
        %7622 = vmatpush1.bf16.msra.mxu0 %v4823
        %7623 = vmatprep.subr.bf16.mxu0 %v4832
        %7624 = vmatpush1.bf16.msra.mxu0 %v4831
        %7625 = vmatprep.subr.bf16.mxu0 %v4840
        %7626 = vmatpush1.bf16.msra.mxu0 %v4839
        %7627 = vmatprep.subr.bf16.mxu0 %v4848
        %7628 = vmatpush1.bf16.msra.mxu0 %v4847
        %7629 = vmatprep.subr.bf16.mxu0 %v4856
        %7630 = vmatpush1.bf16.msra.mxu0 %v4855
        %7631 = vmatprep.subr.bf16.mxu0 %v4864
        %7632 = vmatpush1.bf16.msra.mxu0 %v4863
        %7633 = vmatprep.subr.bf16.mxu0 %v4872
        %7634 = vmatpush1.bf16.msra.mxu0 %v4871
        %7635 = vmatprep.mubr.bf16.mxu0 %v1347
        %7636 = vmatmul.mubr.bf16.gmra.mrb[0].mxu0 %v1333
        %v7637 = vpop.f32.mrb[0].mxu0
        %v7638 = vadd.f32 %v7597, %v7637
        %v7639 = vpop.f32.mrb[0].mxu0
        %v7640 = vadd.f32 %v7599, %v7639
        %v7641 = vpop.f32.mrb[0].mxu0
        %v7642 = vpop.f32.mrb[0].mxu0
        %7643 = vdwg.mxu0
        %7644 = vmatprep.subr.bf16.mxu0 %v4880
        %7645 = vmatpush1.bf16.msra.mxu0 %v4879
        %7646 = vmatprep.subr.bf16.mxu0 %v4888
        %7647 = vmatpush1.bf16.msra.mxu0 %v4887
        %7648 = vmatprep.subr.bf16.mxu0 %v4896
        %7649 = vmatpush1.bf16.msra.mxu0 %v4895
        %7650 = vmatprep.subr.bf16.mxu0 %v4904
        %7651 = vmatpush1.bf16.msra.mxu0 %v4903
        %7652 = vmatprep.subr.bf16.mxu0 %v4912
        %7653 = vmatpush1.bf16.msra.mxu0 %v4911
        %7654 = vmatprep.subr.bf16.mxu0 %v4920
        %7655 = vmatpush1.bf16.msra.mxu0 %v4919
        %7656 = vmatprep.subr.bf16.mxu0 %v4928
        %7657 = vmatpush1.bf16.msra.mxu0 %v4927
        %7658 = vmatprep.subr.bf16.mxu0 %v4936
        %7659 = vmatpush1.bf16.msra.mxu0 %v4935
        %7660 = vmatprep.subr.bf16.mxu0 %v4944
        %7661 = vmatpush1.bf16.msra.mxu0 %v4943
        %7662 = vmatprep.subr.bf16.mxu0 %v4952
        %7663 = vmatpush1.bf16.msra.mxu0 %v4951
        %7664 = vmatprep.subr.bf16.mxu0 %v4960
        %7665 = vmatpush1.bf16.msra.mxu0 %v4959
        %7666 = vmatprep.subr.bf16.mxu0 %v4968
        %7667 = vmatpush1.bf16.msra.mxu0 %v4967
        %7668 = vmatprep.subr.bf16.mxu0 %v4976
        %7669 = vmatpush1.bf16.msra.mxu0 %v4975
        %7670 = vmatprep.subr.bf16.mxu0 %v4984
        %7671 = vmatpush1.bf16.msra.mxu0 %v4983
        %7672 = vmatprep.subr.bf16.mxu0 %v4992
        %7673 = vmatpush1.bf16.msra.mxu0 %v4991
        %7674 = vmatprep.subr.bf16.mxu0 %v5000
        %7675 = vmatpush1.bf16.msra.mxu0 %v4999
        %7676 = vmatprep.mubr.bf16.mxu0 %v1351
        %7677 = vmatmul.mubr.bf16.gmra.mrb[0].mxu0 %v1349
        %v7678 = vpop.f32.mrb[0].mxu0
        %v7679 = vadd.f32 %v7638, %v7678
        %v7680 = vpop.f32.mrb[0].mxu0
        %v7681 = vadd.f32 %v7640, %v7680
        %v7682 = vpop.f32.mrb[0].mxu0
        %v7683 = vpop.f32.mrb[0].mxu0
        %7684 = vdwg.mxu0
        %7685 = vmatprep.subr.bf16.mxu0 %v5008
        %7686 = vmatpush1.bf16.msra.mxu0 %v5007
        %7687 = vmatprep.subr.bf16.mxu0 %v5016
        %7688 = vmatpush1.bf16.msra.mxu0 %v5015
        %7689 = vmatprep.subr.bf16.mxu0 %v5024
        %7690 = vmatpush1.bf16.msra.mxu0 %v5023
        %7691 = vmatprep.subr.bf16.mxu0 %v5032
        %7692 = vmatpush1.bf16.msra.mxu0 %v5031
        %7693 = vmatprep.subr.bf16.mxu0 %v5040
        %7694 = vmatpush1.bf16.msra.mxu0 %v5039
        %7695 = vmatprep.subr.bf16.mxu0 %v5048
        %7696 = vmatpush1.bf16.msra.mxu0 %v5047
        %7697 = vmatprep.subr.bf16.mxu0 %v5056
        %7698 = vmatpush1.bf16.msra.mxu0 %v5055
        %7699 = vmatprep.subr.bf16.mxu0 %v5064
        %7700 = vmatpush1.bf16.msra.mxu0 %v5063
        %7701 = vmatprep.subr.bf16.mxu0 %v5072
        %7702 = vmatpush1.bf16.msra.mxu0 %v5071
        %7703 = vmatprep.subr.bf16.mxu0 %v5080
        %7704 = vmatpush1.bf16.msra.mxu0 %v5079
        %7705 = vmatprep.subr.bf16.mxu0 %v5088
        %7706 = vmatpush1.bf16.msra.mxu0 %v5087
        %7707 = vmatprep.subr.bf16.mxu0 %v5096
        %7708 = vmatpush1.bf16.msra.mxu0 %v5095
        %7709 = vmatprep.subr.bf16.mxu0 %v5104
        %7710 = vmatpush1.bf16.msra.mxu0 %v5103
        %7711 = vmatprep.subr.bf16.mxu0 %v5112
        %7712 = vmatpush1.bf16.msra.mxu0 %v5111
        %7713 = vmatprep.subr.bf16.mxu0 %v5120
        %7714 = vmatpush1.bf16.msra.mxu0 %v5119
        %7715 = vmatprep.subr.bf16.mxu0 %v5128
        %7716 = vmatpush1.bf16.msra.mxu0 %v5127
        %7717 = vmatprep.mubr.bf16.mxu0 %v1389
        %7718 = vmatmul.mubr.bf16.gmra.mrb[0].mxu0 %v1375
        %v7719 = vpop.f32.mrb[0].mxu0
        %v7720 = vadd.f32 %v7679, %v7719
        %v7721 = vpop.f32.mrb[0].mxu0
        %v7722 = vadd.f32 %v7681, %v7721
        %v7723 = vpop.f32.mrb[0].mxu0
        %v7724 = vpop.f32.mrb[0].mxu0
        %7725 = vdwg.mxu0
        %7726 = vmatprep.subr.bf16.mxu0 %v5136
        %7727 = vmatpush1.bf16.msra.mxu0 %v5135
        %7728 = vmatprep.subr.bf16.mxu0 %v5144
        %7729 = vmatpush1.bf16.msra.mxu0 %v5143
        %7730 = vmatprep.subr.bf16.mxu0 %v5152
        %7731 = vmatpush1.bf16.msra.mxu0 %v5151
        %7732 = vmatprep.subr.bf16.mxu0 %v5160
        %7733 = vmatpush1.bf16.msra.mxu0 %v5159
        %7734 = vmatprep.subr.bf16.mxu0 %v5168
        %7735 = vmatpush1.bf16.msra.mxu0 %v5167
        %7736 = vmatprep.subr.bf16.mxu0 %v5176
        %7737 = vmatpush1.bf16.msra.mxu0 %v5175
        %7738 = vmatprep.subr.bf16.mxu0 %v5184
        %7739 = vmatpush1.bf16.msra.mxu0 %v5183
        %7740 = vmatprep.subr.bf16.mxu0 %v5192
        %7741 = vmatpush1.bf16.msra.mxu0 %v5191
        %7742 = vmatprep.subr.bf16.mxu0 %v5200
        %7743 = vmatpush1.bf16.msra.mxu0 %v5199
        %7744 = vmatprep.subr.bf16.mxu0 %v5208
        %7745 = vmatpush1.bf16.msra.mxu0 %v5207
        %7746 = vmatprep.subr.bf16.mxu0 %v5216
        %7747 = vmatpush1.bf16.msra.mxu0 %v5215
        %7748 = vmatprep.subr.bf16.mxu0 %v5224
        %7749 = vmatpush1.bf16.msra.mxu0 %v5223
        %7750 = vmatprep.subr.bf16.mxu0 %v5232
        %7751 = vmatpush1.bf16.msra.mxu0 %v5231
        %7752 = vmatprep.subr.bf16.mxu0 %v5240
        %7753 = vmatpush1.bf16.msra.mxu0 %v5239
        %7754 = vmatprep.subr.bf16.mxu0 %v5248
        %7755 = vmatpush1.bf16.msra.mxu0 %v5247
        %7756 = vmatprep.subr.bf16.mxu0 %v5256
        %7757 = vmatpush1.bf16.msra.mxu0 %v5255
        %7758 = vmatprep.mubr.bf16.mxu0 %v1399
        %7759 = vmatmul.mubr.bf16.gmra.mrb[0].mxu0 %v1397
        %v7760 = vpop.f32.mrb[0].mxu0
        %v7761 = vadd.f32 %v7720, %v7760
        %v7762 = vpop.f32.mrb[0].mxu0
        %v7763 = vadd.f32 %v7722, %v7762
        %v7764 = vpop.f32.mrb[0].mxu0
        %v7765 = vpop.f32.mrb[0].mxu0
        %7766 = vdwg.mxu0
        %7767 = vmatprep.subr.bf16.mxu0 %v5264
        %7768 = vmatpush1.bf16.msra.mxu0 %v5263
        %7769 = vmatprep.subr.bf16.mxu0 %v5272
        %7770 = vmatpush1.bf16.msra.mxu0 %v5271
        %7771 = vmatprep.subr.bf16.mxu0 %v5280
        %7772 = vmatpush1.bf16.msra.mxu0 %v5279
        %7773 = vmatprep.subr.bf16.mxu0 %v5288
        %7774 = vmatpush1.bf16.msra.mxu0 %v5287
        %7775 = vmatprep.subr.bf16.mxu0 %v5296
        %7776 = vmatpush1.bf16.msra.mxu0 %v5295
        %7777 = vmatprep.subr.bf16.mxu0 %v5304
        %7778 = vmatpush1.bf16.msra.mxu0 %v5303
        %7779 = vmatprep.subr.bf16.mxu0 %v5312
        %7780 = vmatpush1.bf16.msra.mxu0 %v5311
        %7781 = vmatprep.subr.bf16.mxu0 %v5320
        %7782 = vmatpush1.bf16.msra.mxu0 %v5319
        %7783 = vmatprep.subr.bf16.mxu0 %v5328
        %7784 = vmatpush1.bf16.msra.mxu0 %v5327
        %7785 = vmatprep.subr.bf16.mxu0 %v5336
        %7786 = vmatpush1.bf16.msra.mxu0 %v5335
        %7787 = vmatprep.subr.bf16.mxu0 %v5344
        %7788 = vmatpush1.bf16.msra.mxu0 %v5343
        %7789 = vmatprep.subr.bf16.mxu0 %v5352
        %7790 = vmatpush1.bf16.msra.mxu0 %v5351
        %7791 = vmatprep.subr.bf16.mxu0 %v5360
        %7792 = vmatpush1.bf16.msra.mxu0 %v5359
        %7793 = vmatprep.subr.bf16.mxu0 %v5368
        %7794 = vmatpush1.bf16.msra.mxu0 %v5367
        %7795 = vmatprep.subr.bf16.mxu0 %v5376
        %7796 = vmatpush1.bf16.msra.mxu0 %v5375
        %7797 = vmatprep.subr.bf16.mxu0 %v5384
        %7798 = vmatpush1.bf16.msra.mxu0 %v5383
        %7799 = vmatprep.mubr.bf16.mxu0 %v1396
        %7800 = vmatmul.mubr.bf16.gmra.mrb[0].mxu0 %v1382
        %v7801 = vpop.f32.mrb[0].mxu0
        %v7802 = vadd.f32 %v7761, %v7801
        %v7803 = vpop.f32.mrb[0].mxu0
        %v7804 = vadd.f32 %v7763, %v7803
        %v7805 = vpop.f32.mrb[0].mxu0
        %v7806 = vpop.f32.mrb[0].mxu0
        %7807 = vdwg.mxu0
        %7808 = vmatprep.subr.bf16.mxu0 %v5392
        %7809 = vmatpush1.bf16.msra.mxu0 %v5391
        %7810 = vmatprep.subr.bf16.mxu0 %v5400
        %7811 = vmatpush1.bf16.msra.mxu0 %v5399
        %7812 = vmatprep.subr.bf16.mxu0 %v5408
        %7813 = vmatpush1.bf16.msra.mxu0 %v5407
        %7814 = vmatprep.subr.bf16.mxu0 %v5416
        %7815 = vmatpush1.bf16.msra.mxu0 %v5415
        %7816 = vmatprep.subr.bf16.mxu0 %v5424
        %7817 = vmatpush1.bf16.msra.mxu0 %v5423
        %7818 = vmatprep.subr.bf16.mxu0 %v5432
        %7819 = vmatpush1.bf16.msra.mxu0 %v5431
        %7820 = vmatprep.subr.bf16.mxu0 %v5440
        %7821 = vmatpush1.bf16.msra.mxu0 %v5439
        %7822 = vmatprep.subr.bf16.mxu0 %v5448
        %7823 = vmatpush1.bf16.msra.mxu0 %v5447
        %7824 = vmatprep.subr.bf16.mxu0 %v5456
        %7825 = vmatpush1.bf16.msra.mxu0 %v5455
        %7826 = vmatprep.subr.bf16.mxu0 %v5464
        %7827 = vmatpush1.bf16.msra.mxu0 %v5463
        %7828 = vmatprep.subr.bf16.mxu0 %v5472
        %7829 = vmatpush1.bf16.msra.mxu0 %v5471
        %7830 = vmatprep.subr.bf16.mxu0 %v5480
        %7831 = vmatpush1.bf16.msra.mxu0 %v5479
        %7832 = vmatprep.subr.bf16.mxu0 %v5488
        %7833 = vmatpush1.bf16.msra.mxu0 %v5487
        %7834 = vmatprep.subr.bf16.mxu0 %v5496
        %7835 = vmatpush1.bf16.msra.mxu0 %v5495
        %7836 = vmatprep.subr.bf16.mxu0 %v5504
        %7837 = vmatpush1.bf16.msra.mxu0 %v5503
        %7838 = vmatprep.subr.bf16.mxu0 %v5512
        %7839 = vmatpush1.bf16.msra.mxu0 %v5511
        %7840 = vmatprep.mubr.bf16.mxu0 %v1400
        %7841 = vmatmul.mubr.bf16.gmra.mrb[0].mxu0 %v1398
        %v7842 = vpop.f32.mrb[0].mxu0
        %v7843 = vadd.f32 %v7802, %v7842
        %v7844 = vpop.f32.mrb[0].mxu0
        %v7845 = vadd.f32 %v7804, %v7844
        %v7846 = vpop.f32.mrb[0].mxu0
        %v7847 = vpop.f32.mrb[0].mxu0
        %7848 = vdwg.mxu0
        %v7857 = vcombine.low %v6859, %v6861
        %v7858 = vcombine.low %v7187, %v7189
        %v7860 = vunpack.c.l.s4 1983009808
        %v7861 = vunpack.c.0.s8 %v7860
        %v7862 = vlaneseq
        %v7863 = vshrl.u32 %v7862, 7
        %v7864 = vsub.s32 %v7861, %v7863
        %v7865 = vrot.slane %v7857, %v7864
        %v7867 = vunpack.c.l.s4 1983009808
        %v7868 = vunpack.c.0.s8 %v7867
        %v7869 = vlaneseq
        %v7870 = vshrl.u32 %v7869, 7
        %v7871 = vsub.s32 %v7868, %v7870
        %v7872 = vrot.slane %v7858, %v7871
        %v7873 = vcombine.low %v7865, %v7872
        %v7874 = vcombine.low %v7515, %v7517
        %v7875 = vcombine.low %v7843, %v7845
        %v7877 = vunpack.c.l.s4 1983009808
        %v7878 = vunpack.c.0.s8 %v7877
        %v7879 = vlaneseq
        %v7880 = vshrl.u32 %v7879, 7
        %v7881 = vsub.s32 %v7878, %v7880
        %v7882 = vrot.slane %v7874, %v7881
        %v7884 = vunpack.c.l.s4 1983009808
        %v7885 = vunpack.c.0.s8 %v7884
        %v7886 = vlaneseq
        %v7887 = vshrl.u32 %v7886, 7
        %v7888 = vsub.s32 %v7885, %v7887
        %v7889 = vrot.slane %v7875, %v7888
        %v7890 = vcombine.low %v7882, %v7889
        %v7893 = vadd.f32 %v273, %v7873
        %v7894 = vadd.f32 %v274, %v7890
        %7895 = vst [vmem:[#allocation2] sm:$0xff] %v7893
        %7896 = vst [vmem:[#allocation2 + $0x8] sm:$0xff] %v7894
        // Predicated region
        $region45: #{discriminator_forward.5} parent=31 // pred_check
          %p7897 = pneg %p267
        $region46: #{discriminator_forward.5} parent=31 // pred_check_branch
          %7899 = sbr.rel (%p7897) target = $region48
        $region47: #{discriminator_forward.5} parent=31 // pred_region
          %v7900 = vld [vmem:[#allocation2] sm:$0xff]
          %v7901 = vld [vmem:[#allocation2 + $0x8] sm:$0xff]
          %vm7902 = vcmp.gt.f32.partialorder %v7900, 0.0
          %vm7903 = vcmp.gt.f32.partialorder %v7901, 0.0
          %v7904 = vmul.f32 %v7900, 0.2
          %v7905 = vmul.f32 %v7901, 0.2
          %v7906 = vsel %vm7902, %v7900, %v7904
          %v7907 = vsel %vm7903, %v7901, %v7905
          %v7910 = vcombine.high %v7906, %v7906
          %v7912 = vunpack.c.l.s4 1983009808
          %v7913 = vunpack.c.0.s8 %v7912
          %v7914 = vlaneseq
          %v7915 = vshrl.u32 %v7914, 7
          %v7916 = vsub.s32 %v7913, %v7915
          %v7917 = vrot.slane %v7906, %v7916
          %v7919 = vunpack.c.l.s4 1983009808
          %v7920 = vunpack.c.0.s8 %v7919
          %v7921 = vlaneseq
          %v7922 = vshrl.u32 %v7921, 7
          %v7923 = vsub.s32 %v7920, %v7922
          %v7924 = vrot.slane %v7910, %v7923
          %v7925 = vcombine.high %v7917, %v7917
          %v7926 = vcombine.high %v7924, %v7924
          %v7927 = vcombine.high %v7907, %v7907
          %v7929 = vunpack.c.l.s4 1983009808
          %v7930 = vunpack.c.0.s8 %v7929
          %v7931 = vlaneseq
          %v7932 = vshrl.u32 %v7931, 7
          %v7933 = vsub.s32 %v7930, %v7932
          %v7934 = vrot.slane %v7907, %v7933
          %v7936 = vunpack.c.l.s4 1983009808
          %v7937 = vunpack.c.0.s8 %v7936
          %v7938 = vlaneseq
          %v7939 = vshrl.u32 %v7938, 7
          %v7940 = vsub.s32 %v7937, %v7939
          %v7941 = vrot.slane %v7927, %v7940
          %v7942 = vcombine.high %v7934, %v7934
          %v7943 = vcombine.high %v7941, %v7941
          %v7952 = vpack.c.bf16 %v7917, %v7917
          %v7953 = vpack.c.bf16 %v7925, %v7925
          %v7954 = vpack.c.bf16 %v7924, %v7924
          %v7955 = vpack.c.bf16 %v7926, %v7926
          %v7956 = vpack.c.bf16 %v7934, %v7934
          %v7957 = vpack.c.bf16 %v7942, %v7942
          %v7958 = vpack.c.bf16 %v7941, %v7941
          %v7959 = vpack.c.bf16 %v7943, %v7943
          %v7960 = vld [vmem:[%s225] sm:$0xf]
          %v7961 = vld [vmem:[%s225 + $0x4] sm:$0xf]
          %v7962 = vld [vmem:[%s225 + $0x8] sm:$0xf]
          %v7963 = vld [vmem:[%s225 + $0xc] sm:$0xf]
          %v7964 = vld [vmem:[%s225 + $0x10] sm:$0xf]
          %v7965 = vld [vmem:[%s225 + $0x14] sm:$0xf]
          %v7966 = vld [vmem:[%s225 + $0x18] sm:$0xf]
          %v7967 = vld [vmem:[%s225 + $0x1c] sm:$0xf]
          %v7968 = vld [vmem:[%s225 + $0x20] sm:$0xf]
          %v7969 = vld [vmem:[%s225 + $0x24] sm:$0xf]
          %v7970 = vld [vmem:[%s225 + $0x28] sm:$0xf]
          %v7971 = vld [vmem:[%s225 + $0x2c] sm:$0xf]
          %v7972 = vld [vmem:[%s225 + $0x30] sm:$0xf]
          %v7973 = vld [vmem:[%s225 + $0x34] sm:$0xf]
          %v7974 = vld [vmem:[%s225 + $0x38] sm:$0xf]
          %v7975 = vld [vmem:[%s225 + $0x3c] sm:$0xf]
          %v7976 = vld [vmem:[%s225 + $0x40] sm:$0xf]
          %v7977 = vld [vmem:[%s225 + $0x44] sm:$0xf]
          %v7978 = vld [vmem:[%s225 + $0x48] sm:$0xf]
          %v7979 = vld [vmem:[%s225 + $0x4c] sm:$0xf]
          %v7980 = vld [vmem:[%s225 + $0x50] sm:$0xf]
          %v7981 = vld [vmem:[%s225 + $0x54] sm:$0xf]
          %v7982 = vld [vmem:[%s225 + $0x58] sm:$0xf]
          %v7983 = vld [vmem:[%s225 + $0x5c] sm:$0xf]
          %v7984 = vld [vmem:[%s225 + $0x60] sm:$0xf]
          %v7985 = vld [vmem:[%s225 + $0x64] sm:$0xf]
          %v7986 = vld [vmem:[%s225 + $0x68] sm:$0xf]
          %v7987 = vld [vmem:[%s225 + $0x6c] sm:$0xf]
          %v7988 = vld [vmem:[%s225 + $0x70] sm:$0xf]
          %v7989 = vld [vmem:[%s225 + $0x74] sm:$0xf]
          %v7990 = vld [vmem:[%s225 + $0x78] sm:$0xf]
          %v7991 = vld [vmem:[%s225 + $0x7c] sm:$0xf]
          %v7992 = vld [vmem:[%s225 + $0x80] sm:$0xf]
          %v7993 = vld [vmem:[%s225 + $0x84] sm:$0xf]
          %v7994 = vld [vmem:[%s225 + $0x88] sm:$0xf]
          %v7995 = vld [vmem:[%s225 + $0x8c] sm:$0xf]
          %v7996 = vld [vmem:[%s225 + $0x90] sm:$0xf]
          %v7997 = vld [vmem:[%s225 + $0x94] sm:$0xf]
          %v7998 = vld [vmem:[%s225 + $0x98] sm:$0xf]
          %v7999 = vld [vmem:[%s225 + $0x9c] sm:$0xf]
          %v8000 = vld [vmem:[%s225 + $0xa0] sm:$0xf]
          %v8001 = vld [vmem:[%s225 + $0xa4] sm:$0xf]
          %v8002 = vld [vmem:[%s225 + $0xa8] sm:$0xf]
          %v8003 = vld [vmem:[%s225 + $0xac] sm:$0xf]
          %v8004 = vld [vmem:[%s225 + $0xb0] sm:$0xf]
          %v8005 = vld [vmem:[%s225 + $0xb4] sm:$0xf]
          %v8006 = vld [vmem:[%s225 + $0xb8] sm:$0xf]
          %v8007 = vld [vmem:[%s225 + $0xbc] sm:$0xf]
          %v8008 = vld [vmem:[%s225 + $0xc0] sm:$0xf]
          %v8009 = vld [vmem:[%s225 + $0xc4] sm:$0xf]
          %v8010 = vld [vmem:[%s225 + $0xc8] sm:$0xf]
          %v8011 = vld [vmem:[%s225 + $0xcc] sm:$0xf]
          %v8012 = vld [vmem:[%s225 + $0xd0] sm:$0xf]
          %v8013 = vld [vmem:[%s225 + $0xd4] sm:$0xf]
          %v8014 = vld [vmem:[%s225 + $0xd8] sm:$0xf]
          %v8015 = vld [vmem:[%s225 + $0xdc] sm:$0xf]
          %v8016 = vld [vmem:[%s225 + $0xe0] sm:$0xf]
          %v8017 = vld [vmem:[%s225 + $0xe4] sm:$0xf]
          %v8018 = vld [vmem:[%s225 + $0xe8] sm:$0xf]
          %v8019 = vld [vmem:[%s225 + $0xec] sm:$0xf]
          %v8020 = vld [vmem:[%s225 + $0xf0] sm:$0xf]
          %v8021 = vld [vmem:[%s225 + $0xf4] sm:$0xf]
          %v8022 = vld [vmem:[%s225 + $0xf8] sm:$0xf]
          %v8023 = vld [vmem:[%s225 + $0xfc] sm:$0xf]
          %v8024 = vld [vmem:[%s225 + $0x100] sm:$0xf]
          %v8025 = vld [vmem:[%s225 + $0x104] sm:$0xf]
          %v8026 = vld [vmem:[%s225 + $0x108] sm:$0xf]
          %v8027 = vld [vmem:[%s225 + $0x10c] sm:$0xf]
          %v8028 = vld [vmem:[%s225 + $0x110] sm:$0xf]
          %v8029 = vld [vmem:[%s225 + $0x114] sm:$0xf]
          %v8030 = vld [vmem:[%s225 + $0x118] sm:$0xf]
          %v8031 = vld [vmem:[%s225 + $0x11c] sm:$0xf]
          %v8032 = vld [vmem:[%s225 + $0x120] sm:$0xf]
          %v8033 = vld [vmem:[%s225 + $0x124] sm:$0xf]
          %v8034 = vld [vmem:[%s225 + $0x128] sm:$0xf]
          %v8035 = vld [vmem:[%s225 + $0x12c] sm:$0xf]
          %v8036 = vld [vmem:[%s225 + $0x130] sm:$0xf]
          %v8037 = vld [vmem:[%s225 + $0x134] sm:$0xf]
          %v8038 = vld [vmem:[%s225 + $0x138] sm:$0xf]
          %v8039 = vld [vmem:[%s225 + $0x13c] sm:$0xf]
          %v8040 = vld [vmem:[%s225 + $0x140] sm:$0xf]
          %v8041 = vld [vmem:[%s225 + $0x144] sm:$0xf]
          %v8042 = vld [vmem:[%s225 + $0x148] sm:$0xf]
          %v8043 = vld [vmem:[%s225 + $0x14c] sm:$0xf]
          %v8044 = vld [vmem:[%s225 + $0x150] sm:$0xf]
          %v8045 = vld [vmem:[%s225 + $0x154] sm:$0xf]
          %v8046 = vld [vmem:[%s225 + $0x158] sm:$0xf]
          %v8047 = vld [vmem:[%s225 + $0x15c] sm:$0xf]
          %v8048 = vld [vmem:[%s225 + $0x160] sm:$0xf]
          %v8049 = vld [vmem:[%s225 + $0x164] sm:$0xf]
          %v8050 = vld [vmem:[%s225 + $0x168] sm:$0xf]
          %v8051 = vld [vmem:[%s225 + $0x16c] sm:$0xf]
          %v8052 = vld [vmem:[%s225 + $0x170] sm:$0xf]
          %v8053 = vld [vmem:[%s225 + $0x174] sm:$0xf]
          %v8054 = vld [vmem:[%s225 + $0x178] sm:$0xf]
          %v8055 = vld [vmem:[%s225 + $0x17c] sm:$0xf]
          %v8056 = vld [vmem:[%s225 + $0x180] sm:$0xf]
          %v8057 = vld [vmem:[%s225 + $0x184] sm:$0xf]
          %v8058 = vld [vmem:[%s225 + $0x188] sm:$0xf]
          %v8059 = vld [vmem:[%s225 + $0x18c] sm:$0xf]
          %v8060 = vld [vmem:[%s225 + $0x190] sm:$0xf]
          %v8061 = vld [vmem:[%s225 + $0x194] sm:$0xf]
          %v8062 = vld [vmem:[%s225 + $0x198] sm:$0xf]
          %v8063 = vld [vmem:[%s225 + $0x19c] sm:$0xf]
          %v8064 = vld [vmem:[%s225 + $0x1a0] sm:$0xf]
          %v8065 = vld [vmem:[%s225 + $0x1a4] sm:$0xf]
          %v8066 = vld [vmem:[%s225 + $0x1a8] sm:$0xf]
          %v8067 = vld [vmem:[%s225 + $0x1ac] sm:$0xf]
          %v8068 = vld [vmem:[%s225 + $0x1b0] sm:$0xf]
          %v8069 = vld [vmem:[%s225 + $0x1b4] sm:$0xf]
          %v8070 = vld [vmem:[%s225 + $0x1b8] sm:$0xf]
          %v8071 = vld [vmem:[%s225 + $0x1bc] sm:$0xf]
          %v8072 = vld [vmem:[%s225 + $0x1c0] sm:$0xf]
          %v8073 = vld [vmem:[%s225 + $0x1c4] sm:$0xf]
          %v8074 = vld [vmem:[%s225 + $0x1c8] sm:$0xf]
          %v8075 = vld [vmem:[%s225 + $0x1cc] sm:$0xf]
          %v8076 = vld [vmem:[%s225 + $0x1d0] sm:$0xf]
          %v8077 = vld [vmem:[%s225 + $0x1d4] sm:$0xf]
          %v8078 = vld [vmem:[%s225 + $0x1d8] sm:$0xf]
          %v8079 = vld [vmem:[%s225 + $0x1dc] sm:$0xf]
          %v8080 = vld [vmem:[%s225 + $0x1e0] sm:$0xf]
          %v8081 = vld [vmem:[%s225 + $0x1e4] sm:$0xf]
          %v8082 = vld [vmem:[%s225 + $0x1e8] sm:$0xf]
          %v8083 = vld [vmem:[%s225 + $0x1ec] sm:$0xf]
          %v8084 = vld [vmem:[%s225 + $0x1f0] sm:$0xf]
          %v8085 = vld [vmem:[%s225 + $0x1f4] sm:$0xf]
          %v8086 = vld [vmem:[%s225 + $0x1f8] sm:$0xf]
          %v8087 = vld [vmem:[%s225 + $0x1fc] sm:$0xf]
          %v8216 = vunpack.c.l.b16 %v7960
          %v8217 = vunpack.c.l.b16 %v7961
          %v8218 = vunpack.c.l.b16 %v7962
          %v8219 = vunpack.c.l.b16 %v7963
          %v8220 = vunpack.c.l.b16 %v7964
          %v8221 = vunpack.c.l.b16 %v7965
          %v8222 = vunpack.c.l.b16 %v7966
          %v8223 = vunpack.c.l.b16 %v7967
          %v8224 = vunpack.c.l.b16 %v7968
          %v8225 = vunpack.c.l.b16 %v7969
          %v8226 = vunpack.c.l.b16 %v7970
          %v8227 = vunpack.c.l.b16 %v7971
          %v8228 = vunpack.c.l.b16 %v7972
          %v8229 = vunpack.c.l.b16 %v7973
          %v8230 = vunpack.c.l.b16 %v7974
          %v8231 = vunpack.c.l.b16 %v7975
          %v8232 = vunpack.c.l.b16 %v7976
          %v8233 = vunpack.c.l.b16 %v7977
          %v8234 = vunpack.c.l.b16 %v7978
          %v8235 = vunpack.c.l.b16 %v7979
          %v8236 = vunpack.c.l.b16 %v7980
          %v8237 = vunpack.c.l.b16 %v7981
          %v8238 = vunpack.c.l.b16 %v7982
          %v8239 = vunpack.c.l.b16 %v7983
          %v8240 = vunpack.c.l.b16 %v7984
          %v8241 = vunpack.c.l.b16 %v7985
          %v8242 = vunpack.c.l.b16 %v7986
          %v8243 = vunpack.c.l.b16 %v7987
          %v8244 = vunpack.c.l.b16 %v7988
          %v8245 = vunpack.c.l.b16 %v7989
          %v8246 = vunpack.c.l.b16 %v7990
          %v8247 = vunpack.c.l.b16 %v7991
          %v8248 = vunpack.c.l.b16 %v7992
          %v8249 = vunpack.c.l.b16 %v7993
          %v8250 = vunpack.c.l.b16 %v7994
          %v8251 = vunpack.c.l.b16 %v7995
          %v8252 = vunpack.c.l.b16 %v7996
          %v8253 = vunpack.c.l.b16 %v7997
          %v8254 = vunpack.c.l.b16 %v7998
          %v8255 = vunpack.c.l.b16 %v7999
          %v8256 = vunpack.c.l.b16 %v8000
          %v8257 = vunpack.c.l.b16 %v8001
          %v8258 = vunpack.c.l.b16 %v8002
          %v8259 = vunpack.c.l.b16 %v8003
          %v8260 = vunpack.c.l.b16 %v8004
          %v8261 = vunpack.c.l.b16 %v8005
          %v8262 = vunpack.c.l.b16 %v8006
          %v8263 = vunpack.c.l.b16 %v8007
          %v8264 = vunpack.c.l.b16 %v8008
          %v8265 = vunpack.c.l.b16 %v8009
          %v8266 = vunpack.c.l.b16 %v8010
          %v8267 = vunpack.c.l.b16 %v8011
          %v8268 = vunpack.c.l.b16 %v8012
          %v8269 = vunpack.c.l.b16 %v8013
          %v8270 = vunpack.c.l.b16 %v8014
          %v8271 = vunpack.c.l.b16 %v8015
          %v8272 = vunpack.c.l.b16 %v8016
          %v8273 = vunpack.c.l.b16 %v8017
          %v8274 = vunpack.c.l.b16 %v8018
          %v8275 = vunpack.c.l.b16 %v8019
          %v8276 = vunpack.c.l.b16 %v8020
          %v8277 = vunpack.c.l.b16 %v8021
          %v8278 = vunpack.c.l.b16 %v8022
          %v8279 = vunpack.c.l.b16 %v8023
          %v8280 = vunpack.c.l.b16 %v8024
          %v8281 = vunpack.c.l.b16 %v8025
          %v8282 = vunpack.c.l.b16 %v8026
          %v8283 = vunpack.c.l.b16 %v8027
          %v8284 = vunpack.c.l.b16 %v8028
          %v8285 = vunpack.c.l.b16 %v8029
          %v8286 = vunpack.c.l.b16 %v8030
          %v8287 = vunpack.c.l.b16 %v8031
          %v8288 = vunpack.c.l.b16 %v8032
          %v8289 = vunpack.c.l.b16 %v8033
          %v8290 = vunpack.c.l.b16 %v8034
          %v8291 = vunpack.c.l.b16 %v8035
          %v8292 = vunpack.c.l.b16 %v8036
          %v8293 = vunpack.c.l.b16 %v8037
          %v8294 = vunpack.c.l.b16 %v8038
          %v8295 = vunpack.c.l.b16 %v8039
          %v8296 = vunpack.c.l.b16 %v8040
          %v8297 = vunpack.c.l.b16 %v8041
          %v8298 = vunpack.c.l.b16 %v8042
          %v8299 = vunpack.c.l.b16 %v8043
          %v8300 = vunpack.c.l.b16 %v8044
          %v8301 = vunpack.c.l.b16 %v8045
          %v8302 = vunpack.c.l.b16 %v8046
          %v8303 = vunpack.c.l.b16 %v8047
          %v8304 = vunpack.c.l.b16 %v8048
          %v8305 = vunpack.c.l.b16 %v8049
          %v8306 = vunpack.c.l.b16 %v8050
          %v8307 = vunpack.c.l.b16 %v8051
          %v8308 = vunpack.c.l.b16 %v8052
          %v8309 = vunpack.c.l.b16 %v8053
          %v8310 = vunpack.c.l.b16 %v8054
          %v8311 = vunpack.c.l.b16 %v8055
          %v8312 = vunpack.c.l.b16 %v8056
          %v8313 = vunpack.c.l.b16 %v8057
          %v8314 = vunpack.c.l.b16 %v8058
          %v8315 = vunpack.c.l.b16 %v8059
          %v8316 = vunpack.c.l.b16 %v8060
          %v8317 = vunpack.c.l.b16 %v8061
          %v8318 = vunpack.c.l.b16 %v8062
          %v8319 = vunpack.c.l.b16 %v8063
          %v8320 = vunpack.c.l.b16 %v8064
          %v8321 = vunpack.c.l.b16 %v8065
          %v8322 = vunpack.c.l.b16 %v8066
          %v8323 = vunpack.c.l.b16 %v8067
          %v8324 = vunpack.c.l.b16 %v8068
          %v8325 = vunpack.c.l.b16 %v8069
          %v8326 = vunpack.c.l.b16 %v8070
          %v8327 = vunpack.c.l.b16 %v8071
          %v8328 = vunpack.c.l.b16 %v8072
          %v8329 = vunpack.c.l.b16 %v8073
          %v8330 = vunpack.c.l.b16 %v8074
          %v8331 = vunpack.c.l.b16 %v8075
          %v8332 = vunpack.c.l.b16 %v8076
          %v8333 = vunpack.c.l.b16 %v8077
          %v8334 = vunpack.c.l.b16 %v8078
          %v8335 = vunpack.c.l.b16 %v8079
          %v8336 = vunpack.c.l.b16 %v8080
          %v8337 = vunpack.c.l.b16 %v8081
          %v8338 = vunpack.c.l.b16 %v8082
          %v8339 = vunpack.c.l.b16 %v8083
          %v8340 = vunpack.c.l.b16 %v8084
          %v8341 = vunpack.c.l.b16 %v8085
          %v8342 = vunpack.c.l.b16 %v8086
          %v8343 = vunpack.c.l.b16 %v8087
          %v8344 = vpack.c.b16 %v8217, %v8216
          %v8345 = vpack.c.b16 %v8219, %v8218
          %v8346 = vpack.c.b16 %v8221, %v8220
          %v8347 = vpack.c.b16 %v8223, %v8222
          %v8348 = vpack.c.b16 %v8225, %v8224
          %v8349 = vpack.c.b16 %v8227, %v8226
          %v8350 = vpack.c.b16 %v8229, %v8228
          %v8351 = vpack.c.b16 %v8231, %v8230
          %v8352 = vpack.c.b16 %v8233, %v8232
          %v8353 = vpack.c.b16 %v8235, %v8234
          %v8354 = vpack.c.b16 %v8237, %v8236
          %v8355 = vpack.c.b16 %v8239, %v8238
          %v8356 = vpack.c.b16 %v8241, %v8240
          %v8357 = vpack.c.b16 %v8243, %v8242
          %v8358 = vpack.c.b16 %v8245, %v8244
          %v8359 = vpack.c.b16 %v8247, %v8246
          %v8360 = vpack.c.b16 %v8249, %v8248
          %v8361 = vpack.c.b16 %v8251, %v8250
          %v8362 = vpack.c.b16 %v8253, %v8252
          %v8363 = vpack.c.b16 %v8255, %v8254
          %v8364 = vpack.c.b16 %v8257, %v8256
          %v8365 = vpack.c.b16 %v8259, %v8258
          %v8366 = vpack.c.b16 %v8261, %v8260
          %v8367 = vpack.c.b16 %v8263, %v8262
          %v8368 = vpack.c.b16 %v8265, %v8264
          %v8369 = vpack.c.b16 %v8267, %v8266
          %v8370 = vpack.c.b16 %v8269, %v8268
          %v8371 = vpack.c.b16 %v8271, %v8270
          %v8372 = vpack.c.b16 %v8273, %v8272
          %v8373 = vpack.c.b16 %v8275, %v8274
          %v8374 = vpack.c.b16 %v8277, %v8276
          %v8375 = vpack.c.b16 %v8279, %v8278
          %v8376 = vpack.c.b16 %v8281, %v8280
          %v8377 = vpack.c.b16 %v8283, %v8282
          %v8378 = vpack.c.b16 %v8285, %v8284
          %v8379 = vpack.c.b16 %v8287, %v8286
          %v8380 = vpack.c.b16 %v8289, %v8288
          %v8381 = vpack.c.b16 %v8291, %v8290
          %v8382 = vpack.c.b16 %v8293, %v8292
          %v8383 = vpack.c.b16 %v8295, %v8294
          %v8384 = vpack.c.b16 %v8297, %v8296
          %v8385 = vpack.c.b16 %v8299, %v8298
          %v8386 = vpack.c.b16 %v8301, %v8300
          %v8387 = vpack.c.b16 %v8303, %v8302
          %v8388 = vpack.c.b16 %v8305, %v8304
          %v8389 = vpack.c.b16 %v8307, %v8306
          %v8390 = vpack.c.b16 %v8309, %v8308
          %v8391 = vpack.c.b16 %v8311, %v8310
          %v8392 = vpack.c.b16 %v8313, %v8312
          %v8393 = vpack.c.b16 %v8315, %v8314
          %v8394 = vpack.c.b16 %v8317, %v8316
          %v8395 = vpack.c.b16 %v8319, %v8318
          %v8396 = vpack.c.b16 %v8321, %v8320
          %v8397 = vpack.c.b16 %v8323, %v8322
          %v8398 = vpack.c.b16 %v8325, %v8324
          %v8399 = vpack.c.b16 %v8327, %v8326
          %v8400 = vpack.c.b16 %v8329, %v8328
          %v8401 = vpack.c.b16 %v8331, %v8330
          %v8402 = vpack.c.b16 %v8333, %v8332
          %v8403 = vpack.c.b16 %v8335, %v8334
          %v8404 = vpack.c.b16 %v8337, %v8336
          %v8405 = vpack.c.b16 %v8339, %v8338
          %v8406 = vpack.c.b16 %v8341, %v8340
          %v8407 = vpack.c.b16 %v8343, %v8342
          %8472 = vmatprep.subr.bf16.mxu0 0
          %8473 = vmatpush1.bf16.msra.mxu0 %v8344
          %8474 = vmatprep.subr.bf16.mxu0 0
          %8475 = vmatpush1.bf16.msra.mxu0 %v8345
          %8476 = vmatprep.subr.bf16.mxu0 0
          %8477 = vmatpush1.bf16.msra.mxu0 %v8346
          %8478 = vmatprep.subr.bf16.mxu0 0
          %8479 = vmatpush1.bf16.msra.mxu0 %v8347
          %8480 = vmatprep.subr.bf16.mxu0 0
          %8481 = vmatpush1.bf16.msra.mxu0 %v8348
          %8482 = vmatprep.subr.bf16.mxu0 0
          %8483 = vmatpush1.bf16.msra.mxu0 %v8349
          %8484 = vmatprep.subr.bf16.mxu0 0
          %8485 = vmatpush1.bf16.msra.mxu0 %v8350
          %8486 = vmatprep.subr.bf16.mxu0 0
          %8487 = vmatpush1.bf16.msra.mxu0 %v8351
          %8488 = vmatprep.subr.bf16.mxu0 0
          %8489 = vmatpush1.bf16.msra.mxu0 %v8352
          %8490 = vmatprep.subr.bf16.mxu0 0
          %8491 = vmatpush1.bf16.msra.mxu0 %v8353
          %8492 = vmatprep.subr.bf16.mxu0 0
          %8493 = vmatpush1.bf16.msra.mxu0 %v8354
          %8494 = vmatprep.subr.bf16.mxu0 0
          %8495 = vmatpush1.bf16.msra.mxu0 %v8355
          %8496 = vmatprep.subr.bf16.mxu0 0
          %8497 = vmatpush1.bf16.msra.mxu0 %v8356
          %8498 = vmatprep.subr.bf16.mxu0 0
          %8499 = vmatpush1.bf16.msra.mxu0 %v8357
          %8500 = vmatprep.subr.bf16.mxu0 0
          %8501 = vmatpush1.bf16.msra.mxu0 %v8358
          %8502 = vmatprep.subr.bf16.mxu0 0
          %8503 = vmatpush1.bf16.msra.mxu0 %v8359
          %8504 = vmatprep.mubr.bf16.mxu0 %v7953
          %8505 = vmatmul.mubr.bf16.gmra.mrb[0].mxu0 %v7952
          %v8506 = vpop.f32.mrb[0].mxu0
          %v8507 = vadd.f32 0.0, %v8506
          %v8508 = vpop.f32.mrb[0].mxu0
          %v8509 = vpop.f32.mrb[0].mxu0
          %v8510 = vpop.f32.mrb[0].mxu0
          %8511 = vdwg.mxu0
          %8512 = vmatprep.subr.bf16.mxu0 0
          %8513 = vmatpush1.bf16.msra.mxu0 %v8360
          %8514 = vmatprep.subr.bf16.mxu0 0
          %8515 = vmatpush1.bf16.msra.mxu0 %v8361
          %8516 = vmatprep.subr.bf16.mxu0 0
          %8517 = vmatpush1.bf16.msra.mxu0 %v8362
          %8518 = vmatprep.subr.bf16.mxu0 0
          %8519 = vmatpush1.bf16.msra.mxu0 %v8363
          %8520 = vmatprep.subr.bf16.mxu0 0
          %8521 = vmatpush1.bf16.msra.mxu0 %v8364
          %8522 = vmatprep.subr.bf16.mxu0 0
          %8523 = vmatpush1.bf16.msra.mxu0 %v8365
          %8524 = vmatprep.subr.bf16.mxu0 0
          %8525 = vmatpush1.bf16.msra.mxu0 %v8366
          %8526 = vmatprep.subr.bf16.mxu0 0
          %8527 = vmatpush1.bf16.msra.mxu0 %v8367
          %8528 = vmatprep.subr.bf16.mxu0 0
          %8529 = vmatpush1.bf16.msra.mxu0 %v8368
          %8530 = vmatprep.subr.bf16.mxu0 0
          %8531 = vmatpush1.bf16.msra.mxu0 %v8369
          %8532 = vmatprep.subr.bf16.mxu0 0
          %8533 = vmatpush1.bf16.msra.mxu0 %v8370
          %8534 = vmatprep.subr.bf16.mxu0 0
          %8535 = vmatpush1.bf16.msra.mxu0 %v8371
          %8536 = vmatprep.subr.bf16.mxu0 0
          %8537 = vmatpush1.bf16.msra.mxu0 %v8372
          %8538 = vmatprep.subr.bf16.mxu0 0
          %8539 = vmatpush1.bf16.msra.mxu0 %v8373
          %8540 = vmatprep.subr.bf16.mxu0 0
          %8541 = vmatpush1.bf16.msra.mxu0 %v8374
          %8542 = vmatprep.subr.bf16.mxu0 0
          %8543 = vmatpush1.bf16.msra.mxu0 %v8375
          %8544 = vmatprep.mubr.bf16.mxu0 %v7955
          %8545 = vmatmul.mubr.bf16.gmra.mrb[0].mxu0 %v7954
          %v8546 = vpop.f32.mrb[0].mxu0
          %v8547 = vadd.f32 %v8507, %v8546
          %v8548 = vpop.f32.mrb[0].mxu0
          %v8549 = vpop.f32.mrb[0].mxu0
          %v8550 = vpop.f32.mrb[0].mxu0
          %8551 = vdwg.mxu0
          %8552 = vmatprep.subr.bf16.mxu0 0
          %8553 = vmatpush1.bf16.msra.mxu0 %v8376
          %8554 = vmatprep.subr.bf16.mxu0 0
          %8555 = vmatpush1.bf16.msra.mxu0 %v8377
          %8556 = vmatprep.subr.bf16.mxu0 0
          %8557 = vmatpush1.bf16.msra.mxu0 %v8378
          %8558 = vmatprep.subr.bf16.mxu0 0
          %8559 = vmatpush1.bf16.msra.mxu0 %v8379
          %8560 = vmatprep.subr.bf16.mxu0 0
          %8561 = vmatpush1.bf16.msra.mxu0 %v8380
          %8562 = vmatprep.subr.bf16.mxu0 0
          %8563 = vmatpush1.bf16.msra.mxu0 %v8381
          %8564 = vmatprep.subr.bf16.mxu0 0
          %8565 = vmatpush1.bf16.msra.mxu0 %v8382
          %8566 = vmatprep.subr.bf16.mxu0 0
          %8567 = vmatpush1.bf16.msra.mxu0 %v8383
          %8568 = vmatprep.subr.bf16.mxu0 0
          %8569 = vmatpush1.bf16.msra.mxu0 %v8384
          %8570 = vmatprep.subr.bf16.mxu0 0
          %8571 = vmatpush1.bf16.msra.mxu0 %v8385
          %8572 = vmatprep.subr.bf16.mxu0 0
          %8573 = vmatpush1.bf16.msra.mxu0 %v8386
          %8574 = vmatprep.subr.bf16.mxu0 0
          %8575 = vmatpush1.bf16.msra.mxu0 %v8387
          %8576 = vmatprep.subr.bf16.mxu0 0
          %8577 = vmatpush1.bf16.msra.mxu0 %v8388
          %8578 = vmatprep.subr.bf16.mxu0 0
          %8579 = vmatpush1.bf16.msra.mxu0 %v8389
          %8580 = vmatprep.subr.bf16.mxu0 0
          %8581 = vmatpush1.bf16.msra.mxu0 %v8390
          %8582 = vmatprep.subr.bf16.mxu0 0
          %8583 = vmatpush1.bf16.msra.mxu0 %v8391
          %8584 = vmatprep.mubr.bf16.mxu0 %v7957
          %8585 = vmatmul.mubr.bf16.gmra.mrb[0].mxu0 %v7956
          %v8586 = vpop.f32.mrb[0].mxu0
          %v8587 = vadd.f32 %v8547, %v8586
          %v8588 = vpop.f32.mrb[0].mxu0
          %v8589 = vpop.f32.mrb[0].mxu0
          %v8590 = vpop.f32.mrb[0].mxu0
          %8591 = vdwg.mxu0
          %8592 = vmatprep.subr.bf16.mxu0 0
          %8593 = vmatpush1.bf16.msra.mxu0 %v8392
          %8594 = vmatprep.subr.bf16.mxu0 0
          %8595 = vmatpush1.bf16.msra.mxu0 %v8393
          %8596 = vmatprep.subr.bf16.mxu0 0
          %8597 = vmatpush1.bf16.msra.mxu0 %v8394
          %8598 = vmatprep.subr.bf16.mxu0 0
          %8599 = vmatpush1.bf16.msra.mxu0 %v8395
          %8600 = vmatprep.subr.bf16.mxu0 0
          %8601 = vmatpush1.bf16.msra.mxu0 %v8396
          %8602 = vmatprep.subr.bf16.mxu0 0
          %8603 = vmatpush1.bf16.msra.mxu0 %v8397
          %8604 = vmatprep.subr.bf16.mxu0 0
          %8605 = vmatpush1.bf16.msra.mxu0 %v8398
          %8606 = vmatprep.subr.bf16.mxu0 0
          %8607 = vmatpush1.bf16.msra.mxu0 %v8399
          %8608 = vmatprep.subr.bf16.mxu0 0
          %8609 = vmatpush1.bf16.msra.mxu0 %v8400
          %8610 = vmatprep.subr.bf16.mxu0 0
          %8611 = vmatpush1.bf16.msra.mxu0 %v8401
          %8612 = vmatprep.subr.bf16.mxu0 0
          %8613 = vmatpush1.bf16.msra.mxu0 %v8402
          %8614 = vmatprep.subr.bf16.mxu0 0
          %8615 = vmatpush1.bf16.msra.mxu0 %v8403
          %8616 = vmatprep.subr.bf16.mxu0 0
          %8617 = vmatpush1.bf16.msra.mxu0 %v8404
          %8618 = vmatprep.subr.bf16.mxu0 0
          %8619 = vmatpush1.bf16.msra.mxu0 %v8405
          %8620 = vmatprep.subr.bf16.mxu0 0
          %8621 = vmatpush1.bf16.msra.mxu0 %v8406
          %8622 = vmatprep.subr.bf16.mxu0 0
          %8623 = vmatpush1.bf16.msra.mxu0 %v8407
          %8624 = vmatprep.mubr.bf16.mxu0 %v7959
          %8625 = vmatmul.mubr.bf16.gmra.mrb[0].mxu0 %v7958
          %v8626 = vpop.f32.mrb[0].mxu0
          %v8627 = vadd.f32 %v8587, %v8626
          %v8628 = vpop.f32.mrb[0].mxu0
          %v8629 = vpop.f32.mrb[0].mxu0
          %v8630 = vpop.f32.mrb[0].mxu0
          %8631 = vdwg.mxu0
          %p8632 = scmp.eq.s32.totalorder %s24, 0
          %v8633 = vxor.u32 %v8627, 2147483648
          %v8634 = vmul.f32 %v8633, 1.442695
          %v8635 = vpow.pop %v8634
          %v8636 = vadd.f32 %v8635, 1.0
          %v8637 = vrcp.pop %v8636
          %v8638 = vmul.f32 1.0, %v8637
          %s8639 = scalar_select %p8632, 1, 0
          %v8640 = vstv %s8639
          %vm8641 = vcmp.eq.s32.totalorder %v8640, 1
          %v8642 = vsel %vm8641, %v8638, %v8627
          %8643 = vst [vmem:[%s265] sm:$0x3] %v8642
        $region48: #{discriminator_forward.5} parent=31 // pred_fallthru
          _
        %p8644 = scmp.lt.s32.totalorder %s24, 1
        %s8645 = scalar_select %p8644, %s24, 1
        %s8646 = smul.addr %s8645, 2
        %s8647 = scalar_lea.vmem %s3, %s8646
        // Predicated region
        $region49: #{discriminator_forward.5} parent=31 // pred_check
          %p8648 = pneg %p130
        $region50: #{discriminator_forward.5} parent=31 // pred_check_branch
          %8650 = sbr.rel (%p8648) target = $region52
        $region51: #{discriminator_forward.5} parent=31 // pred_region
          _
        $region52: #{discriminator_forward.5} parent=31 // pred_fallthru
          _
      $region32: #{discriminator_forward.5} parent=5 // pred_fallthru
        _
      %p8651 = scmp.le.s32.totalorder 2, %s15
      // Predicated region
      $region53: #{discriminator_forward.5} parent=5 // pred_check
        %p8652 = pneg %p8651
      $region54: #{discriminator_forward.5} parent=5 // pred_check_branch
        %8654 = sbr.rel (%p8652) target = $region56
      $region55: #{discriminator_forward.5} parent=5 // pred_region
        %s8655 = ssub.s32 %s15, 2
        // Predicated region
        $region57: #{discriminator_forward.5} parent=55 // pred_check
          %p8656 = pneg %p136
        $region58: #{discriminator_forward.5} parent=55 // pred_check_branch
          %8658 = sbr.rel (%p8656) target = $region60
        $region59: #{discriminator_forward.5} parent=55 // pred_region
          %p8659 = scmp.lt.s32.totalorder %s26, 1
          %s8660 = scalar_select %p8659, %s26, 1
          %s8661 = smul.addr %s8660, 2
          %s8662 = scalar_lea.vmem %s3, %s8661
        $region60: #{discriminator_forward.5} parent=55 // pred_fallthru
          _
      $region56: #{discriminator_forward.5} parent=5 // pred_fallthru
        _
    $region6: #{discriminator_forward.5} parent=1 // loop_footer
      %s19 = sadd.s32 1, %s15
    $region7: #{discriminator_forward.5} parent=1 // loop_footer_branch
      %14 = sbr.rel target = $region3
    $region8: #{discriminator_forward.5} parent=1 // loop_exit
      _
    %8663 = vsyncpa [#allocation4], 1
    %s8664 = scalar_lea.sflag [#allocation4], 1
    %8665 = vsyncpa %s8664, 1
    %8666 = vsyncpa [#allocation6], 1
    %s8667 = scalar_lea.sflag [#allocation6], 1
    %8668 = vsyncpa %s8667, 1

</llo_original>
